<compile_context>
chip_gen: v5e
topology: v5e:2x2
jax: 0.10.0
libtpu: 0.0.40
codegen_flags: <defaults>
</compile_context>

<pallas_src>
import functools

import jax
import jax.numpy as jnp
from jax.experimental import pallas as pl
from jax.experimental.pallas import tpu as pltpu


def _round_up(x, m):
    return ((x + m - 1) // m) * m


def bertclassifier_kernel(ids_ref,        # SMEM  (B_pad, S) int32  (scalar prefetch)
                          w_ref,          # VMEM  (D_pad, O_pad)    resident
                          bias_ref,       # VMEM  (1, O_pad)        resident
                          emb_hbm,        # ANY   (V, D_pad)        stays in HBM
                          out_ref,        # VMEM  (TB, O_pad)       per-tile block
                          stage,          # VMEM  (2, CHUNK, D_pad) DMA double buffer
                          sem,            # DMA sems (2, CHUNK)
                          acc_ref,        # VMEM  (TB, D_pad) f32 accumulator
                          *, seq_len, chunk, tb):
    V = emb_hbm.shape[0]
    n_chunks = (seq_len + chunk - 1) // chunk
    n_jobs = tb * n_chunks                       # one "job" = one row-chunk of DMAs
    row0 = pl.program_id(0) * tb                 # first batch row of this tile

    # Descriptors kept per slot so .wait() uses the exact matching copy.
    inflight = [[], []]

    def issue(job, slot):
        r, c = divmod(job, n_chunks)             # static ints (unrolled loop)
        base = c * chunk
        clen = min(chunk, seq_len - base)
        cps = []
        for k in range(clen):
            tok = jnp.clip(ids_ref[row0 + r, base + k], 0, V - 1)
            cp = pltpu.make_async_copy(emb_hbm.at[pl.ds(tok, 1)],
                                       stage.at[slot, pl.ds(k, 1)],
                                       sem.at[slot, k])
            cp.start()
            cps.append(cp)
        inflight[slot] = cps

    def drain(job, slot):
        for cp in inflight[slot]:
            cp.wait()
        r, c = divmod(job, n_chunks)
        base = c * chunk
        clen = min(chunk, seq_len - base)
        rows = stage[slot][:clen].astype(jnp.float32)          # (clen, D_pad)
        acc_ref[pl.ds(r, 1), :] += jnp.sum(rows, axis=0, keepdims=True)

    acc_ref[...] = jnp.zeros_like(acc_ref)

    issue(0, 0)
    # Statically unrolled for small S*TB; switch to pl.loop/fori for long runs.
    for job in range(n_jobs):
        slot = job % 2
        # Issue the NEXT chunk's DMAs before waiting on the current chunk so a
        # full chunk of gathers is always in flight.
        if job + 1 < n_jobs:
            issue(job + 1, 1 - slot)
        drain(job, slot)

    # EmbeddingBag "mean" + fused Linear (+ bias): one dense MXU matmul.
    x = acc_ref[...] * (1.0 / seq_len)                         # (TB, D_pad) f32
    lhs = x if w_ref.dtype == jnp.float32 else x.astype(w_ref.dtype)
    out = jnp.dot(lhs, w_ref[...], preferred_element_type=jnp.float32)
    out = out + bias_ref[...].astype(jnp.float32)              # (TB, O_pad)
    out_ref[...] = out.astype(out_ref.dtype)                   # dense unmasked store


def bertclassifier_forward(text, emb_table, w, bias, *, tb=8, chunk=16):
    """text: (B,S) int, emb_table: (V,D), w: (D,O), bias: (1,O) -> (B,O) f32."""
    B, S = text.shape
    V, D = emb_table.shape
    O = w.shape[1]

    D_pad = _round_up(max(D, 128), 128)          # lane-dense hidden dim
    O_pad = _round_up(max(O, 128), 128)          # lane-dense output dim
    tb = max(8, _round_up(tb, 8))                # sublane-dense batch tile
    B_pad = _round_up(max(B, tb), tb)
    chunk = max(1, min(chunk, S))                # rows staged per DMA burst

    ids_p = jnp.pad(text.astype(jnp.int32), ((0, B_pad - B), (0, 0)))
    emb_p = jnp.pad(emb_table, ((0, 0), (0, D_pad - D)))
    w_p = jnp.pad(w, ((0, D_pad - D), (0, O_pad - O)))
    b_p = jnp.pad(bias.reshape(1, O), ((0, 0), (0, O_pad - O)))

    n_tiles = B_pad // tb

    kernel = functools.partial(bertclassifier_kernel,
                               seq_len=S, chunk=chunk, tb=tb)

    grid_spec = pltpu.PrefetchScalarGridSpec(
        num_scalar_prefetch=1,                   # token ids -> SMEM
        grid=(n_tiles,),
        in_specs=[
            pl.BlockSpec((D_pad, O_pad), lambda i, ids: (0, 0)),   # W resident
            pl.BlockSpec((1, O_pad), lambda i, ids: (0, 0)),       # bias resident
            pl.BlockSpec(memory_space=pl.ANY),                     # table in HBM
        ],
        out_specs=pl.BlockSpec((tb, O_pad), lambda i, ids: (i, 0)),
        scratch_shapes=[
            pltpu.VMEM((2, chunk, D_pad), emb_p.dtype),  # staged gather rows
            pltpu.SemaphoreType.DMA((2, chunk)),         # per-row DMA sems
            pltpu.VMEM((tb, D_pad), jnp.float32),        # per-tile mean accumulator
        ],
    )

    emb_bytes = jnp.dtype(emb_p.dtype).itemsize
    cost = pl.CostEstimate(
        flops=2 * B_pad * D_pad * O_pad + B_pad * S * D_pad,
        transcendentals=0,
        bytes_accessed=(B_pad * S * D_pad * emb_bytes          # gathered rows
                        + D_pad * O_pad * jnp.dtype(w_p.dtype).itemsize
                        + O_pad * jnp.dtype(b_p.dtype).itemsize
                        + B_pad * O_pad * 4                     # output write
                        + B_pad * S * 4),                       # ids
    )

    out = pl.pallas_call(
        kernel,
        out_shape=jax.ShapeDtypeStruct((B_pad, O_pad), jnp.float32),
        grid_spec=grid_spec,
        compiler_params=pltpu.CompilerParams(
            dimension_semantics=("parallel",),   # batch tiles across TCs on v7x
        ),
        cost_estimate=cost,
    )(ids_p, w_p, b_p, emb_p)

    return out[:B, :O]


def reference_forward(text, emb_table, w, bias):
    # Pure-JAX reference: EmbeddingBag(mean) + Linear.
    x = jnp.take(emb_table, text, axis=0).mean(axis=1)   # (B, D)
    return x @ w + bias                                   # (B, O)


if __name__ == "__main__":
    # Small, deterministic problem sizes consistent with the module.
    B, S = 2, 8          # batch, sequence length
    V = 32               # vocab size
    D = 32               # emb_dim
    O = 16               # output_dim

    key = jax.random.PRNGKey(0)
    k_text, k_emb, k_w, k_b = jax.random.split(key, 4)

    text = jax.random.randint(k_text, (B, S), 0, V, dtype=jnp.int32)
    emb_table = jax.random.normal(k_emb, (V, D), dtype=jnp.float32) * 0.1
    w = jax.random.normal(k_w, (D, O), dtype=jnp.float32) * 0.1
    b = jax.random.normal(k_b, (1, O), dtype=jnp.float32) * 0.1

    out = bertclassifier_forward(text, emb_table, w, b)
    out = jax.block_until_ready(out)

    ref = reference_forward(text, emb_table, w, b)
    assert out.shape == (B, O)
    assert jnp.allclose(out, ref, atol=1e-4, rtol=1e-4), "mismatch vs reference"

    print("KERNEL_OK")
</pallas_src>

<mosaic_0001>
module attributes {stable_mosaic.version = 11 : i64} {
  func.func @bertclassifier_kernel(%arg0: i32, %arg1: memref<8x8xi32, #tpu.memory_space<smem>>, %arg2: memref<128x128xf32, #tpu.memory_space<vmem>>, %arg3: memref<1x128xf32, #tpu.memory_space<vmem>>, %arg4: memref<32x128xf32, #tpu.memory_space<any>>, %arg5: memref<8x128xf32, #tpu.memory_space<vmem>>, %arg6: memref<2x8x128xf32, #tpu.memory_space<vmem>>, %arg7: memref<2x8x!tpu.dma_semaphore, #tpu.memory_space<semaphore_mem>>, %arg8: memref<8x128xf32, #tpu.memory_space<vmem>>) attributes {dimension_semantics = [#tpu.dimension_semantics<parallel>], iteration_bounds = array<i64: 1>, scalar_prefetch = 1 : i64, scratch_operands = 3 : i64, tpu.core_type = #tpu.core_type<tc>, window_params = [{pipeline_mode = #tpu.pipeline_mode<synchronous>, transform_indices = @transform_0, window_bounds = array<i64: 128, 128>}, {pipeline_mode = #tpu.pipeline_mode<synchronous>, transform_indices = @transform_1, window_bounds = array<i64: 1, 128>}, {}, {transform_indices = @transform_3, window_bounds = array<i64: 8, 128>}]} {
    %c8_i32 = arith.constant 8 : i32
    %0 = arith.muli %arg0, %c8_i32 : i32
    %cst = arith.constant 0.000000e+00 : f32
    %1 = vector.broadcast %cst : f32 to vector<8x128xf32>
    %c0 = arith.constant 0 : index
    %c0_0 = arith.constant 0 : index
    %2 = vector.load %arg8[%c0, %c0_0] : memref<8x128xf32, #tpu.memory_space<vmem>>, vector<8x128xf32>
    tpu.vector_store %arg8[%c0, %c0_0], %1 {strides = array<i32>} : memref<8x128xf32, #tpu.memory_space<vmem>>, vector<8x128xf32>,
    %c0_i32 = arith.constant 0 : i32
    %3 = arith.addi %0, %c0_i32 : i32
    %4 = arith.index_cast %3 : i32 to index
    %c0_1 = arith.constant 0 : index
    %5 = memref.load %arg1[%4, %c0_1] : memref<8x8xi32, #tpu.memory_space<smem>>
    %c0_i32_2 = arith.constant 0 : i32
    %c31_i32 = arith.constant 31 : i32
    %6 = arith.maxsi %c0_i32_2, %5 : i32
    %7 = arith.minsi %c31_i32, %6 : i32
    %c0_i32_3 = arith.constant 0 : i32
    %c0_i32_4 = arith.constant 0 : i32
    %c0_i32_5 = arith.constant 0 : i32
    %c0_i32_6 = arith.constant 0 : i32
    %8 = tpu.memref_slice %arg4[%7, %c0_i32_6] : memref<32x128xf32, #tpu.memory_space<any>> -> memref<1x128xf32, #tpu.memory_space<any>>
    %c0_i32_7 = arith.constant 0 : i32
    %c0_i32_8 = arith.constant 0 : i32
    %9 = tpu.memref_slice %arg6[%c0_i32_3, %c0_i32_7, %c0_i32_8] : memref<2x8x128xf32, #tpu.memory_space<vmem>> -> memref<1x1x128xf32, #tpu.memory_space<vmem>>
    %10 = tpu.memref_squeeze %9 : memref<1x1x128xf32, #tpu.memory_space<vmem>> -> memref<1x128xf32, #tpu.memory_space<vmem>>
    %11 = tpu.memref_slice %arg7[%c0_i32_4, %c0_i32_5] : memref<2x8x!tpu.dma_semaphore, #tpu.memory_space<semaphore_mem>> -> memref<1x1x!tpu.dma_semaphore, #tpu.memory_space<semaphore_mem>>
    %12 = tpu.memref_squeeze %11 : memref<1x1x!tpu.dma_semaphore, #tpu.memory_space<semaphore_mem>> -> memref<!tpu.dma_semaphore, #tpu.memory_space<semaphore_mem>>
    tpu.enqueue_dma source(%8 : memref<1x128xf32, #tpu.memory_space<any>>) target(%10 : memref<1x128xf32, #tpu.memory_space<vmem>>) target_semaphore(%12 : memref<!tpu.dma_semaphore, #tpu.memory_space<semaphore_mem>>)
    %c0_i32_9 = arith.constant 0 : i32
    %13 = arith.addi %0, %c0_i32_9 : i32
    %14 = arith.index_cast %13 : i32 to index
    %c1 = arith.constant 1 : index
    %15 = memref.load %arg1[%14, %c1] : memref<8x8xi32, #tpu.memory_space<smem>>
    %c0_i32_10 = arith.constant 0 : i32
    %c31_i32_11 = arith.constant 31 : i32
    %16 = arith.maxsi %c0_i32_10, %15 : i32
    %17 = arith.minsi %c31_i32_11, %16 : i32
    %c0_i32_12 = arith.constant 0 : i32
    %c0_i32_13 = arith.constant 0 : i32
    %c1_i32 = arith.constant 1 : i32
    %c0_i32_14 = arith.constant 0 : i32
    %18 = tpu.memref_slice %arg4[%17, %c0_i32_14] : memref<32x128xf32, #tpu.memory_space<any>> -> memref<1x128xf32, #tpu.memory_space<any>>
    %c1_i32_15 = arith.constant 1 : i32
    %c0_i32_16 = arith.constant 0 : i32
    %19 = tpu.memref_slice %arg6[%c0_i32_12, %c1_i32_15, %c0_i32_16] : memref<2x8x128xf32, #tpu.memory_space<vmem>> -> memref<1x1x128xf32, #tpu.memory_space<vmem>>
    %20 = tpu.memref_squeeze %19 : memref<1x1x128xf32, #tpu.memory_space<vmem>> -> memref<1x128xf32, #tpu.memory_space<vmem>>
    %21 = tpu.memref_slice %arg7[%c0_i32_13, %c1_i32] : memref<2x8x!tpu.dma_semaphore, #tpu.memory_space<semaphore_mem>> -> memref<1x1x!tpu.dma_semaphore, #tpu.memory_space<semaphore_mem>>
    %22 = tpu.memref_squeeze %21 : memref<1x1x!tpu.dma_semaphore, #tpu.memory_space<semaphore_mem>> -> memref<!tpu.dma_semaphore, #tpu.memory_space<semaphore_mem>>
    tpu.enqueue_dma source(%18 : memref<1x128xf32, #tpu.memory_space<any>>) target(%20 : memref<1x128xf32, #tpu.memory_space<vmem>>) target_semaphore(%22 : memref<!tpu.dma_semaphore, #tpu.memory_space<semaphore_mem>>)
    %c0_i32_17 = arith.constant 0 : i32
    %23 = arith.addi %0, %c0_i32_17 : i32
    %24 = arith.index_cast %23 : i32 to index
    %c2 = arith.constant 2 : index
    %25 = memref.load %arg1[%24, %c2] : memref<8x8xi32, #tpu.memory_space<smem>>
    %c0_i32_18 = arith.constant 0 : i32
    %c31_i32_19 = arith.constant 31 : i32
    %26 = arith.maxsi %c0_i32_18, %25 : i32
    %27 = arith.minsi %c31_i32_19, %26 : i32
    %c0_i32_20 = arith.constant 0 : i32
    %c0_i32_21 = arith.constant 0 : i32
    %c2_i32 = arith.constant 2 : i32
    %c0_i32_22 = arith.constant 0 : i32
    %28 = tpu.memref_slice %arg4[%27, %c0_i32_22] : memref<32x128xf32, #tpu.memory_space<any>> -> memref<1x128xf32, #tpu.memory_space<any>>
    %c2_i32_23 = arith.constant 2 : i32
    %c0_i32_24 = arith.constant 0 : i32
    %29 = tpu.memref_slice %arg6[%c0_i32_20, %c2_i32_23, %c0_i32_24] : memref<2x8x128xf32, #tpu.memory_space<vmem>> -> memref<1x1x128xf32, #tpu.memory_space<vmem>>
    %30 = tpu.memref_squeeze %29 : memref<1x1x128xf32, #tpu.memory_space<vmem>> -> memref<1x128xf32, #tpu.memory_space<vmem>>
    %31 = tpu.memref_slice %arg7[%c0_i32_21, %c2_i32] : memref<2x8x!tpu.dma_semaphore, #tpu.memory_space<semaphore_mem>> -> memref<1x1x!tpu.dma_semaphore, #tpu.memory_space<semaphore_mem>>
    %32 = tpu.memref_squeeze %31 : memref<1x1x!tpu.dma_semaphore, #tpu.memory_space<semaphore_mem>> -> memref<!tpu.dma_semaphore, #tpu.memory_space<semaphore_mem>>
    tpu.enqueue_dma source(%28 : memref<1x128xf32, #tpu.memory_space<any>>) target(%30 : memref<1x128xf32, #tpu.memory_space<vmem>>) target_semaphore(%32 : memref<!tpu.dma_semaphore, #tpu.memory_space<semaphore_mem>>)
    %c0_i32_25 = arith.constant 0 : i32
    %33 = arith.addi %0, %c0_i32_25 : i32
    %34 = arith.index_cast %33 : i32 to index
    %c3 = arith.constant 3 : index
    %35 = memref.load %arg1[%34, %c3] : memref<8x8xi32, #tpu.memory_space<smem>>
    %c0_i32_26 = arith.constant 0 : i32
    %c31_i32_27 = arith.constant 31 : i32
    %36 = arith.maxsi %c0_i32_26, %35 : i32
    %37 = arith.minsi %c31_i32_27, %36 : i32
    %c0_i32_28 = arith.constant 0 : i32
    %c0_i32_29 = arith.constant 0 : i32
    %c3_i32 = arith.constant 3 : i32
    %c0_i32_30 = arith.constant 0 : i32
    %38 = tpu.memref_slice %arg4[%37, %c0_i32_30] : memref<32x128xf32, #tpu.memory_space<any>> -> memref<1x128xf32, #tpu.memory_space<any>>
    %c3_i32_31 = arith.constant 3 : i32
    %c0_i32_32 = arith.constant 0 : i32
    %39 = tpu.memref_slice %arg6[%c0_i32_28, %c3_i32_31, %c0_i32_32] : memref<2x8x128xf32, #tpu.memory_space<vmem>> -> memref<1x1x128xf32, #tpu.memory_space<vmem>>
    %40 = tpu.memref_squeeze %39 : memref<1x1x128xf32, #tpu.memory_space<vmem>> -> memref<1x128xf32, #tpu.memory_space<vmem>>
    %41 = tpu.memref_slice %arg7[%c0_i32_29, %c3_i32] : memref<2x8x!tpu.dma_semaphore, #tpu.memory_space<semaphore_mem>> -> memref<1x1x!tpu.dma_semaphore, #tpu.memory_space<semaphore_mem>>
    %42 = tpu.memref_squeeze %41 : memref<1x1x!tpu.dma_semaphore, #tpu.memory_space<semaphore_mem>> -> memref<!tpu.dma_semaphore, #tpu.memory_space<semaphore_mem>>
    tpu.enqueue_dma source(%38 : memref<1x128xf32, #tpu.memory_space<any>>) target(%40 : memref<1x128xf32, #tpu.memory_space<vmem>>) target_semaphore(%42 : memref<!tpu.dma_semaphore, #tpu.memory_space<semaphore_mem>>)
    %c0_i32_33 = arith.constant 0 : i32
    %43 = arith.addi %0, %c0_i32_33 : i32
    %44 = arith.index_cast %43 : i32 to index
    %c4 = arith.constant 4 : index
    %45 = memref.load %arg1[%44, %c4] : memref<8x8xi32, #tpu.memory_space<smem>>
    %c0_i32_34 = arith.constant 0 : i32
    %c31_i32_35 = arith.constant 31 : i32
    %46 = arith.maxsi %c0_i32_34, %45 : i32
    %47 = arith.minsi %c31_i32_35, %46 : i32
    %c0_i32_36 = arith.constant 0 : i32
    %c0_i32_37 = arith.constant 0 : i32
    %c4_i32 = arith.constant 4 : i32
    %c0_i32_38 = arith.constant 0 : i32
    %48 = tpu.memref_slice %arg4[%47, %c0_i32_38] : memref<32x128xf32, #tpu.memory_space<any>> -> memref<1x128xf32, #tpu.memory_space<any>>
    %c4_i32_39 = arith.constant 4 : i32
    %c0_i32_40 = arith.constant 0 : i32
    %49 = tpu.memref_slice %arg6[%c0_i32_36, %c4_i32_39, %c0_i32_40] : memref<2x8x128xf32, #tpu.memory_space<vmem>> -> memref<1x1x128xf32, #tpu.memory_space<vmem>>
    %50 = tpu.memref_squeeze %49 : memref<1x1x128xf32, #tpu.memory_space<vmem>> -> memref<1x128xf32, #tpu.memory_space<vmem>>
    %51 = tpu.memref_slice %arg7[%c0_i32_37, %c4_i32] : memref<2x8x!tpu.dma_semaphore, #tpu.memory_space<semaphore_mem>> -> memref<1x1x!tpu.dma_semaphore, #tpu.memory_space<semaphore_mem>>
    %52 = tpu.memref_squeeze %51 : memref<1x1x!tpu.dma_semaphore, #tpu.memory_space<semaphore_mem>> -> memref<!tpu.dma_semaphore, #tpu.memory_space<semaphore_mem>>
    tpu.enqueue_dma source(%48 : memref<1x128xf32, #tpu.memory_space<any>>) target(%50 : memref<1x128xf32, #tpu.memory_space<vmem>>) target_semaphore(%52 : memref<!tpu.dma_semaphore, #tpu.memory_space<semaphore_mem>>)
    %c0_i32_41 = arith.constant 0 : i32
    %53 = arith.addi %0, %c0_i32_41 : i32
    %54 = arith.index_cast %53 : i32 to index
    %c5 = arith.constant 5 : index
    %55 = memref.load %arg1[%54, %c5] : memref<8x8xi32, #tpu.memory_space<smem>>
    %c0_i32_42 = arith.constant 0 : i32
    %c31_i32_43 = arith.constant 31 : i32
    %56 = arith.maxsi %c0_i32_42, %55 : i32
    %57 = arith.minsi %c31_i32_43, %56 : i32
    %c0_i32_44 = arith.constant 0 : i32
    %c0_i32_45 = arith.constant 0 : i32
    %c5_i32 = arith.constant 5 : i32
    %c0_i32_46 = arith.constant 0 : i32
    %58 = tpu.memref_slice %arg4[%57, %c0_i32_46] : memref<32x128xf32, #tpu.memory_space<any>> -> memref<1x128xf32, #tpu.memory_space<any>>
    %c5_i32_47 = arith.constant 5 : i32
    %c0_i32_48 = arith.constant 0 : i32
    %59 = tpu.memref_slice %arg6[%c0_i32_44, %c5_i32_47, %c0_i32_48] : memref<2x8x128xf32, #tpu.memory_space<vmem>> -> memref<1x1x128xf32, #tpu.memory_space<vmem>>
    %60 = tpu.memref_squeeze %59 : memref<1x1x128xf32, #tpu.memory_space<vmem>> -> memref<1x128xf32, #tpu.memory_space<vmem>>
    %61 = tpu.memref_slice %arg7[%c0_i32_45, %c5_i32] : memref<2x8x!tpu.dma_semaphore, #tpu.memory_space<semaphore_mem>> -> memref<1x1x!tpu.dma_semaphore, #tpu.memory_space<semaphore_mem>>
    %62 = tpu.memref_squeeze %61 : memref<1x1x!tpu.dma_semaphore, #tpu.memory_space<semaphore_mem>> -> memref<!tpu.dma_semaphore, #tpu.memory_space<semaphore_mem>>
    tpu.enqueue_dma source(%58 : memref<1x128xf32, #tpu.memory_space<any>>) target(%60 : memref<1x128xf32, #tpu.memory_space<vmem>>) target_semaphore(%62 : memref<!tpu.dma_semaphore, #tpu.memory_space<semaphore_mem>>)
    %c0_i32_49 = arith.constant 0 : i32
    %63 = arith.addi %0, %c0_i32_49 : i32
    %64 = arith.index_cast %63 : i32 to index
    %c6 = arith.constant 6 : index
    %65 = memref.load %arg1[%64, %c6] : memref<8x8xi32, #tpu.memory_space<smem>>
    %c0_i32_50 = arith.constant 0 : i32
    %c31_i32_51 = arith.constant 31 : i32
    %66 = arith.maxsi %c0_i32_50, %65 : i32
    %67 = arith.minsi %c31_i32_51, %66 : i32
    %c0_i32_52 = arith.constant 0 : i32
    %c0_i32_53 = arith.constant 0 : i32
    %c6_i32 = arith.constant 6 : i32
    %c0_i32_54 = arith.constant 0 : i32
    %68 = tpu.memref_slice %arg4[%67, %c0_i32_54] : memref<32x128xf32, #tpu.memory_space<any>> -> memref<1x128xf32, #tpu.memory_space<any>>
    %c6_i32_55 = arith.constant 6 : i32
    %c0_i32_56 = arith.constant 0 : i32
    %69 = tpu.memref_slice %arg6[%c0_i32_52, %c6_i32_55, %c0_i32_56] : memref<2x8x128xf32, #tpu.memory_space<vmem>> -> memref<1x1x128xf32, #tpu.memory_space<vmem>>
    %70 = tpu.memref_squeeze %69 : memref<1x1x128xf32, #tpu.memory_space<vmem>> -> memref<1x128xf32, #tpu.memory_space<vmem>>
    %71 = tpu.memref_slice %arg7[%c0_i32_53, %c6_i32] : memref<2x8x!tpu.dma_semaphore, #tpu.memory_space<semaphore_mem>> -> memref<1x1x!tpu.dma_semaphore, #tpu.memory_space<semaphore_mem>>
    %72 = tpu.memref_squeeze %71 : memref<1x1x!tpu.dma_semaphore, #tpu.memory_space<semaphore_mem>> -> memref<!tpu.dma_semaphore, #tpu.memory_space<semaphore_mem>>
    tpu.enqueue_dma source(%68 : memref<1x128xf32, #tpu.memory_space<any>>) target(%70 : memref<1x128xf32, #tpu.memory_space<vmem>>) target_semaphore(%72 : memref<!tpu.dma_semaphore, #tpu.memory_space<semaphore_mem>>)
    %c0_i32_57 = arith.constant 0 : i32
    %73 = arith.addi %0, %c0_i32_57 : i32
    %74 = arith.index_cast %73 : i32 to index
    %c7 = arith.constant 7 : index
    %75 = memref.load %arg1[%74, %c7] : memref<8x8xi32, #tpu.memory_space<smem>>
    %c0_i32_58 = arith.constant 0 : i32
    %c31_i32_59 = arith.constant 31 : i32
    %76 = arith.maxsi %c0_i32_58, %75 : i32
    %77 = arith.minsi %c31_i32_59, %76 : i32
    %c0_i32_60 = arith.constant 0 : i32
    %c0_i32_61 = arith.constant 0 : i32
    %c7_i32 = arith.constant 7 : i32
    %c0_i32_62 = arith.constant 0 : i32
    %78 = tpu.memref_slice %arg4[%77, %c0_i32_62] : memref<32x128xf32, #tpu.memory_space<any>> -> memref<1x128xf32, #tpu.memory_space<any>>
    %c7_i32_63 = arith.constant 7 : i32
    %c0_i32_64 = arith.constant 0 : i32
    %79 = tpu.memref_slice %arg6[%c0_i32_60, %c7_i32_63, %c0_i32_64] : memref<2x8x128xf32, #tpu.memory_space<vmem>> -> memref<1x1x128xf32, #tpu.memory_space<vmem>>
    %80 = tpu.memref_squeeze %79 : memref<1x1x128xf32, #tpu.memory_space<vmem>> -> memref<1x128xf32, #tpu.memory_space<vmem>>
    %81 = tpu.memref_slice %arg7[%c0_i32_61, %c7_i32] : memref<2x8x!tpu.dma_semaphore, #tpu.memory_space<semaphore_mem>> -> memref<1x1x!tpu.dma_semaphore, #tpu.memory_space<semaphore_mem>>
    %82 = tpu.memref_squeeze %81 : memref<1x1x!tpu.dma_semaphore, #tpu.memory_space<semaphore_mem>> -> memref<!tpu.dma_semaphore, #tpu.memory_space<semaphore_mem>>
    tpu.enqueue_dma source(%78 : memref<1x128xf32, #tpu.memory_space<any>>) target(%80 : memref<1x128xf32, #tpu.memory_space<vmem>>) target_semaphore(%82 : memref<!tpu.dma_semaphore, #tpu.memory_space<semaphore_mem>>)
    %c1_i32_65 = arith.constant 1 : i32
    %83 = arith.addi %0, %c1_i32_65 : i32
    %84 = arith.index_cast %83 : i32 to index
    %c0_66 = arith.constant 0 : index
    %85 = memref.load %arg1[%84, %c0_66] : memref<8x8xi32, #tpu.memory_space<smem>>
    %c0_i32_67 = arith.constant 0 : i32
    %c31_i32_68 = arith.constant 31 : i32
    %86 = arith.maxsi %c0_i32_67, %85 : i32
    %87 = arith.minsi %c31_i32_68, %86 : i32
    %c1_i32_69 = arith.constant 1 : i32
    %c1_i32_70 = arith.constant 1 : i32
    %c0_i32_71 = arith.constant 0 : i32
    %c0_i32_72 = arith.constant 0 : i32
    %88 = tpu.memref_slice %arg4[%87, %c0_i32_72] : memref<32x128xf32, #tpu.memory_space<any>> -> memref<1x128xf32, #tpu.memory_space<any>>
    %c0_i32_73 = arith.constant 0 : i32
    %c0_i32_74 = arith.constant 0 : i32
    %89 = tpu.memref_slice %arg6[%c1_i32_69, %c0_i32_73, %c0_i32_74] : memref<2x8x128xf32, #tpu.memory_space<vmem>> -> memref<1x1x128xf32, #tpu.memory_space<vmem>>
    %90 = tpu.memref_squeeze %89 : memref<1x1x128xf32, #tpu.memory_space<vmem>> -> memref<1x128xf32, #tpu.memory_space<vmem>>
    %91 = tpu.memref_slice %arg7[%c1_i32_70, %c0_i32_71] : memref<2x8x!tpu.dma_semaphore, #tpu.memory_space<semaphore_mem>> -> memref<1x1x!tpu.dma_semaphore, #tpu.memory_space<semaphore_mem>>
    %92 = tpu.memref_squeeze %91 : memref<1x1x!tpu.dma_semaphore, #tpu.memory_space<semaphore_mem>> -> memref<!tpu.dma_semaphore, #tpu.memory_space<semaphore_mem>>
    tpu.enqueue_dma source(%88 : memref<1x128xf32, #tpu.memory_space<any>>) target(%90 : memref<1x128xf32, #tpu.memory_space<vmem>>) target_semaphore(%92 : memref<!tpu.dma_semaphore, #tpu.memory_space<semaphore_mem>>)
    %c1_i32_75 = arith.constant 1 : i32
    %93 = arith.addi %0, %c1_i32_75 : i32
    %94 = arith.index_cast %93 : i32 to index
    %c1_76 = arith.constant 1 : index
    %95 = memref.load %arg1[%94, %c1_76] : memref<8x8xi32, #tpu.memory_space<smem>>
    %c0_i32_77 = arith.constant 0 : i32
    %c31_i32_78 = arith.constant 31 : i32
    %96 = arith.maxsi %c0_i32_77, %95 : i32
    %97 = arith.minsi %c31_i32_78, %96 : i32
    %c1_i32_79 = arith.constant 1 : i32
    %c1_i32_80 = arith.constant 1 : i32
    %c1_i32_81 = arith.constant 1 : i32
    %c0_i32_82 = arith.constant 0 : i32
    %98 = tpu.memref_slice %arg4[%97, %c0_i32_82] : memref<32x128xf32, #tpu.memory_space<any>> -> memref<1x128xf32, #tpu.memory_space<any>>
    %c1_i32_83 = arith.constant 1 : i32
    %c0_i32_84 = arith.constant 0 : i32
    %99 = tpu.memref_slice %arg6[%c1_i32_79, %c1_i32_83, %c0_i32_84] : memref<2x8x128xf32, #tpu.memory_space<vmem>> -> memref<1x1x128xf32, #tpu.memory_space<vmem>>
    %100 = tpu.memref_squeeze %99 : memref<1x1x128xf32, #tpu.memory_space<vmem>> -> memref<1x128xf32, #tpu.memory_space<vmem>>
    %101 = tpu.memref_slice %arg7[%c1_i32_80, %c1_i32_81] : memref<2x8x!tpu.dma_semaphore, #tpu.memory_space<semaphore_mem>> -> memref<1x1x!tpu.dma_semaphore, #tpu.memory_space<semaphore_mem>>
    %102 = tpu.memref_squeeze %101 : memref<1x1x!tpu.dma_semaphore, #tpu.memory_space<semaphore_mem>> -> memref<!tpu.dma_semaphore, #tpu.memory_space<semaphore_mem>>
    tpu.enqueue_dma source(%98 : memref<1x128xf32, #tpu.memory_space<any>>) target(%100 : memref<1x128xf32, #tpu.memory_space<vmem>>) target_semaphore(%102 : memref<!tpu.dma_semaphore, #tpu.memory_space<semaphore_mem>>)
    %c1_i32_85 = arith.constant 1 : i32
    %103 = arith.addi %0, %c1_i32_85 : i32
    %104 = arith.index_cast %103 : i32 to index
    %c2_86 = arith.constant 2 : index
    %105 = memref.load %arg1[%104, %c2_86] : memref<8x8xi32, #tpu.memory_space<smem>>
    %c0_i32_87 = arith.constant 0 : i32
    %c31_i32_88 = arith.constant 31 : i32
    %106 = arith.maxsi %c0_i32_87, %105 : i32
    %107 = arith.minsi %c31_i32_88, %106 : i32
    %c1_i32_89 = arith.constant 1 : i32
    %c1_i32_90 = arith.constant 1 : i32
    %c2_i32_91 = arith.constant 2 : i32
    %c0_i32_92 = arith.constant 0 : i32
    %108 = tpu.memref_slice %arg4[%107, %c0_i32_92] : memref<32x128xf32, #tpu.memory_space<any>> -> memref<1x128xf32, #tpu.memory_space<any>>
    %c2_i32_93 = arith.constant 2 : i32
    %c0_i32_94 = arith.constant 0 : i32
    %109 = tpu.memref_slice %arg6[%c1_i32_89, %c2_i32_93, %c0_i32_94] : memref<2x8x128xf32, #tpu.memory_space<vmem>> -> memref<1x1x128xf32, #tpu.memory_space<vmem>>
    %110 = tpu.memref_squeeze %109 : memref<1x1x128xf32, #tpu.memory_space<vmem>> -> memref<1x128xf32, #tpu.memory_space<vmem>>
    %111 = tpu.memref_slice %arg7[%c1_i32_90, %c2_i32_91] : memref<2x8x!tpu.dma_semaphore, #tpu.memory_space<semaphore_mem>> -> memref<1x1x!tpu.dma_semaphore, #tpu.memory_space<semaphore_mem>>
    %112 = tpu.memref_squeeze %111 : memref<1x1x!tpu.dma_semaphore, #tpu.memory_space<semaphore_mem>> -> memref<!tpu.dma_semaphore, #tpu.memory_space<semaphore_mem>>
    tpu.enqueue_dma source(%108 : memref<1x128xf32, #tpu.memory_space<any>>) target(%110 : memref<1x128xf32, #tpu.memory_space<vmem>>) target_semaphore(%112 : memref<!tpu.dma_semaphore, #tpu.memory_space<semaphore_mem>>)
    %c1_i32_95 = arith.constant 1 : i32
    %113 = arith.addi %0, %c1_i32_95 : i32
    %114 = arith.index_cast %113 : i32 to index
    %c3_96 = arith.constant 3 : index
    %115 = memref.load %arg1[%114, %c3_96] : memref<8x8xi32, #tpu.memory_space<smem>>
    %c0_i32_97 = arith.constant 0 : i32
    %c31_i32_98 = arith.constant 31 : i32
    %116 = arith.maxsi %c0_i32_97, %115 : i32
    %117 = arith.minsi %c31_i32_98, %116 : i32
    %c1_i32_99 = arith.constant 1 : i32
    %c1_i32_100 = arith.constant 1 : i32
    %c3_i32_101 = arith.constant 3 : i32
    %c0_i32_102 = arith.constant 0 : i32
    %118 = tpu.memref_slice %arg4[%117, %c0_i32_102] : memref<32x128xf32, #tpu.memory_space<any>> -> memref<1x128xf32, #tpu.memory_space<any>>
    %c3_i32_103 = arith.constant 3 : i32
    %c0_i32_104 = arith.constant 0 : i32
    %119 = tpu.memref_slice %arg6[%c1_i32_99, %c3_i32_103, %c0_i32_104] : memref<2x8x128xf32, #tpu.memory_space<vmem>> -> memref<1x1x128xf32, #tpu.memory_space<vmem>>
    %120 = tpu.memref_squeeze %119 : memref<1x1x128xf32, #tpu.memory_space<vmem>> -> memref<1x128xf32, #tpu.memory_space<vmem>>
    %121 = tpu.memref_slice %arg7[%c1_i32_100, %c3_i32_101] : memref<2x8x!tpu.dma_semaphore, #tpu.memory_space<semaphore_mem>> -> memref<1x1x!tpu.dma_semaphore, #tpu.memory_space<semaphore_mem>>
    %122 = tpu.memref_squeeze %121 : memref<1x1x!tpu.dma_semaphore, #tpu.memory_space<semaphore_mem>> -> memref<!tpu.dma_semaphore, #tpu.memory_space<semaphore_mem>>
    tpu.enqueue_dma source(%118 : memref<1x128xf32, #tpu.memory_space<any>>) target(%120 : memref<1x128xf32, #tpu.memory_space<vmem>>) target_semaphore(%122 : memref<!tpu.dma_semaphore, #tpu.memory_space<semaphore_mem>>)
    %c1_i32_105 = arith.constant 1 : i32
    %123 = arith.addi %0, %c1_i32_105 : i32
    %124 = arith.index_cast %123 : i32 to index
    %c4_106 = arith.constant 4 : index
    %125 = memref.load %arg1[%124, %c4_106] : memref<8x8xi32, #tpu.memory_space<smem>>
    %c0_i32_107 = arith.constant 0 : i32
    %c31_i32_108 = arith.constant 31 : i32
    %126 = arith.maxsi %c0_i32_107, %125 : i32
    %127 = arith.minsi %c31_i32_108, %126 : i32
    %c1_i32_109 = arith.constant 1 : i32
    %c1_i32_110 = arith.constant 1 : i32
    %c4_i32_111 = arith.constant 4 : i32
    %c0_i32_112 = arith.constant 0 : i32
    %128 = tpu.memref_slice %arg4[%127, %c0_i32_112] : memref<32x128xf32, #tpu.memory_space<any>> -> memref<1x128xf32, #tpu.memory_space<any>>
    %c4_i32_113 = arith.constant 4 : i32
    %c0_i32_114 = arith.constant 0 : i32
    %129 = tpu.memref_slice %arg6[%c1_i32_109, %c4_i32_113, %c0_i32_114] : memref<2x8x128xf32, #tpu.memory_space<vmem>> -> memref<1x1x128xf32, #tpu.memory_space<vmem>>
    %130 = tpu.memref_squeeze %129 : memref<1x1x128xf32, #tpu.memory_space<vmem>> -> memref<1x128xf32, #tpu.memory_space<vmem>>
    %131 = tpu.memref_slice %arg7[%c1_i32_110, %c4_i32_111] : memref<2x8x!tpu.dma_semaphore, #tpu.memory_space<semaphore_mem>> -> memref<1x1x!tpu.dma_semaphore, #tpu.memory_space<semaphore_mem>>
    %132 = tpu.memref_squeeze %131 : memref<1x1x!tpu.dma_semaphore, #tpu.memory_space<semaphore_mem>> -> memref<!tpu.dma_semaphore, #tpu.memory_space<semaphore_mem>>
    tpu.enqueue_dma source(%128 : memref<1x128xf32, #tpu.memory_space<any>>) target(%130 : memref<1x128xf32, #tpu.memory_space<vmem>>) target_semaphore(%132 : memref<!tpu.dma_semaphore, #tpu.memory_space<semaphore_mem>>)
    %c1_i32_115 = arith.constant 1 : i32
    %133 = arith.addi %0, %c1_i32_115 : i32
    %134 = arith.index_cast %133 : i32 to index
    %c5_116 = arith.constant 5 : index
    %135 = memref.load %arg1[%134, %c5_116] : memref<8x8xi32, #tpu.memory_space<smem>>
    %c0_i32_117 = arith.constant 0 : i32
    %c31_i32_118 = arith.constant 31 : i32
    %136 = arith.maxsi %c0_i32_117, %135 : i32
    %137 = arith.minsi %c31_i32_118, %136 : i32
    %c1_i32_119 = arith.constant 1 : i32
    %c1_i32_120 = arith.constant 1 : i32
    %c5_i32_121 = arith.constant 5 : i32
    %c0_i32_122 = arith.constant 0 : i32
    %138 = tpu.memref_slice %arg4[%137, %c0_i32_122] : memref<32x128xf32, #tpu.memory_space<any>> -> memref<1x128xf32, #tpu.memory_space<any>>
    %c5_i32_123 = arith.constant 5 : i32
    %c0_i32_124 = arith.constant 0 : i32
    %139 = tpu.memref_slice %arg6[%c1_i32_119, %c5_i32_123, %c0_i32_124] : memref<2x8x128xf32, #tpu.memory_space<vmem>> -> memref<1x1x128xf32, #tpu.memory_space<vmem>>
    %140 = tpu.memref_squeeze %139 : memref<1x1x128xf32, #tpu.memory_space<vmem>> -> memref<1x128xf32, #tpu.memory_space<vmem>>
    %141 = tpu.memref_slice %arg7[%c1_i32_120, %c5_i32_121] : memref<2x8x!tpu.dma_semaphore, #tpu.memory_space<semaphore_mem>> -> memref<1x1x!tpu.dma_semaphore, #tpu.memory_space<semaphore_mem>>
    %142 = tpu.memref_squeeze %141 : memref<1x1x!tpu.dma_semaphore, #tpu.memory_space<semaphore_mem>> -> memref<!tpu.dma_semaphore, #tpu.memory_space<semaphore_mem>>
    tpu.enqueue_dma source(%138 : memref<1x128xf32, #tpu.memory_space<any>>) target(%140 : memref<1x128xf32, #tpu.memory_space<vmem>>) target_semaphore(%142 : memref<!tpu.dma_semaphore, #tpu.memory_space<semaphore_mem>>)
    %c1_i32_125 = arith.constant 1 : i32
    %143 = arith.addi %0, %c1_i32_125 : i32
    %144 = arith.index_cast %143 : i32 to index
    %c6_126 = arith.constant 6 : index
    %145 = memref.load %arg1[%144, %c6_126] : memref<8x8xi32, #tpu.memory_space<smem>>
    %c0_i32_127 = arith.constant 0 : i32
    %c31_i32_128 = arith.constant 31 : i32
    %146 = arith.maxsi %c0_i32_127, %145 : i32
    %147 = arith.minsi %c31_i32_128, %146 : i32
    %c1_i32_129 = arith.constant 1 : i32
    %c1_i32_130 = arith.constant 1 : i32
    %c6_i32_131 = arith.constant 6 : i32
    %c0_i32_132 = arith.constant 0 : i32
    %148 = tpu.memref_slice %arg4[%147, %c0_i32_132] : memref<32x128xf32, #tpu.memory_space<any>> -> memref<1x128xf32, #tpu.memory_space<any>>
    %c6_i32_133 = arith.constant 6 : i32
    %c0_i32_134 = arith.constant 0 : i32
    %149 = tpu.memref_slice %arg6[%c1_i32_129, %c6_i32_133, %c0_i32_134] : memref<2x8x128xf32, #tpu.memory_space<vmem>> -> memref<1x1x128xf32, #tpu.memory_space<vmem>>
    %150 = tpu.memref_squeeze %149 : memref<1x1x128xf32, #tpu.memory_space<vmem>> -> memref<1x128xf32, #tpu.memory_space<vmem>>
    %151 = tpu.memref_slice %arg7[%c1_i32_130, %c6_i32_131] : memref<2x8x!tpu.dma_semaphore, #tpu.memory_space<semaphore_mem>> -> memref<1x1x!tpu.dma_semaphore, #tpu.memory_space<semaphore_mem>>
    %152 = tpu.memref_squeeze %151 : memref<1x1x!tpu.dma_semaphore, #tpu.memory_space<semaphore_mem>> -> memref<!tpu.dma_semaphore, #tpu.memory_space<semaphore_mem>>
    tpu.enqueue_dma source(%148 : memref<1x128xf32, #tpu.memory_space<any>>) target(%150 : memref<1x128xf32, #tpu.memory_space<vmem>>) target_semaphore(%152 : memref<!tpu.dma_semaphore, #tpu.memory_space<semaphore_mem>>)
    %c1_i32_135 = arith.constant 1 : i32
    %153 = arith.addi %0, %c1_i32_135 : i32
    %154 = arith.index_cast %153 : i32 to index
    %c7_136 = arith.constant 7 : index
    %155 = memref.load %arg1[%154, %c7_136] : memref<8x8xi32, #tpu.memory_space<smem>>
    %c0_i32_137 = arith.constant 0 : i32
    %c31_i32_138 = arith.constant 31 : i32
    %156 = arith.maxsi %c0_i32_137, %155 : i32
    %157 = arith.minsi %c31_i32_138, %156 : i32
    %c1_i32_139 = arith.constant 1 : i32
    %c1_i32_140 = arith.constant 1 : i32
    %c7_i32_141 = arith.constant 7 : i32
    %c0_i32_142 = arith.constant 0 : i32
    %158 = tpu.memref_slice %arg4[%157, %c0_i32_142] : memref<32x128xf32, #tpu.memory_space<any>> -> memref<1x128xf32, #tpu.memory_space<any>>
    %c7_i32_143 = arith.constant 7 : i32
    %c0_i32_144 = arith.constant 0 : i32
    %159 = tpu.memref_slice %arg6[%c1_i32_139, %c7_i32_143, %c0_i32_144] : memref<2x8x128xf32, #tpu.memory_space<vmem>> -> memref<1x1x128xf32, #tpu.memory_space<vmem>>
    %160 = tpu.memref_squeeze %159 : memref<1x1x128xf32, #tpu.memory_space<vmem>> -> memref<1x128xf32, #tpu.memory_space<vmem>>
    %161 = tpu.memref_slice %arg7[%c1_i32_140, %c7_i32_141] : memref<2x8x!tpu.dma_semaphore, #tpu.memory_space<semaphore_mem>> -> memref<1x1x!tpu.dma_semaphore, #tpu.memory_space<semaphore_mem>>
    %162 = tpu.memref_squeeze %161 : memref<1x1x!tpu.dma_semaphore, #tpu.memory_space<semaphore_mem>> -> memref<!tpu.dma_semaphore, #tpu.memory_space<semaphore_mem>>
    tpu.enqueue_dma source(%158 : memref<1x128xf32, #tpu.memory_space<any>>) target(%160 : memref<1x128xf32, #tpu.memory_space<vmem>>) target_semaphore(%162 : memref<!tpu.dma_semaphore, #tpu.memory_space<semaphore_mem>>)
    %c0_i32_145 = arith.constant 0 : i32
    %c0_i32_146 = arith.constant 0 : i32
    %c0_i32_147 = arith.constant 0 : i32
    %c0_i32_148 = arith.constant 0 : i32
    %163 = tpu.memref_slice %arg4[%7, %c0_i32_148] : memref<32x128xf32, #tpu.memory_space<any>> -> memref<1x128xf32, #tpu.memory_space<any>>
    %c0_i32_149 = arith.constant 0 : i32
    %c0_i32_150 = arith.constant 0 : i32
    %164 = tpu.memref_slice %arg6[%c0_i32_145, %c0_i32_149, %c0_i32_150] : memref<2x8x128xf32, #tpu.memory_space<vmem>> -> memref<1x1x128xf32, #tpu.memory_space<vmem>>
    %165 = tpu.memref_squeeze %164 : memref<1x1x128xf32, #tpu.memory_space<vmem>> -> memref<1x128xf32, #tpu.memory_space<vmem>>
    %166 = tpu.memref_slice %arg7[%c0_i32_146, %c0_i32_147] : memref<2x8x!tpu.dma_semaphore, #tpu.memory_space<semaphore_mem>> -> memref<1x1x!tpu.dma_semaphore, #tpu.memory_space<semaphore_mem>>
    %167 = tpu.memref_squeeze %166 : memref<1x1x!tpu.dma_semaphore, #tpu.memory_space<semaphore_mem>> -> memref<!tpu.dma_semaphore, #tpu.memory_space<semaphore_mem>>
    tpu.wait_dma2 semaphore(%167 : memref<!tpu.dma_semaphore, #tpu.memory_space<semaphore_mem>>) src(%163 : memref<1x128xf32, #tpu.memory_space<any>>) dst(%165 : memref<1x128xf32, #tpu.memory_space<vmem>>)
    %c0_i32_151 = arith.constant 0 : i32
    %c0_i32_152 = arith.constant 0 : i32
    %c1_i32_153 = arith.constant 1 : i32
    %c0_i32_154 = arith.constant 0 : i32
    %168 = tpu.memref_slice %arg4[%17, %c0_i32_154] : memref<32x128xf32, #tpu.memory_space<any>> -> memref<1x128xf32, #tpu.memory_space<any>>
    %c1_i32_155 = arith.constant 1 : i32
    %c0_i32_156 = arith.constant 0 : i32
    %169 = tpu.memref_slice %arg6[%c0_i32_151, %c1_i32_155, %c0_i32_156] : memref<2x8x128xf32, #tpu.memory_space<vmem>> -> memref<1x1x128xf32, #tpu.memory_space<vmem>>
    %170 = tpu.memref_squeeze %169 : memref<1x1x128xf32, #tpu.memory_space<vmem>> -> memref<1x128xf32, #tpu.memory_space<vmem>>
    %171 = tpu.memref_slice %arg7[%c0_i32_152, %c1_i32_153] : memref<2x8x!tpu.dma_semaphore, #tpu.memory_space<semaphore_mem>> -> memref<1x1x!tpu.dma_semaphore, #tpu.memory_space<semaphore_mem>>
    %172 = tpu.memref_squeeze %171 : memref<1x1x!tpu.dma_semaphore, #tpu.memory_space<semaphore_mem>> -> memref<!tpu.dma_semaphore, #tpu.memory_space<semaphore_mem>>
    tpu.wait_dma2 semaphore(%172 : memref<!tpu.dma_semaphore, #tpu.memory_space<semaphore_mem>>) src(%168 : memref<1x128xf32, #tpu.memory_space<any>>) dst(%170 : memref<1x128xf32, #tpu.memory_space<vmem>>)
    %c0_i32_157 = arith.constant 0 : i32
    %c0_i32_158 = arith.constant 0 : i32
    %c2_i32_159 = arith.constant 2 : i32
    %c0_i32_160 = arith.constant 0 : i32
    %173 = tpu.memref_slice %arg4[%27, %c0_i32_160] : memref<32x128xf32, #tpu.memory_space<any>> -> memref<1x128xf32, #tpu.memory_space<any>>
    %c2_i32_161 = arith.constant 2 : i32
    %c0_i32_162 = arith.constant 0 : i32
    %174 = tpu.memref_slice %arg6[%c0_i32_157, %c2_i32_161, %c0_i32_162] : memref<2x8x128xf32, #tpu.memory_space<vmem>> -> memref<1x1x128xf32, #tpu.memory_space<vmem>>
    %175 = tpu.memref_squeeze %174 : memref<1x1x128xf32, #tpu.memory_space<vmem>> -> memref<1x128xf32, #tpu.memory_space<vmem>>
    %176 = tpu.memref_slice %arg7[%c0_i32_158, %c2_i32_159] : memref<2x8x!tpu.dma_semaphore, #tpu.memory_space<semaphore_mem>> -> memref<1x1x!tpu.dma_semaphore, #tpu.memory_space<semaphore_mem>>
    %177 = tpu.memref_squeeze %176 : memref<1x1x!tpu.dma_semaphore, #tpu.memory_space<semaphore_mem>> -> memref<!tpu.dma_semaphore, #tpu.memory_space<semaphore_mem>>
    tpu.wait_dma2 semaphore(%177 : memref<!tpu.dma_semaphore, #tpu.memory_space<semaphore_mem>>) src(%173 : memref<1x128xf32, #tpu.memory_space<any>>) dst(%175 : memref<1x128xf32, #tpu.memory_space<vmem>>)
    %c0_i32_163 = arith.constant 0 : i32
    %c0_i32_164 = arith.constant 0 : i32
    %c3_i32_165 = arith.constant 3 : i32
    %c0_i32_166 = arith.constant 0 : i32
    %178 = tpu.memref_slice %arg4[%37, %c0_i32_166] : memref<32x128xf32, #tpu.memory_space<any>> -> memref<1x128xf32, #tpu.memory_space<any>>
    %c3_i32_167 = arith.constant 3 : i32
    %c0_i32_168 = arith.constant 0 : i32
    %179 = tpu.memref_slice %arg6[%c0_i32_163, %c3_i32_167, %c0_i32_168] : memref<2x8x128xf32, #tpu.memory_space<vmem>> -> memref<1x1x128xf32, #tpu.memory_space<vmem>>
    %180 = tpu.memref_squeeze %179 : memref<1x1x128xf32, #tpu.memory_space<vmem>> -> memref<1x128xf32, #tpu.memory_space<vmem>>
    %181 = tpu.memref_slice %arg7[%c0_i32_164, %c3_i32_165] : memref<2x8x!tpu.dma_semaphore, #tpu.memory_space<semaphore_mem>> -> memref<1x1x!tpu.dma_semaphore, #tpu.memory_space<semaphore_mem>>
    %182 = tpu.memref_squeeze %181 : memref<1x1x!tpu.dma_semaphore, #tpu.memory_space<semaphore_mem>> -> memref<!tpu.dma_semaphore, #tpu.memory_space<semaphore_mem>>
    tpu.wait_dma2 semaphore(%182 : memref<!tpu.dma_semaphore, #tpu.memory_space<semaphore_mem>>) src(%178 : memref<1x128xf32, #tpu.memory_space<any>>) dst(%180 : memref<1x128xf32, #tpu.memory_space<vmem>>)
    %c0_i32_169 = arith.constant 0 : i32
    %c0_i32_170 = arith.constant 0 : i32
    %c4_i32_171 = arith.constant 4 : i32
    %c0_i32_172 = arith.constant 0 : i32
    %183 = tpu.memref_slice %arg4[%47, %c0_i32_172] : memref<32x128xf32, #tpu.memory_space<any>> -> memref<1x128xf32, #tpu.memory_space<any>>
    %c4_i32_173 = arith.constant 4 : i32
    %c0_i32_174 = arith.constant 0 : i32
    %184 = tpu.memref_slice %arg6[%c0_i32_169, %c4_i32_173, %c0_i32_174] : memref<2x8x128xf32, #tpu.memory_space<vmem>> -> memref<1x1x128xf32, #tpu.memory_space<vmem>>
    %185 = tpu.memref_squeeze %184 : memref<1x1x128xf32, #tpu.memory_space<vmem>> -> memref<1x128xf32, #tpu.memory_space<vmem>>
    %186 = tpu.memref_slice %arg7[%c0_i32_170, %c4_i32_171] : memref<2x8x!tpu.dma_semaphore, #tpu.memory_space<semaphore_mem>> -> memref<1x1x!tpu.dma_semaphore, #tpu.memory_space<semaphore_mem>>
    %187 = tpu.memref_squeeze %186 : memref<1x1x!tpu.dma_semaphore, #tpu.memory_space<semaphore_mem>> -> memref<!tpu.dma_semaphore, #tpu.memory_space<semaphore_mem>>
    tpu.wait_dma2 semaphore(%187 : memref<!tpu.dma_semaphore, #tpu.memory_space<semaphore_mem>>) src(%183 : memref<1x128xf32, #tpu.memory_space<any>>) dst(%185 : memref<1x128xf32, #tpu.memory_space<vmem>>)
    %c0_i32_175 = arith.constant 0 : i32
    %c0_i32_176 = arith.constant 0 : i32
    %c5_i32_177 = arith.constant 5 : i32
    %c0_i32_178 = arith.constant 0 : i32
    %188 = tpu.memref_slice %arg4[%57, %c0_i32_178] : memref<32x128xf32, #tpu.memory_space<any>> -> memref<1x128xf32, #tpu.memory_space<any>>
    %c5_i32_179 = arith.constant 5 : i32
    %c0_i32_180 = arith.constant 0 : i32
    %189 = tpu.memref_slice %arg6[%c0_i32_175, %c5_i32_179, %c0_i32_180] : memref<2x8x128xf32, #tpu.memory_space<vmem>> -> memref<1x1x128xf32, #tpu.memory_space<vmem>>
    %190 = tpu.memref_squeeze %189 : memref<1x1x128xf32, #tpu.memory_space<vmem>> -> memref<1x128xf32, #tpu.memory_space<vmem>>
    %191 = tpu.memref_slice %arg7[%c0_i32_176, %c5_i32_177] : memref<2x8x!tpu.dma_semaphore, #tpu.memory_space<semaphore_mem>> -> memref<1x1x!tpu.dma_semaphore, #tpu.memory_space<semaphore_mem>>
    %192 = tpu.memref_squeeze %191 : memref<1x1x!tpu.dma_semaphore, #tpu.memory_space<semaphore_mem>> -> memref<!tpu.dma_semaphore, #tpu.memory_space<semaphore_mem>>
    tpu.wait_dma2 semaphore(%192 : memref<!tpu.dma_semaphore, #tpu.memory_space<semaphore_mem>>) src(%188 : memref<1x128xf32, #tpu.memory_space<any>>) dst(%190 : memref<1x128xf32, #tpu.memory_space<vmem>>)
    %c0_i32_181 = arith.constant 0 : i32
    %c0_i32_182 = arith.constant 0 : i32
    %c6_i32_183 = arith.constant 6 : i32
    %c0_i32_184 = arith.constant 0 : i32
    %193 = tpu.memref_slice %arg4[%67, %c0_i32_184] : memref<32x128xf32, #tpu.memory_space<any>> -> memref<1x128xf32, #tpu.memory_space<any>>
    %c6_i32_185 = arith.constant 6 : i32
    %c0_i32_186 = arith.constant 0 : i32
    %194 = tpu.memref_slice %arg6[%c0_i32_181, %c6_i32_185, %c0_i32_186] : memref<2x8x128xf32, #tpu.memory_space<vmem>> -> memref<1x1x128xf32, #tpu.memory_space<vmem>>
    %195 = tpu.memref_squeeze %194 : memref<1x1x128xf32, #tpu.memory_space<vmem>> -> memref<1x128xf32, #tpu.memory_space<vmem>>
    %196 = tpu.memref_slice %arg7[%c0_i32_182, %c6_i32_183] : memref<2x8x!tpu.dma_semaphore, #tpu.memory_space<semaphore_mem>> -> memref<1x1x!tpu.dma_semaphore, #tpu.memory_space<semaphore_mem>>
    %197 = tpu.memref_squeeze %196 : memref<1x1x!tpu.dma_semaphore, #tpu.memory_space<semaphore_mem>> -> memref<!tpu.dma_semaphore, #tpu.memory_space<semaphore_mem>>
    tpu.wait_dma2 semaphore(%197 : memref<!tpu.dma_semaphore, #tpu.memory_space<semaphore_mem>>) src(%193 : memref<1x128xf32, #tpu.memory_space<any>>) dst(%195 : memref<1x128xf32, #tpu.memory_space<vmem>>)
    %c0_i32_187 = arith.constant 0 : i32
    %c0_i32_188 = arith.constant 0 : i32
    %c7_i32_189 = arith.constant 7 : i32
    %c0_i32_190 = arith.constant 0 : i32
    %198 = tpu.memref_slice %arg4[%77, %c0_i32_190] : memref<32x128xf32, #tpu.memory_space<any>> -> memref<1x128xf32, #tpu.memory_space<any>>
    %c7_i32_191 = arith.constant 7 : i32
    %c0_i32_192 = arith.constant 0 : i32
    %199 = tpu.memref_slice %arg6[%c0_i32_187, %c7_i32_191, %c0_i32_192] : memref<2x8x128xf32, #tpu.memory_space<vmem>> -> memref<1x1x128xf32, #tpu.memory_space<vmem>>
    %200 = tpu.memref_squeeze %199 : memref<1x1x128xf32, #tpu.memory_space<vmem>> -> memref<1x128xf32, #tpu.memory_space<vmem>>
    %201 = tpu.memref_slice %arg7[%c0_i32_188, %c7_i32_189] : memref<2x8x!tpu.dma_semaphore, #tpu.memory_space<semaphore_mem>> -> memref<1x1x!tpu.dma_semaphore, #tpu.memory_space<semaphore_mem>>
    %202 = tpu.memref_squeeze %201 : memref<1x1x!tpu.dma_semaphore, #tpu.memory_space<semaphore_mem>> -> memref<!tpu.dma_semaphore, #tpu.memory_space<semaphore_mem>>
    tpu.wait_dma2 semaphore(%202 : memref<!tpu.dma_semaphore, #tpu.memory_space<semaphore_mem>>) src(%198 : memref<1x128xf32, #tpu.memory_space<any>>) dst(%200 : memref<1x128xf32, #tpu.memory_space<vmem>>)
    %c0_193 = arith.constant 0 : index
    %c0_194 = arith.constant 0 : index
    %c0_195 = arith.constant 0 : index
    %203 = vector.load %arg6[%c0_193, %c0_194, %c0_195] : memref<2x8x128xf32, #tpu.memory_space<vmem>>, vector<1x8x128xf32>
    %204 = vector.shape_cast %203 : vector<1x8x128xf32> to vector<8x128xf32>
    %c0_196 = arith.constant 0 : index
    %c0_197 = arith.constant 0 : index
    %205 = vector.load %arg8[%c0_196, %c0_197] : memref<8x128xf32, #tpu.memory_space<vmem>>, vector<1x128xf32>
    %cst_198 = arith.constant dense<0.000000e+00> : vector<128xf32>
    %206 = vector.multi_reduction <add>, %204, %cst_198 [0] : vector<8x128xf32> to vector<128xf32>
    %207 = vector.shape_cast %206 : vector<128xf32> to vector<1x128xf32>
    %208 = arith.addf %205, %207 : vector<1x128xf32>
    %c0_199 = arith.constant 0 : index
    %c0_200 = arith.constant 0 : index
    %209 = vector.load %arg8[%c0_199, %c0_200] : memref<8x128xf32, #tpu.memory_space<vmem>>, vector<1x128xf32>
    tpu.vector_store %arg8[%c0_199, %c0_200], %208 {strides = array<i32>} : memref<8x128xf32, #tpu.memory_space<vmem>>, vector<1x128xf32>,
    %c2_i32_201 = arith.constant 2 : i32
    %210 = arith.addi %0, %c2_i32_201 : i32
    %211 = arith.index_cast %210 : i32 to index
    %c0_202 = arith.constant 0 : index
    %212 = memref.load %arg1[%211, %c0_202] : memref<8x8xi32, #tpu.memory_space<smem>>
    %c0_i32_203 = arith.constant 0 : i32
    %c31_i32_204 = arith.constant 31 : i32
    %213 = arith.maxsi %c0_i32_203, %212 : i32
    %214 = arith.minsi %c31_i32_204, %213 : i32
    %c0_i32_205 = arith.constant 0 : i32
    %c0_i32_206 = arith.constant 0 : i32
    %c0_i32_207 = arith.constant 0 : i32
    %c0_i32_208 = arith.constant 0 : i32
    %215 = tpu.memref_slice %arg4[%214, %c0_i32_208] : memref<32x128xf32, #tpu.memory_space<any>> -> memref<1x128xf32, #tpu.memory_space<any>>
    %c0_i32_209 = arith.constant 0 : i32
    %c0_i32_210 = arith.constant 0 : i32
    %216 = tpu.memref_slice %arg6[%c0_i32_205, %c0_i32_209, %c0_i32_210] : memref<2x8x128xf32, #tpu.memory_space<vmem>> -> memref<1x1x128xf32, #tpu.memory_space<vmem>>
    %217 = tpu.memref_squeeze %216 : memref<1x1x128xf32, #tpu.memory_space<vmem>> -> memref<1x128xf32, #tpu.memory_space<vmem>>
    %218 = tpu.memref_slice %arg7[%c0_i32_206, %c0_i32_207] : memref<2x8x!tpu.dma_semaphore, #tpu.memory_space<semaphore_mem>> -> memref<1x1x!tpu.dma_semaphore, #tpu.memory_space<semaphore_mem>>
    %219 = tpu.memref_squeeze %218 : memref<1x1x!tpu.dma_semaphore, #tpu.memory_space<semaphore_mem>> -> memref<!tpu.dma_semaphore, #tpu.memory_space<semaphore_mem>>
    tpu.enqueue_dma source(%215 : memref<1x128xf32, #tpu.memory_space<any>>) target(%217 : memref<1x128xf32, #tpu.memory_space<vmem>>) target_semaphore(%219 : memref<!tpu.dma_semaphore, #tpu.memory_space<semaphore_mem>>)
    %c2_i32_211 = arith.constant 2 : i32
    %220 = arith.addi %0, %c2_i32_211 : i32
    %221 = arith.index_cast %220 : i32 to index
    %c1_212 = arith.constant 1 : index
    %222 = memref.load %arg1[%221, %c1_212] : memref<8x8xi32, #tpu.memory_space<smem>>
    %c0_i32_213 = arith.constant 0 : i32
    %c31_i32_214 = arith.constant 31 : i32
    %223 = arith.maxsi %c0_i32_213, %222 : i32
    %224 = arith.minsi %c31_i32_214, %223 : i32
    %c0_i32_215 = arith.constant 0 : i32
    %c0_i32_216 = arith.constant 0 : i32
    %c1_i32_217 = arith.constant 1 : i32
    %c0_i32_218 = arith.constant 0 : i32
    %225 = tpu.memref_slice %arg4[%224, %c0_i32_218] : memref<32x128xf32, #tpu.memory_space<any>> -> memref<1x128xf32, #tpu.memory_space<any>>
    %c1_i32_219 = arith.constant 1 : i32
    %c0_i32_220 = arith.constant 0 : i32
    %226 = tpu.memref_slice %arg6[%c0_i32_215, %c1_i32_219, %c0_i32_220] : memref<2x8x128xf32, #tpu.memory_space<vmem>> -> memref<1x1x128xf32, #tpu.memory_space<vmem>>
    %227 = tpu.memref_squeeze %226 : memref<1x1x128xf32, #tpu.memory_space<vmem>> -> memref<1x128xf32, #tpu.memory_space<vmem>>
    %228 = tpu.memref_slice %arg7[%c0_i32_216, %c1_i32_217] : memref<2x8x!tpu.dma_semaphore, #tpu.memory_space<semaphore_mem>> -> memref<1x1x!tpu.dma_semaphore, #tpu.memory_space<semaphore_mem>>
    %229 = tpu.memref_squeeze %228 : memref<1x1x!tpu.dma_semaphore, #tpu.memory_space<semaphore_mem>> -> memref<!tpu.dma_semaphore, #tpu.memory_space<semaphore_mem>>
    tpu.enqueue_dma source(%225 : memref<1x128xf32, #tpu.memory_space<any>>) target(%227 : memref<1x128xf32, #tpu.memory_space<vmem>>) target_semaphore(%229 : memref<!tpu.dma_semaphore, #tpu.memory_space<semaphore_mem>>)
    %c2_i32_221 = arith.constant 2 : i32
    %230 = arith.addi %0, %c2_i32_221 : i32
    %231 = arith.index_cast %230 : i32 to index
    %c2_222 = arith.constant 2 : index
    %232 = memref.load %arg1[%231, %c2_222] : memref<8x8xi32, #tpu.memory_space<smem>>
    %c0_i32_223 = arith.constant 0 : i32
    %c31_i32_224 = arith.constant 31 : i32
    %233 = arith.maxsi %c0_i32_223, %232 : i32
    %234 = arith.minsi %c31_i32_224, %233 : i32
    %c0_i32_225 = arith.constant 0 : i32
    %c0_i32_226 = arith.constant 0 : i32
    %c2_i32_227 = arith.constant 2 : i32
    %c0_i32_228 = arith.constant 0 : i32
    %235 = tpu.memref_slice %arg4[%234, %c0_i32_228] : memref<32x128xf32, #tpu.memory_space<any>> -> memref<1x128xf32, #tpu.memory_space<any>>
    %c2_i32_229 = arith.constant 2 : i32
    %c0_i32_230 = arith.constant 0 : i32
    %236 = tpu.memref_slice %arg6[%c0_i32_225, %c2_i32_229, %c0_i32_230] : memref<2x8x128xf32, #tpu.memory_space<vmem>> -> memref<1x1x128xf32, #tpu.memory_space<vmem>>
    %237 = tpu.memref_squeeze %236 : memref<1x1x128xf32, #tpu.memory_space<vmem>> -> memref<1x128xf32, #tpu.memory_space<vmem>>
    %238 = tpu.memref_slice %arg7[%c0_i32_226, %c2_i32_227] : memref<2x8x!tpu.dma_semaphore, #tpu.memory_space<semaphore_mem>> -> memref<1x1x!tpu.dma_semaphore, #tpu.memory_space<semaphore_mem>>
    %239 = tpu.memref_squeeze %238 : memref<1x1x!tpu.dma_semaphore, #tpu.memory_space<semaphore_mem>> -> memref<!tpu.dma_semaphore, #tpu.memory_space<semaphore_mem>>
    tpu.enqueue_dma source(%235 : memref<1x128xf32, #tpu.memory_space<any>>) target(%237 : memref<1x128xf32, #tpu.memory_space<vmem>>) target_semaphore(%239 : memref<!tpu.dma_semaphore, #tpu.memory_space<semaphore_mem>>)
    %c2_i32_231 = arith.constant 2 : i32
    %240 = arith.addi %0, %c2_i32_231 : i32
    %241 = arith.index_cast %240 : i32 to index
    %c3_232 = arith.constant 3 : index
    %242 = memref.load %arg1[%241, %c3_232] : memref<8x8xi32, #tpu.memory_space<smem>>
    %c0_i32_233 = arith.constant 0 : i32
    %c31_i32_234 = arith.constant 31 : i32
    %243 = arith.maxsi %c0_i32_233, %242 : i32
    %244 = arith.minsi %c31_i32_234, %243 : i32
    %c0_i32_235 = arith.constant 0 : i32
    %c0_i32_236 = arith.constant 0 : i32
    %c3_i32_237 = arith.constant 3 : i32
    %c0_i32_238 = arith.constant 0 : i32
    %245 = tpu.memref_slice %arg4[%244, %c0_i32_238] : memref<32x128xf32, #tpu.memory_space<any>> -> memref<1x128xf32, #tpu.memory_space<any>>
    %c3_i32_239 = arith.constant 3 : i32
    %c0_i32_240 = arith.constant 0 : i32
    %246 = tpu.memref_slice %arg6[%c0_i32_235, %c3_i32_239, %c0_i32_240] : memref<2x8x128xf32, #tpu.memory_space<vmem>> -> memref<1x1x128xf32, #tpu.memory_space<vmem>>
    %247 = tpu.memref_squeeze %246 : memref<1x1x128xf32, #tpu.memory_space<vmem>> -> memref<1x128xf32, #tpu.memory_space<vmem>>
    %248 = tpu.memref_slice %arg7[%c0_i32_236, %c3_i32_237] : memref<2x8x!tpu.dma_semaphore, #tpu.memory_space<semaphore_mem>> -> memref<1x1x!tpu.dma_semaphore, #tpu.memory_space<semaphore_mem>>
    %249 = tpu.memref_squeeze %248 : memref<1x1x!tpu.dma_semaphore, #tpu.memory_space<semaphore_mem>> -> memref<!tpu.dma_semaphore, #tpu.memory_space<semaphore_mem>>
    tpu.enqueue_dma source(%245 : memref<1x128xf32, #tpu.memory_space<any>>) target(%247 : memref<1x128xf32, #tpu.memory_space<vmem>>) target_semaphore(%249 : memref<!tpu.dma_semaphore, #tpu.memory_space<semaphore_mem>>)
    %c2_i32_241 = arith.constant 2 : i32
    %250 = arith.addi %0, %c2_i32_241 : i32
    %251 = arith.index_cast %250 : i32 to index
    %c4_242 = arith.constant 4 : index
    %252 = memref.load %arg1[%251, %c4_242] : memref<8x8xi32, #tpu.memory_space<smem>>
    %c0_i32_243 = arith.constant 0 : i32
    %c31_i32_244 = arith.constant 31 : i32
    %253 = arith.maxsi %c0_i32_243, %252 : i32
    %254 = arith.minsi %c31_i32_244, %253 : i32
    %c0_i32_245 = arith.constant 0 : i32
    %c0_i32_246 = arith.constant 0 : i32
    %c4_i32_247 = arith.constant 4 : i32
    %c0_i32_248 = arith.constant 0 : i32
    %255 = tpu.memref_slice %arg4[%254, %c0_i32_248] : memref<32x128xf32, #tpu.memory_space<any>> -> memref<1x128xf32, #tpu.memory_space<any>>
    %c4_i32_249 = arith.constant 4 : i32
    %c0_i32_250 = arith.constant 0 : i32
    %256 = tpu.memref_slice %arg6[%c0_i32_245, %c4_i32_249, %c0_i32_250] : memref<2x8x128xf32, #tpu.memory_space<vmem>> -> memref<1x1x128xf32, #tpu.memory_space<vmem>>
    %257 = tpu.memref_squeeze %256 : memref<1x1x128xf32, #tpu.memory_space<vmem>> -> memref<1x128xf32, #tpu.memory_space<vmem>>
    %258 = tpu.memref_slice %arg7[%c0_i32_246, %c4_i32_247] : memref<2x8x!tpu.dma_semaphore, #tpu.memory_space<semaphore_mem>> -> memref<1x1x!tpu.dma_semaphore, #tpu.memory_space<semaphore_mem>>
    %259 = tpu.memref_squeeze %258 : memref<1x1x!tpu.dma_semaphore, #tpu.memory_space<semaphore_mem>> -> memref<!tpu.dma_semaphore, #tpu.memory_space<semaphore_mem>>
    tpu.enqueue_dma source(%255 : memref<1x128xf32, #tpu.memory_space<any>>) target(%257 : memref<1x128xf32, #tpu.memory_space<vmem>>) target_semaphore(%259 : memref<!tpu.dma_semaphore, #tpu.memory_space<semaphore_mem>>)
    %c2_i32_251 = arith.constant 2 : i32
    %260 = arith.addi %0, %c2_i32_251 : i32
    %261 = arith.index_cast %260 : i32 to index
    %c5_252 = arith.constant 5 : index
    %262 = memref.load %arg1[%261, %c5_252] : memref<8x8xi32, #tpu.memory_space<smem>>
    %c0_i32_253 = arith.constant 0 : i32
    %c31_i32_254 = arith.constant 31 : i32
    %263 = arith.maxsi %c0_i32_253, %262 : i32
    %264 = arith.minsi %c31_i32_254, %263 : i32
    %c0_i32_255 = arith.constant 0 : i32
    %c0_i32_256 = arith.constant 0 : i32
    %c5_i32_257 = arith.constant 5 : i32
    %c0_i32_258 = arith.constant 0 : i32
    %265 = tpu.memref_slice %arg4[%264, %c0_i32_258] : memref<32x128xf32, #tpu.memory_space<any>> -> memref<1x128xf32, #tpu.memory_space<any>>
    %c5_i32_259 = arith.constant 5 : i32
    %c0_i32_260 = arith.constant 0 : i32
    %266 = tpu.memref_slice %arg6[%c0_i32_255, %c5_i32_259, %c0_i32_260] : memref<2x8x128xf32, #tpu.memory_space<vmem>> -> memref<1x1x128xf32, #tpu.memory_space<vmem>>
    %267 = tpu.memref_squeeze %266 : memref<1x1x128xf32, #tpu.memory_space<vmem>> -> memref<1x128xf32, #tpu.memory_space<vmem>>
    %268 = tpu.memref_slice %arg7[%c0_i32_256, %c5_i32_257] : memref<2x8x!tpu.dma_semaphore, #tpu.memory_space<semaphore_mem>> -> memref<1x1x!tpu.dma_semaphore, #tpu.memory_space<semaphore_mem>>
    %269 = tpu.memref_squeeze %268 : memref<1x1x!tpu.dma_semaphore, #tpu.memory_space<semaphore_mem>> -> memref<!tpu.dma_semaphore, #tpu.memory_space<semaphore_mem>>
    tpu.enqueue_dma source(%265 : memref<1x128xf32, #tpu.memory_space<any>>) target(%267 : memref<1x128xf32, #tpu.memory_space<vmem>>) target_semaphore(%269 : memref<!tpu.dma_semaphore, #tpu.memory_space<semaphore_mem>>)
    %c2_i32_261 = arith.constant 2 : i32
    %270 = arith.addi %0, %c2_i32_261 : i32
    %271 = arith.index_cast %270 : i32 to index
    %c6_262 = arith.constant 6 : index
    %272 = memref.load %arg1[%271, %c6_262] : memref<8x8xi32, #tpu.memory_space<smem>>
    %c0_i32_263 = arith.constant 0 : i32
    %c31_i32_264 = arith.constant 31 : i32
    %273 = arith.maxsi %c0_i32_263, %272 : i32
    %274 = arith.minsi %c31_i32_264, %273 : i32
    %c0_i32_265 = arith.constant 0 : i32
    %c0_i32_266 = arith.constant 0 : i32
    %c6_i32_267 = arith.constant 6 : i32
    %c0_i32_268 = arith.constant 0 : i32
    %275 = tpu.memref_slice %arg4[%274, %c0_i32_268] : memref<32x128xf32, #tpu.memory_space<any>> -> memref<1x128xf32, #tpu.memory_space<any>>
    %c6_i32_269 = arith.constant 6 : i32
    %c0_i32_270 = arith.constant 0 : i32
    %276 = tpu.memref_slice %arg6[%c0_i32_265, %c6_i32_269, %c0_i32_270] : memref<2x8x128xf32, #tpu.memory_space<vmem>> -> memref<1x1x128xf32, #tpu.memory_space<vmem>>
    %277 = tpu.memref_squeeze %276 : memref<1x1x128xf32, #tpu.memory_space<vmem>> -> memref<1x128xf32, #tpu.memory_space<vmem>>
    %278 = tpu.memref_slice %arg7[%c0_i32_266, %c6_i32_267] : memref<2x8x!tpu.dma_semaphore, #tpu.memory_space<semaphore_mem>> -> memref<1x1x!tpu.dma_semaphore, #tpu.memory_space<semaphore_mem>>
    %279 = tpu.memref_squeeze %278 : memref<1x1x!tpu.dma_semaphore, #tpu.memory_space<semaphore_mem>> -> memref<!tpu.dma_semaphore, #tpu.memory_space<semaphore_mem>>
    tpu.enqueue_dma source(%275 : memref<1x128xf32, #tpu.memory_space<any>>) target(%277 : memref<1x128xf32, #tpu.memory_space<vmem>>) target_semaphore(%279 : memref<!tpu.dma_semaphore, #tpu.memory_space<semaphore_mem>>)
    %c2_i32_271 = arith.constant 2 : i32
    %280 = arith.addi %0, %c2_i32_271 : i32
    %281 = arith.index_cast %280 : i32 to index
    %c7_272 = arith.constant 7 : index
    %282 = memref.load %arg1[%281, %c7_272] : memref<8x8xi32, #tpu.memory_space<smem>>
    %c0_i32_273 = arith.constant 0 : i32
    %c31_i32_274 = arith.constant 31 : i32
    %283 = arith.maxsi %c0_i32_273, %282 : i32
    %284 = arith.minsi %c31_i32_274, %283 : i32
    %c0_i32_275 = arith.constant 0 : i32
    %c0_i32_276 = arith.constant 0 : i32
    %c7_i32_277 = arith.constant 7 : i32
    %c0_i32_278 = arith.constant 0 : i32
    %285 = tpu.memref_slice %arg4[%284, %c0_i32_278] : memref<32x128xf32, #tpu.memory_space<any>> -> memref<1x128xf32, #tpu.memory_space<any>>
    %c7_i32_279 = arith.constant 7 : i32
    %c0_i32_280 = arith.constant 0 : i32
    %286 = tpu.memref_slice %arg6[%c0_i32_275, %c7_i32_279, %c0_i32_280] : memref<2x8x128xf32, #tpu.memory_space<vmem>> -> memref<1x1x128xf32, #tpu.memory_space<vmem>>
    %287 = tpu.memref_squeeze %286 : memref<1x1x128xf32, #tpu.memory_space<vmem>> -> memref<1x128xf32, #tpu.memory_space<vmem>>
    %288 = tpu.memref_slice %arg7[%c0_i32_276, %c7_i32_277] : memref<2x8x!tpu.dma_semaphore, #tpu.memory_space<semaphore_mem>> -> memref<1x1x!tpu.dma_semaphore, #tpu.memory_space<semaphore_mem>>
    %289 = tpu.memref_squeeze %288 : memref<1x1x!tpu.dma_semaphore, #tpu.memory_space<semaphore_mem>> -> memref<!tpu.dma_semaphore, #tpu.memory_space<semaphore_mem>>
    tpu.enqueue_dma source(%285 : memref<1x128xf32, #tpu.memory_space<any>>) target(%287 : memref<1x128xf32, #tpu.memory_space<vmem>>) target_semaphore(%289 : memref<!tpu.dma_semaphore, #tpu.memory_space<semaphore_mem>>)
    %c1_i32_281 = arith.constant 1 : i32
    %c1_i32_282 = arith.constant 1 : i32
    %c0_i32_283 = arith.constant 0 : i32
    %c0_i32_284 = arith.constant 0 : i32
    %290 = tpu.memref_slice %arg4[%87, %c0_i32_284] : memref<32x128xf32, #tpu.memory_space<any>> -> memref<1x128xf32, #tpu.memory_space<any>>
    %c0_i32_285 = arith.constant 0 : i32
    %c0_i32_286 = arith.constant 0 : i32
    %291 = tpu.memref_slice %arg6[%c1_i32_281, %c0_i32_285, %c0_i32_286] : memref<2x8x128xf32, #tpu.memory_space<vmem>> -> memref<1x1x128xf32, #tpu.memory_space<vmem>>
    %292 = tpu.memref_squeeze %291 : memref<1x1x128xf32, #tpu.memory_space<vmem>> -> memref<1x128xf32, #tpu.memory_space<vmem>>
    %293 = tpu.memref_slice %arg7[%c1_i32_282, %c0_i32_283] : memref<2x8x!tpu.dma_semaphore, #tpu.memory_space<semaphore_mem>> -> memref<1x1x!tpu.dma_semaphore, #tpu.memory_space<semaphore_mem>>
    %294 = tpu.memref_squeeze %293 : memref<1x1x!tpu.dma_semaphore, #tpu.memory_space<semaphore_mem>> -> memref<!tpu.dma_semaphore, #tpu.memory_space<semaphore_mem>>
    tpu.wait_dma2 semaphore(%294 : memref<!tpu.dma_semaphore, #tpu.memory_space<semaphore_mem>>) src(%290 : memref<1x128xf32, #tpu.memory_space<any>>) dst(%292 : memref<1x128xf32, #tpu.memory_space<vmem>>)
    %c1_i32_287 = arith.constant 1 : i32
    %c1_i32_288 = arith.constant 1 : i32
    %c1_i32_289 = arith.constant 1 : i32
    %c0_i32_290 = arith.constant 0 : i32
    %295 = tpu.memref_slice %arg4[%97, %c0_i32_290] : memref<32x128xf32, #tpu.memory_space<any>> -> memref<1x128xf32, #tpu.memory_space<any>>
    %c1_i32_291 = arith.constant 1 : i32
    %c0_i32_292 = arith.constant 0 : i32
    %296 = tpu.memref_slice %arg6[%c1_i32_287, %c1_i32_291, %c0_i32_292] : memref<2x8x128xf32, #tpu.memory_space<vmem>> -> memref<1x1x128xf32, #tpu.memory_space<vmem>>
    %297 = tpu.memref_squeeze %296 : memref<1x1x128xf32, #tpu.memory_space<vmem>> -> memref<1x128xf32, #tpu.memory_space<vmem>>
    %298 = tpu.memref_slice %arg7[%c1_i32_288, %c1_i32_289] : memref<2x8x!tpu.dma_semaphore, #tpu.memory_space<semaphore_mem>> -> memref<1x1x!tpu.dma_semaphore, #tpu.memory_space<semaphore_mem>>
    %299 = tpu.memref_squeeze %298 : memref<1x1x!tpu.dma_semaphore, #tpu.memory_space<semaphore_mem>> -> memref<!tpu.dma_semaphore, #tpu.memory_space<semaphore_mem>>
    tpu.wait_dma2 semaphore(%299 : memref<!tpu.dma_semaphore, #tpu.memory_space<semaphore_mem>>) src(%295 : memref<1x128xf32, #tpu.memory_space<any>>) dst(%297 : memref<1x128xf32, #tpu.memory_space<vmem>>)
    %c1_i32_293 = arith.constant 1 : i32
    %c1_i32_294 = arith.constant 1 : i32
    %c2_i32_295 = arith.constant 2 : i32
    %c0_i32_296 = arith.constant 0 : i32
    %300 = tpu.memref_slice %arg4[%107, %c0_i32_296] : memref<32x128xf32, #tpu.memory_space<any>> -> memref<1x128xf32, #tpu.memory_space<any>>
    %c2_i32_297 = arith.constant 2 : i32
    %c0_i32_298 = arith.constant 0 : i32
    %301 = tpu.memref_slice %arg6[%c1_i32_293, %c2_i32_297, %c0_i32_298] : memref<2x8x128xf32, #tpu.memory_space<vmem>> -> memref<1x1x128xf32, #tpu.memory_space<vmem>>
    %302 = tpu.memref_squeeze %301 : memref<1x1x128xf32, #tpu.memory_space<vmem>> -> memref<1x128xf32, #tpu.memory_space<vmem>>
    %303 = tpu.memref_slice %arg7[%c1_i32_294, %c2_i32_295] : memref<2x8x!tpu.dma_semaphore, #tpu.memory_space<semaphore_mem>> -> memref<1x1x!tpu.dma_semaphore, #tpu.memory_space<semaphore_mem>>
    %304 = tpu.memref_squeeze %303 : memref<1x1x!tpu.dma_semaphore, #tpu.memory_space<semaphore_mem>> -> memref<!tpu.dma_semaphore, #tpu.memory_space<semaphore_mem>>
    tpu.wait_dma2 semaphore(%304 : memref<!tpu.dma_semaphore, #tpu.memory_space<semaphore_mem>>) src(%300 : memref<1x128xf32, #tpu.memory_space<any>>) dst(%302 : memref<1x128xf32, #tpu.memory_space<vmem>>)
    %c1_i32_299 = arith.constant 1 : i32
    %c1_i32_300 = arith.constant 1 : i32
    %c3_i32_301 = arith.constant 3 : i32
    %c0_i32_302 = arith.constant 0 : i32
    %305 = tpu.memref_slice %arg4[%117, %c0_i32_302] : memref<32x128xf32, #tpu.memory_space<any>> -> memref<1x128xf32, #tpu.memory_space<any>>
    %c3_i32_303 = arith.constant 3 : i32
    %c0_i32_304 = arith.constant 0 : i32
    %306 = tpu.memref_slice %arg6[%c1_i32_299, %c3_i32_303, %c0_i32_304] : memref<2x8x128xf32, #tpu.memory_space<vmem>> -> memref<1x1x128xf32, #tpu.memory_space<vmem>>
    %307 = tpu.memref_squeeze %306 : memref<1x1x128xf32, #tpu.memory_space<vmem>> -> memref<1x128xf32, #tpu.memory_space<vmem>>
    %308 = tpu.memref_slice %arg7[%c1_i32_300, %c3_i32_301] : memref<2x8x!tpu.dma_semaphore, #tpu.memory_space<semaphore_mem>> -> memref<1x1x!tpu.dma_semaphore, #tpu.memory_space<semaphore_mem>>
    %309 = tpu.memref_squeeze %308 : memref<1x1x!tpu.dma_semaphore, #tpu.memory_space<semaphore_mem>> -> memref<!tpu.dma_semaphore, #tpu.memory_space<semaphore_mem>>
    tpu.wait_dma2 semaphore(%309 : memref<!tpu.dma_semaphore, #tpu.memory_space<semaphore_mem>>) src(%305 : memref<1x128xf32, #tpu.memory_space<any>>) dst(%307 : memref<1x128xf32, #tpu.memory_space<vmem>>)
    %c1_i32_305 = arith.constant 1 : i32
    %c1_i32_306 = arith.constant 1 : i32
    %c4_i32_307 = arith.constant 4 : i32
    %c0_i32_308 = arith.constant 0 : i32
    %310 = tpu.memref_slice %arg4[%127, %c0_i32_308] : memref<32x128xf32, #tpu.memory_space<any>> -> memref<1x128xf32, #tpu.memory_space<any>>
    %c4_i32_309 = arith.constant 4 : i32
    %c0_i32_310 = arith.constant 0 : i32
    %311 = tpu.memref_slice %arg6[%c1_i32_305, %c4_i32_309, %c0_i32_310] : memref<2x8x128xf32, #tpu.memory_space<vmem>> -> memref<1x1x128xf32, #tpu.memory_space<vmem>>
    %312 = tpu.memref_squeeze %311 : memref<1x1x128xf32, #tpu.memory_space<vmem>> -> memref<1x128xf32, #tpu.memory_space<vmem>>
    %313 = tpu.memref_slice %arg7[%c1_i32_306, %c4_i32_307] : memref<2x8x!tpu.dma_semaphore, #tpu.memory_space<semaphore_mem>> -> memref<1x1x!tpu.dma_semaphore, #tpu.memory_space<semaphore_mem>>
    %314 = tpu.memref_squeeze %313 : memref<1x1x!tpu.dma_semaphore, #tpu.memory_space<semaphore_mem>> -> memref<!tpu.dma_semaphore, #tpu.memory_space<semaphore_mem>>
    tpu.wait_dma2 semaphore(%314 : memref<!tpu.dma_semaphore, #tpu.memory_space<semaphore_mem>>) src(%310 : memref<1x128xf32, #tpu.memory_space<any>>) dst(%312 : memref<1x128xf32, #tpu.memory_space<vmem>>)
    %c1_i32_311 = arith.constant 1 : i32
    %c1_i32_312 = arith.constant 1 : i32
    %c5_i32_313 = arith.constant 5 : i32
    %c0_i32_314 = arith.constant 0 : i32
    %315 = tpu.memref_slice %arg4[%137, %c0_i32_314] : memref<32x128xf32, #tpu.memory_space<any>> -> memref<1x128xf32, #tpu.memory_space<any>>
    %c5_i32_315 = arith.constant 5 : i32
    %c0_i32_316 = arith.constant 0 : i32
    %316 = tpu.memref_slice %arg6[%c1_i32_311, %c5_i32_315, %c0_i32_316] : memref<2x8x128xf32, #tpu.memory_space<vmem>> -> memref<1x1x128xf32, #tpu.memory_space<vmem>>
    %317 = tpu.memref_squeeze %316 : memref<1x1x128xf32, #tpu.memory_space<vmem>> -> memref<1x128xf32, #tpu.memory_space<vmem>>
    %318 = tpu.memref_slice %arg7[%c1_i32_312, %c5_i32_313] : memref<2x8x!tpu.dma_semaphore, #tpu.memory_space<semaphore_mem>> -> memref<1x1x!tpu.dma_semaphore, #tpu.memory_space<semaphore_mem>>
    %319 = tpu.memref_squeeze %318 : memref<1x1x!tpu.dma_semaphore, #tpu.memory_space<semaphore_mem>> -> memref<!tpu.dma_semaphore, #tpu.memory_space<semaphore_mem>>
    tpu.wait_dma2 semaphore(%319 : memref<!tpu.dma_semaphore, #tpu.memory_space<semaphore_mem>>) src(%315 : memref<1x128xf32, #tpu.memory_space<any>>) dst(%317 : memref<1x128xf32, #tpu.memory_space<vmem>>)
    %c1_i32_317 = arith.constant 1 : i32
    %c1_i32_318 = arith.constant 1 : i32
    %c6_i32_319 = arith.constant 6 : i32
    %c0_i32_320 = arith.constant 0 : i32
    %320 = tpu.memref_slice %arg4[%147, %c0_i32_320] : memref<32x128xf32, #tpu.memory_space<any>> -> memref<1x128xf32, #tpu.memory_space<any>>
    %c6_i32_321 = arith.constant 6 : i32
    %c0_i32_322 = arith.constant 0 : i32
    %321 = tpu.memref_slice %arg6[%c1_i32_317, %c6_i32_321, %c0_i32_322] : memref<2x8x128xf32, #tpu.memory_space<vmem>> -> memref<1x1x128xf32, #tpu.memory_space<vmem>>
    %322 = tpu.memref_squeeze %321 : memref<1x1x128xf32, #tpu.memory_space<vmem>> -> memref<1x128xf32, #tpu.memory_space<vmem>>
    %323 = tpu.memref_slice %arg7[%c1_i32_318, %c6_i32_319] : memref<2x8x!tpu.dma_semaphore, #tpu.memory_space<semaphore_mem>> -> memref<1x1x!tpu.dma_semaphore, #tpu.memory_space<semaphore_mem>>
    %324 = tpu.memref_squeeze %323 : memref<1x1x!tpu.dma_semaphore, #tpu.memory_space<semaphore_mem>> -> memref<!tpu.dma_semaphore, #tpu.memory_space<semaphore_mem>>
    tpu.wait_dma2 semaphore(%324 : memref<!tpu.dma_semaphore, #tpu.memory_space<semaphore_mem>>) src(%320 : memref<1x128xf32, #tpu.memory_space<any>>) dst(%322 : memref<1x128xf32, #tpu.memory_space<vmem>>)
    %c1_i32_323 = arith.constant 1 : i32
    %c1_i32_324 = arith.constant 1 : i32
    %c7_i32_325 = arith.constant 7 : i32
    %c0_i32_326 = arith.constant 0 : i32
    %325 = tpu.memref_slice %arg4[%157, %c0_i32_326] : memref<32x128xf32, #tpu.memory_space<any>> -> memref<1x128xf32, #tpu.memory_space<any>>
    %c7_i32_327 = arith.constant 7 : i32
    %c0_i32_328 = arith.constant 0 : i32
    %326 = tpu.memref_slice %arg6[%c1_i32_323, %c7_i32_327, %c0_i32_328] : memref<2x8x128xf32, #tpu.memory_space<vmem>> -> memref<1x1x128xf32, #tpu.memory_space<vmem>>
    %327 = tpu.memref_squeeze %326 : memref<1x1x128xf32, #tpu.memory_space<vmem>> -> memref<1x128xf32, #tpu.memory_space<vmem>>
    %328 = tpu.memref_slice %arg7[%c1_i32_324, %c7_i32_325] : memref<2x8x!tpu.dma_semaphore, #tpu.memory_space<semaphore_mem>> -> memref<1x1x!tpu.dma_semaphore, #tpu.memory_space<semaphore_mem>>
    %329 = tpu.memref_squeeze %328 : memref<1x1x!tpu.dma_semaphore, #tpu.memory_space<semaphore_mem>> -> memref<!tpu.dma_semaphore, #tpu.memory_space<semaphore_mem>>
    tpu.wait_dma2 semaphore(%329 : memref<!tpu.dma_semaphore, #tpu.memory_space<semaphore_mem>>) src(%325 : memref<1x128xf32, #tpu.memory_space<any>>) dst(%327 : memref<1x128xf32, #tpu.memory_space<vmem>>)
    %c1_329 = arith.constant 1 : index
    %c0_330 = arith.constant 0 : index
    %c0_331 = arith.constant 0 : index
    %330 = vector.load %arg6[%c1_329, %c0_330, %c0_331] : memref<2x8x128xf32, #tpu.memory_space<vmem>>, vector<1x8x128xf32>
    %331 = vector.shape_cast %330 : vector<1x8x128xf32> to vector<8x128xf32>
    %c1_332 = arith.constant 1 : index
    %c0_333 = arith.constant 0 : index
    %332 = vector.load %arg8[%c1_332, %c0_333] : memref<8x128xf32, #tpu.memory_space<vmem>>, vector<1x128xf32>
    %cst_334 = arith.constant dense<0.000000e+00> : vector<128xf32>
    %333 = vector.multi_reduction <add>, %331, %cst_334 [0] : vector<8x128xf32> to vector<128xf32>
    %334 = vector.shape_cast %333 : vector<128xf32> to vector<1x128xf32>
    %335 = arith.addf %332, %334 : vector<1x128xf32>
    %c1_335 = arith.constant 1 : index
    %c0_336 = arith.constant 0 : index
    %336 = vector.load %arg8[%c1_335, %c0_336] : memref<8x128xf32, #tpu.memory_space<vmem>>, vector<1x128xf32>
    tpu.vector_store %arg8[%c1_335, %c0_336], %335 {strides = array<i32>} : memref<8x128xf32, #tpu.memory_space<vmem>>, vector<1x128xf32>,
    %c3_i32_337 = arith.constant 3 : i32
    %337 = arith.addi %0, %c3_i32_337 : i32
    %338 = arith.index_cast %337 : i32 to index
    %c0_338 = arith.constant 0 : index
    %339 = memref.load %arg1[%338, %c0_338] : memref<8x8xi32, #tpu.memory_space<smem>>
    %c0_i32_339 = arith.constant 0 : i32
    %c31_i32_340 = arith.constant 31 : i32
    %340 = arith.maxsi %c0_i32_339, %339 : i32
    %341 = arith.minsi %c31_i32_340, %340 : i32
    %c1_i32_341 = arith.constant 1 : i32
    %c1_i32_342 = arith.constant 1 : i32
    %c0_i32_343 = arith.constant 0 : i32
    %c0_i32_344 = arith.constant 0 : i32
    %342 = tpu.memref_slice %arg4[%341, %c0_i32_344] : memref<32x128xf32, #tpu.memory_space<any>> -> memref<1x128xf32, #tpu.memory_space<any>>
    %c0_i32_345 = arith.constant 0 : i32
    %c0_i32_346 = arith.constant 0 : i32
    %343 = tpu.memref_slice %arg6[%c1_i32_341, %c0_i32_345, %c0_i32_346] : memref<2x8x128xf32, #tpu.memory_space<vmem>> -> memref<1x1x128xf32, #tpu.memory_space<vmem>>
    %344 = tpu.memref_squeeze %343 : memref<1x1x128xf32, #tpu.memory_space<vmem>> -> memref<1x128xf32, #tpu.memory_space<vmem>>
    %345 = tpu.memref_slice %arg7[%c1_i32_342, %c0_i32_343] : memref<2x8x!tpu.dma_semaphore, #tpu.memory_space<semaphore_mem>> -> memref<1x1x!tpu.dma_semaphore, #tpu.memory_space<semaphore_mem>>
    %346 = tpu.memref_squeeze %345 : memref<1x1x!tpu.dma_semaphore, #tpu.memory_space<semaphore_mem>> -> memref<!tpu.dma_semaphore, #tpu.memory_space<semaphore_mem>>
    tpu.enqueue_dma source(%342 : memref<1x128xf32, #tpu.memory_space<any>>) target(%344 : memref<1x128xf32, #tpu.memory_space<vmem>>) target_semaphore(%346 : memref<!tpu.dma_semaphore, #tpu.memory_space<semaphore_mem>>)
    %c3_i32_347 = arith.constant 3 : i32
    %347 = arith.addi %0, %c3_i32_347 : i32
    %348 = arith.index_cast %347 : i32 to index
    %c1_348 = arith.constant 1 : index
    %349 = memref.load %arg1[%348, %c1_348] : memref<8x8xi32, #tpu.memory_space<smem>>
    %c0_i32_349 = arith.constant 0 : i32
    %c31_i32_350 = arith.constant 31 : i32
    %350 = arith.maxsi %c0_i32_349, %349 : i32
    %351 = arith.minsi %c31_i32_350, %350 : i32
    %c1_i32_351 = arith.constant 1 : i32
    %c1_i32_352 = arith.constant 1 : i32
    %c1_i32_353 = arith.constant 1 : i32
    %c0_i32_354 = arith.constant 0 : i32
    %352 = tpu.memref_slice %arg4[%351, %c0_i32_354] : memref<32x128xf32, #tpu.memory_space<any>> -> memref<1x128xf32, #tpu.memory_space<any>>
    %c1_i32_355 = arith.constant 1 : i32
    %c0_i32_356 = arith.constant 0 : i32
    %353 = tpu.memref_slice %arg6[%c1_i32_351, %c1_i32_355, %c0_i32_356] : memref<2x8x128xf32, #tpu.memory_space<vmem>> -> memref<1x1x128xf32, #tpu.memory_space<vmem>>
    %354 = tpu.memref_squeeze %353 : memref<1x1x128xf32, #tpu.memory_space<vmem>> -> memref<1x128xf32, #tpu.memory_space<vmem>>
    %355 = tpu.memref_slice %arg7[%c1_i32_352, %c1_i32_353] : memref<2x8x!tpu.dma_semaphore, #tpu.memory_space<semaphore_mem>> -> memref<1x1x!tpu.dma_semaphore, #tpu.memory_space<semaphore_mem>>
    %356 = tpu.memref_squeeze %355 : memref<1x1x!tpu.dma_semaphore, #tpu.memory_space<semaphore_mem>> -> memref<!tpu.dma_semaphore, #tpu.memory_space<semaphore_mem>>
    tpu.enqueue_dma source(%352 : memref<1x128xf32, #tpu.memory_space<any>>) target(%354 : memref<1x128xf32, #tpu.memory_space<vmem>>) target_semaphore(%356 : memref<!tpu.dma_semaphore, #tpu.memory_space<semaphore_mem>>)
    %c3_i32_357 = arith.constant 3 : i32
    %357 = arith.addi %0, %c3_i32_357 : i32
    %358 = arith.index_cast %357 : i32 to index
    %c2_358 = arith.constant 2 : index
    %359 = memref.load %arg1[%358, %c2_358] : memref<8x8xi32, #tpu.memory_space<smem>>
    %c0_i32_359 = arith.constant 0 : i32
    %c31_i32_360 = arith.constant 31 : i32
    %360 = arith.maxsi %c0_i32_359, %359 : i32
    %361 = arith.minsi %c31_i32_360, %360 : i32
    %c1_i32_361 = arith.constant 1 : i32
    %c1_i32_362 = arith.constant 1 : i32
    %c2_i32_363 = arith.constant 2 : i32
    %c0_i32_364 = arith.constant 0 : i32
    %362 = tpu.memref_slice %arg4[%361, %c0_i32_364] : memref<32x128xf32, #tpu.memory_space<any>> -> memref<1x128xf32, #tpu.memory_space<any>>
    %c2_i32_365 = arith.constant 2 : i32
    %c0_i32_366 = arith.constant 0 : i32
    %363 = tpu.memref_slice %arg6[%c1_i32_361, %c2_i32_365, %c0_i32_366] : memref<2x8x128xf32, #tpu.memory_space<vmem>> -> memref<1x1x128xf32, #tpu.memory_space<vmem>>
    %364 = tpu.memref_squeeze %363 : memref<1x1x128xf32, #tpu.memory_space<vmem>> -> memref<1x128xf32, #tpu.memory_space<vmem>>
    %365 = tpu.memref_slice %arg7[%c1_i32_362, %c2_i32_363] : memref<2x8x!tpu.dma_semaphore, #tpu.memory_space<semaphore_mem>> -> memref<1x1x!tpu.dma_semaphore, #tpu.memory_space<semaphore_mem>>
    %366 = tpu.memref_squeeze %365 : memref<1x1x!tpu.dma_semaphore, #tpu.memory_space<semaphore_mem>> -> memref<!tpu.dma_semaphore, #tpu.memory_space<semaphore_mem>>
    tpu.enqueue_dma source(%362 : memref<1x128xf32, #tpu.memory_space<any>>) target(%364 : memref<1x128xf32, #tpu.memory_space<vmem>>) target_semaphore(%366 : memref<!tpu.dma_semaphore, #tpu.memory_space<semaphore_mem>>)
    %c3_i32_367 = arith.constant 3 : i32
    %367 = arith.addi %0, %c3_i32_367 : i32
    %368 = arith.index_cast %367 : i32 to index
    %c3_368 = arith.constant 3 : index
    %369 = memref.load %arg1[%368, %c3_368] : memref<8x8xi32, #tpu.memory_space<smem>>
    %c0_i32_369 = arith.constant 0 : i32
    %c31_i32_370 = arith.constant 31 : i32
    %370 = arith.maxsi %c0_i32_369, %369 : i32
    %371 = arith.minsi %c31_i32_370, %370 : i32
    %c1_i32_371 = arith.constant 1 : i32
    %c1_i32_372 = arith.constant 1 : i32
    %c3_i32_373 = arith.constant 3 : i32
    %c0_i32_374 = arith.constant 0 : i32
    %372 = tpu.memref_slice %arg4[%371, %c0_i32_374] : memref<32x128xf32, #tpu.memory_space<any>> -> memref<1x128xf32, #tpu.memory_space<any>>
    %c3_i32_375 = arith.constant 3 : i32
    %c0_i32_376 = arith.constant 0 : i32
    %373 = tpu.memref_slice %arg6[%c1_i32_371, %c3_i32_375, %c0_i32_376] : memref<2x8x128xf32, #tpu.memory_space<vmem>> -> memref<1x1x128xf32, #tpu.memory_space<vmem>>
    %374 = tpu.memref_squeeze %373 : memref<1x1x128xf32, #tpu.memory_space<vmem>> -> memref<1x128xf32, #tpu.memory_space<vmem>>
    %375 = tpu.memref_slice %arg7[%c1_i32_372, %c3_i32_373] : memref<2x8x!tpu.dma_semaphore, #tpu.memory_space<semaphore_mem>> -> memref<1x1x!tpu.dma_semaphore, #tpu.memory_space<semaphore_mem>>
    %376 = tpu.memref_squeeze %375 : memref<1x1x!tpu.dma_semaphore, #tpu.memory_space<semaphore_mem>> -> memref<!tpu.dma_semaphore, #tpu.memory_space<semaphore_mem>>
    tpu.enqueue_dma source(%372 : memref<1x128xf32, #tpu.memory_space<any>>) target(%374 : memref<1x128xf32, #tpu.memory_space<vmem>>) target_semaphore(%376 : memref<!tpu.dma_semaphore, #tpu.memory_space<semaphore_mem>>)
    %c3_i32_377 = arith.constant 3 : i32
    %377 = arith.addi %0, %c3_i32_377 : i32
    %378 = arith.index_cast %377 : i32 to index
    %c4_378 = arith.constant 4 : index
    %379 = memref.load %arg1[%378, %c4_378] : memref<8x8xi32, #tpu.memory_space<smem>>
    %c0_i32_379 = arith.constant 0 : i32
    %c31_i32_380 = arith.constant 31 : i32
    %380 = arith.maxsi %c0_i32_379, %379 : i32
    %381 = arith.minsi %c31_i32_380, %380 : i32
    %c1_i32_381 = arith.constant 1 : i32
    %c1_i32_382 = arith.constant 1 : i32
    %c4_i32_383 = arith.constant 4 : i32
    %c0_i32_384 = arith.constant 0 : i32
    %382 = tpu.memref_slice %arg4[%381, %c0_i32_384] : memref<32x128xf32, #tpu.memory_space<any>> -> memref<1x128xf32, #tpu.memory_space<any>>
    %c4_i32_385 = arith.constant 4 : i32
    %c0_i32_386 = arith.constant 0 : i32
    %383 = tpu.memref_slice %arg6[%c1_i32_381, %c4_i32_385, %c0_i32_386] : memref<2x8x128xf32, #tpu.memory_space<vmem>> -> memref<1x1x128xf32, #tpu.memory_space<vmem>>
    %384 = tpu.memref_squeeze %383 : memref<1x1x128xf32, #tpu.memory_space<vmem>> -> memref<1x128xf32, #tpu.memory_space<vmem>>
    %385 = tpu.memref_slice %arg7[%c1_i32_382, %c4_i32_383] : memref<2x8x!tpu.dma_semaphore, #tpu.memory_space<semaphore_mem>> -> memref<1x1x!tpu.dma_semaphore, #tpu.memory_space<semaphore_mem>>
    %386 = tpu.memref_squeeze %385 : memref<1x1x!tpu.dma_semaphore, #tpu.memory_space<semaphore_mem>> -> memref<!tpu.dma_semaphore, #tpu.memory_space<semaphore_mem>>
    tpu.enqueue_dma source(%382 : memref<1x128xf32, #tpu.memory_space<any>>) target(%384 : memref<1x128xf32, #tpu.memory_space<vmem>>) target_semaphore(%386 : memref<!tpu.dma_semaphore, #tpu.memory_space<semaphore_mem>>)
    %c3_i32_387 = arith.constant 3 : i32
    %387 = arith.addi %0, %c3_i32_387 : i32
    %388 = arith.index_cast %387 : i32 to index
    %c5_388 = arith.constant 5 : index
    %389 = memref.load %arg1[%388, %c5_388] : memref<8x8xi32, #tpu.memory_space<smem>>
    %c0_i32_389 = arith.constant 0 : i32
    %c31_i32_390 = arith.constant 31 : i32
    %390 = arith.maxsi %c0_i32_389, %389 : i32
    %391 = arith.minsi %c31_i32_390, %390 : i32
    %c1_i32_391 = arith.constant 1 : i32
    %c1_i32_392 = arith.constant 1 : i32
    %c5_i32_393 = arith.constant 5 : i32
    %c0_i32_394 = arith.constant 0 : i32
    %392 = tpu.memref_slice %arg4[%391, %c0_i32_394] : memref<32x128xf32, #tpu.memory_space<any>> -> memref<1x128xf32, #tpu.memory_space<any>>
    %c5_i32_395 = arith.constant 5 : i32
    %c0_i32_396 = arith.constant 0 : i32
    %393 = tpu.memref_slice %arg6[%c1_i32_391, %c5_i32_395, %c0_i32_396] : memref<2x8x128xf32, #tpu.memory_space<vmem>> -> memref<1x1x128xf32, #tpu.memory_space<vmem>>
    %394 = tpu.memref_squeeze %393 : memref<1x1x128xf32, #tpu.memory_space<vmem>> -> memref<1x128xf32, #tpu.memory_space<vmem>>
    %395 = tpu.memref_slice %arg7[%c1_i32_392, %c5_i32_393] : memref<2x8x!tpu.dma_semaphore, #tpu.memory_space<semaphore_mem>> -> memref<1x1x!tpu.dma_semaphore, #tpu.memory_space<semaphore_mem>>
    %396 = tpu.memref_squeeze %395 : memref<1x1x!tpu.dma_semaphore, #tpu.memory_space<semaphore_mem>> -> memref<!tpu.dma_semaphore, #tpu.memory_space<semaphore_mem>>
    tpu.enqueue_dma source(%392 : memref<1x128xf32, #tpu.memory_space<any>>) target(%394 : memref<1x128xf32, #tpu.memory_space<vmem>>) target_semaphore(%396 : memref<!tpu.dma_semaphore, #tpu.memory_space<semaphore_mem>>)
    %c3_i32_397 = arith.constant 3 : i32
    %397 = arith.addi %0, %c3_i32_397 : i32
    %398 = arith.index_cast %397 : i32 to index
    %c6_398 = arith.constant 6 : index
    %399 = memref.load %arg1[%398, %c6_398] : memref<8x8xi32, #tpu.memory_space<smem>>
    %c0_i32_399 = arith.constant 0 : i32
    %c31_i32_400 = arith.constant 31 : i32
    %400 = arith.maxsi %c0_i32_399, %399 : i32
    %401 = arith.minsi %c31_i32_400, %400 : i32
    %c1_i32_401 = arith.constant 1 : i32
    %c1_i32_402 = arith.constant 1 : i32
    %c6_i32_403 = arith.constant 6 : i32
    %c0_i32_404 = arith.constant 0 : i32
    %402 = tpu.memref_slice %arg4[%401, %c0_i32_404] : memref<32x128xf32, #tpu.memory_space<any>> -> memref<1x128xf32, #tpu.memory_space<any>>
    %c6_i32_405 = arith.constant 6 : i32
    %c0_i32_406 = arith.constant 0 : i32
    %403 = tpu.memref_slice %arg6[%c1_i32_401, %c6_i32_405, %c0_i32_406] : memref<2x8x128xf32, #tpu.memory_space<vmem>> -> memref<1x1x128xf32, #tpu.memory_space<vmem>>
    %404 = tpu.memref_squeeze %403 : memref<1x1x128xf32, #tpu.memory_space<vmem>> -> memref<1x128xf32, #tpu.memory_space<vmem>>
    %405 = tpu.memref_slice %arg7[%c1_i32_402, %c6_i32_403] : memref<2x8x!tpu.dma_semaphore, #tpu.memory_space<semaphore_mem>> -> memref<1x1x!tpu.dma_semaphore, #tpu.memory_space<semaphore_mem>>
    %406 = tpu.memref_squeeze %405 : memref<1x1x!tpu.dma_semaphore, #tpu.memory_space<semaphore_mem>> -> memref<!tpu.dma_semaphore, #tpu.memory_space<semaphore_mem>>
    tpu.enqueue_dma source(%402 : memref<1x128xf32, #tpu.memory_space<any>>) target(%404 : memref<1x128xf32, #tpu.memory_space<vmem>>) target_semaphore(%406 : memref<!tpu.dma_semaphore, #tpu.memory_space<semaphore_mem>>)
    %c3_i32_407 = arith.constant 3 : i32
    %407 = arith.addi %0, %c3_i32_407 : i32
    %408 = arith.index_cast %407 : i32 to index
    %c7_408 = arith.constant 7 : index
    %409 = memref.load %arg1[%408, %c7_408] : memref<8x8xi32, #tpu.memory_space<smem>>
    %c0_i32_409 = arith.constant 0 : i32
    %c31_i32_410 = arith.constant 31 : i32
    %410 = arith.maxsi %c0_i32_409, %409 : i32
    %411 = arith.minsi %c31_i32_410, %410 : i32
    %c1_i32_411 = arith.constant 1 : i32
    %c1_i32_412 = arith.constant 1 : i32
    %c7_i32_413 = arith.constant 7 : i32
    %c0_i32_414 = arith.constant 0 : i32
    %412 = tpu.memref_slice %arg4[%411, %c0_i32_414] : memref<32x128xf32, #tpu.memory_space<any>> -> memref<1x128xf32, #tpu.memory_space<any>>
    %c7_i32_415 = arith.constant 7 : i32
    %c0_i32_416 = arith.constant 0 : i32
    %413 = tpu.memref_slice %arg6[%c1_i32_411, %c7_i32_415, %c0_i32_416] : memref<2x8x128xf32, #tpu.memory_space<vmem>> -> memref<1x1x128xf32, #tpu.memory_space<vmem>>
    %414 = tpu.memref_squeeze %413 : memref<1x1x128xf32, #tpu.memory_space<vmem>> -> memref<1x128xf32, #tpu.memory_space<vmem>>
    %415 = tpu.memref_slice %arg7[%c1_i32_412, %c7_i32_413] : memref<2x8x!tpu.dma_semaphore, #tpu.memory_space<semaphore_mem>> -> memref<1x1x!tpu.dma_semaphore, #tpu.memory_space<semaphore_mem>>
    %416 = tpu.memref_squeeze %415 : memref<1x1x!tpu.dma_semaphore, #tpu.memory_space<semaphore_mem>> -> memref<!tpu.dma_semaphore, #tpu.memory_space<semaphore_mem>>
    tpu.enqueue_dma source(%412 : memref<1x128xf32, #tpu.memory_space<any>>) target(%414 : memref<1x128xf32, #tpu.memory_space<vmem>>) target_semaphore(%416 : memref<!tpu.dma_semaphore, #tpu.memory_space<semaphore_mem>>)
    %c0_i32_417 = arith.constant 0 : i32
    %c0_i32_418 = arith.constant 0 : i32
    %c0_i32_419 = arith.constant 0 : i32
    %c0_i32_420 = arith.constant 0 : i32
    %417 = tpu.memref_slice %arg4[%214, %c0_i32_420] : memref<32x128xf32, #tpu.memory_space<any>> -> memref<1x128xf32, #tpu.memory_space<any>>
    %c0_i32_421 = arith.constant 0 : i32
    %c0_i32_422 = arith.constant 0 : i32
    %418 = tpu.memref_slice %arg6[%c0_i32_417, %c0_i32_421, %c0_i32_422] : memref<2x8x128xf32, #tpu.memory_space<vmem>> -> memref<1x1x128xf32, #tpu.memory_space<vmem>>
    %419 = tpu.memref_squeeze %418 : memref<1x1x128xf32, #tpu.memory_space<vmem>> -> memref<1x128xf32, #tpu.memory_space<vmem>>
    %420 = tpu.memref_slice %arg7[%c0_i32_418, %c0_i32_419] : memref<2x8x!tpu.dma_semaphore, #tpu.memory_space<semaphore_mem>> -> memref<1x1x!tpu.dma_semaphore, #tpu.memory_space<semaphore_mem>>
    %421 = tpu.memref_squeeze %420 : memref<1x1x!tpu.dma_semaphore, #tpu.memory_space<semaphore_mem>> -> memref<!tpu.dma_semaphore, #tpu.memory_space<semaphore_mem>>
    tpu.wait_dma2 semaphore(%421 : memref<!tpu.dma_semaphore, #tpu.memory_space<semaphore_mem>>) src(%417 : memref<1x128xf32, #tpu.memory_space<any>>) dst(%419 : memref<1x128xf32, #tpu.memory_space<vmem>>)
    %c0_i32_423 = arith.constant 0 : i32
    %c0_i32_424 = arith.constant 0 : i32
    %c1_i32_425 = arith.constant 1 : i32
    %c0_i32_426 = arith.constant 0 : i32
    %422 = tpu.memref_slice %arg4[%224, %c0_i32_426] : memref<32x128xf32, #tpu.memory_space<any>> -> memref<1x128xf32, #tpu.memory_space<any>>
    %c1_i32_427 = arith.constant 1 : i32
    %c0_i32_428 = arith.constant 0 : i32
    %423 = tpu.memref_slice %arg6[%c0_i32_423, %c1_i32_427, %c0_i32_428] : memref<2x8x128xf32, #tpu.memory_space<vmem>> -> memref<1x1x128xf32, #tpu.memory_space<vmem>>
    %424 = tpu.memref_squeeze %423 : memref<1x1x128xf32, #tpu.memory_space<vmem>> -> memref<1x128xf32, #tpu.memory_space<vmem>>
    %425 = tpu.memref_slice %arg7[%c0_i32_424, %c1_i32_425] : memref<2x8x!tpu.dma_semaphore, #tpu.memory_space<semaphore_mem>> -> memref<1x1x!tpu.dma_semaphore, #tpu.memory_space<semaphore_mem>>
    %426 = tpu.memref_squeeze %425 : memref<1x1x!tpu.dma_semaphore, #tpu.memory_space<semaphore_mem>> -> memref<!tpu.dma_semaphore, #tpu.memory_space<semaphore_mem>>
    tpu.wait_dma2 semaphore(%426 : memref<!tpu.dma_semaphore, #tpu.memory_space<semaphore_mem>>) src(%422 : memref<1x128xf32, #tpu.memory_space<any>>) dst(%424 : memref<1x128xf32, #tpu.memory_space<vmem>>)
    %c0_i32_429 = arith.constant 0 : i32
    %c0_i32_430 = arith.constant 0 : i32
    %c2_i32_431 = arith.constant 2 : i32
    %c0_i32_432 = arith.constant 0 : i32
    %427 = tpu.memref_slice %arg4[%234, %c0_i32_432] : memref<32x128xf32, #tpu.memory_space<any>> -> memref<1x128xf32, #tpu.memory_space<any>>
    %c2_i32_433 = arith.constant 2 : i32
    %c0_i32_434 = arith.constant 0 : i32
    %428 = tpu.memref_slice %arg6[%c0_i32_429, %c2_i32_433, %c0_i32_434] : memref<2x8x128xf32, #tpu.memory_space<vmem>> -> memref<1x1x128xf32, #tpu.memory_space<vmem>>
    %429 = tpu.memref_squeeze %428 : memref<1x1x128xf32, #tpu.memory_space<vmem>> -> memref<1x128xf32, #tpu.memory_space<vmem>>
    %430 = tpu.memref_slice %arg7[%c0_i32_430, %c2_i32_431] : memref<2x8x!tpu.dma_semaphore, #tpu.memory_space<semaphore_mem>> -> memref<1x1x!tpu.dma_semaphore, #tpu.memory_space<semaphore_mem>>
    %431 = tpu.memref_squeeze %430 : memref<1x1x!tpu.dma_semaphore, #tpu.memory_space<semaphore_mem>> -> memref<!tpu.dma_semaphore, #tpu.memory_space<semaphore_mem>>
    tpu.wait_dma2 semaphore(%431 : memref<!tpu.dma_semaphore, #tpu.memory_space<semaphore_mem>>) src(%427 : memref<1x128xf32, #tpu.memory_space<any>>) dst(%429 : memref<1x128xf32, #tpu.memory_space<vmem>>)
    %c0_i32_435 = arith.constant 0 : i32
    %c0_i32_436 = arith.constant 0 : i32
    %c3_i32_437 = arith.constant 3 : i32
    %c0_i32_438 = arith.constant 0 : i32
    %432 = tpu.memref_slice %arg4[%244, %c0_i32_438] : memref<32x128xf32, #tpu.memory_space<any>> -> memref<1x128xf32, #tpu.memory_space<any>>
    %c3_i32_439 = arith.constant 3 : i32
    %c0_i32_440 = arith.constant 0 : i32
    %433 = tpu.memref_slice %arg6[%c0_i32_435, %c3_i32_439, %c0_i32_440] : memref<2x8x128xf32, #tpu.memory_space<vmem>> -> memref<1x1x128xf32, #tpu.memory_space<vmem>>
    %434 = tpu.memref_squeeze %433 : memref<1x1x128xf32, #tpu.memory_space<vmem>> -> memref<1x128xf32, #tpu.memory_space<vmem>>
    %435 = tpu.memref_slice %arg7[%c0_i32_436, %c3_i32_437] : memref<2x8x!tpu.dma_semaphore, #tpu.memory_space<semaphore_mem>> -> memref<1x1x!tpu.dma_semaphore, #tpu.memory_space<semaphore_mem>>
    %436 = tpu.memref_squeeze %435 : memref<1x1x!tpu.dma_semaphore, #tpu.memory_space<semaphore_mem>> -> memref<!tpu.dma_semaphore, #tpu.memory_space<semaphore_mem>>
    tpu.wait_dma2 semaphore(%436 : memref<!tpu.dma_semaphore, #tpu.memory_space<semaphore_mem>>) src(%432 : memref<1x128xf32, #tpu.memory_space<any>>) dst(%434 : memref<1x128xf32, #tpu.memory_space<vmem>>)
    %c0_i32_441 = arith.constant 0 : i32
    %c0_i32_442 = arith.constant 0 : i32
    %c4_i32_443 = arith.constant 4 : i32
    %c0_i32_444 = arith.constant 0 : i32
    %437 = tpu.memref_slice %arg4[%254, %c0_i32_444] : memref<32x128xf32, #tpu.memory_space<any>> -> memref<1x128xf32, #tpu.memory_space<any>>
    %c4_i32_445 = arith.constant 4 : i32
    %c0_i32_446 = arith.constant 0 : i32
    %438 = tpu.memref_slice %arg6[%c0_i32_441, %c4_i32_445, %c0_i32_446] : memref<2x8x128xf32, #tpu.memory_space<vmem>> -> memref<1x1x128xf32, #tpu.memory_space<vmem>>
    %439 = tpu.memref_squeeze %438 : memref<1x1x128xf32, #tpu.memory_space<vmem>> -> memref<1x128xf32, #tpu.memory_space<vmem>>
    %440 = tpu.memref_slice %arg7[%c0_i32_442, %c4_i32_443] : memref<2x8x!tpu.dma_semaphore, #tpu.memory_space<semaphore_mem>> -> memref<1x1x!tpu.dma_semaphore, #tpu.memory_space<semaphore_mem>>
    %441 = tpu.memref_squeeze %440 : memref<1x1x!tpu.dma_semaphore, #tpu.memory_space<semaphore_mem>> -> memref<!tpu.dma_semaphore, #tpu.memory_space<semaphore_mem>>
    tpu.wait_dma2 semaphore(%441 : memref<!tpu.dma_semaphore, #tpu.memory_space<semaphore_mem>>) src(%437 : memref<1x128xf32, #tpu.memory_space<any>>) dst(%439 : memref<1x128xf32, #tpu.memory_space<vmem>>)
    %c0_i32_447 = arith.constant 0 : i32
    %c0_i32_448 = arith.constant 0 : i32
    %c5_i32_449 = arith.constant 5 : i32
    %c0_i32_450 = arith.constant 0 : i32
    %442 = tpu.memref_slice %arg4[%264, %c0_i32_450] : memref<32x128xf32, #tpu.memory_space<any>> -> memref<1x128xf32, #tpu.memory_space<any>>
    %c5_i32_451 = arith.constant 5 : i32
    %c0_i32_452 = arith.constant 0 : i32
    %443 = tpu.memref_slice %arg6[%c0_i32_447, %c5_i32_451, %c0_i32_452] : memref<2x8x128xf32, #tpu.memory_space<vmem>> -> memref<1x1x128xf32, #tpu.memory_space<vmem>>
    %444 = tpu.memref_squeeze %443 : memref<1x1x128xf32, #tpu.memory_space<vmem>> -> memref<1x128xf32, #tpu.memory_space<vmem>>
    %445 = tpu.memref_slice %arg7[%c0_i32_448, %c5_i32_449] : memref<2x8x!tpu.dma_semaphore, #tpu.memory_space<semaphore_mem>> -> memref<1x1x!tpu.dma_semaphore, #tpu.memory_space<semaphore_mem>>
    %446 = tpu.memref_squeeze %445 : memref<1x1x!tpu.dma_semaphore, #tpu.memory_space<semaphore_mem>> -> memref<!tpu.dma_semaphore, #tpu.memory_space<semaphore_mem>>
    tpu.wait_dma2 semaphore(%446 : memref<!tpu.dma_semaphore, #tpu.memory_space<semaphore_mem>>) src(%442 : memref<1x128xf32, #tpu.memory_space<any>>) dst(%444 : memref<1x128xf32, #tpu.memory_space<vmem>>)
    %c0_i32_453 = arith.constant 0 : i32
    %c0_i32_454 = arith.constant 0 : i32
    %c6_i32_455 = arith.constant 6 : i32
    %c0_i32_456 = arith.constant 0 : i32
    %447 = tpu.memref_slice %arg4[%274, %c0_i32_456] : memref<32x128xf32, #tpu.memory_space<any>> -> memref<1x128xf32, #tpu.memory_space<any>>
    %c6_i32_457 = arith.constant 6 : i32
    %c0_i32_458 = arith.constant 0 : i32
    %448 = tpu.memref_slice %arg6[%c0_i32_453, %c6_i32_457, %c0_i32_458] : memref<2x8x128xf32, #tpu.memory_space<vmem>> -> memref<1x1x128xf32, #tpu.memory_space<vmem>>
    %449 = tpu.memref_squeeze %448 : memref<1x1x128xf32, #tpu.memory_space<vmem>> -> memref<1x128xf32, #tpu.memory_space<vmem>>
    %450 = tpu.memref_slice %arg7[%c0_i32_454, %c6_i32_455] : memref<2x8x!tpu.dma_semaphore, #tpu.memory_space<semaphore_mem>> -> memref<1x1x!tpu.dma_semaphore, #tpu.memory_space<semaphore_mem>>
    %451 = tpu.memref_squeeze %450 : memref<1x1x!tpu.dma_semaphore, #tpu.memory_space<semaphore_mem>> -> memref<!tpu.dma_semaphore, #tpu.memory_space<semaphore_mem>>
    tpu.wait_dma2 semaphore(%451 : memref<!tpu.dma_semaphore, #tpu.memory_space<semaphore_mem>>) src(%447 : memref<1x128xf32, #tpu.memory_space<any>>) dst(%449 : memref<1x128xf32, #tpu.memory_space<vmem>>)
    %c0_i32_459 = arith.constant 0 : i32
    %c0_i32_460 = arith.constant 0 : i32
    %c7_i32_461 = arith.constant 7 : i32
    %c0_i32_462 = arith.constant 0 : i32
    %452 = tpu.memref_slice %arg4[%284, %c0_i32_462] : memref<32x128xf32, #tpu.memory_space<any>> -> memref<1x128xf32, #tpu.memory_space<any>>
    %c7_i32_463 = arith.constant 7 : i32
    %c0_i32_464 = arith.constant 0 : i32
    %453 = tpu.memref_slice %arg6[%c0_i32_459, %c7_i32_463, %c0_i32_464] : memref<2x8x128xf32, #tpu.memory_space<vmem>> -> memref<1x1x128xf32, #tpu.memory_space<vmem>>
    %454 = tpu.memref_squeeze %453 : memref<1x1x128xf32, #tpu.memory_space<vmem>> -> memref<1x128xf32, #tpu.memory_space<vmem>>
    %455 = tpu.memref_slice %arg7[%c0_i32_460, %c7_i32_461] : memref<2x8x!tpu.dma_semaphore, #tpu.memory_space<semaphore_mem>> -> memref<1x1x!tpu.dma_semaphore, #tpu.memory_space<semaphore_mem>>
    %456 = tpu.memref_squeeze %455 : memref<1x1x!tpu.dma_semaphore, #tpu.memory_space<semaphore_mem>> -> memref<!tpu.dma_semaphore, #tpu.memory_space<semaphore_mem>>
    tpu.wait_dma2 semaphore(%456 : memref<!tpu.dma_semaphore, #tpu.memory_space<semaphore_mem>>) src(%452 : memref<1x128xf32, #tpu.memory_space<any>>) dst(%454 : memref<1x128xf32, #tpu.memory_space<vmem>>)
    %c0_465 = arith.constant 0 : index
    %c0_466 = arith.constant 0 : index
    %c0_467 = arith.constant 0 : index
    %457 = vector.load %arg6[%c0_465, %c0_466, %c0_467] : memref<2x8x128xf32, #tpu.memory_space<vmem>>, vector<1x8x128xf32>
    %458 = vector.shape_cast %457 : vector<1x8x128xf32> to vector<8x128xf32>
    %c2_468 = arith.constant 2 : index
    %c0_469 = arith.constant 0 : index
    %459 = vector.load %arg8[%c2_468, %c0_469] : memref<8x128xf32, #tpu.memory_space<vmem>>, vector<1x128xf32>
    %cst_470 = arith.constant dense<0.000000e+00> : vector<128xf32>
    %460 = vector.multi_reduction <add>, %458, %cst_470 [0] : vector<8x128xf32> to vector<128xf32>
    %461 = vector.shape_cast %460 : vector<128xf32> to vector<1x128xf32>
    %462 = arith.addf %459, %461 : vector<1x128xf32>
    %c2_471 = arith.constant 2 : index
    %c0_472 = arith.constant 0 : index
    %463 = vector.load %arg8[%c2_471, %c0_472] : memref<8x128xf32, #tpu.memory_space<vmem>>, vector<1x128xf32>
    tpu.vector_store %arg8[%c2_471, %c0_472], %462 {strides = array<i32>} : memref<8x128xf32, #tpu.memory_space<vmem>>, vector<1x128xf32>,
    %c4_i32_473 = arith.constant 4 : i32
    %464 = arith.addi %0, %c4_i32_473 : i32
    %465 = arith.index_cast %464 : i32 to index
    %c0_474 = arith.constant 0 : index
    %466 = memref.load %arg1[%465, %c0_474] : memref<8x8xi32, #tpu.memory_space<smem>>
    %c0_i32_475 = arith.constant 0 : i32
    %c31_i32_476 = arith.constant 31 : i32
    %467 = arith.maxsi %c0_i32_475, %466 : i32
    %468 = arith.minsi %c31_i32_476, %467 : i32
    %c0_i32_477 = arith.constant 0 : i32
    %c0_i32_478 = arith.constant 0 : i32
    %c0_i32_479 = arith.constant 0 : i32
    %c0_i32_480 = arith.constant 0 : i32
    %469 = tpu.memref_slice %arg4[%468, %c0_i32_480] : memref<32x128xf32, #tpu.memory_space<any>> -> memref<1x128xf32, #tpu.memory_space<any>>
    %c0_i32_481 = arith.constant 0 : i32
    %c0_i32_482 = arith.constant 0 : i32
    %470 = tpu.memref_slice %arg6[%c0_i32_477, %c0_i32_481, %c0_i32_482] : memref<2x8x128xf32, #tpu.memory_space<vmem>> -> memref<1x1x128xf32, #tpu.memory_space<vmem>>
    %471 = tpu.memref_squeeze %470 : memref<1x1x128xf32, #tpu.memory_space<vmem>> -> memref<1x128xf32, #tpu.memory_space<vmem>>
    %472 = tpu.memref_slice %arg7[%c0_i32_478, %c0_i32_479] : memref<2x8x!tpu.dma_semaphore, #tpu.memory_space<semaphore_mem>> -> memref<1x1x!tpu.dma_semaphore, #tpu.memory_space<semaphore_mem>>
    %473 = tpu.memref_squeeze %472 : memref<1x1x!tpu.dma_semaphore, #tpu.memory_space<semaphore_mem>> -> memref<!tpu.dma_semaphore, #tpu.memory_space<semaphore_mem>>
    tpu.enqueue_dma source(%469 : memref<1x128xf32, #tpu.memory_space<any>>) target(%471 : memref<1x128xf32, #tpu.memory_space<vmem>>) target_semaphore(%473 : memref<!tpu.dma_semaphore, #tpu.memory_space<semaphore_mem>>)
    %c4_i32_483 = arith.constant 4 : i32
    %474 = arith.addi %0, %c4_i32_483 : i32
    %475 = arith.index_cast %474 : i32 to index
    %c1_484 = arith.constant 1 : index
    %476 = memref.load %arg1[%475, %c1_484] : memref<8x8xi32, #tpu.memory_space<smem>>
    %c0_i32_485 = arith.constant 0 : i32
    %c31_i32_486 = arith.constant 31 : i32
    %477 = arith.maxsi %c0_i32_485, %476 : i32
    %478 = arith.minsi %c31_i32_486, %477 : i32
    %c0_i32_487 = arith.constant 0 : i32
    %c0_i32_488 = arith.constant 0 : i32
    %c1_i32_489 = arith.constant 1 : i32
    %c0_i32_490 = arith.constant 0 : i32
    %479 = tpu.memref_slice %arg4[%478, %c0_i32_490] : memref<32x128xf32, #tpu.memory_space<any>> -> memref<1x128xf32, #tpu.memory_space<any>>
    %c1_i32_491 = arith.constant 1 : i32
    %c0_i32_492 = arith.constant 0 : i32
    %480 = tpu.memref_slice %arg6[%c0_i32_487, %c1_i32_491, %c0_i32_492] : memref<2x8x128xf32, #tpu.memory_space<vmem>> -> memref<1x1x128xf32, #tpu.memory_space<vmem>>
    %481 = tpu.memref_squeeze %480 : memref<1x1x128xf32, #tpu.memory_space<vmem>> -> memref<1x128xf32, #tpu.memory_space<vmem>>
    %482 = tpu.memref_slice %arg7[%c0_i32_488, %c1_i32_489] : memref<2x8x!tpu.dma_semaphore, #tpu.memory_space<semaphore_mem>> -> memref<1x1x!tpu.dma_semaphore, #tpu.memory_space<semaphore_mem>>
    %483 = tpu.memref_squeeze %482 : memref<1x1x!tpu.dma_semaphore, #tpu.memory_space<semaphore_mem>> -> memref<!tpu.dma_semaphore, #tpu.memory_space<semaphore_mem>>
    tpu.enqueue_dma source(%479 : memref<1x128xf32, #tpu.memory_space<any>>) target(%481 : memref<1x128xf32, #tpu.memory_space<vmem>>) target_semaphore(%483 : memref<!tpu.dma_semaphore, #tpu.memory_space<semaphore_mem>>)
    %c4_i32_493 = arith.constant 4 : i32
    %484 = arith.addi %0, %c4_i32_493 : i32
    %485 = arith.index_cast %484 : i32 to index
    %c2_494 = arith.constant 2 : index
    %486 = memref.load %arg1[%485, %c2_494] : memref<8x8xi32, #tpu.memory_space<smem>>
    %c0_i32_495 = arith.constant 0 : i32
    %c31_i32_496 = arith.constant 31 : i32
    %487 = arith.maxsi %c0_i32_495, %486 : i32
    %488 = arith.minsi %c31_i32_496, %487 : i32
    %c0_i32_497 = arith.constant 0 : i32
    %c0_i32_498 = arith.constant 0 : i32
    %c2_i32_499 = arith.constant 2 : i32
    %c0_i32_500 = arith.constant 0 : i32
    %489 = tpu.memref_slice %arg4[%488, %c0_i32_500] : memref<32x128xf32, #tpu.memory_space<any>> -> memref<1x128xf32, #tpu.memory_space<any>>
    %c2_i32_501 = arith.constant 2 : i32
    %c0_i32_502 = arith.constant 0 : i32
    %490 = tpu.memref_slice %arg6[%c0_i32_497, %c2_i32_501, %c0_i32_502] : memref<2x8x128xf32, #tpu.memory_space<vmem>> -> memref<1x1x128xf32, #tpu.memory_space<vmem>>
    %491 = tpu.memref_squeeze %490 : memref<1x1x128xf32, #tpu.memory_space<vmem>> -> memref<1x128xf32, #tpu.memory_space<vmem>>
    %492 = tpu.memref_slice %arg7[%c0_i32_498, %c2_i32_499] : memref<2x8x!tpu.dma_semaphore, #tpu.memory_space<semaphore_mem>> -> memref<1x1x!tpu.dma_semaphore, #tpu.memory_space<semaphore_mem>>
    %493 = tpu.memref_squeeze %492 : memref<1x1x!tpu.dma_semaphore, #tpu.memory_space<semaphore_mem>> -> memref<!tpu.dma_semaphore, #tpu.memory_space<semaphore_mem>>
    tpu.enqueue_dma source(%489 : memref<1x128xf32, #tpu.memory_space<any>>) target(%491 : memref<1x128xf32, #tpu.memory_space<vmem>>) target_semaphore(%493 : memref<!tpu.dma_semaphore, #tpu.memory_space<semaphore_mem>>)
    %c4_i32_503 = arith.constant 4 : i32
    %494 = arith.addi %0, %c4_i32_503 : i32
    %495 = arith.index_cast %494 : i32 to index
    %c3_504 = arith.constant 3 : index
    %496 = memref.load %arg1[%495, %c3_504] : memref<8x8xi32, #tpu.memory_space<smem>>
    %c0_i32_505 = arith.constant 0 : i32
    %c31_i32_506 = arith.constant 31 : i32
    %497 = arith.maxsi %c0_i32_505, %496 : i32
    %498 = arith.minsi %c31_i32_506, %497 : i32
    %c0_i32_507 = arith.constant 0 : i32
    %c0_i32_508 = arith.constant 0 : i32
    %c3_i32_509 = arith.constant 3 : i32
    %c0_i32_510 = arith.constant 0 : i32
    %499 = tpu.memref_slice %arg4[%498, %c0_i32_510] : memref<32x128xf32, #tpu.memory_space<any>> -> memref<1x128xf32, #tpu.memory_space<any>>
    %c3_i32_511 = arith.constant 3 : i32
    %c0_i32_512 = arith.constant 0 : i32
    %500 = tpu.memref_slice %arg6[%c0_i32_507, %c3_i32_511, %c0_i32_512] : memref<2x8x128xf32, #tpu.memory_space<vmem>> -> memref<1x1x128xf32, #tpu.memory_space<vmem>>
    %501 = tpu.memref_squeeze %500 : memref<1x1x128xf32, #tpu.memory_space<vmem>> -> memref<1x128xf32, #tpu.memory_space<vmem>>
    %502 = tpu.memref_slice %arg7[%c0_i32_508, %c3_i32_509] : memref<2x8x!tpu.dma_semaphore, #tpu.memory_space<semaphore_mem>> -> memref<1x1x!tpu.dma_semaphore, #tpu.memory_space<semaphore_mem>>
    %503 = tpu.memref_squeeze %502 : memref<1x1x!tpu.dma_semaphore, #tpu.memory_space<semaphore_mem>> -> memref<!tpu.dma_semaphore, #tpu.memory_space<semaphore_mem>>
    tpu.enqueue_dma source(%499 : memref<1x128xf32, #tpu.memory_space<any>>) target(%501 : memref<1x128xf32, #tpu.memory_space<vmem>>) target_semaphore(%503 : memref<!tpu.dma_semaphore, #tpu.memory_space<semaphore_mem>>)
    %c4_i32_513 = arith.constant 4 : i32
    %504 = arith.addi %0, %c4_i32_513 : i32
    %505 = arith.index_cast %504 : i32 to index
    %c4_514 = arith.constant 4 : index
    %506 = memref.load %arg1[%505, %c4_514] : memref<8x8xi32, #tpu.memory_space<smem>>
    %c0_i32_515 = arith.constant 0 : i32
    %c31_i32_516 = arith.constant 31 : i32
    %507 = arith.maxsi %c0_i32_515, %506 : i32
    %508 = arith.minsi %c31_i32_516, %507 : i32
    %c0_i32_517 = arith.constant 0 : i32
    %c0_i32_518 = arith.constant 0 : i32
    %c4_i32_519 = arith.constant 4 : i32
    %c0_i32_520 = arith.constant 0 : i32
    %509 = tpu.memref_slice %arg4[%508, %c0_i32_520] : memref<32x128xf32, #tpu.memory_space<any>> -> memref<1x128xf32, #tpu.memory_space<any>>
    %c4_i32_521 = arith.constant 4 : i32
    %c0_i32_522 = arith.constant 0 : i32
    %510 = tpu.memref_slice %arg6[%c0_i32_517, %c4_i32_521, %c0_i32_522] : memref<2x8x128xf32, #tpu.memory_space<vmem>> -> memref<1x1x128xf32, #tpu.memory_space<vmem>>
    %511 = tpu.memref_squeeze %510 : memref<1x1x128xf32, #tpu.memory_space<vmem>> -> memref<1x128xf32, #tpu.memory_space<vmem>>
    %512 = tpu.memref_slice %arg7[%c0_i32_518, %c4_i32_519] : memref<2x8x!tpu.dma_semaphore, #tpu.memory_space<semaphore_mem>> -> memref<1x1x!tpu.dma_semaphore, #tpu.memory_space<semaphore_mem>>
    %513 = tpu.memref_squeeze %512 : memref<1x1x!tpu.dma_semaphore, #tpu.memory_space<semaphore_mem>> -> memref<!tpu.dma_semaphore, #tpu.memory_space<semaphore_mem>>
    tpu.enqueue_dma source(%509 : memref<1x128xf32, #tpu.memory_space<any>>) target(%511 : memref<1x128xf32, #tpu.memory_space<vmem>>) target_semaphore(%513 : memref<!tpu.dma_semaphore, #tpu.memory_space<semaphore_mem>>)
    %c4_i32_523 = arith.constant 4 : i32
    %514 = arith.addi %0, %c4_i32_523 : i32
    %515 = arith.index_cast %514 : i32 to index
    %c5_524 = arith.constant 5 : index
    %516 = memref.load %arg1[%515, %c5_524] : memref<8x8xi32, #tpu.memory_space<smem>>
    %c0_i32_525 = arith.constant 0 : i32
    %c31_i32_526 = arith.constant 31 : i32
    %517 = arith.maxsi %c0_i32_525, %516 : i32
    %518 = arith.minsi %c31_i32_526, %517 : i32
    %c0_i32_527 = arith.constant 0 : i32
    %c0_i32_528 = arith.constant 0 : i32
    %c5_i32_529 = arith.constant 5 : i32
    %c0_i32_530 = arith.constant 0 : i32
    %519 = tpu.memref_slice %arg4[%518, %c0_i32_530] : memref<32x128xf32, #tpu.memory_space<any>> -> memref<1x128xf32, #tpu.memory_space<any>>
    %c5_i32_531 = arith.constant 5 : i32
    %c0_i32_532 = arith.constant 0 : i32
    %520 = tpu.memref_slice %arg6[%c0_i32_527, %c5_i32_531, %c0_i32_532] : memref<2x8x128xf32, #tpu.memory_space<vmem>> -> memref<1x1x128xf32, #tpu.memory_space<vmem>>
    %521 = tpu.memref_squeeze %520 : memref<1x1x128xf32, #tpu.memory_space<vmem>> -> memref<1x128xf32, #tpu.memory_space<vmem>>
    %522 = tpu.memref_slice %arg7[%c0_i32_528, %c5_i32_529] : memref<2x8x!tpu.dma_semaphore, #tpu.memory_space<semaphore_mem>> -> memref<1x1x!tpu.dma_semaphore, #tpu.memory_space<semaphore_mem>>
    %523 = tpu.memref_squeeze %522 : memref<1x1x!tpu.dma_semaphore, #tpu.memory_space<semaphore_mem>> -> memref<!tpu.dma_semaphore, #tpu.memory_space<semaphore_mem>>
    tpu.enqueue_dma source(%519 : memref<1x128xf32, #tpu.memory_space<any>>) target(%521 : memref<1x128xf32, #tpu.memory_space<vmem>>) target_semaphore(%523 : memref<!tpu.dma_semaphore, #tpu.memory_space<semaphore_mem>>)
    %c4_i32_533 = arith.constant 4 : i32
    %524 = arith.addi %0, %c4_i32_533 : i32
    %525 = arith.index_cast %524 : i32 to index
    %c6_534 = arith.constant 6 : index
    %526 = memref.load %arg1[%525, %c6_534] : memref<8x8xi32, #tpu.memory_space<smem>>
    %c0_i32_535 = arith.constant 0 : i32
    %c31_i32_536 = arith.constant 31 : i32
    %527 = arith.maxsi %c0_i32_535, %526 : i32
    %528 = arith.minsi %c31_i32_536, %527 : i32
    %c0_i32_537 = arith.constant 0 : i32
    %c0_i32_538 = arith.constant 0 : i32
    %c6_i32_539 = arith.constant 6 : i32
    %c0_i32_540 = arith.constant 0 : i32
    %529 = tpu.memref_slice %arg4[%528, %c0_i32_540] : memref<32x128xf32, #tpu.memory_space<any>> -> memref<1x128xf32, #tpu.memory_space<any>>
    %c6_i32_541 = arith.constant 6 : i32
    %c0_i32_542 = arith.constant 0 : i32
    %530 = tpu.memref_slice %arg6[%c0_i32_537, %c6_i32_541, %c0_i32_542] : memref<2x8x128xf32, #tpu.memory_space<vmem>> -> memref<1x1x128xf32, #tpu.memory_space<vmem>>
    %531 = tpu.memref_squeeze %530 : memref<1x1x128xf32, #tpu.memory_space<vmem>> -> memref<1x128xf32, #tpu.memory_space<vmem>>
    %532 = tpu.memref_slice %arg7[%c0_i32_538, %c6_i32_539] : memref<2x8x!tpu.dma_semaphore, #tpu.memory_space<semaphore_mem>> -> memref<1x1x!tpu.dma_semaphore, #tpu.memory_space<semaphore_mem>>
    %533 = tpu.memref_squeeze %532 : memref<1x1x!tpu.dma_semaphore, #tpu.memory_space<semaphore_mem>> -> memref<!tpu.dma_semaphore, #tpu.memory_space<semaphore_mem>>
    tpu.enqueue_dma source(%529 : memref<1x128xf32, #tpu.memory_space<any>>) target(%531 : memref<1x128xf32, #tpu.memory_space<vmem>>) target_semaphore(%533 : memref<!tpu.dma_semaphore, #tpu.memory_space<semaphore_mem>>)
    %c4_i32_543 = arith.constant 4 : i32
    %534 = arith.addi %0, %c4_i32_543 : i32
    %535 = arith.index_cast %534 : i32 to index
    %c7_544 = arith.constant 7 : index
    %536 = memref.load %arg1[%535, %c7_544] : memref<8x8xi32, #tpu.memory_space<smem>>
    %c0_i32_545 = arith.constant 0 : i32
    %c31_i32_546 = arith.constant 31 : i32
    %537 = arith.maxsi %c0_i32_545, %536 : i32
    %538 = arith.minsi %c31_i32_546, %537 : i32
    %c0_i32_547 = arith.constant 0 : i32
    %c0_i32_548 = arith.constant 0 : i32
    %c7_i32_549 = arith.constant 7 : i32
    %c0_i32_550 = arith.constant 0 : i32
    %539 = tpu.memref_slice %arg4[%538, %c0_i32_550] : memref<32x128xf32, #tpu.memory_space<any>> -> memref<1x128xf32, #tpu.memory_space<any>>
    %c7_i32_551 = arith.constant 7 : i32
    %c0_i32_552 = arith.constant 0 : i32
    %540 = tpu.memref_slice %arg6[%c0_i32_547, %c7_i32_551, %c0_i32_552] : memref<2x8x128xf32, #tpu.memory_space<vmem>> -> memref<1x1x128xf32, #tpu.memory_space<vmem>>
    %541 = tpu.memref_squeeze %540 : memref<1x1x128xf32, #tpu.memory_space<vmem>> -> memref<1x128xf32, #tpu.memory_space<vmem>>
    %542 = tpu.memref_slice %arg7[%c0_i32_548, %c7_i32_549] : memref<2x8x!tpu.dma_semaphore, #tpu.memory_space<semaphore_mem>> -> memref<1x1x!tpu.dma_semaphore, #tpu.memory_space<semaphore_mem>>
    %543 = tpu.memref_squeeze %542 : memref<1x1x!tpu.dma_semaphore, #tpu.memory_space<semaphore_mem>> -> memref<!tpu.dma_semaphore, #tpu.memory_space<semaphore_mem>>
    tpu.enqueue_dma source(%539 : memref<1x128xf32, #tpu.memory_space<any>>) target(%541 : memref<1x128xf32, #tpu.memory_space<vmem>>) target_semaphore(%543 : memref<!tpu.dma_semaphore, #tpu.memory_space<semaphore_mem>>)
    %c1_i32_553 = arith.constant 1 : i32
    %c1_i32_554 = arith.constant 1 : i32
    %c0_i32_555 = arith.constant 0 : i32
    %c0_i32_556 = arith.constant 0 : i32
    %544 = tpu.memref_slice %arg4[%341, %c0_i32_556] : memref<32x128xf32, #tpu.memory_space<any>> -> memref<1x128xf32, #tpu.memory_space<any>>
    %c0_i32_557 = arith.constant 0 : i32
    %c0_i32_558 = arith.constant 0 : i32
    %545 = tpu.memref_slice %arg6[%c1_i32_553, %c0_i32_557, %c0_i32_558] : memref<2x8x128xf32, #tpu.memory_space<vmem>> -> memref<1x1x128xf32, #tpu.memory_space<vmem>>
    %546 = tpu.memref_squeeze %545 : memref<1x1x128xf32, #tpu.memory_space<vmem>> -> memref<1x128xf32, #tpu.memory_space<vmem>>
    %547 = tpu.memref_slice %arg7[%c1_i32_554, %c0_i32_555] : memref<2x8x!tpu.dma_semaphore, #tpu.memory_space<semaphore_mem>> -> memref<1x1x!tpu.dma_semaphore, #tpu.memory_space<semaphore_mem>>
    %548 = tpu.memref_squeeze %547 : memref<1x1x!tpu.dma_semaphore, #tpu.memory_space<semaphore_mem>> -> memref<!tpu.dma_semaphore, #tpu.memory_space<semaphore_mem>>
    tpu.wait_dma2 semaphore(%548 : memref<!tpu.dma_semaphore, #tpu.memory_space<semaphore_mem>>) src(%544 : memref<1x128xf32, #tpu.memory_space<any>>) dst(%546 : memref<1x128xf32, #tpu.memory_space<vmem>>)
    %c1_i32_559 = arith.constant 1 : i32
    %c1_i32_560 = arith.constant 1 : i32
    %c1_i32_561 = arith.constant 1 : i32
    %c0_i32_562 = arith.constant 0 : i32
    %549 = tpu.memref_slice %arg4[%351, %c0_i32_562] : memref<32x128xf32, #tpu.memory_space<any>> -> memref<1x128xf32, #tpu.memory_space<any>>
    %c1_i32_563 = arith.constant 1 : i32
    %c0_i32_564 = arith.constant 0 : i32
    %550 = tpu.memref_slice %arg6[%c1_i32_559, %c1_i32_563, %c0_i32_564] : memref<2x8x128xf32, #tpu.memory_space<vmem>> -> memref<1x1x128xf32, #tpu.memory_space<vmem>>
    %551 = tpu.memref_squeeze %550 : memref<1x1x128xf32, #tpu.memory_space<vmem>> -> memref<1x128xf32, #tpu.memory_space<vmem>>
    %552 = tpu.memref_slice %arg7[%c1_i32_560, %c1_i32_561] : memref<2x8x!tpu.dma_semaphore, #tpu.memory_space<semaphore_mem>> -> memref<1x1x!tpu.dma_semaphore, #tpu.memory_space<semaphore_mem>>
    %553 = tpu.memref_squeeze %552 : memref<1x1x!tpu.dma_semaphore, #tpu.memory_space<semaphore_mem>> -> memref<!tpu.dma_semaphore, #tpu.memory_space<semaphore_mem>>
    tpu.wait_dma2 semaphore(%553 : memref<!tpu.dma_semaphore, #tpu.memory_space<semaphore_mem>>) src(%549 : memref<1x128xf32, #tpu.memory_space<any>>) dst(%551 : memref<1x128xf32, #tpu.memory_space<vmem>>)
    %c1_i32_565 = arith.constant 1 : i32
    %c1_i32_566 = arith.constant 1 : i32
    %c2_i32_567 = arith.constant 2 : i32
    %c0_i32_568 = arith.constant 0 : i32
    %554 = tpu.memref_slice %arg4[%361, %c0_i32_568] : memref<32x128xf32, #tpu.memory_space<any>> -> memref<1x128xf32, #tpu.memory_space<any>>
    %c2_i32_569 = arith.constant 2 : i32
    %c0_i32_570 = arith.constant 0 : i32
    %555 = tpu.memref_slice %arg6[%c1_i32_565, %c2_i32_569, %c0_i32_570] : memref<2x8x128xf32, #tpu.memory_space<vmem>> -> memref<1x1x128xf32, #tpu.memory_space<vmem>>
    %556 = tpu.memref_squeeze %555 : memref<1x1x128xf32, #tpu.memory_space<vmem>> -> memref<1x128xf32, #tpu.memory_space<vmem>>
    %557 = tpu.memref_slice %arg7[%c1_i32_566, %c2_i32_567] : memref<2x8x!tpu.dma_semaphore, #tpu.memory_space<semaphore_mem>> -> memref<1x1x!tpu.dma_semaphore, #tpu.memory_space<semaphore_mem>>
    %558 = tpu.memref_squeeze %557 : memref<1x1x!tpu.dma_semaphore, #tpu.memory_space<semaphore_mem>> -> memref<!tpu.dma_semaphore, #tpu.memory_space<semaphore_mem>>
    tpu.wait_dma2 semaphore(%558 : memref<!tpu.dma_semaphore, #tpu.memory_space<semaphore_mem>>) src(%554 : memref<1x128xf32, #tpu.memory_space<any>>) dst(%556 : memref<1x128xf32, #tpu.memory_space<vmem>>)
    %c1_i32_571 = arith.constant 1 : i32
    %c1_i32_572 = arith.constant 1 : i32
    %c3_i32_573 = arith.constant 3 : i32
    %c0_i32_574 = arith.constant 0 : i32
    %559 = tpu.memref_slice %arg4[%371, %c0_i32_574] : memref<32x128xf32, #tpu.memory_space<any>> -> memref<1x128xf32, #tpu.memory_space<any>>
    %c3_i32_575 = arith.constant 3 : i32
    %c0_i32_576 = arith.constant 0 : i32
    %560 = tpu.memref_slice %arg6[%c1_i32_571, %c3_i32_575, %c0_i32_576] : memref<2x8x128xf32, #tpu.memory_space<vmem>> -> memref<1x1x128xf32, #tpu.memory_space<vmem>>
    %561 = tpu.memref_squeeze %560 : memref<1x1x128xf32, #tpu.memory_space<vmem>> -> memref<1x128xf32, #tpu.memory_space<vmem>>
    %562 = tpu.memref_slice %arg7[%c1_i32_572, %c3_i32_573] : memref<2x8x!tpu.dma_semaphore, #tpu.memory_space<semaphore_mem>> -> memref<1x1x!tpu.dma_semaphore, #tpu.memory_space<semaphore_mem>>
    %563 = tpu.memref_squeeze %562 : memref<1x1x!tpu.dma_semaphore, #tpu.memory_space<semaphore_mem>> -> memref<!tpu.dma_semaphore, #tpu.memory_space<semaphore_mem>>
    tpu.wait_dma2 semaphore(%563 : memref<!tpu.dma_semaphore, #tpu.memory_space<semaphore_mem>>) src(%559 : memref<1x128xf32, #tpu.memory_space<any>>) dst(%561 : memref<1x128xf32, #tpu.memory_space<vmem>>)
    %c1_i32_577 = arith.constant 1 : i32
    %c1_i32_578 = arith.constant 1 : i32
    %c4_i32_579 = arith.constant 4 : i32
    %c0_i32_580 = arith.constant 0 : i32
    %564 = tpu.memref_slice %arg4[%381, %c0_i32_580] : memref<32x128xf32, #tpu.memory_space<any>> -> memref<1x128xf32, #tpu.memory_space<any>>
    %c4_i32_581 = arith.constant 4 : i32
    %c0_i32_582 = arith.constant 0 : i32
    %565 = tpu.memref_slice %arg6[%c1_i32_577, %c4_i32_581, %c0_i32_582] : memref<2x8x128xf32, #tpu.memory_space<vmem>> -> memref<1x1x128xf32, #tpu.memory_space<vmem>>
    %566 = tpu.memref_squeeze %565 : memref<1x1x128xf32, #tpu.memory_space<vmem>> -> memref<1x128xf32, #tpu.memory_space<vmem>>
    %567 = tpu.memref_slice %arg7[%c1_i32_578, %c4_i32_579] : memref<2x8x!tpu.dma_semaphore, #tpu.memory_space<semaphore_mem>> -> memref<1x1x!tpu.dma_semaphore, #tpu.memory_space<semaphore_mem>>
    %568 = tpu.memref_squeeze %567 : memref<1x1x!tpu.dma_semaphore, #tpu.memory_space<semaphore_mem>> -> memref<!tpu.dma_semaphore, #tpu.memory_space<semaphore_mem>>
    tpu.wait_dma2 semaphore(%568 : memref<!tpu.dma_semaphore, #tpu.memory_space<semaphore_mem>>) src(%564 : memref<1x128xf32, #tpu.memory_space<any>>) dst(%566 : memref<1x128xf32, #tpu.memory_space<vmem>>)
    %c1_i32_583 = arith.constant 1 : i32
    %c1_i32_584 = arith.constant 1 : i32
    %c5_i32_585 = arith.constant 5 : i32
    %c0_i32_586 = arith.constant 0 : i32
    %569 = tpu.memref_slice %arg4[%391, %c0_i32_586] : memref<32x128xf32, #tpu.memory_space<any>> -> memref<1x128xf32, #tpu.memory_space<any>>
    %c5_i32_587 = arith.constant 5 : i32
    %c0_i32_588 = arith.constant 0 : i32
    %570 = tpu.memref_slice %arg6[%c1_i32_583, %c5_i32_587, %c0_i32_588] : memref<2x8x128xf32, #tpu.memory_space<vmem>> -> memref<1x1x128xf32, #tpu.memory_space<vmem>>
    %571 = tpu.memref_squeeze %570 : memref<1x1x128xf32, #tpu.memory_space<vmem>> -> memref<1x128xf32, #tpu.memory_space<vmem>>
    %572 = tpu.memref_slice %arg7[%c1_i32_584, %c5_i32_585] : memref<2x8x!tpu.dma_semaphore, #tpu.memory_space<semaphore_mem>> -> memref<1x1x!tpu.dma_semaphore, #tpu.memory_space<semaphore_mem>>
    %573 = tpu.memref_squeeze %572 : memref<1x1x!tpu.dma_semaphore, #tpu.memory_space<semaphore_mem>> -> memref<!tpu.dma_semaphore, #tpu.memory_space<semaphore_mem>>
    tpu.wait_dma2 semaphore(%573 : memref<!tpu.dma_semaphore, #tpu.memory_space<semaphore_mem>>) src(%569 : memref<1x128xf32, #tpu.memory_space<any>>) dst(%571 : memref<1x128xf32, #tpu.memory_space<vmem>>)
    %c1_i32_589 = arith.constant 1 : i32
    %c1_i32_590 = arith.constant 1 : i32
    %c6_i32_591 = arith.constant 6 : i32
    %c0_i32_592 = arith.constant 0 : i32
    %574 = tpu.memref_slice %arg4[%401, %c0_i32_592] : memref<32x128xf32, #tpu.memory_space<any>> -> memref<1x128xf32, #tpu.memory_space<any>>
    %c6_i32_593 = arith.constant 6 : i32
    %c0_i32_594 = arith.constant 0 : i32
    %575 = tpu.memref_slice %arg6[%c1_i32_589, %c6_i32_593, %c0_i32_594] : memref<2x8x128xf32, #tpu.memory_space<vmem>> -> memref<1x1x128xf32, #tpu.memory_space<vmem>>
    %576 = tpu.memref_squeeze %575 : memref<1x1x128xf32, #tpu.memory_space<vmem>> -> memref<1x128xf32, #tpu.memory_space<vmem>>
    %577 = tpu.memref_slice %arg7[%c1_i32_590, %c6_i32_591] : memref<2x8x!tpu.dma_semaphore, #tpu.memory_space<semaphore_mem>> -> memref<1x1x!tpu.dma_semaphore, #tpu.memory_space<semaphore_mem>>
    %578 = tpu.memref_squeeze %577 : memref<1x1x!tpu.dma_semaphore, #tpu.memory_space<semaphore_mem>> -> memref<!tpu.dma_semaphore, #tpu.memory_space<semaphore_mem>>
    tpu.wait_dma2 semaphore(%578 : memref<!tpu.dma_semaphore, #tpu.memory_space<semaphore_mem>>) src(%574 : memref<1x128xf32, #tpu.memory_space<any>>) dst(%576 : memref<1x128xf32, #tpu.memory_space<vmem>>)
    %c1_i32_595 = arith.constant 1 : i32
    %c1_i32_596 = arith.constant 1 : i32
    %c7_i32_597 = arith.constant 7 : i32
    %c0_i32_598 = arith.constant 0 : i32
    %579 = tpu.memref_slice %arg4[%411, %c0_i32_598] : memref<32x128xf32, #tpu.memory_space<any>> -> memref<1x128xf32, #tpu.memory_space<any>>
    %c7_i32_599 = arith.constant 7 : i32
    %c0_i32_600 = arith.constant 0 : i32
    %580 = tpu.memref_slice %arg6[%c1_i32_595, %c7_i32_599, %c0_i32_600] : memref<2x8x128xf32, #tpu.memory_space<vmem>> -> memref<1x1x128xf32, #tpu.memory_space<vmem>>
    %581 = tpu.memref_squeeze %580 : memref<1x1x128xf32, #tpu.memory_space<vmem>> -> memref<1x128xf32, #tpu.memory_space<vmem>>
    %582 = tpu.memref_slice %arg7[%c1_i32_596, %c7_i32_597] : memref<2x8x!tpu.dma_semaphore, #tpu.memory_space<semaphore_mem>> -> memref<1x1x!tpu.dma_semaphore, #tpu.memory_space<semaphore_mem>>
    %583 = tpu.memref_squeeze %582 : memref<1x1x!tpu.dma_semaphore, #tpu.memory_space<semaphore_mem>> -> memref<!tpu.dma_semaphore, #tpu.memory_space<semaphore_mem>>
    tpu.wait_dma2 semaphore(%583 : memref<!tpu.dma_semaphore, #tpu.memory_space<semaphore_mem>>) src(%579 : memref<1x128xf32, #tpu.memory_space<any>>) dst(%581 : memref<1x128xf32, #tpu.memory_space<vmem>>)
    %c1_601 = arith.constant 1 : index
    %c0_602 = arith.constant 0 : index
    %c0_603 = arith.constant 0 : index
    %584 = vector.load %arg6[%c1_601, %c0_602, %c0_603] : memref<2x8x128xf32, #tpu.memory_space<vmem>>, vector<1x8x128xf32>
    %585 = vector.shape_cast %584 : vector<1x8x128xf32> to vector<8x128xf32>
    %c3_604 = arith.constant 3 : index
    %c0_605 = arith.constant 0 : index
    %586 = vector.load %arg8[%c3_604, %c0_605] : memref<8x128xf32, #tpu.memory_space<vmem>>, vector<1x128xf32>
    %cst_606 = arith.constant dense<0.000000e+00> : vector<128xf32>
    %587 = vector.multi_reduction <add>, %585, %cst_606 [0] : vector<8x128xf32> to vector<128xf32>
    %588 = vector.shape_cast %587 : vector<128xf32> to vector<1x128xf32>
    %589 = arith.addf %586, %588 : vector<1x128xf32>
    %c3_607 = arith.constant 3 : index
    %c0_608 = arith.constant 0 : index
    %590 = vector.load %arg8[%c3_607, %c0_608] : memref<8x128xf32, #tpu.memory_space<vmem>>, vector<1x128xf32>
    tpu.vector_store %arg8[%c3_607, %c0_608], %589 {strides = array<i32>} : memref<8x128xf32, #tpu.memory_space<vmem>>, vector<1x128xf32>,
    %c5_i32_609 = arith.constant 5 : i32
    %591 = arith.addi %0, %c5_i32_609 : i32
    %592 = arith.index_cast %591 : i32 to index
    %c0_610 = arith.constant 0 : index
    %593 = memref.load %arg1[%592, %c0_610] : memref<8x8xi32, #tpu.memory_space<smem>>
    %c0_i32_611 = arith.constant 0 : i32
    %c31_i32_612 = arith.constant 31 : i32
    %594 = arith.maxsi %c0_i32_611, %593 : i32
    %595 = arith.minsi %c31_i32_612, %594 : i32
    %c1_i32_613 = arith.constant 1 : i32
    %c1_i32_614 = arith.constant 1 : i32
    %c0_i32_615 = arith.constant 0 : i32
    %c0_i32_616 = arith.constant 0 : i32
    %596 = tpu.memref_slice %arg4[%595, %c0_i32_616] : memref<32x128xf32, #tpu.memory_space<any>> -> memref<1x128xf32, #tpu.memory_space<any>>
    %c0_i32_617 = arith.constant 0 : i32
    %c0_i32_618 = arith.constant 0 : i32
    %597 = tpu.memref_slice %arg6[%c1_i32_613, %c0_i32_617, %c0_i32_618] : memref<2x8x128xf32, #tpu.memory_space<vmem>> -> memref<1x1x128xf32, #tpu.memory_space<vmem>>
    %598 = tpu.memref_squeeze %597 : memref<1x1x128xf32, #tpu.memory_space<vmem>> -> memref<1x128xf32, #tpu.memory_space<vmem>>
    %599 = tpu.memref_slice %arg7[%c1_i32_614, %c0_i32_615] : memref<2x8x!tpu.dma_semaphore, #tpu.memory_space<semaphore_mem>> -> memref<1x1x!tpu.dma_semaphore, #tpu.memory_space<semaphore_mem>>
    %600 = tpu.memref_squeeze %599 : memref<1x1x!tpu.dma_semaphore, #tpu.memory_space<semaphore_mem>> -> memref<!tpu.dma_semaphore, #tpu.memory_space<semaphore_mem>>
    tpu.enqueue_dma source(%596 : memref<1x128xf32, #tpu.memory_space<any>>) target(%598 : memref<1x128xf32, #tpu.memory_space<vmem>>) target_semaphore(%600 : memref<!tpu.dma_semaphore, #tpu.memory_space<semaphore_mem>>)
    %c5_i32_619 = arith.constant 5 : i32
    %601 = arith.addi %0, %c5_i32_619 : i32
    %602 = arith.index_cast %601 : i32 to index
    %c1_620 = arith.constant 1 : index
    %603 = memref.load %arg1[%602, %c1_620] : memref<8x8xi32, #tpu.memory_space<smem>>
    %c0_i32_621 = arith.constant 0 : i32
    %c31_i32_622 = arith.constant 31 : i32
    %604 = arith.maxsi %c0_i32_621, %603 : i32
    %605 = arith.minsi %c31_i32_622, %604 : i32
    %c1_i32_623 = arith.constant 1 : i32
    %c1_i32_624 = arith.constant 1 : i32
    %c1_i32_625 = arith.constant 1 : i32
    %c0_i32_626 = arith.constant 0 : i32
    %606 = tpu.memref_slice %arg4[%605, %c0_i32_626] : memref<32x128xf32, #tpu.memory_space<any>> -> memref<1x128xf32, #tpu.memory_space<any>>
    %c1_i32_627 = arith.constant 1 : i32
    %c0_i32_628 = arith.constant 0 : i32
    %607 = tpu.memref_slice %arg6[%c1_i32_623, %c1_i32_627, %c0_i32_628] : memref<2x8x128xf32, #tpu.memory_space<vmem>> -> memref<1x1x128xf32, #tpu.memory_space<vmem>>
    %608 = tpu.memref_squeeze %607 : memref<1x1x128xf32, #tpu.memory_space<vmem>> -> memref<1x128xf32, #tpu.memory_space<vmem>>
    %609 = tpu.memref_slice %arg7[%c1_i32_624, %c1_i32_625] : memref<2x8x!tpu.dma_semaphore, #tpu.memory_space<semaphore_mem>> -> memref<1x1x!tpu.dma_semaphore, #tpu.memory_space<semaphore_mem>>
    %610 = tpu.memref_squeeze %609 : memref<1x1x!tpu.dma_semaphore, #tpu.memory_space<semaphore_mem>> -> memref<!tpu.dma_semaphore, #tpu.memory_space<semaphore_mem>>
    tpu.enqueue_dma source(%606 : memref<1x128xf32, #tpu.memory_space<any>>) target(%608 : memref<1x128xf32, #tpu.memory_space<vmem>>) target_semaphore(%610 : memref<!tpu.dma_semaphore, #tpu.memory_space<semaphore_mem>>)
    %c5_i32_629 = arith.constant 5 : i32
    %611 = arith.addi %0, %c5_i32_629 : i32
    %612 = arith.index_cast %611 : i32 to index
    %c2_630 = arith.constant 2 : index
    %613 = memref.load %arg1[%612, %c2_630] : memref<8x8xi32, #tpu.memory_space<smem>>
    %c0_i32_631 = arith.constant 0 : i32
    %c31_i32_632 = arith.constant 31 : i32
    %614 = arith.maxsi %c0_i32_631, %613 : i32
    %615 = arith.minsi %c31_i32_632, %614 : i32
    %c1_i32_633 = arith.constant 1 : i32
    %c1_i32_634 = arith.constant 1 : i32
    %c2_i32_635 = arith.constant 2 : i32
    %c0_i32_636 = arith.constant 0 : i32
    %616 = tpu.memref_slice %arg4[%615, %c0_i32_636] : memref<32x128xf32, #tpu.memory_space<any>> -> memref<1x128xf32, #tpu.memory_space<any>>
    %c2_i32_637 = arith.constant 2 : i32
    %c0_i32_638 = arith.constant 0 : i32
    %617 = tpu.memref_slice %arg6[%c1_i32_633, %c2_i32_637, %c0_i32_638] : memref<2x8x128xf32, #tpu.memory_space<vmem>> -> memref<1x1x128xf32, #tpu.memory_space<vmem>>
    %618 = tpu.memref_squeeze %617 : memref<1x1x128xf32, #tpu.memory_space<vmem>> -> memref<1x128xf32, #tpu.memory_space<vmem>>
    %619 = tpu.memref_slice %arg7[%c1_i32_634, %c2_i32_635] : memref<2x8x!tpu.dma_semaphore, #tpu.memory_space<semaphore_mem>> -> memref<1x1x!tpu.dma_semaphore, #tpu.memory_space<semaphore_mem>>
    %620 = tpu.memref_squeeze %619 : memref<1x1x!tpu.dma_semaphore, #tpu.memory_space<semaphore_mem>> -> memref<!tpu.dma_semaphore, #tpu.memory_space<semaphore_mem>>
    tpu.enqueue_dma source(%616 : memref<1x128xf32, #tpu.memory_space<any>>) target(%618 : memref<1x128xf32, #tpu.memory_space<vmem>>) target_semaphore(%620 : memref<!tpu.dma_semaphore, #tpu.memory_space<semaphore_mem>>)
    %c5_i32_639 = arith.constant 5 : i32
    %621 = arith.addi %0, %c5_i32_639 : i32
    %622 = arith.index_cast %621 : i32 to index
    %c3_640 = arith.constant 3 : index
    %623 = memref.load %arg1[%622, %c3_640] : memref<8x8xi32, #tpu.memory_space<smem>>
    %c0_i32_641 = arith.constant 0 : i32
    %c31_i32_642 = arith.constant 31 : i32
    %624 = arith.maxsi %c0_i32_641, %623 : i32
    %625 = arith.minsi %c31_i32_642, %624 : i32
    %c1_i32_643 = arith.constant 1 : i32
    %c1_i32_644 = arith.constant 1 : i32
    %c3_i32_645 = arith.constant 3 : i32
    %c0_i32_646 = arith.constant 0 : i32
    %626 = tpu.memref_slice %arg4[%625, %c0_i32_646] : memref<32x128xf32, #tpu.memory_space<any>> -> memref<1x128xf32, #tpu.memory_space<any>>
    %c3_i32_647 = arith.constant 3 : i32
    %c0_i32_648 = arith.constant 0 : i32
    %627 = tpu.memref_slice %arg6[%c1_i32_643, %c3_i32_647, %c0_i32_648] : memref<2x8x128xf32, #tpu.memory_space<vmem>> -> memref<1x1x128xf32, #tpu.memory_space<vmem>>
    %628 = tpu.memref_squeeze %627 : memref<1x1x128xf32, #tpu.memory_space<vmem>> -> memref<1x128xf32, #tpu.memory_space<vmem>>
    %629 = tpu.memref_slice %arg7[%c1_i32_644, %c3_i32_645] : memref<2x8x!tpu.dma_semaphore, #tpu.memory_space<semaphore_mem>> -> memref<1x1x!tpu.dma_semaphore, #tpu.memory_space<semaphore_mem>>
    %630 = tpu.memref_squeeze %629 : memref<1x1x!tpu.dma_semaphore, #tpu.memory_space<semaphore_mem>> -> memref<!tpu.dma_semaphore, #tpu.memory_space<semaphore_mem>>
    tpu.enqueue_dma source(%626 : memref<1x128xf32, #tpu.memory_space<any>>) target(%628 : memref<1x128xf32, #tpu.memory_space<vmem>>) target_semaphore(%630 : memref<!tpu.dma_semaphore, #tpu.memory_space<semaphore_mem>>)
    %c5_i32_649 = arith.constant 5 : i32
    %631 = arith.addi %0, %c5_i32_649 : i32
    %632 = arith.index_cast %631 : i32 to index
    %c4_650 = arith.constant 4 : index
    %633 = memref.load %arg1[%632, %c4_650] : memref<8x8xi32, #tpu.memory_space<smem>>
    %c0_i32_651 = arith.constant 0 : i32
    %c31_i32_652 = arith.constant 31 : i32
    %634 = arith.maxsi %c0_i32_651, %633 : i32
    %635 = arith.minsi %c31_i32_652, %634 : i32
    %c1_i32_653 = arith.constant 1 : i32
    %c1_i32_654 = arith.constant 1 : i32
    %c4_i32_655 = arith.constant 4 : i32
    %c0_i32_656 = arith.constant 0 : i32
    %636 = tpu.memref_slice %arg4[%635, %c0_i32_656] : memref<32x128xf32, #tpu.memory_space<any>> -> memref<1x128xf32, #tpu.memory_space<any>>
    %c4_i32_657 = arith.constant 4 : i32
    %c0_i32_658 = arith.constant 0 : i32
    %637 = tpu.memref_slice %arg6[%c1_i32_653, %c4_i32_657, %c0_i32_658] : memref<2x8x128xf32, #tpu.memory_space<vmem>> -> memref<1x1x128xf32, #tpu.memory_space<vmem>>
    %638 = tpu.memref_squeeze %637 : memref<1x1x128xf32, #tpu.memory_space<vmem>> -> memref<1x128xf32, #tpu.memory_space<vmem>>
    %639 = tpu.memref_slice %arg7[%c1_i32_654, %c4_i32_655] : memref<2x8x!tpu.dma_semaphore, #tpu.memory_space<semaphore_mem>> -> memref<1x1x!tpu.dma_semaphore, #tpu.memory_space<semaphore_mem>>
    %640 = tpu.memref_squeeze %639 : memref<1x1x!tpu.dma_semaphore, #tpu.memory_space<semaphore_mem>> -> memref<!tpu.dma_semaphore, #tpu.memory_space<semaphore_mem>>
    tpu.enqueue_dma source(%636 : memref<1x128xf32, #tpu.memory_space<any>>) target(%638 : memref<1x128xf32, #tpu.memory_space<vmem>>) target_semaphore(%640 : memref<!tpu.dma_semaphore, #tpu.memory_space<semaphore_mem>>)
    %c5_i32_659 = arith.constant 5 : i32
    %641 = arith.addi %0, %c5_i32_659 : i32
    %642 = arith.index_cast %641 : i32 to index
    %c5_660 = arith.constant 5 : index
    %643 = memref.load %arg1[%642, %c5_660] : memref<8x8xi32, #tpu.memory_space<smem>>
    %c0_i32_661 = arith.constant 0 : i32
    %c31_i32_662 = arith.constant 31 : i32
    %644 = arith.maxsi %c0_i32_661, %643 : i32
    %645 = arith.minsi %c31_i32_662, %644 : i32
    %c1_i32_663 = arith.constant 1 : i32
    %c1_i32_664 = arith.constant 1 : i32
    %c5_i32_665 = arith.constant 5 : i32
    %c0_i32_666 = arith.constant 0 : i32
    %646 = tpu.memref_slice %arg4[%645, %c0_i32_666] : memref<32x128xf32, #tpu.memory_space<any>> -> memref<1x128xf32, #tpu.memory_space<any>>
    %c5_i32_667 = arith.constant 5 : i32
    %c0_i32_668 = arith.constant 0 : i32
    %647 = tpu.memref_slice %arg6[%c1_i32_663, %c5_i32_667, %c0_i32_668] : memref<2x8x128xf32, #tpu.memory_space<vmem>> -> memref<1x1x128xf32, #tpu.memory_space<vmem>>
    %648 = tpu.memref_squeeze %647 : memref<1x1x128xf32, #tpu.memory_space<vmem>> -> memref<1x128xf32, #tpu.memory_space<vmem>>
    %649 = tpu.memref_slice %arg7[%c1_i32_664, %c5_i32_665] : memref<2x8x!tpu.dma_semaphore, #tpu.memory_space<semaphore_mem>> -> memref<1x1x!tpu.dma_semaphore, #tpu.memory_space<semaphore_mem>>
    %650 = tpu.memref_squeeze %649 : memref<1x1x!tpu.dma_semaphore, #tpu.memory_space<semaphore_mem>> -> memref<!tpu.dma_semaphore, #tpu.memory_space<semaphore_mem>>
    tpu.enqueue_dma source(%646 : memref<1x128xf32, #tpu.memory_space<any>>) target(%648 : memref<1x128xf32, #tpu.memory_space<vmem>>) target_semaphore(%650 : memref<!tpu.dma_semaphore, #tpu.memory_space<semaphore_mem>>)
    %c5_i32_669 = arith.constant 5 : i32
    %651 = arith.addi %0, %c5_i32_669 : i32
    %652 = arith.index_cast %651 : i32 to index
    %c6_670 = arith.constant 6 : index
    %653 = memref.load %arg1[%652, %c6_670] : memref<8x8xi32, #tpu.memory_space<smem>>
    %c0_i32_671 = arith.constant 0 : i32
    %c31_i32_672 = arith.constant 31 : i32
    %654 = arith.maxsi %c0_i32_671, %653 : i32
    %655 = arith.minsi %c31_i32_672, %654 : i32
    %c1_i32_673 = arith.constant 1 : i32
    %c1_i32_674 = arith.constant 1 : i32
    %c6_i32_675 = arith.constant 6 : i32
    %c0_i32_676 = arith.constant 0 : i32
    %656 = tpu.memref_slice %arg4[%655, %c0_i32_676] : memref<32x128xf32, #tpu.memory_space<any>> -> memref<1x128xf32, #tpu.memory_space<any>>
    %c6_i32_677 = arith.constant 6 : i32
    %c0_i32_678 = arith.constant 0 : i32
    %657 = tpu.memref_slice %arg6[%c1_i32_673, %c6_i32_677, %c0_i32_678] : memref<2x8x128xf32, #tpu.memory_space<vmem>> -> memref<1x1x128xf32, #tpu.memory_space<vmem>>
    %658 = tpu.memref_squeeze %657 : memref<1x1x128xf32, #tpu.memory_space<vmem>> -> memref<1x128xf32, #tpu.memory_space<vmem>>
    %659 = tpu.memref_slice %arg7[%c1_i32_674, %c6_i32_675] : memref<2x8x!tpu.dma_semaphore, #tpu.memory_space<semaphore_mem>> -> memref<1x1x!tpu.dma_semaphore, #tpu.memory_space<semaphore_mem>>
    %660 = tpu.memref_squeeze %659 : memref<1x1x!tpu.dma_semaphore, #tpu.memory_space<semaphore_mem>> -> memref<!tpu.dma_semaphore, #tpu.memory_space<semaphore_mem>>
    tpu.enqueue_dma source(%656 : memref<1x128xf32, #tpu.memory_space<any>>) target(%658 : memref<1x128xf32, #tpu.memory_space<vmem>>) target_semaphore(%660 : memref<!tpu.dma_semaphore, #tpu.memory_space<semaphore_mem>>)
    %c5_i32_679 = arith.constant 5 : i32
    %661 = arith.addi %0, %c5_i32_679 : i32
    %662 = arith.index_cast %661 : i32 to index
    %c7_680 = arith.constant 7 : index
    %663 = memref.load %arg1[%662, %c7_680] : memref<8x8xi32, #tpu.memory_space<smem>>
    %c0_i32_681 = arith.constant 0 : i32
    %c31_i32_682 = arith.constant 31 : i32
    %664 = arith.maxsi %c0_i32_681, %663 : i32
    %665 = arith.minsi %c31_i32_682, %664 : i32
    %c1_i32_683 = arith.constant 1 : i32
    %c1_i32_684 = arith.constant 1 : i32
    %c7_i32_685 = arith.constant 7 : i32
    %c0_i32_686 = arith.constant 0 : i32
    %666 = tpu.memref_slice %arg4[%665, %c0_i32_686] : memref<32x128xf32, #tpu.memory_space<any>> -> memref<1x128xf32, #tpu.memory_space<any>>
    %c7_i32_687 = arith.constant 7 : i32
    %c0_i32_688 = arith.constant 0 : i32
    %667 = tpu.memref_slice %arg6[%c1_i32_683, %c7_i32_687, %c0_i32_688] : memref<2x8x128xf32, #tpu.memory_space<vmem>> -> memref<1x1x128xf32, #tpu.memory_space<vmem>>
    %668 = tpu.memref_squeeze %667 : memref<1x1x128xf32, #tpu.memory_space<vmem>> -> memref<1x128xf32, #tpu.memory_space<vmem>>
    %669 = tpu.memref_slice %arg7[%c1_i32_684, %c7_i32_685] : memref<2x8x!tpu.dma_semaphore, #tpu.memory_space<semaphore_mem>> -> memref<1x1x!tpu.dma_semaphore, #tpu.memory_space<semaphore_mem>>
    %670 = tpu.memref_squeeze %669 : memref<1x1x!tpu.dma_semaphore, #tpu.memory_space<semaphore_mem>> -> memref<!tpu.dma_semaphore, #tpu.memory_space<semaphore_mem>>
    tpu.enqueue_dma source(%666 : memref<1x128xf32, #tpu.memory_space<any>>) target(%668 : memref<1x128xf32, #tpu.memory_space<vmem>>) target_semaphore(%670 : memref<!tpu.dma_semaphore, #tpu.memory_space<semaphore_mem>>)
    %c0_i32_689 = arith.constant 0 : i32
    %c0_i32_690 = arith.constant 0 : i32
    %c0_i32_691 = arith.constant 0 : i32
    %c0_i32_692 = arith.constant 0 : i32
    %671 = tpu.memref_slice %arg4[%468, %c0_i32_692] : memref<32x128xf32, #tpu.memory_space<any>> -> memref<1x128xf32, #tpu.memory_space<any>>
    %c0_i32_693 = arith.constant 0 : i32
    %c0_i32_694 = arith.constant 0 : i32
    %672 = tpu.memref_slice %arg6[%c0_i32_689, %c0_i32_693, %c0_i32_694] : memref<2x8x128xf32, #tpu.memory_space<vmem>> -> memref<1x1x128xf32, #tpu.memory_space<vmem>>
    %673 = tpu.memref_squeeze %672 : memref<1x1x128xf32, #tpu.memory_space<vmem>> -> memref<1x128xf32, #tpu.memory_space<vmem>>
    %674 = tpu.memref_slice %arg7[%c0_i32_690, %c0_i32_691] : memref<2x8x!tpu.dma_semaphore, #tpu.memory_space<semaphore_mem>> -> memref<1x1x!tpu.dma_semaphore, #tpu.memory_space<semaphore_mem>>
    %675 = tpu.memref_squeeze %674 : memref<1x1x!tpu.dma_semaphore, #tpu.memory_space<semaphore_mem>> -> memref<!tpu.dma_semaphore, #tpu.memory_space<semaphore_mem>>
    tpu.wait_dma2 semaphore(%675 : memref<!tpu.dma_semaphore, #tpu.memory_space<semaphore_mem>>) src(%671 : memref<1x128xf32, #tpu.memory_space<any>>) dst(%673 : memref<1x128xf32, #tpu.memory_space<vmem>>)
    %c0_i32_695 = arith.constant 0 : i32
    %c0_i32_696 = arith.constant 0 : i32
    %c1_i32_697 = arith.constant 1 : i32
    %c0_i32_698 = arith.constant 0 : i32
    %676 = tpu.memref_slice %arg4[%478, %c0_i32_698] : memref<32x128xf32, #tpu.memory_space<any>> -> memref<1x128xf32, #tpu.memory_space<any>>
    %c1_i32_699 = arith.constant 1 : i32
    %c0_i32_700 = arith.constant 0 : i32
    %677 = tpu.memref_slice %arg6[%c0_i32_695, %c1_i32_699, %c0_i32_700] : memref<2x8x128xf32, #tpu.memory_space<vmem>> -> memref<1x1x128xf32, #tpu.memory_space<vmem>>
    %678 = tpu.memref_squeeze %677 : memref<1x1x128xf32, #tpu.memory_space<vmem>> -> memref<1x128xf32, #tpu.memory_space<vmem>>
    %679 = tpu.memref_slice %arg7[%c0_i32_696, %c1_i32_697] : memref<2x8x!tpu.dma_semaphore, #tpu.memory_space<semaphore_mem>> -> memref<1x1x!tpu.dma_semaphore, #tpu.memory_space<semaphore_mem>>
    %680 = tpu.memref_squeeze %679 : memref<1x1x!tpu.dma_semaphore, #tpu.memory_space<semaphore_mem>> -> memref<!tpu.dma_semaphore, #tpu.memory_space<semaphore_mem>>
    tpu.wait_dma2 semaphore(%680 : memref<!tpu.dma_semaphore, #tpu.memory_space<semaphore_mem>>) src(%676 : memref<1x128xf32, #tpu.memory_space<any>>) dst(%678 : memref<1x128xf32, #tpu.memory_space<vmem>>)
    %c0_i32_701 = arith.constant 0 : i32
    %c0_i32_702 = arith.constant 0 : i32
    %c2_i32_703 = arith.constant 2 : i32
    %c0_i32_704 = arith.constant 0 : i32
    %681 = tpu.memref_slice %arg4[%488, %c0_i32_704] : memref<32x128xf32, #tpu.memory_space<any>> -> memref<1x128xf32, #tpu.memory_space<any>>
    %c2_i32_705 = arith.constant 2 : i32
    %c0_i32_706 = arith.constant 0 : i32
    %682 = tpu.memref_slice %arg6[%c0_i32_701, %c2_i32_705, %c0_i32_706] : memref<2x8x128xf32, #tpu.memory_space<vmem>> -> memref<1x1x128xf32, #tpu.memory_space<vmem>>
    %683 = tpu.memref_squeeze %682 : memref<1x1x128xf32, #tpu.memory_space<vmem>> -> memref<1x128xf32, #tpu.memory_space<vmem>>
    %684 = tpu.memref_slice %arg7[%c0_i32_702, %c2_i32_703] : memref<2x8x!tpu.dma_semaphore, #tpu.memory_space<semaphore_mem>> -> memref<1x1x!tpu.dma_semaphore, #tpu.memory_space<semaphore_mem>>
    %685 = tpu.memref_squeeze %684 : memref<1x1x!tpu.dma_semaphore, #tpu.memory_space<semaphore_mem>> -> memref<!tpu.dma_semaphore, #tpu.memory_space<semaphore_mem>>
    tpu.wait_dma2 semaphore(%685 : memref<!tpu.dma_semaphore, #tpu.memory_space<semaphore_mem>>) src(%681 : memref<1x128xf32, #tpu.memory_space<any>>) dst(%683 : memref<1x128xf32, #tpu.memory_space<vmem>>)
    %c0_i32_707 = arith.constant 0 : i32
    %c0_i32_708 = arith.constant 0 : i32
    %c3_i32_709 = arith.constant 3 : i32
    %c0_i32_710 = arith.constant 0 : i32
    %686 = tpu.memref_slice %arg4[%498, %c0_i32_710] : memref<32x128xf32, #tpu.memory_space<any>> -> memref<1x128xf32, #tpu.memory_space<any>>
    %c3_i32_711 = arith.constant 3 : i32
    %c0_i32_712 = arith.constant 0 : i32
    %687 = tpu.memref_slice %arg6[%c0_i32_707, %c3_i32_711, %c0_i32_712] : memref<2x8x128xf32, #tpu.memory_space<vmem>> -> memref<1x1x128xf32, #tpu.memory_space<vmem>>
    %688 = tpu.memref_squeeze %687 : memref<1x1x128xf32, #tpu.memory_space<vmem>> -> memref<1x128xf32, #tpu.memory_space<vmem>>
    %689 = tpu.memref_slice %arg7[%c0_i32_708, %c3_i32_709] : memref<2x8x!tpu.dma_semaphore, #tpu.memory_space<semaphore_mem>> -> memref<1x1x!tpu.dma_semaphore, #tpu.memory_space<semaphore_mem>>
    %690 = tpu.memref_squeeze %689 : memref<1x1x!tpu.dma_semaphore, #tpu.memory_space<semaphore_mem>> -> memref<!tpu.dma_semaphore, #tpu.memory_space<semaphore_mem>>
    tpu.wait_dma2 semaphore(%690 : memref<!tpu.dma_semaphore, #tpu.memory_space<semaphore_mem>>) src(%686 : memref<1x128xf32, #tpu.memory_space<any>>) dst(%688 : memref<1x128xf32, #tpu.memory_space<vmem>>)
    %c0_i32_713 = arith.constant 0 : i32
    %c0_i32_714 = arith.constant 0 : i32
    %c4_i32_715 = arith.constant 4 : i32
    %c0_i32_716 = arith.constant 0 : i32
    %691 = tpu.memref_slice %arg4[%508, %c0_i32_716] : memref<32x128xf32, #tpu.memory_space<any>> -> memref<1x128xf32, #tpu.memory_space<any>>
    %c4_i32_717 = arith.constant 4 : i32
    %c0_i32_718 = arith.constant 0 : i32
    %692 = tpu.memref_slice %arg6[%c0_i32_713, %c4_i32_717, %c0_i32_718] : memref<2x8x128xf32, #tpu.memory_space<vmem>> -> memref<1x1x128xf32, #tpu.memory_space<vmem>>
    %693 = tpu.memref_squeeze %692 : memref<1x1x128xf32, #tpu.memory_space<vmem>> -> memref<1x128xf32, #tpu.memory_space<vmem>>
    %694 = tpu.memref_slice %arg7[%c0_i32_714, %c4_i32_715] : memref<2x8x!tpu.dma_semaphore, #tpu.memory_space<semaphore_mem>> -> memref<1x1x!tpu.dma_semaphore, #tpu.memory_space<semaphore_mem>>
    %695 = tpu.memref_squeeze %694 : memref<1x1x!tpu.dma_semaphore, #tpu.memory_space<semaphore_mem>> -> memref<!tpu.dma_semaphore, #tpu.memory_space<semaphore_mem>>
    tpu.wait_dma2 semaphore(%695 : memref<!tpu.dma_semaphore, #tpu.memory_space<semaphore_mem>>) src(%691 : memref<1x128xf32, #tpu.memory_space<any>>) dst(%693 : memref<1x128xf32, #tpu.memory_space<vmem>>)
    %c0_i32_719 = arith.constant 0 : i32
    %c0_i32_720 = arith.constant 0 : i32
    %c5_i32_721 = arith.constant 5 : i32
    %c0_i32_722 = arith.constant 0 : i32
    %696 = tpu.memref_slice %arg4[%518, %c0_i32_722] : memref<32x128xf32, #tpu.memory_space<any>> -> memref<1x128xf32, #tpu.memory_space<any>>
    %c5_i32_723 = arith.constant 5 : i32
    %c0_i32_724 = arith.constant 0 : i32
    %697 = tpu.memref_slice %arg6[%c0_i32_719, %c5_i32_723, %c0_i32_724] : memref<2x8x128xf32, #tpu.memory_space<vmem>> -> memref<1x1x128xf32, #tpu.memory_space<vmem>>
    %698 = tpu.memref_squeeze %697 : memref<1x1x128xf32, #tpu.memory_space<vmem>> -> memref<1x128xf32, #tpu.memory_space<vmem>>
    %699 = tpu.memref_slice %arg7[%c0_i32_720, %c5_i32_721] : memref<2x8x!tpu.dma_semaphore, #tpu.memory_space<semaphore_mem>> -> memref<1x1x!tpu.dma_semaphore, #tpu.memory_space<semaphore_mem>>
    %700 = tpu.memref_squeeze %699 : memref<1x1x!tpu.dma_semaphore, #tpu.memory_space<semaphore_mem>> -> memref<!tpu.dma_semaphore, #tpu.memory_space<semaphore_mem>>
    tpu.wait_dma2 semaphore(%700 : memref<!tpu.dma_semaphore, #tpu.memory_space<semaphore_mem>>) src(%696 : memref<1x128xf32, #tpu.memory_space<any>>) dst(%698 : memref<1x128xf32, #tpu.memory_space<vmem>>)
    %c0_i32_725 = arith.constant 0 : i32
    %c0_i32_726 = arith.constant 0 : i32
    %c6_i32_727 = arith.constant 6 : i32
    %c0_i32_728 = arith.constant 0 : i32
    %701 = tpu.memref_slice %arg4[%528, %c0_i32_728] : memref<32x128xf32, #tpu.memory_space<any>> -> memref<1x128xf32, #tpu.memory_space<any>>
    %c6_i32_729 = arith.constant 6 : i32
    %c0_i32_730 = arith.constant 0 : i32
    %702 = tpu.memref_slice %arg6[%c0_i32_725, %c6_i32_729, %c0_i32_730] : memref<2x8x128xf32, #tpu.memory_space<vmem>> -> memref<1x1x128xf32, #tpu.memory_space<vmem>>
    %703 = tpu.memref_squeeze %702 : memref<1x1x128xf32, #tpu.memory_space<vmem>> -> memref<1x128xf32, #tpu.memory_space<vmem>>
    %704 = tpu.memref_slice %arg7[%c0_i32_726, %c6_i32_727] : memref<2x8x!tpu.dma_semaphore, #tpu.memory_space<semaphore_mem>> -> memref<1x1x!tpu.dma_semaphore, #tpu.memory_space<semaphore_mem>>
    %705 = tpu.memref_squeeze %704 : memref<1x1x!tpu.dma_semaphore, #tpu.memory_space<semaphore_mem>> -> memref<!tpu.dma_semaphore, #tpu.memory_space<semaphore_mem>>
    tpu.wait_dma2 semaphore(%705 : memref<!tpu.dma_semaphore, #tpu.memory_space<semaphore_mem>>) src(%701 : memref<1x128xf32, #tpu.memory_space<any>>) dst(%703 : memref<1x128xf32, #tpu.memory_space<vmem>>)
    %c0_i32_731 = arith.constant 0 : i32
    %c0_i32_732 = arith.constant 0 : i32
    %c7_i32_733 = arith.constant 7 : i32
    %c0_i32_734 = arith.constant 0 : i32
    %706 = tpu.memref_slice %arg4[%538, %c0_i32_734] : memref<32x128xf32, #tpu.memory_space<any>> -> memref<1x128xf32, #tpu.memory_space<any>>
    %c7_i32_735 = arith.constant 7 : i32
    %c0_i32_736 = arith.constant 0 : i32
    %707 = tpu.memref_slice %arg6[%c0_i32_731, %c7_i32_735, %c0_i32_736] : memref<2x8x128xf32, #tpu.memory_space<vmem>> -> memref<1x1x128xf32, #tpu.memory_space<vmem>>
    %708 = tpu.memref_squeeze %707 : memref<1x1x128xf32, #tpu.memory_space<vmem>> -> memref<1x128xf32, #tpu.memory_space<vmem>>
    %709 = tpu.memref_slice %arg7[%c0_i32_732, %c7_i32_733] : memref<2x8x!tpu.dma_semaphore, #tpu.memory_space<semaphore_mem>> -> memref<1x1x!tpu.dma_semaphore, #tpu.memory_space<semaphore_mem>>
    %710 = tpu.memref_squeeze %709 : memref<1x1x!tpu.dma_semaphore, #tpu.memory_space<semaphore_mem>> -> memref<!tpu.dma_semaphore, #tpu.memory_space<semaphore_mem>>
    tpu.wait_dma2 semaphore(%710 : memref<!tpu.dma_semaphore, #tpu.memory_space<semaphore_mem>>) src(%706 : memref<1x128xf32, #tpu.memory_space<any>>) dst(%708 : memref<1x128xf32, #tpu.memory_space<vmem>>)
    %c0_737 = arith.constant 0 : index
    %c0_738 = arith.constant 0 : index
    %c0_739 = arith.constant 0 : index
    %711 = vector.load %arg6[%c0_737, %c0_738, %c0_739] : memref<2x8x128xf32, #tpu.memory_space<vmem>>, vector<1x8x128xf32>
    %712 = vector.shape_cast %711 : vector<1x8x128xf32> to vector<8x128xf32>
    %c4_740 = arith.constant 4 : index
    %c0_741 = arith.constant 0 : index
    %713 = vector.load %arg8[%c4_740, %c0_741] : memref<8x128xf32, #tpu.memory_space<vmem>>, vector<1x128xf32>
    %cst_742 = arith.constant dense<0.000000e+00> : vector<128xf32>
    %714 = vector.multi_reduction <add>, %712, %cst_742 [0] : vector<8x128xf32> to vector<128xf32>
    %715 = vector.shape_cast %714 : vector<128xf32> to vector<1x128xf32>
    %716 = arith.addf %713, %715 : vector<1x128xf32>
    %c4_743 = arith.constant 4 : index
    %c0_744 = arith.constant 0 : index
    %717 = vector.load %arg8[%c4_743, %c0_744] : memref<8x128xf32, #tpu.memory_space<vmem>>, vector<1x128xf32>
    tpu.vector_store %arg8[%c4_743, %c0_744], %716 {strides = array<i32>} : memref<8x128xf32, #tpu.memory_space<vmem>>, vector<1x128xf32>,
    %c6_i32_745 = arith.constant 6 : i32
    %718 = arith.addi %0, %c6_i32_745 : i32
    %719 = arith.index_cast %718 : i32 to index
    %c0_746 = arith.constant 0 : index
    %720 = memref.load %arg1[%719, %c0_746] : memref<8x8xi32, #tpu.memory_space<smem>>
    %c0_i32_747 = arith.constant 0 : i32
    %c31_i32_748 = arith.constant 31 : i32
    %721 = arith.maxsi %c0_i32_747, %720 : i32
    %722 = arith.minsi %c31_i32_748, %721 : i32
    %c0_i32_749 = arith.constant 0 : i32
    %c0_i32_750 = arith.constant 0 : i32
    %c0_i32_751 = arith.constant 0 : i32
    %c0_i32_752 = arith.constant 0 : i32
    %723 = tpu.memref_slice %arg4[%722, %c0_i32_752] : memref<32x128xf32, #tpu.memory_space<any>> -> memref<1x128xf32, #tpu.memory_space<any>>
    %c0_i32_753 = arith.constant 0 : i32
    %c0_i32_754 = arith.constant 0 : i32
    %724 = tpu.memref_slice %arg6[%c0_i32_749, %c0_i32_753, %c0_i32_754] : memref<2x8x128xf32, #tpu.memory_space<vmem>> -> memref<1x1x128xf32, #tpu.memory_space<vmem>>
    %725 = tpu.memref_squeeze %724 : memref<1x1x128xf32, #tpu.memory_space<vmem>> -> memref<1x128xf32, #tpu.memory_space<vmem>>
    %726 = tpu.memref_slice %arg7[%c0_i32_750, %c0_i32_751] : memref<2x8x!tpu.dma_semaphore, #tpu.memory_space<semaphore_mem>> -> memref<1x1x!tpu.dma_semaphore, #tpu.memory_space<semaphore_mem>>
    %727 = tpu.memref_squeeze %726 : memref<1x1x!tpu.dma_semaphore, #tpu.memory_space<semaphore_mem>> -> memref<!tpu.dma_semaphore, #tpu.memory_space<semaphore_mem>>
    tpu.enqueue_dma source(%723 : memref<1x128xf32, #tpu.memory_space<any>>) target(%725 : memref<1x128xf32, #tpu.memory_space<vmem>>) target_semaphore(%727 : memref<!tpu.dma_semaphore, #tpu.memory_space<semaphore_mem>>)
    %c6_i32_755 = arith.constant 6 : i32
    %728 = arith.addi %0, %c6_i32_755 : i32
    %729 = arith.index_cast %728 : i32 to index
    %c1_756 = arith.constant 1 : index
    %730 = memref.load %arg1[%729, %c1_756] : memref<8x8xi32, #tpu.memory_space<smem>>
    %c0_i32_757 = arith.constant 0 : i32
    %c31_i32_758 = arith.constant 31 : i32
    %731 = arith.maxsi %c0_i32_757, %730 : i32
    %732 = arith.minsi %c31_i32_758, %731 : i32
    %c0_i32_759 = arith.constant 0 : i32
    %c0_i32_760 = arith.constant 0 : i32
    %c1_i32_761 = arith.constant 1 : i32
    %c0_i32_762 = arith.constant 0 : i32
    %733 = tpu.memref_slice %arg4[%732, %c0_i32_762] : memref<32x128xf32, #tpu.memory_space<any>> -> memref<1x128xf32, #tpu.memory_space<any>>
    %c1_i32_763 = arith.constant 1 : i32
    %c0_i32_764 = arith.constant 0 : i32
    %734 = tpu.memref_slice %arg6[%c0_i32_759, %c1_i32_763, %c0_i32_764] : memref<2x8x128xf32, #tpu.memory_space<vmem>> -> memref<1x1x128xf32, #tpu.memory_space<vmem>>
    %735 = tpu.memref_squeeze %734 : memref<1x1x128xf32, #tpu.memory_space<vmem>> -> memref<1x128xf32, #tpu.memory_space<vmem>>
    %736 = tpu.memref_slice %arg7[%c0_i32_760, %c1_i32_761] : memref<2x8x!tpu.dma_semaphore, #tpu.memory_space<semaphore_mem>> -> memref<1x1x!tpu.dma_semaphore, #tpu.memory_space<semaphore_mem>>
    %737 = tpu.memref_squeeze %736 : memref<1x1x!tpu.dma_semaphore, #tpu.memory_space<semaphore_mem>> -> memref<!tpu.dma_semaphore, #tpu.memory_space<semaphore_mem>>
    tpu.enqueue_dma source(%733 : memref<1x128xf32, #tpu.memory_space<any>>) target(%735 : memref<1x128xf32, #tpu.memory_space<vmem>>) target_semaphore(%737 : memref<!tpu.dma_semaphore, #tpu.memory_space<semaphore_mem>>)
    %c6_i32_765 = arith.constant 6 : i32
    %738 = arith.addi %0, %c6_i32_765 : i32
    %739 = arith.index_cast %738 : i32 to index
    %c2_766 = arith.constant 2 : index
    %740 = memref.load %arg1[%739, %c2_766] : memref<8x8xi32, #tpu.memory_space<smem>>
    %c0_i32_767 = arith.constant 0 : i32
    %c31_i32_768 = arith.constant 31 : i32
    %741 = arith.maxsi %c0_i32_767, %740 : i32
    %742 = arith.minsi %c31_i32_768, %741 : i32
    %c0_i32_769 = arith.constant 0 : i32
    %c0_i32_770 = arith.constant 0 : i32
    %c2_i32_771 = arith.constant 2 : i32
    %c0_i32_772 = arith.constant 0 : i32
    %743 = tpu.memref_slice %arg4[%742, %c0_i32_772] : memref<32x128xf32, #tpu.memory_space<any>> -> memref<1x128xf32, #tpu.memory_space<any>>
    %c2_i32_773 = arith.constant 2 : i32
    %c0_i32_774 = arith.constant 0 : i32
    %744 = tpu.memref_slice %arg6[%c0_i32_769, %c2_i32_773, %c0_i32_774] : memref<2x8x128xf32, #tpu.memory_space<vmem>> -> memref<1x1x128xf32, #tpu.memory_space<vmem>>
    %745 = tpu.memref_squeeze %744 : memref<1x1x128xf32, #tpu.memory_space<vmem>> -> memref<1x128xf32, #tpu.memory_space<vmem>>
    %746 = tpu.memref_slice %arg7[%c0_i32_770, %c2_i32_771] : memref<2x8x!tpu.dma_semaphore, #tpu.memory_space<semaphore_mem>> -> memref<1x1x!tpu.dma_semaphore, #tpu.memory_space<semaphore_mem>>
    %747 = tpu.memref_squeeze %746 : memref<1x1x!tpu.dma_semaphore, #tpu.memory_space<semaphore_mem>> -> memref<!tpu.dma_semaphore, #tpu.memory_space<semaphore_mem>>
    tpu.enqueue_dma source(%743 : memref<1x128xf32, #tpu.memory_space<any>>) target(%745 : memref<1x128xf32, #tpu.memory_space<vmem>>) target_semaphore(%747 : memref<!tpu.dma_semaphore, #tpu.memory_space<semaphore_mem>>)
    %c6_i32_775 = arith.constant 6 : i32
    %748 = arith.addi %0, %c6_i32_775 : i32
    %749 = arith.index_cast %748 : i32 to index
    %c3_776 = arith.constant 3 : index
    %750 = memref.load %arg1[%749, %c3_776] : memref<8x8xi32, #tpu.memory_space<smem>>
    %c0_i32_777 = arith.constant 0 : i32
    %c31_i32_778 = arith.constant 31 : i32
    %751 = arith.maxsi %c0_i32_777, %750 : i32
    %752 = arith.minsi %c31_i32_778, %751 : i32
    %c0_i32_779 = arith.constant 0 : i32
    %c0_i32_780 = arith.constant 0 : i32
    %c3_i32_781 = arith.constant 3 : i32
    %c0_i32_782 = arith.constant 0 : i32
    %753 = tpu.memref_slice %arg4[%752, %c0_i32_782] : memref<32x128xf32, #tpu.memory_space<any>> -> memref<1x128xf32, #tpu.memory_space<any>>
    %c3_i32_783 = arith.constant 3 : i32
    %c0_i32_784 = arith.constant 0 : i32
    %754 = tpu.memref_slice %arg6[%c0_i32_779, %c3_i32_783, %c0_i32_784] : memref<2x8x128xf32, #tpu.memory_space<vmem>> -> memref<1x1x128xf32, #tpu.memory_space<vmem>>
    %755 = tpu.memref_squeeze %754 : memref<1x1x128xf32, #tpu.memory_space<vmem>> -> memref<1x128xf32, #tpu.memory_space<vmem>>
    %756 = tpu.memref_slice %arg7[%c0_i32_780, %c3_i32_781] : memref<2x8x!tpu.dma_semaphore, #tpu.memory_space<semaphore_mem>> -> memref<1x1x!tpu.dma_semaphore, #tpu.memory_space<semaphore_mem>>
    %757 = tpu.memref_squeeze %756 : memref<1x1x!tpu.dma_semaphore, #tpu.memory_space<semaphore_mem>> -> memref<!tpu.dma_semaphore, #tpu.memory_space<semaphore_mem>>
    tpu.enqueue_dma source(%753 : memref<1x128xf32, #tpu.memory_space<any>>) target(%755 : memref<1x128xf32, #tpu.memory_space<vmem>>) target_semaphore(%757 : memref<!tpu.dma_semaphore, #tpu.memory_space<semaphore_mem>>)
    %c6_i32_785 = arith.constant 6 : i32
    %758 = arith.addi %0, %c6_i32_785 : i32
    %759 = arith.index_cast %758 : i32 to index
    %c4_786 = arith.constant 4 : index
    %760 = memref.load %arg1[%759, %c4_786] : memref<8x8xi32, #tpu.memory_space<smem>>
    %c0_i32_787 = arith.constant 0 : i32
    %c31_i32_788 = arith.constant 31 : i32
    %761 = arith.maxsi %c0_i32_787, %760 : i32
    %762 = arith.minsi %c31_i32_788, %761 : i32
    %c0_i32_789 = arith.constant 0 : i32
    %c0_i32_790 = arith.constant 0 : i32
    %c4_i32_791 = arith.constant 4 : i32
    %c0_i32_792 = arith.constant 0 : i32
    %763 = tpu.memref_slice %arg4[%762, %c0_i32_792] : memref<32x128xf32, #tpu.memory_space<any>> -> memref<1x128xf32, #tpu.memory_space<any>>
    %c4_i32_793 = arith.constant 4 : i32
    %c0_i32_794 = arith.constant 0 : i32
    %764 = tpu.memref_slice %arg6[%c0_i32_789, %c4_i32_793, %c0_i32_794] : memref<2x8x128xf32, #tpu.memory_space<vmem>> -> memref<1x1x128xf32, #tpu.memory_space<vmem>>
    %765 = tpu.memref_squeeze %764 : memref<1x1x128xf32, #tpu.memory_space<vmem>> -> memref<1x128xf32, #tpu.memory_space<vmem>>
    %766 = tpu.memref_slice %arg7[%c0_i32_790, %c4_i32_791] : memref<2x8x!tpu.dma_semaphore, #tpu.memory_space<semaphore_mem>> -> memref<1x1x!tpu.dma_semaphore, #tpu.memory_space<semaphore_mem>>
    %767 = tpu.memref_squeeze %766 : memref<1x1x!tpu.dma_semaphore, #tpu.memory_space<semaphore_mem>> -> memref<!tpu.dma_semaphore, #tpu.memory_space<semaphore_mem>>
    tpu.enqueue_dma source(%763 : memref<1x128xf32, #tpu.memory_space<any>>) target(%765 : memref<1x128xf32, #tpu.memory_space<vmem>>) target_semaphore(%767 : memref<!tpu.dma_semaphore, #tpu.memory_space<semaphore_mem>>)
    %c6_i32_795 = arith.constant 6 : i32
    %768 = arith.addi %0, %c6_i32_795 : i32
    %769 = arith.index_cast %768 : i32 to index
    %c5_796 = arith.constant 5 : index
    %770 = memref.load %arg1[%769, %c5_796] : memref<8x8xi32, #tpu.memory_space<smem>>
    %c0_i32_797 = arith.constant 0 : i32
    %c31_i32_798 = arith.constant 31 : i32
    %771 = arith.maxsi %c0_i32_797, %770 : i32
    %772 = arith.minsi %c31_i32_798, %771 : i32
    %c0_i32_799 = arith.constant 0 : i32
    %c0_i32_800 = arith.constant 0 : i32
    %c5_i32_801 = arith.constant 5 : i32
    %c0_i32_802 = arith.constant 0 : i32
    %773 = tpu.memref_slice %arg4[%772, %c0_i32_802] : memref<32x128xf32, #tpu.memory_space<any>> -> memref<1x128xf32, #tpu.memory_space<any>>
    %c5_i32_803 = arith.constant 5 : i32
    %c0_i32_804 = arith.constant 0 : i32
    %774 = tpu.memref_slice %arg6[%c0_i32_799, %c5_i32_803, %c0_i32_804] : memref<2x8x128xf32, #tpu.memory_space<vmem>> -> memref<1x1x128xf32, #tpu.memory_space<vmem>>
    %775 = tpu.memref_squeeze %774 : memref<1x1x128xf32, #tpu.memory_space<vmem>> -> memref<1x128xf32, #tpu.memory_space<vmem>>
    %776 = tpu.memref_slice %arg7[%c0_i32_800, %c5_i32_801] : memref<2x8x!tpu.dma_semaphore, #tpu.memory_space<semaphore_mem>> -> memref<1x1x!tpu.dma_semaphore, #tpu.memory_space<semaphore_mem>>
    %777 = tpu.memref_squeeze %776 : memref<1x1x!tpu.dma_semaphore, #tpu.memory_space<semaphore_mem>> -> memref<!tpu.dma_semaphore, #tpu.memory_space<semaphore_mem>>
    tpu.enqueue_dma source(%773 : memref<1x128xf32, #tpu.memory_space<any>>) target(%775 : memref<1x128xf32, #tpu.memory_space<vmem>>) target_semaphore(%777 : memref<!tpu.dma_semaphore, #tpu.memory_space<semaphore_mem>>)
    %c6_i32_805 = arith.constant 6 : i32
    %778 = arith.addi %0, %c6_i32_805 : i32
    %779 = arith.index_cast %778 : i32 to index
    %c6_806 = arith.constant 6 : index
    %780 = memref.load %arg1[%779, %c6_806] : memref<8x8xi32, #tpu.memory_space<smem>>
    %c0_i32_807 = arith.constant 0 : i32
    %c31_i32_808 = arith.constant 31 : i32
    %781 = arith.maxsi %c0_i32_807, %780 : i32
    %782 = arith.minsi %c31_i32_808, %781 : i32
    %c0_i32_809 = arith.constant 0 : i32
    %c0_i32_810 = arith.constant 0 : i32
    %c6_i32_811 = arith.constant 6 : i32
    %c0_i32_812 = arith.constant 0 : i32
    %783 = tpu.memref_slice %arg4[%782, %c0_i32_812] : memref<32x128xf32, #tpu.memory_space<any>> -> memref<1x128xf32, #tpu.memory_space<any>>
    %c6_i32_813 = arith.constant 6 : i32
    %c0_i32_814 = arith.constant 0 : i32
    %784 = tpu.memref_slice %arg6[%c0_i32_809, %c6_i32_813, %c0_i32_814] : memref<2x8x128xf32, #tpu.memory_space<vmem>> -> memref<1x1x128xf32, #tpu.memory_space<vmem>>
    %785 = tpu.memref_squeeze %784 : memref<1x1x128xf32, #tpu.memory_space<vmem>> -> memref<1x128xf32, #tpu.memory_space<vmem>>
    %786 = tpu.memref_slice %arg7[%c0_i32_810, %c6_i32_811] : memref<2x8x!tpu.dma_semaphore, #tpu.memory_space<semaphore_mem>> -> memref<1x1x!tpu.dma_semaphore, #tpu.memory_space<semaphore_mem>>
    %787 = tpu.memref_squeeze %786 : memref<1x1x!tpu.dma_semaphore, #tpu.memory_space<semaphore_mem>> -> memref<!tpu.dma_semaphore, #tpu.memory_space<semaphore_mem>>
    tpu.enqueue_dma source(%783 : memref<1x128xf32, #tpu.memory_space<any>>) target(%785 : memref<1x128xf32, #tpu.memory_space<vmem>>) target_semaphore(%787 : memref<!tpu.dma_semaphore, #tpu.memory_space<semaphore_mem>>)
    %c6_i32_815 = arith.constant 6 : i32
    %788 = arith.addi %0, %c6_i32_815 : i32
    %789 = arith.index_cast %788 : i32 to index
    %c7_816 = arith.constant 7 : index
    %790 = memref.load %arg1[%789, %c7_816] : memref<8x8xi32, #tpu.memory_space<smem>>
    %c0_i32_817 = arith.constant 0 : i32
    %c31_i32_818 = arith.constant 31 : i32
    %791 = arith.maxsi %c0_i32_817, %790 : i32
    %792 = arith.minsi %c31_i32_818, %791 : i32
    %c0_i32_819 = arith.constant 0 : i32
    %c0_i32_820 = arith.constant 0 : i32
    %c7_i32_821 = arith.constant 7 : i32
    %c0_i32_822 = arith.constant 0 : i32
    %793 = tpu.memref_slice %arg4[%792, %c0_i32_822] : memref<32x128xf32, #tpu.memory_space<any>> -> memref<1x128xf32, #tpu.memory_space<any>>
    %c7_i32_823 = arith.constant 7 : i32
    %c0_i32_824 = arith.constant 0 : i32
    %794 = tpu.memref_slice %arg6[%c0_i32_819, %c7_i32_823, %c0_i32_824] : memref<2x8x128xf32, #tpu.memory_space<vmem>> -> memref<1x1x128xf32, #tpu.memory_space<vmem>>
    %795 = tpu.memref_squeeze %794 : memref<1x1x128xf32, #tpu.memory_space<vmem>> -> memref<1x128xf32, #tpu.memory_space<vmem>>
    %796 = tpu.memref_slice %arg7[%c0_i32_820, %c7_i32_821] : memref<2x8x!tpu.dma_semaphore, #tpu.memory_space<semaphore_mem>> -> memref<1x1x!tpu.dma_semaphore, #tpu.memory_space<semaphore_mem>>
    %797 = tpu.memref_squeeze %796 : memref<1x1x!tpu.dma_semaphore, #tpu.memory_space<semaphore_mem>> -> memref<!tpu.dma_semaphore, #tpu.memory_space<semaphore_mem>>
    tpu.enqueue_dma source(%793 : memref<1x128xf32, #tpu.memory_space<any>>) target(%795 : memref<1x128xf32, #tpu.memory_space<vmem>>) target_semaphore(%797 : memref<!tpu.dma_semaphore, #tpu.memory_space<semaphore_mem>>)
    %c1_i32_825 = arith.constant 1 : i32
    %c1_i32_826 = arith.constant 1 : i32
    %c0_i32_827 = arith.constant 0 : i32
    %c0_i32_828 = arith.constant 0 : i32
    %798 = tpu.memref_slice %arg4[%595, %c0_i32_828] : memref<32x128xf32, #tpu.memory_space<any>> -> memref<1x128xf32, #tpu.memory_space<any>>
    %c0_i32_829 = arith.constant 0 : i32
    %c0_i32_830 = arith.constant 0 : i32
    %799 = tpu.memref_slice %arg6[%c1_i32_825, %c0_i32_829, %c0_i32_830] : memref<2x8x128xf32, #tpu.memory_space<vmem>> -> memref<1x1x128xf32, #tpu.memory_space<vmem>>
    %800 = tpu.memref_squeeze %799 : memref<1x1x128xf32, #tpu.memory_space<vmem>> -> memref<1x128xf32, #tpu.memory_space<vmem>>
    %801 = tpu.memref_slice %arg7[%c1_i32_826, %c0_i32_827] : memref<2x8x!tpu.dma_semaphore, #tpu.memory_space<semaphore_mem>> -> memref<1x1x!tpu.dma_semaphore, #tpu.memory_space<semaphore_mem>>
    %802 = tpu.memref_squeeze %801 : memref<1x1x!tpu.dma_semaphore, #tpu.memory_space<semaphore_mem>> -> memref<!tpu.dma_semaphore, #tpu.memory_space<semaphore_mem>>
    tpu.wait_dma2 semaphore(%802 : memref<!tpu.dma_semaphore, #tpu.memory_space<semaphore_mem>>) src(%798 : memref<1x128xf32, #tpu.memory_space<any>>) dst(%800 : memref<1x128xf32, #tpu.memory_space<vmem>>)
    %c1_i32_831 = arith.constant 1 : i32
    %c1_i32_832 = arith.constant 1 : i32
    %c1_i32_833 = arith.constant 1 : i32
    %c0_i32_834 = arith.constant 0 : i32
    %803 = tpu.memref_slice %arg4[%605, %c0_i32_834] : memref<32x128xf32, #tpu.memory_space<any>> -> memref<1x128xf32, #tpu.memory_space<any>>
    %c1_i32_835 = arith.constant 1 : i32
    %c0_i32_836 = arith.constant 0 : i32
    %804 = tpu.memref_slice %arg6[%c1_i32_831, %c1_i32_835, %c0_i32_836] : memref<2x8x128xf32, #tpu.memory_space<vmem>> -> memref<1x1x128xf32, #tpu.memory_space<vmem>>
    %805 = tpu.memref_squeeze %804 : memref<1x1x128xf32, #tpu.memory_space<vmem>> -> memref<1x128xf32, #tpu.memory_space<vmem>>
    %806 = tpu.memref_slice %arg7[%c1_i32_832, %c1_i32_833] : memref<2x8x!tpu.dma_semaphore, #tpu.memory_space<semaphore_mem>> -> memref<1x1x!tpu.dma_semaphore, #tpu.memory_space<semaphore_mem>>
    %807 = tpu.memref_squeeze %806 : memref<1x1x!tpu.dma_semaphore, #tpu.memory_space<semaphore_mem>> -> memref<!tpu.dma_semaphore, #tpu.memory_space<semaphore_mem>>
    tpu.wait_dma2 semaphore(%807 : memref<!tpu.dma_semaphore, #tpu.memory_space<semaphore_mem>>) src(%803 : memref<1x128xf32, #tpu.memory_space<any>>) dst(%805 : memref<1x128xf32, #tpu.memory_space<vmem>>)
    %c1_i32_837 = arith.constant 1 : i32
    %c1_i32_838 = arith.constant 1 : i32
    %c2_i32_839 = arith.constant 2 : i32
    %c0_i32_840 = arith.constant 0 : i32
    %808 = tpu.memref_slice %arg4[%615, %c0_i32_840] : memref<32x128xf32, #tpu.memory_space<any>> -> memref<1x128xf32, #tpu.memory_space<any>>
    %c2_i32_841 = arith.constant 2 : i32
    %c0_i32_842 = arith.constant 0 : i32
    %809 = tpu.memref_slice %arg6[%c1_i32_837, %c2_i32_841, %c0_i32_842] : memref<2x8x128xf32, #tpu.memory_space<vmem>> -> memref<1x1x128xf32, #tpu.memory_space<vmem>>
    %810 = tpu.memref_squeeze %809 : memref<1x1x128xf32, #tpu.memory_space<vmem>> -> memref<1x128xf32, #tpu.memory_space<vmem>>
    %811 = tpu.memref_slice %arg7[%c1_i32_838, %c2_i32_839] : memref<2x8x!tpu.dma_semaphore, #tpu.memory_space<semaphore_mem>> -> memref<1x1x!tpu.dma_semaphore, #tpu.memory_space<semaphore_mem>>
    %812 = tpu.memref_squeeze %811 : memref<1x1x!tpu.dma_semaphore, #tpu.memory_space<semaphore_mem>> -> memref<!tpu.dma_semaphore, #tpu.memory_space<semaphore_mem>>
    tpu.wait_dma2 semaphore(%812 : memref<!tpu.dma_semaphore, #tpu.memory_space<semaphore_mem>>) src(%808 : memref<1x128xf32, #tpu.memory_space<any>>) dst(%810 : memref<1x128xf32, #tpu.memory_space<vmem>>)
    %c1_i32_843 = arith.constant 1 : i32
    %c1_i32_844 = arith.constant 1 : i32
    %c3_i32_845 = arith.constant 3 : i32
    %c0_i32_846 = arith.constant 0 : i32
    %813 = tpu.memref_slice %arg4[%625, %c0_i32_846] : memref<32x128xf32, #tpu.memory_space<any>> -> memref<1x128xf32, #tpu.memory_space<any>>
    %c3_i32_847 = arith.constant 3 : i32
    %c0_i32_848 = arith.constant 0 : i32
    %814 = tpu.memref_slice %arg6[%c1_i32_843, %c3_i32_847, %c0_i32_848] : memref<2x8x128xf32, #tpu.memory_space<vmem>> -> memref<1x1x128xf32, #tpu.memory_space<vmem>>
    %815 = tpu.memref_squeeze %814 : memref<1x1x128xf32, #tpu.memory_space<vmem>> -> memref<1x128xf32, #tpu.memory_space<vmem>>
    %816 = tpu.memref_slice %arg7[%c1_i32_844, %c3_i32_845] : memref<2x8x!tpu.dma_semaphore, #tpu.memory_space<semaphore_mem>> -> memref<1x1x!tpu.dma_semaphore, #tpu.memory_space<semaphore_mem>>
    %817 = tpu.memref_squeeze %816 : memref<1x1x!tpu.dma_semaphore, #tpu.memory_space<semaphore_mem>> -> memref<!tpu.dma_semaphore, #tpu.memory_space<semaphore_mem>>
    tpu.wait_dma2 semaphore(%817 : memref<!tpu.dma_semaphore, #tpu.memory_space<semaphore_mem>>) src(%813 : memref<1x128xf32, #tpu.memory_space<any>>) dst(%815 : memref<1x128xf32, #tpu.memory_space<vmem>>)
    %c1_i32_849 = arith.constant 1 : i32
    %c1_i32_850 = arith.constant 1 : i32
    %c4_i32_851 = arith.constant 4 : i32
    %c0_i32_852 = arith.constant 0 : i32
    %818 = tpu.memref_slice %arg4[%635, %c0_i32_852] : memref<32x128xf32, #tpu.memory_space<any>> -> memref<1x128xf32, #tpu.memory_space<any>>
    %c4_i32_853 = arith.constant 4 : i32
    %c0_i32_854 = arith.constant 0 : i32
    %819 = tpu.memref_slice %arg6[%c1_i32_849, %c4_i32_853, %c0_i32_854] : memref<2x8x128xf32, #tpu.memory_space<vmem>> -> memref<1x1x128xf32, #tpu.memory_space<vmem>>
    %820 = tpu.memref_squeeze %819 : memref<1x1x128xf32, #tpu.memory_space<vmem>> -> memref<1x128xf32, #tpu.memory_space<vmem>>
    %821 = tpu.memref_slice %arg7[%c1_i32_850, %c4_i32_851] : memref<2x8x!tpu.dma_semaphore, #tpu.memory_space<semaphore_mem>> -> memref<1x1x!tpu.dma_semaphore, #tpu.memory_space<semaphore_mem>>
    %822 = tpu.memref_squeeze %821 : memref<1x1x!tpu.dma_semaphore, #tpu.memory_space<semaphore_mem>> -> memref<!tpu.dma_semaphore, #tpu.memory_space<semaphore_mem>>
    tpu.wait_dma2 semaphore(%822 : memref<!tpu.dma_semaphore, #tpu.memory_space<semaphore_mem>>) src(%818 : memref<1x128xf32, #tpu.memory_space<any>>) dst(%820 : memref<1x128xf32, #tpu.memory_space<vmem>>)
    %c1_i32_855 = arith.constant 1 : i32
    %c1_i32_856 = arith.constant 1 : i32
    %c5_i32_857 = arith.constant 5 : i32
    %c0_i32_858 = arith.constant 0 : i32
    %823 = tpu.memref_slice %arg4[%645, %c0_i32_858] : memref<32x128xf32, #tpu.memory_space<any>> -> memref<1x128xf32, #tpu.memory_space<any>>
    %c5_i32_859 = arith.constant 5 : i32
    %c0_i32_860 = arith.constant 0 : i32
    %824 = tpu.memref_slice %arg6[%c1_i32_855, %c5_i32_859, %c0_i32_860] : memref<2x8x128xf32, #tpu.memory_space<vmem>> -> memref<1x1x128xf32, #tpu.memory_space<vmem>>
    %825 = tpu.memref_squeeze %824 : memref<1x1x128xf32, #tpu.memory_space<vmem>> -> memref<1x128xf32, #tpu.memory_space<vmem>>
    %826 = tpu.memref_slice %arg7[%c1_i32_856, %c5_i32_857] : memref<2x8x!tpu.dma_semaphore, #tpu.memory_space<semaphore_mem>> -> memref<1x1x!tpu.dma_semaphore, #tpu.memory_space<semaphore_mem>>
    %827 = tpu.memref_squeeze %826 : memref<1x1x!tpu.dma_semaphore, #tpu.memory_space<semaphore_mem>> -> memref<!tpu.dma_semaphore, #tpu.memory_space<semaphore_mem>>
    tpu.wait_dma2 semaphore(%827 : memref<!tpu.dma_semaphore, #tpu.memory_space<semaphore_mem>>) src(%823 : memref<1x128xf32, #tpu.memory_space<any>>) dst(%825 : memref<1x128xf32, #tpu.memory_space<vmem>>)
    %c1_i32_861 = arith.constant 1 : i32
    %c1_i32_862 = arith.constant 1 : i32
    %c6_i32_863 = arith.constant 6 : i32
    %c0_i32_864 = arith.constant 0 : i32
    %828 = tpu.memref_slice %arg4[%655, %c0_i32_864] : memref<32x128xf32, #tpu.memory_space<any>> -> memref<1x128xf32, #tpu.memory_space<any>>
    %c6_i32_865 = arith.constant 6 : i32
    %c0_i32_866 = arith.constant 0 : i32
    %829 = tpu.memref_slice %arg6[%c1_i32_861, %c6_i32_865, %c0_i32_866] : memref<2x8x128xf32, #tpu.memory_space<vmem>> -> memref<1x1x128xf32, #tpu.memory_space<vmem>>
    %830 = tpu.memref_squeeze %829 : memref<1x1x128xf32, #tpu.memory_space<vmem>> -> memref<1x128xf32, #tpu.memory_space<vmem>>
    %831 = tpu.memref_slice %arg7[%c1_i32_862, %c6_i32_863] : memref<2x8x!tpu.dma_semaphore, #tpu.memory_space<semaphore_mem>> -> memref<1x1x!tpu.dma_semaphore, #tpu.memory_space<semaphore_mem>>
    %832 = tpu.memref_squeeze %831 : memref<1x1x!tpu.dma_semaphore, #tpu.memory_space<semaphore_mem>> -> memref<!tpu.dma_semaphore, #tpu.memory_space<semaphore_mem>>
    tpu.wait_dma2 semaphore(%832 : memref<!tpu.dma_semaphore, #tpu.memory_space<semaphore_mem>>) src(%828 : memref<1x128xf32, #tpu.memory_space<any>>) dst(%830 : memref<1x128xf32, #tpu.memory_space<vmem>>)
    %c1_i32_867 = arith.constant 1 : i32
    %c1_i32_868 = arith.constant 1 : i32
    %c7_i32_869 = arith.constant 7 : i32
    %c0_i32_870 = arith.constant 0 : i32
    %833 = tpu.memref_slice %arg4[%665, %c0_i32_870] : memref<32x128xf32, #tpu.memory_space<any>> -> memref<1x128xf32, #tpu.memory_space<any>>
    %c7_i32_871 = arith.constant 7 : i32
    %c0_i32_872 = arith.constant 0 : i32
    %834 = tpu.memref_slice %arg6[%c1_i32_867, %c7_i32_871, %c0_i32_872] : memref<2x8x128xf32, #tpu.memory_space<vmem>> -> memref<1x1x128xf32, #tpu.memory_space<vmem>>
    %835 = tpu.memref_squeeze %834 : memref<1x1x128xf32, #tpu.memory_space<vmem>> -> memref<1x128xf32, #tpu.memory_space<vmem>>
    %836 = tpu.memref_slice %arg7[%c1_i32_868, %c7_i32_869] : memref<2x8x!tpu.dma_semaphore, #tpu.memory_space<semaphore_mem>> -> memref<1x1x!tpu.dma_semaphore, #tpu.memory_space<semaphore_mem>>
    %837 = tpu.memref_squeeze %836 : memref<1x1x!tpu.dma_semaphore, #tpu.memory_space<semaphore_mem>> -> memref<!tpu.dma_semaphore, #tpu.memory_space<semaphore_mem>>
    tpu.wait_dma2 semaphore(%837 : memref<!tpu.dma_semaphore, #tpu.memory_space<semaphore_mem>>) src(%833 : memref<1x128xf32, #tpu.memory_space<any>>) dst(%835 : memref<1x128xf32, #tpu.memory_space<vmem>>)
    %c1_873 = arith.constant 1 : index
    %c0_874 = arith.constant 0 : index
    %c0_875 = arith.constant 0 : index
    %838 = vector.load %arg6[%c1_873, %c0_874, %c0_875] : memref<2x8x128xf32, #tpu.memory_space<vmem>>, vector<1x8x128xf32>
    %839 = vector.shape_cast %838 : vector<1x8x128xf32> to vector<8x128xf32>
    %c5_876 = arith.constant 5 : index
    %c0_877 = arith.constant 0 : index
    %840 = vector.load %arg8[%c5_876, %c0_877] : memref<8x128xf32, #tpu.memory_space<vmem>>, vector<1x128xf32>
    %cst_878 = arith.constant dense<0.000000e+00> : vector<128xf32>
    %841 = vector.multi_reduction <add>, %839, %cst_878 [0] : vector<8x128xf32> to vector<128xf32>
    %842 = vector.shape_cast %841 : vector<128xf32> to vector<1x128xf32>
    %843 = arith.addf %840, %842 : vector<1x128xf32>
    %c5_879 = arith.constant 5 : index
    %c0_880 = arith.constant 0 : index
    %844 = vector.load %arg8[%c5_879, %c0_880] : memref<8x128xf32, #tpu.memory_space<vmem>>, vector<1x128xf32>
    tpu.vector_store %arg8[%c5_879, %c0_880], %843 {strides = array<i32>} : memref<8x128xf32, #tpu.memory_space<vmem>>, vector<1x128xf32>,
    %c7_i32_881 = arith.constant 7 : i32
    %845 = arith.addi %0, %c7_i32_881 : i32
    %846 = arith.index_cast %845 : i32 to index
    %c0_882 = arith.constant 0 : index
    %847 = memref.load %arg1[%846, %c0_882] : memref<8x8xi32, #tpu.memory_space<smem>>
    %c0_i32_883 = arith.constant 0 : i32
    %c31_i32_884 = arith.constant 31 : i32
    %848 = arith.maxsi %c0_i32_883, %847 : i32
    %849 = arith.minsi %c31_i32_884, %848 : i32
    %c1_i32_885 = arith.constant 1 : i32
    %c1_i32_886 = arith.constant 1 : i32
    %c0_i32_887 = arith.constant 0 : i32
    %c0_i32_888 = arith.constant 0 : i32
    %850 = tpu.memref_slice %arg4[%849, %c0_i32_888] : memref<32x128xf32, #tpu.memory_space<any>> -> memref<1x128xf32, #tpu.memory_space<any>>
    %c0_i32_889 = arith.constant 0 : i32
    %c0_i32_890 = arith.constant 0 : i32
    %851 = tpu.memref_slice %arg6[%c1_i32_885, %c0_i32_889, %c0_i32_890] : memref<2x8x128xf32, #tpu.memory_space<vmem>> -> memref<1x1x128xf32, #tpu.memory_space<vmem>>
    %852 = tpu.memref_squeeze %851 : memref<1x1x128xf32, #tpu.memory_space<vmem>> -> memref<1x128xf32, #tpu.memory_space<vmem>>
    %853 = tpu.memref_slice %arg7[%c1_i32_886, %c0_i32_887] : memref<2x8x!tpu.dma_semaphore, #tpu.memory_space<semaphore_mem>> -> memref<1x1x!tpu.dma_semaphore, #tpu.memory_space<semaphore_mem>>
    %854 = tpu.memref_squeeze %853 : memref<1x1x!tpu.dma_semaphore, #tpu.memory_space<semaphore_mem>> -> memref<!tpu.dma_semaphore, #tpu.memory_space<semaphore_mem>>
    tpu.enqueue_dma source(%850 : memref<1x128xf32, #tpu.memory_space<any>>) target(%852 : memref<1x128xf32, #tpu.memory_space<vmem>>) target_semaphore(%854 : memref<!tpu.dma_semaphore, #tpu.memory_space<semaphore_mem>>)
    %c7_i32_891 = arith.constant 7 : i32
    %855 = arith.addi %0, %c7_i32_891 : i32
    %856 = arith.index_cast %855 : i32 to index
    %c1_892 = arith.constant 1 : index
    %857 = memref.load %arg1[%856, %c1_892] : memref<8x8xi32, #tpu.memory_space<smem>>
    %c0_i32_893 = arith.constant 0 : i32
    %c31_i32_894 = arith.constant 31 : i32
    %858 = arith.maxsi %c0_i32_893, %857 : i32
    %859 = arith.minsi %c31_i32_894, %858 : i32
    %c1_i32_895 = arith.constant 1 : i32
    %c1_i32_896 = arith.constant 1 : i32
    %c1_i32_897 = arith.constant 1 : i32
    %c0_i32_898 = arith.constant 0 : i32
    %860 = tpu.memref_slice %arg4[%859, %c0_i32_898] : memref<32x128xf32, #tpu.memory_space<any>> -> memref<1x128xf32, #tpu.memory_space<any>>
    %c1_i32_899 = arith.constant 1 : i32
    %c0_i32_900 = arith.constant 0 : i32
    %861 = tpu.memref_slice %arg6[%c1_i32_895, %c1_i32_899, %c0_i32_900] : memref<2x8x128xf32, #tpu.memory_space<vmem>> -> memref<1x1x128xf32, #tpu.memory_space<vmem>>
    %862 = tpu.memref_squeeze %861 : memref<1x1x128xf32, #tpu.memory_space<vmem>> -> memref<1x128xf32, #tpu.memory_space<vmem>>
    %863 = tpu.memref_slice %arg7[%c1_i32_896, %c1_i32_897] : memref<2x8x!tpu.dma_semaphore, #tpu.memory_space<semaphore_mem>> -> memref<1x1x!tpu.dma_semaphore, #tpu.memory_space<semaphore_mem>>
    %864 = tpu.memref_squeeze %863 : memref<1x1x!tpu.dma_semaphore, #tpu.memory_space<semaphore_mem>> -> memref<!tpu.dma_semaphore, #tpu.memory_space<semaphore_mem>>
    tpu.enqueue_dma source(%860 : memref<1x128xf32, #tpu.memory_space<any>>) target(%862 : memref<1x128xf32, #tpu.memory_space<vmem>>) target_semaphore(%864 : memref<!tpu.dma_semaphore, #tpu.memory_space<semaphore_mem>>)
    %c7_i32_901 = arith.constant 7 : i32
    %865 = arith.addi %0, %c7_i32_901 : i32
    %866 = arith.index_cast %865 : i32 to index
    %c2_902 = arith.constant 2 : index
    %867 = memref.load %arg1[%866, %c2_902] : memref<8x8xi32, #tpu.memory_space<smem>>
    %c0_i32_903 = arith.constant 0 : i32
    %c31_i32_904 = arith.constant 31 : i32
    %868 = arith.maxsi %c0_i32_903, %867 : i32
    %869 = arith.minsi %c31_i32_904, %868 : i32
    %c1_i32_905 = arith.constant 1 : i32
    %c1_i32_906 = arith.constant 1 : i32
    %c2_i32_907 = arith.constant 2 : i32
    %c0_i32_908 = arith.constant 0 : i32
    %870 = tpu.memref_slice %arg4[%869, %c0_i32_908] : memref<32x128xf32, #tpu.memory_space<any>> -> memref<1x128xf32, #tpu.memory_space<any>>
    %c2_i32_909 = arith.constant 2 : i32
    %c0_i32_910 = arith.constant 0 : i32
    %871 = tpu.memref_slice %arg6[%c1_i32_905, %c2_i32_909, %c0_i32_910] : memref<2x8x128xf32, #tpu.memory_space<vmem>> -> memref<1x1x128xf32, #tpu.memory_space<vmem>>
    %872 = tpu.memref_squeeze %871 : memref<1x1x128xf32, #tpu.memory_space<vmem>> -> memref<1x128xf32, #tpu.memory_space<vmem>>
    %873 = tpu.memref_slice %arg7[%c1_i32_906, %c2_i32_907] : memref<2x8x!tpu.dma_semaphore, #tpu.memory_space<semaphore_mem>> -> memref<1x1x!tpu.dma_semaphore, #tpu.memory_space<semaphore_mem>>
    %874 = tpu.memref_squeeze %873 : memref<1x1x!tpu.dma_semaphore, #tpu.memory_space<semaphore_mem>> -> memref<!tpu.dma_semaphore, #tpu.memory_space<semaphore_mem>>
    tpu.enqueue_dma source(%870 : memref<1x128xf32, #tpu.memory_space<any>>) target(%872 : memref<1x128xf32, #tpu.memory_space<vmem>>) target_semaphore(%874 : memref<!tpu.dma_semaphore, #tpu.memory_space<semaphore_mem>>)
    %c7_i32_911 = arith.constant 7 : i32
    %875 = arith.addi %0, %c7_i32_911 : i32
    %876 = arith.index_cast %875 : i32 to index
    %c3_912 = arith.constant 3 : index
    %877 = memref.load %arg1[%876, %c3_912] : memref<8x8xi32, #tpu.memory_space<smem>>
    %c0_i32_913 = arith.constant 0 : i32
    %c31_i32_914 = arith.constant 31 : i32
    %878 = arith.maxsi %c0_i32_913, %877 : i32
    %879 = arith.minsi %c31_i32_914, %878 : i32
    %c1_i32_915 = arith.constant 1 : i32
    %c1_i32_916 = arith.constant 1 : i32
    %c3_i32_917 = arith.constant 3 : i32
    %c0_i32_918 = arith.constant 0 : i32
    %880 = tpu.memref_slice %arg4[%879, %c0_i32_918] : memref<32x128xf32, #tpu.memory_space<any>> -> memref<1x128xf32, #tpu.memory_space<any>>
    %c3_i32_919 = arith.constant 3 : i32
    %c0_i32_920 = arith.constant 0 : i32
    %881 = tpu.memref_slice %arg6[%c1_i32_915, %c3_i32_919, %c0_i32_920] : memref<2x8x128xf32, #tpu.memory_space<vmem>> -> memref<1x1x128xf32, #tpu.memory_space<vmem>>
    %882 = tpu.memref_squeeze %881 : memref<1x1x128xf32, #tpu.memory_space<vmem>> -> memref<1x128xf32, #tpu.memory_space<vmem>>
    %883 = tpu.memref_slice %arg7[%c1_i32_916, %c3_i32_917] : memref<2x8x!tpu.dma_semaphore, #tpu.memory_space<semaphore_mem>> -> memref<1x1x!tpu.dma_semaphore, #tpu.memory_space<semaphore_mem>>
    %884 = tpu.memref_squeeze %883 : memref<1x1x!tpu.dma_semaphore, #tpu.memory_space<semaphore_mem>> -> memref<!tpu.dma_semaphore, #tpu.memory_space<semaphore_mem>>
    tpu.enqueue_dma source(%880 : memref<1x128xf32, #tpu.memory_space<any>>) target(%882 : memref<1x128xf32, #tpu.memory_space<vmem>>) target_semaphore(%884 : memref<!tpu.dma_semaphore, #tpu.memory_space<semaphore_mem>>)
    %c7_i32_921 = arith.constant 7 : i32
    %885 = arith.addi %0, %c7_i32_921 : i32
    %886 = arith.index_cast %885 : i32 to index
    %c4_922 = arith.constant 4 : index
    %887 = memref.load %arg1[%886, %c4_922] : memref<8x8xi32, #tpu.memory_space<smem>>
    %c0_i32_923 = arith.constant 0 : i32
    %c31_i32_924 = arith.constant 31 : i32
    %888 = arith.maxsi %c0_i32_923, %887 : i32
    %889 = arith.minsi %c31_i32_924, %888 : i32
    %c1_i32_925 = arith.constant 1 : i32
    %c1_i32_926 = arith.constant 1 : i32
    %c4_i32_927 = arith.constant 4 : i32
    %c0_i32_928 = arith.constant 0 : i32
    %890 = tpu.memref_slice %arg4[%889, %c0_i32_928] : memref<32x128xf32, #tpu.memory_space<any>> -> memref<1x128xf32, #tpu.memory_space<any>>
    %c4_i32_929 = arith.constant 4 : i32
    %c0_i32_930 = arith.constant 0 : i32
    %891 = tpu.memref_slice %arg6[%c1_i32_925, %c4_i32_929, %c0_i32_930] : memref<2x8x128xf32, #tpu.memory_space<vmem>> -> memref<1x1x128xf32, #tpu.memory_space<vmem>>
    %892 = tpu.memref_squeeze %891 : memref<1x1x128xf32, #tpu.memory_space<vmem>> -> memref<1x128xf32, #tpu.memory_space<vmem>>
    %893 = tpu.memref_slice %arg7[%c1_i32_926, %c4_i32_927] : memref<2x8x!tpu.dma_semaphore, #tpu.memory_space<semaphore_mem>> -> memref<1x1x!tpu.dma_semaphore, #tpu.memory_space<semaphore_mem>>
    %894 = tpu.memref_squeeze %893 : memref<1x1x!tpu.dma_semaphore, #tpu.memory_space<semaphore_mem>> -> memref<!tpu.dma_semaphore, #tpu.memory_space<semaphore_mem>>
    tpu.enqueue_dma source(%890 : memref<1x128xf32, #tpu.memory_space<any>>) target(%892 : memref<1x128xf32, #tpu.memory_space<vmem>>) target_semaphore(%894 : memref<!tpu.dma_semaphore, #tpu.memory_space<semaphore_mem>>)
    %c7_i32_931 = arith.constant 7 : i32
    %895 = arith.addi %0, %c7_i32_931 : i32
    %896 = arith.index_cast %895 : i32 to index
    %c5_932 = arith.constant 5 : index
    %897 = memref.load %arg1[%896, %c5_932] : memref<8x8xi32, #tpu.memory_space<smem>>
    %c0_i32_933 = arith.constant 0 : i32
    %c31_i32_934 = arith.constant 31 : i32
    %898 = arith.maxsi %c0_i32_933, %897 : i32
    %899 = arith.minsi %c31_i32_934, %898 : i32
    %c1_i32_935 = arith.constant 1 : i32
    %c1_i32_936 = arith.constant 1 : i32
    %c5_i32_937 = arith.constant 5 : i32
    %c0_i32_938 = arith.constant 0 : i32
    %900 = tpu.memref_slice %arg4[%899, %c0_i32_938] : memref<32x128xf32, #tpu.memory_space<any>> -> memref<1x128xf32, #tpu.memory_space<any>>
    %c5_i32_939 = arith.constant 5 : i32
    %c0_i32_940 = arith.constant 0 : i32
    %901 = tpu.memref_slice %arg6[%c1_i32_935, %c5_i32_939, %c0_i32_940] : memref<2x8x128xf32, #tpu.memory_space<vmem>> -> memref<1x1x128xf32, #tpu.memory_space<vmem>>
    %902 = tpu.memref_squeeze %901 : memref<1x1x128xf32, #tpu.memory_space<vmem>> -> memref<1x128xf32, #tpu.memory_space<vmem>>
    %903 = tpu.memref_slice %arg7[%c1_i32_936, %c5_i32_937] : memref<2x8x!tpu.dma_semaphore, #tpu.memory_space<semaphore_mem>> -> memref<1x1x!tpu.dma_semaphore, #tpu.memory_space<semaphore_mem>>
    %904 = tpu.memref_squeeze %903 : memref<1x1x!tpu.dma_semaphore, #tpu.memory_space<semaphore_mem>> -> memref<!tpu.dma_semaphore, #tpu.memory_space<semaphore_mem>>
    tpu.enqueue_dma source(%900 : memref<1x128xf32, #tpu.memory_space<any>>) target(%902 : memref<1x128xf32, #tpu.memory_space<vmem>>) target_semaphore(%904 : memref<!tpu.dma_semaphore, #tpu.memory_space<semaphore_mem>>)
    %c7_i32_941 = arith.constant 7 : i32
    %905 = arith.addi %0, %c7_i32_941 : i32
    %906 = arith.index_cast %905 : i32 to index
    %c6_942 = arith.constant 6 : index
    %907 = memref.load %arg1[%906, %c6_942] : memref<8x8xi32, #tpu.memory_space<smem>>
    %c0_i32_943 = arith.constant 0 : i32
    %c31_i32_944 = arith.constant 31 : i32
    %908 = arith.maxsi %c0_i32_943, %907 : i32
    %909 = arith.minsi %c31_i32_944, %908 : i32
    %c1_i32_945 = arith.constant 1 : i32
    %c1_i32_946 = arith.constant 1 : i32
    %c6_i32_947 = arith.constant 6 : i32
    %c0_i32_948 = arith.constant 0 : i32
    %910 = tpu.memref_slice %arg4[%909, %c0_i32_948] : memref<32x128xf32, #tpu.memory_space<any>> -> memref<1x128xf32, #tpu.memory_space<any>>
    %c6_i32_949 = arith.constant 6 : i32
    %c0_i32_950 = arith.constant 0 : i32
    %911 = tpu.memref_slice %arg6[%c1_i32_945, %c6_i32_949, %c0_i32_950] : memref<2x8x128xf32, #tpu.memory_space<vmem>> -> memref<1x1x128xf32, #tpu.memory_space<vmem>>
    %912 = tpu.memref_squeeze %911 : memref<1x1x128xf32, #tpu.memory_space<vmem>> -> memref<1x128xf32, #tpu.memory_space<vmem>>
    %913 = tpu.memref_slice %arg7[%c1_i32_946, %c6_i32_947] : memref<2x8x!tpu.dma_semaphore, #tpu.memory_space<semaphore_mem>> -> memref<1x1x!tpu.dma_semaphore, #tpu.memory_space<semaphore_mem>>
    %914 = tpu.memref_squeeze %913 : memref<1x1x!tpu.dma_semaphore, #tpu.memory_space<semaphore_mem>> -> memref<!tpu.dma_semaphore, #tpu.memory_space<semaphore_mem>>
    tpu.enqueue_dma source(%910 : memref<1x128xf32, #tpu.memory_space<any>>) target(%912 : memref<1x128xf32, #tpu.memory_space<vmem>>) target_semaphore(%914 : memref<!tpu.dma_semaphore, #tpu.memory_space<semaphore_mem>>)
    %c7_i32_951 = arith.constant 7 : i32
    %915 = arith.addi %0, %c7_i32_951 : i32
    %916 = arith.index_cast %915 : i32 to index
    %c7_952 = arith.constant 7 : index
    %917 = memref.load %arg1[%916, %c7_952] : memref<8x8xi32, #tpu.memory_space<smem>>
    %c0_i32_953 = arith.constant 0 : i32
    %c31_i32_954 = arith.constant 31 : i32
    %918 = arith.maxsi %c0_i32_953, %917 : i32
    %919 = arith.minsi %c31_i32_954, %918 : i32
    %c1_i32_955 = arith.constant 1 : i32
    %c1_i32_956 = arith.constant 1 : i32
    %c7_i32_957 = arith.constant 7 : i32
    %c0_i32_958 = arith.constant 0 : i32
    %920 = tpu.memref_slice %arg4[%919, %c0_i32_958] : memref<32x128xf32, #tpu.memory_space<any>> -> memref<1x128xf32, #tpu.memory_space<any>>
    %c7_i32_959 = arith.constant 7 : i32
    %c0_i32_960 = arith.constant 0 : i32
    %921 = tpu.memref_slice %arg6[%c1_i32_955, %c7_i32_959, %c0_i32_960] : memref<2x8x128xf32, #tpu.memory_space<vmem>> -> memref<1x1x128xf32, #tpu.memory_space<vmem>>
    %922 = tpu.memref_squeeze %921 : memref<1x1x128xf32, #tpu.memory_space<vmem>> -> memref<1x128xf32, #tpu.memory_space<vmem>>
    %923 = tpu.memref_slice %arg7[%c1_i32_956, %c7_i32_957] : memref<2x8x!tpu.dma_semaphore, #tpu.memory_space<semaphore_mem>> -> memref<1x1x!tpu.dma_semaphore, #tpu.memory_space<semaphore_mem>>
    %924 = tpu.memref_squeeze %923 : memref<1x1x!tpu.dma_semaphore, #tpu.memory_space<semaphore_mem>> -> memref<!tpu.dma_semaphore, #tpu.memory_space<semaphore_mem>>
    tpu.enqueue_dma source(%920 : memref<1x128xf32, #tpu.memory_space<any>>) target(%922 : memref<1x128xf32, #tpu.memory_space<vmem>>) target_semaphore(%924 : memref<!tpu.dma_semaphore, #tpu.memory_space<semaphore_mem>>)
    %c0_i32_961 = arith.constant 0 : i32
    %c0_i32_962 = arith.constant 0 : i32
    %c0_i32_963 = arith.constant 0 : i32
    %c0_i32_964 = arith.constant 0 : i32
    %925 = tpu.memref_slice %arg4[%722, %c0_i32_964] : memref<32x128xf32, #tpu.memory_space<any>> -> memref<1x128xf32, #tpu.memory_space<any>>
    %c0_i32_965 = arith.constant 0 : i32
    %c0_i32_966 = arith.constant 0 : i32
    %926 = tpu.memref_slice %arg6[%c0_i32_961, %c0_i32_965, %c0_i32_966] : memref<2x8x128xf32, #tpu.memory_space<vmem>> -> memref<1x1x128xf32, #tpu.memory_space<vmem>>
    %927 = tpu.memref_squeeze %926 : memref<1x1x128xf32, #tpu.memory_space<vmem>> -> memref<1x128xf32, #tpu.memory_space<vmem>>
    %928 = tpu.memref_slice %arg7[%c0_i32_962, %c0_i32_963] : memref<2x8x!tpu.dma_semaphore, #tpu.memory_space<semaphore_mem>> -> memref<1x1x!tpu.dma_semaphore, #tpu.memory_space<semaphore_mem>>
    %929 = tpu.memref_squeeze %928 : memref<1x1x!tpu.dma_semaphore, #tpu.memory_space<semaphore_mem>> -> memref<!tpu.dma_semaphore, #tpu.memory_space<semaphore_mem>>
    tpu.wait_dma2 semaphore(%929 : memref<!tpu.dma_semaphore, #tpu.memory_space<semaphore_mem>>) src(%925 : memref<1x128xf32, #tpu.memory_space<any>>) dst(%927 : memref<1x128xf32, #tpu.memory_space<vmem>>)
    %c0_i32_967 = arith.constant 0 : i32
    %c0_i32_968 = arith.constant 0 : i32
    %c1_i32_969 = arith.constant 1 : i32
    %c0_i32_970 = arith.constant 0 : i32
    %930 = tpu.memref_slice %arg4[%732, %c0_i32_970] : memref<32x128xf32, #tpu.memory_space<any>> -> memref<1x128xf32, #tpu.memory_space<any>>
    %c1_i32_971 = arith.constant 1 : i32
    %c0_i32_972 = arith.constant 0 : i32
    %931 = tpu.memref_slice %arg6[%c0_i32_967, %c1_i32_971, %c0_i32_972] : memref<2x8x128xf32, #tpu.memory_space<vmem>> -> memref<1x1x128xf32, #tpu.memory_space<vmem>>
    %932 = tpu.memref_squeeze %931 : memref<1x1x128xf32, #tpu.memory_space<vmem>> -> memref<1x128xf32, #tpu.memory_space<vmem>>
    %933 = tpu.memref_slice %arg7[%c0_i32_968, %c1_i32_969] : memref<2x8x!tpu.dma_semaphore, #tpu.memory_space<semaphore_mem>> -> memref<1x1x!tpu.dma_semaphore, #tpu.memory_space<semaphore_mem>>
    %934 = tpu.memref_squeeze %933 : memref<1x1x!tpu.dma_semaphore, #tpu.memory_space<semaphore_mem>> -> memref<!tpu.dma_semaphore, #tpu.memory_space<semaphore_mem>>
    tpu.wait_dma2 semaphore(%934 : memref<!tpu.dma_semaphore, #tpu.memory_space<semaphore_mem>>) src(%930 : memref<1x128xf32, #tpu.memory_space<any>>) dst(%932 : memref<1x128xf32, #tpu.memory_space<vmem>>)
    %c0_i32_973 = arith.constant 0 : i32
    %c0_i32_974 = arith.constant 0 : i32
    %c2_i32_975 = arith.constant 2 : i32
    %c0_i32_976 = arith.constant 0 : i32
    %935 = tpu.memref_slice %arg4[%742, %c0_i32_976] : memref<32x128xf32, #tpu.memory_space<any>> -> memref<1x128xf32, #tpu.memory_space<any>>
    %c2_i32_977 = arith.constant 2 : i32
    %c0_i32_978 = arith.constant 0 : i32
    %936 = tpu.memref_slice %arg6[%c0_i32_973, %c2_i32_977, %c0_i32_978] : memref<2x8x128xf32, #tpu.memory_space<vmem>> -> memref<1x1x128xf32, #tpu.memory_space<vmem>>
    %937 = tpu.memref_squeeze %936 : memref<1x1x128xf32, #tpu.memory_space<vmem>> -> memref<1x128xf32, #tpu.memory_space<vmem>>
    %938 = tpu.memref_slice %arg7[%c0_i32_974, %c2_i32_975] : memref<2x8x!tpu.dma_semaphore, #tpu.memory_space<semaphore_mem>> -> memref<1x1x!tpu.dma_semaphore, #tpu.memory_space<semaphore_mem>>
    %939 = tpu.memref_squeeze %938 : memref<1x1x!tpu.dma_semaphore, #tpu.memory_space<semaphore_mem>> -> memref<!tpu.dma_semaphore, #tpu.memory_space<semaphore_mem>>
    tpu.wait_dma2 semaphore(%939 : memref<!tpu.dma_semaphore, #tpu.memory_space<semaphore_mem>>) src(%935 : memref<1x128xf32, #tpu.memory_space<any>>) dst(%937 : memref<1x128xf32, #tpu.memory_space<vmem>>)
    %c0_i32_979 = arith.constant 0 : i32
    %c0_i32_980 = arith.constant 0 : i32
    %c3_i32_981 = arith.constant 3 : i32
    %c0_i32_982 = arith.constant 0 : i32
    %940 = tpu.memref_slice %arg4[%752, %c0_i32_982] : memref<32x128xf32, #tpu.memory_space<any>> -> memref<1x128xf32, #tpu.memory_space<any>>
    %c3_i32_983 = arith.constant 3 : i32
    %c0_i32_984 = arith.constant 0 : i32
    %941 = tpu.memref_slice %arg6[%c0_i32_979, %c3_i32_983, %c0_i32_984] : memref<2x8x128xf32, #tpu.memory_space<vmem>> -> memref<1x1x128xf32, #tpu.memory_space<vmem>>
    %942 = tpu.memref_squeeze %941 : memref<1x1x128xf32, #tpu.memory_space<vmem>> -> memref<1x128xf32, #tpu.memory_space<vmem>>
    %943 = tpu.memref_slice %arg7[%c0_i32_980, %c3_i32_981] : memref<2x8x!tpu.dma_semaphore, #tpu.memory_space<semaphore_mem>> -> memref<1x1x!tpu.dma_semaphore, #tpu.memory_space<semaphore_mem>>
    %944 = tpu.memref_squeeze %943 : memref<1x1x!tpu.dma_semaphore, #tpu.memory_space<semaphore_mem>> -> memref<!tpu.dma_semaphore, #tpu.memory_space<semaphore_mem>>
    tpu.wait_dma2 semaphore(%944 : memref<!tpu.dma_semaphore, #tpu.memory_space<semaphore_mem>>) src(%940 : memref<1x128xf32, #tpu.memory_space<any>>) dst(%942 : memref<1x128xf32, #tpu.memory_space<vmem>>)
    %c0_i32_985 = arith.constant 0 : i32
    %c0_i32_986 = arith.constant 0 : i32
    %c4_i32_987 = arith.constant 4 : i32
    %c0_i32_988 = arith.constant 0 : i32
    %945 = tpu.memref_slice %arg4[%762, %c0_i32_988] : memref<32x128xf32, #tpu.memory_space<any>> -> memref<1x128xf32, #tpu.memory_space<any>>
    %c4_i32_989 = arith.constant 4 : i32
    %c0_i32_990 = arith.constant 0 : i32
    %946 = tpu.memref_slice %arg6[%c0_i32_985, %c4_i32_989, %c0_i32_990] : memref<2x8x128xf32, #tpu.memory_space<vmem>> -> memref<1x1x128xf32, #tpu.memory_space<vmem>>
    %947 = tpu.memref_squeeze %946 : memref<1x1x128xf32, #tpu.memory_space<vmem>> -> memref<1x128xf32, #tpu.memory_space<vmem>>
    %948 = tpu.memref_slice %arg7[%c0_i32_986, %c4_i32_987] : memref<2x8x!tpu.dma_semaphore, #tpu.memory_space<semaphore_mem>> -> memref<1x1x!tpu.dma_semaphore, #tpu.memory_space<semaphore_mem>>
    %949 = tpu.memref_squeeze %948 : memref<1x1x!tpu.dma_semaphore, #tpu.memory_space<semaphore_mem>> -> memref<!tpu.dma_semaphore, #tpu.memory_space<semaphore_mem>>
    tpu.wait_dma2 semaphore(%949 : memref<!tpu.dma_semaphore, #tpu.memory_space<semaphore_mem>>) src(%945 : memref<1x128xf32, #tpu.memory_space<any>>) dst(%947 : memref<1x128xf32, #tpu.memory_space<vmem>>)
    %c0_i32_991 = arith.constant 0 : i32
    %c0_i32_992 = arith.constant 0 : i32
    %c5_i32_993 = arith.constant 5 : i32
    %c0_i32_994 = arith.constant 0 : i32
    %950 = tpu.memref_slice %arg4[%772, %c0_i32_994] : memref<32x128xf32, #tpu.memory_space<any>> -> memref<1x128xf32, #tpu.memory_space<any>>
    %c5_i32_995 = arith.constant 5 : i32
    %c0_i32_996 = arith.constant 0 : i32
    %951 = tpu.memref_slice %arg6[%c0_i32_991, %c5_i32_995, %c0_i32_996] : memref<2x8x128xf32, #tpu.memory_space<vmem>> -> memref<1x1x128xf32, #tpu.memory_space<vmem>>
    %952 = tpu.memref_squeeze %951 : memref<1x1x128xf32, #tpu.memory_space<vmem>> -> memref<1x128xf32, #tpu.memory_space<vmem>>
    %953 = tpu.memref_slice %arg7[%c0_i32_992, %c5_i32_993] : memref<2x8x!tpu.dma_semaphore, #tpu.memory_space<semaphore_mem>> -> memref<1x1x!tpu.dma_semaphore, #tpu.memory_space<semaphore_mem>>
    %954 = tpu.memref_squeeze %953 : memref<1x1x!tpu.dma_semaphore, #tpu.memory_space<semaphore_mem>> -> memref<!tpu.dma_semaphore, #tpu.memory_space<semaphore_mem>>
    tpu.wait_dma2 semaphore(%954 : memref<!tpu.dma_semaphore, #tpu.memory_space<semaphore_mem>>) src(%950 : memref<1x128xf32, #tpu.memory_space<any>>) dst(%952 : memref<1x128xf32, #tpu.memory_space<vmem>>)
    %c0_i32_997 = arith.constant 0 : i32
    %c0_i32_998 = arith.constant 0 : i32
    %c6_i32_999 = arith.constant 6 : i32
    %c0_i32_1000 = arith.constant 0 : i32
    %955 = tpu.memref_slice %arg4[%782, %c0_i32_1000] : memref<32x128xf32, #tpu.memory_space<any>> -> memref<1x128xf32, #tpu.memory_space<any>>
    %c6_i32_1001 = arith.constant 6 : i32
    %c0_i32_1002 = arith.constant 0 : i32
    %956 = tpu.memref_slice %arg6[%c0_i32_997, %c6_i32_1001, %c0_i32_1002] : memref<2x8x128xf32, #tpu.memory_space<vmem>> -> memref<1x1x128xf32, #tpu.memory_space<vmem>>
    %957 = tpu.memref_squeeze %956 : memref<1x1x128xf32, #tpu.memory_space<vmem>> -> memref<1x128xf32, #tpu.memory_space<vmem>>
    %958 = tpu.memref_slice %arg7[%c0_i32_998, %c6_i32_999] : memref<2x8x!tpu.dma_semaphore, #tpu.memory_space<semaphore_mem>> -> memref<1x1x!tpu.dma_semaphore, #tpu.memory_space<semaphore_mem>>
    %959 = tpu.memref_squeeze %958 : memref<1x1x!tpu.dma_semaphore, #tpu.memory_space<semaphore_mem>> -> memref<!tpu.dma_semaphore, #tpu.memory_space<semaphore_mem>>
    tpu.wait_dma2 semaphore(%959 : memref<!tpu.dma_semaphore, #tpu.memory_space<semaphore_mem>>) src(%955 : memref<1x128xf32, #tpu.memory_space<any>>) dst(%957 : memref<1x128xf32, #tpu.memory_space<vmem>>)
    %c0_i32_1003 = arith.constant 0 : i32
    %c0_i32_1004 = arith.constant 0 : i32
    %c7_i32_1005 = arith.constant 7 : i32
    %c0_i32_1006 = arith.constant 0 : i32
    %960 = tpu.memref_slice %arg4[%792, %c0_i32_1006] : memref<32x128xf32, #tpu.memory_space<any>> -> memref<1x128xf32, #tpu.memory_space<any>>
    %c7_i32_1007 = arith.constant 7 : i32
    %c0_i32_1008 = arith.constant 0 : i32
    %961 = tpu.memref_slice %arg6[%c0_i32_1003, %c7_i32_1007, %c0_i32_1008] : memref<2x8x128xf32, #tpu.memory_space<vmem>> -> memref<1x1x128xf32, #tpu.memory_space<vmem>>
    %962 = tpu.memref_squeeze %961 : memref<1x1x128xf32, #tpu.memory_space<vmem>> -> memref<1x128xf32, #tpu.memory_space<vmem>>
    %963 = tpu.memref_slice %arg7[%c0_i32_1004, %c7_i32_1005] : memref<2x8x!tpu.dma_semaphore, #tpu.memory_space<semaphore_mem>> -> memref<1x1x!tpu.dma_semaphore, #tpu.memory_space<semaphore_mem>>
    %964 = tpu.memref_squeeze %963 : memref<1x1x!tpu.dma_semaphore, #tpu.memory_space<semaphore_mem>> -> memref<!tpu.dma_semaphore, #tpu.memory_space<semaphore_mem>>
    tpu.wait_dma2 semaphore(%964 : memref<!tpu.dma_semaphore, #tpu.memory_space<semaphore_mem>>) src(%960 : memref<1x128xf32, #tpu.memory_space<any>>) dst(%962 : memref<1x128xf32, #tpu.memory_space<vmem>>)
    %c0_1009 = arith.constant 0 : index
    %c0_1010 = arith.constant 0 : index
    %c0_1011 = arith.constant 0 : index
    %965 = vector.load %arg6[%c0_1009, %c0_1010, %c0_1011] : memref<2x8x128xf32, #tpu.memory_space<vmem>>, vector<1x8x128xf32>
    %966 = vector.shape_cast %965 : vector<1x8x128xf32> to vector<8x128xf32>
    %c6_1012 = arith.constant 6 : index
    %c0_1013 = arith.constant 0 : index
    %967 = vector.load %arg8[%c6_1012, %c0_1013] : memref<8x128xf32, #tpu.memory_space<vmem>>, vector<1x128xf32>
    %cst_1014 = arith.constant dense<0.000000e+00> : vector<128xf32>
    %968 = vector.multi_reduction <add>, %966, %cst_1014 [0] : vector<8x128xf32> to vector<128xf32>
    %969 = vector.shape_cast %968 : vector<128xf32> to vector<1x128xf32>
    %970 = arith.addf %967, %969 : vector<1x128xf32>
    %c6_1015 = arith.constant 6 : index
    %c0_1016 = arith.constant 0 : index
    %971 = vector.load %arg8[%c6_1015, %c0_1016] : memref<8x128xf32, #tpu.memory_space<vmem>>, vector<1x128xf32>
    tpu.vector_store %arg8[%c6_1015, %c0_1016], %970 {strides = array<i32>} : memref<8x128xf32, #tpu.memory_space<vmem>>, vector<1x128xf32>,
    %c1_i32_1017 = arith.constant 1 : i32
    %c1_i32_1018 = arith.constant 1 : i32
    %c0_i32_1019 = arith.constant 0 : i32
    %c0_i32_1020 = arith.constant 0 : i32
    %972 = tpu.memref_slice %arg4[%849, %c0_i32_1020] : memref<32x128xf32, #tpu.memory_space<any>> -> memref<1x128xf32, #tpu.memory_space<any>>
    %c0_i32_1021 = arith.constant 0 : i32
    %c0_i32_1022 = arith.constant 0 : i32
    %973 = tpu.memref_slice %arg6[%c1_i32_1017, %c0_i32_1021, %c0_i32_1022] : memref<2x8x128xf32, #tpu.memory_space<vmem>> -> memref<1x1x128xf32, #tpu.memory_space<vmem>>
    %974 = tpu.memref_squeeze %973 : memref<1x1x128xf32, #tpu.memory_space<vmem>> -> memref<1x128xf32, #tpu.memory_space<vmem>>
    %975 = tpu.memref_slice %arg7[%c1_i32_1018, %c0_i32_1019] : memref<2x8x!tpu.dma_semaphore, #tpu.memory_space<semaphore_mem>> -> memref<1x1x!tpu.dma_semaphore, #tpu.memory_space<semaphore_mem>>
    %976 = tpu.memref_squeeze %975 : memref<1x1x!tpu.dma_semaphore, #tpu.memory_space<semaphore_mem>> -> memref<!tpu.dma_semaphore, #tpu.memory_space<semaphore_mem>>
    tpu.wait_dma2 semaphore(%976 : memref<!tpu.dma_semaphore, #tpu.memory_space<semaphore_mem>>) src(%972 : memref<1x128xf32, #tpu.memory_space<any>>) dst(%974 : memref<1x128xf32, #tpu.memory_space<vmem>>)
    %c1_i32_1023 = arith.constant 1 : i32
    %c1_i32_1024 = arith.constant 1 : i32
    %c1_i32_1025 = arith.constant 1 : i32
    %c0_i32_1026 = arith.constant 0 : i32
    %977 = tpu.memref_slice %arg4[%859, %c0_i32_1026] : memref<32x128xf32, #tpu.memory_space<any>> -> memref<1x128xf32, #tpu.memory_space<any>>
    %c1_i32_1027 = arith.constant 1 : i32
    %c0_i32_1028 = arith.constant 0 : i32
    %978 = tpu.memref_slice %arg6[%c1_i32_1023, %c1_i32_1027, %c0_i32_1028] : memref<2x8x128xf32, #tpu.memory_space<vmem>> -> memref<1x1x128xf32, #tpu.memory_space<vmem>>
    %979 = tpu.memref_squeeze %978 : memref<1x1x128xf32, #tpu.memory_space<vmem>> -> memref<1x128xf32, #tpu.memory_space<vmem>>
    %980 = tpu.memref_slice %arg7[%c1_i32_1024, %c1_i32_1025] : memref<2x8x!tpu.dma_semaphore, #tpu.memory_space<semaphore_mem>> -> memref<1x1x!tpu.dma_semaphore, #tpu.memory_space<semaphore_mem>>
    %981 = tpu.memref_squeeze %980 : memref<1x1x!tpu.dma_semaphore, #tpu.memory_space<semaphore_mem>> -> memref<!tpu.dma_semaphore, #tpu.memory_space<semaphore_mem>>
    tpu.wait_dma2 semaphore(%981 : memref<!tpu.dma_semaphore, #tpu.memory_space<semaphore_mem>>) src(%977 : memref<1x128xf32, #tpu.memory_space<any>>) dst(%979 : memref<1x128xf32, #tpu.memory_space<vmem>>)
    %c1_i32_1029 = arith.constant 1 : i32
    %c1_i32_1030 = arith.constant 1 : i32
    %c2_i32_1031 = arith.constant 2 : i32
    %c0_i32_1032 = arith.constant 0 : i32
    %982 = tpu.memref_slice %arg4[%869, %c0_i32_1032] : memref<32x128xf32, #tpu.memory_space<any>> -> memref<1x128xf32, #tpu.memory_space<any>>
    %c2_i32_1033 = arith.constant 2 : i32
    %c0_i32_1034 = arith.constant 0 : i32
    %983 = tpu.memref_slice %arg6[%c1_i32_1029, %c2_i32_1033, %c0_i32_1034] : memref<2x8x128xf32, #tpu.memory_space<vmem>> -> memref<1x1x128xf32, #tpu.memory_space<vmem>>
    %984 = tpu.memref_squeeze %983 : memref<1x1x128xf32, #tpu.memory_space<vmem>> -> memref<1x128xf32, #tpu.memory_space<vmem>>
    %985 = tpu.memref_slice %arg7[%c1_i32_1030, %c2_i32_1031] : memref<2x8x!tpu.dma_semaphore, #tpu.memory_space<semaphore_mem>> -> memref<1x1x!tpu.dma_semaphore, #tpu.memory_space<semaphore_mem>>
    %986 = tpu.memref_squeeze %985 : memref<1x1x!tpu.dma_semaphore, #tpu.memory_space<semaphore_mem>> -> memref<!tpu.dma_semaphore, #tpu.memory_space<semaphore_mem>>
    tpu.wait_dma2 semaphore(%986 : memref<!tpu.dma_semaphore, #tpu.memory_space<semaphore_mem>>) src(%982 : memref<1x128xf32, #tpu.memory_space<any>>) dst(%984 : memref<1x128xf32, #tpu.memory_space<vmem>>)
    %c1_i32_1035 = arith.constant 1 : i32
    %c1_i32_1036 = arith.constant 1 : i32
    %c3_i32_1037 = arith.constant 3 : i32
    %c0_i32_1038 = arith.constant 0 : i32
    %987 = tpu.memref_slice %arg4[%879, %c0_i32_1038] : memref<32x128xf32, #tpu.memory_space<any>> -> memref<1x128xf32, #tpu.memory_space<any>>
    %c3_i32_1039 = arith.constant 3 : i32
    %c0_i32_1040 = arith.constant 0 : i32
    %988 = tpu.memref_slice %arg6[%c1_i32_1035, %c3_i32_1039, %c0_i32_1040] : memref<2x8x128xf32, #tpu.memory_space<vmem>> -> memref<1x1x128xf32, #tpu.memory_space<vmem>>
    %989 = tpu.memref_squeeze %988 : memref<1x1x128xf32, #tpu.memory_space<vmem>> -> memref<1x128xf32, #tpu.memory_space<vmem>>
    %990 = tpu.memref_slice %arg7[%c1_i32_1036, %c3_i32_1037] : memref<2x8x!tpu.dma_semaphore, #tpu.memory_space<semaphore_mem>> -> memref<1x1x!tpu.dma_semaphore, #tpu.memory_space<semaphore_mem>>
    %991 = tpu.memref_squeeze %990 : memref<1x1x!tpu.dma_semaphore, #tpu.memory_space<semaphore_mem>> -> memref<!tpu.dma_semaphore, #tpu.memory_space<semaphore_mem>>
    tpu.wait_dma2 semaphore(%991 : memref<!tpu.dma_semaphore, #tpu.memory_space<semaphore_mem>>) src(%987 : memref<1x128xf32, #tpu.memory_space<any>>) dst(%989 : memref<1x128xf32, #tpu.memory_space<vmem>>)
    %c1_i32_1041 = arith.constant 1 : i32
    %c1_i32_1042 = arith.constant 1 : i32
    %c4_i32_1043 = arith.constant 4 : i32
    %c0_i32_1044 = arith.constant 0 : i32
    %992 = tpu.memref_slice %arg4[%889, %c0_i32_1044] : memref<32x128xf32, #tpu.memory_space<any>> -> memref<1x128xf32, #tpu.memory_space<any>>
    %c4_i32_1045 = arith.constant 4 : i32
    %c0_i32_1046 = arith.constant 0 : i32
    %993 = tpu.memref_slice %arg6[%c1_i32_1041, %c4_i32_1045, %c0_i32_1046] : memref<2x8x128xf32, #tpu.memory_space<vmem>> -> memref<1x1x128xf32, #tpu.memory_space<vmem>>
    %994 = tpu.memref_squeeze %993 : memref<1x1x128xf32, #tpu.memory_space<vmem>> -> memref<1x128xf32, #tpu.memory_space<vmem>>
    %995 = tpu.memref_slice %arg7[%c1_i32_1042, %c4_i32_1043] : memref<2x8x!tpu.dma_semaphore, #tpu.memory_space<semaphore_mem>> -> memref<1x1x!tpu.dma_semaphore, #tpu.memory_space<semaphore_mem>>
    %996 = tpu.memref_squeeze %995 : memref<1x1x!tpu.dma_semaphore, #tpu.memory_space<semaphore_mem>> -> memref<!tpu.dma_semaphore, #tpu.memory_space<semaphore_mem>>
    tpu.wait_dma2 semaphore(%996 : memref<!tpu.dma_semaphore, #tpu.memory_space<semaphore_mem>>) src(%992 : memref<1x128xf32, #tpu.memory_space<any>>) dst(%994 : memref<1x128xf32, #tpu.memory_space<vmem>>)
    %c1_i32_1047 = arith.constant 1 : i32
    %c1_i32_1048 = arith.constant 1 : i32
    %c5_i32_1049 = arith.constant 5 : i32
    %c0_i32_1050 = arith.constant 0 : i32
    %997 = tpu.memref_slice %arg4[%899, %c0_i32_1050] : memref<32x128xf32, #tpu.memory_space<any>> -> memref<1x128xf32, #tpu.memory_space<any>>
    %c5_i32_1051 = arith.constant 5 : i32
    %c0_i32_1052 = arith.constant 0 : i32
    %998 = tpu.memref_slice %arg6[%c1_i32_1047, %c5_i32_1051, %c0_i32_1052] : memref<2x8x128xf32, #tpu.memory_space<vmem>> -> memref<1x1x128xf32, #tpu.memory_space<vmem>>
    %999 = tpu.memref_squeeze %998 : memref<1x1x128xf32, #tpu.memory_space<vmem>> -> memref<1x128xf32, #tpu.memory_space<vmem>>
    %1000 = tpu.memref_slice %arg7[%c1_i32_1048, %c5_i32_1049] : memref<2x8x!tpu.dma_semaphore, #tpu.memory_space<semaphore_mem>> -> memref<1x1x!tpu.dma_semaphore, #tpu.memory_space<semaphore_mem>>
    %1001 = tpu.memref_squeeze %1000 : memref<1x1x!tpu.dma_semaphore, #tpu.memory_space<semaphore_mem>> -> memref<!tpu.dma_semaphore, #tpu.memory_space<semaphore_mem>>
    tpu.wait_dma2 semaphore(%1001 : memref<!tpu.dma_semaphore, #tpu.memory_space<semaphore_mem>>) src(%997 : memref<1x128xf32, #tpu.memory_space<any>>) dst(%999 : memref<1x128xf32, #tpu.memory_space<vmem>>)
    %c1_i32_1053 = arith.constant 1 : i32
    %c1_i32_1054 = arith.constant 1 : i32
    %c6_i32_1055 = arith.constant 6 : i32
    %c0_i32_1056 = arith.constant 0 : i32
    %1002 = tpu.memref_slice %arg4[%909, %c0_i32_1056] : memref<32x128xf32, #tpu.memory_space<any>> -> memref<1x128xf32, #tpu.memory_space<any>>
    %c6_i32_1057 = arith.constant 6 : i32
    %c0_i32_1058 = arith.constant 0 : i32
    %1003 = tpu.memref_slice %arg6[%c1_i32_1053, %c6_i32_1057, %c0_i32_1058] : memref<2x8x128xf32, #tpu.memory_space<vmem>> -> memref<1x1x128xf32, #tpu.memory_space<vmem>>
    %1004 = tpu.memref_squeeze %1003 : memref<1x1x128xf32, #tpu.memory_space<vmem>> -> memref<1x128xf32, #tpu.memory_space<vmem>>
    %1005 = tpu.memref_slice %arg7[%c1_i32_1054, %c6_i32_1055] : memref<2x8x!tpu.dma_semaphore, #tpu.memory_space<semaphore_mem>> -> memref<1x1x!tpu.dma_semaphore, #tpu.memory_space<semaphore_mem>>
    %1006 = tpu.memref_squeeze %1005 : memref<1x1x!tpu.dma_semaphore, #tpu.memory_space<semaphore_mem>> -> memref<!tpu.dma_semaphore, #tpu.memory_space<semaphore_mem>>
    tpu.wait_dma2 semaphore(%1006 : memref<!tpu.dma_semaphore, #tpu.memory_space<semaphore_mem>>) src(%1002 : memref<1x128xf32, #tpu.memory_space<any>>) dst(%1004 : memref<1x128xf32, #tpu.memory_space<vmem>>)
    %c1_i32_1059 = arith.constant 1 : i32
    %c1_i32_1060 = arith.constant 1 : i32
    %c7_i32_1061 = arith.constant 7 : i32
    %c0_i32_1062 = arith.constant 0 : i32
    %1007 = tpu.memref_slice %arg4[%919, %c0_i32_1062] : memref<32x128xf32, #tpu.memory_space<any>> -> memref<1x128xf32, #tpu.memory_space<any>>
    %c7_i32_1063 = arith.constant 7 : i32
    %c0_i32_1064 = arith.constant 0 : i32
    %1008 = tpu.memref_slice %arg6[%c1_i32_1059, %c7_i32_1063, %c0_i32_1064] : memref<2x8x128xf32, #tpu.memory_space<vmem>> -> memref<1x1x128xf32, #tpu.memory_space<vmem>>
    %1009 = tpu.memref_squeeze %1008 : memref<1x1x128xf32, #tpu.memory_space<vmem>> -> memref<1x128xf32, #tpu.memory_space<vmem>>
    %1010 = tpu.memref_slice %arg7[%c1_i32_1060, %c7_i32_1061] : memref<2x8x!tpu.dma_semaphore, #tpu.memory_space<semaphore_mem>> -> memref<1x1x!tpu.dma_semaphore, #tpu.memory_space<semaphore_mem>>
    %1011 = tpu.memref_squeeze %1010 : memref<1x1x!tpu.dma_semaphore, #tpu.memory_space<semaphore_mem>> -> memref<!tpu.dma_semaphore, #tpu.memory_space<semaphore_mem>>
    tpu.wait_dma2 semaphore(%1011 : memref<!tpu.dma_semaphore, #tpu.memory_space<semaphore_mem>>) src(%1007 : memref<1x128xf32, #tpu.memory_space<any>>) dst(%1009 : memref<1x128xf32, #tpu.memory_space<vmem>>)
    %c1_1065 = arith.constant 1 : index
    %c0_1066 = arith.constant 0 : index
    %c0_1067 = arith.constant 0 : index
    %1012 = vector.load %arg6[%c1_1065, %c0_1066, %c0_1067] : memref<2x8x128xf32, #tpu.memory_space<vmem>>, vector<1x8x128xf32>
    %1013 = vector.shape_cast %1012 : vector<1x8x128xf32> to vector<8x128xf32>
    %c7_1068 = arith.constant 7 : index
    %c0_1069 = arith.constant 0 : index
    %1014 = vector.load %arg8[%c7_1068, %c0_1069] : memref<8x128xf32, #tpu.memory_space<vmem>>, vector<1x128xf32>
    %cst_1070 = arith.constant dense<0.000000e+00> : vector<128xf32>
    %1015 = vector.multi_reduction <add>, %1013, %cst_1070 [0] : vector<8x128xf32> to vector<128xf32>
    %1016 = vector.shape_cast %1015 : vector<128xf32> to vector<1x128xf32>
    %1017 = arith.addf %1014, %1016 : vector<1x128xf32>
    %c7_1071 = arith.constant 7 : index
    %c0_1072 = arith.constant 0 : index
    %1018 = vector.load %arg8[%c7_1071, %c0_1072] : memref<8x128xf32, #tpu.memory_space<vmem>>, vector<1x128xf32>
    tpu.vector_store %arg8[%c7_1071, %c0_1072], %1017 {strides = array<i32>} : memref<8x128xf32, #tpu.memory_space<vmem>>, vector<1x128xf32>,
    %c0_1073 = arith.constant 0 : index
    %c0_1074 = arith.constant 0 : index
    %1019 = vector.load %arg8[%c0_1073, %c0_1074] : memref<8x128xf32, #tpu.memory_space<vmem>>, vector<8x128xf32>
    %cst_1075 = arith.constant 1.250000e-01 : f32
    %1020 = vector.broadcast %cst_1075 : f32 to vector<8x128xf32>
    %1021 = arith.mulf %1019, %1020 : vector<8x128xf32>
    %c0_1076 = arith.constant 0 : index
    %c0_1077 = arith.constant 0 : index
    %1022 = vector.load %arg2[%c0_1076, %c0_1077] : memref<128x128xf32, #tpu.memory_space<vmem>>, vector<128x128xf32>
    %cst_1078 = arith.constant dense<0.000000e+00> : vector<8x128xf32>
    %1023 = tpu.matmul %1021, %1022, %cst_1078 {dimension_numbers = #tpu.dot_dimension_numbers<[1], [0], [0], [1], [0, 0, 1, 1], [], []>} : vector<8x128xf32>, vector<128x128xf32>, vector<8x128xf32> -> vector<8x128xf32>
    %c0_1079 = arith.constant 0 : index
    %c0_1080 = arith.constant 0 : index
    %1024 = vector.load %arg3[%c0_1079, %c0_1080] : memref<1x128xf32, #tpu.memory_space<vmem>>, vector<1x128xf32>
    %1025 = vector.broadcast %1024 : vector<1x128xf32> to vector<8x128xf32>
    %1026 = arith.addf %1023, %1025 : vector<8x128xf32>
    %c0_1081 = arith.constant 0 : index
    %c0_1082 = arith.constant 0 : index
    %1027 = vector.load %arg5[%c0_1081, %c0_1082] : memref<8x128xf32, #tpu.memory_space<vmem>>, vector<8x128xf32>
    tpu.vector_store %arg5[%c0_1081, %c0_1082], %1026 {strides = array<i32>} : memref<8x128xf32, #tpu.memory_space<vmem>>, vector<8x128xf32>,
    return
  }
  func.func @transform_0(%arg0: i32, %arg1: memref<8x8xi32, #tpu.memory_space<smem>>) -> (i32, i32) {
    %c0_i32 = arith.constant 0 : i32
    %c0_i32_0 = arith.constant 0 : i32
    %c0_i32_1 = arith.constant 0 : i32
    return %c0_i32, %c0_i32_0 : i32, i32
  }
  func.func @transform_1(%arg0: i32, %arg1: memref<8x8xi32, #tpu.memory_space<smem>>) -> (i32, i32) {
    %c0_i32 = arith.constant 0 : i32
    %c0_i32_0 = arith.constant 0 : i32
    %c0_i32_1 = arith.constant 0 : i32
    return %c0_i32, %c0_i32_0 : i32, i32
  }
  func.func @transform_3(%arg0: i32, %arg1: memref<8x8xi32, #tpu.memory_space<smem>>) -> (i32, i32) {
    %c0_i32 = arith.constant 0 : i32
    %c0_i32_0 = arith.constant 0 : i32
    return %arg0, %c0_i32 : i32, i32
  }
}

</mosaic_0001>

<llo_original>
// kernel: tpu_custom_call.1
$region0: #{tpu_custom_call.1}
  #allocation0 [shape = 'u32[]', space=smem, size = 0x4, offset = 0x4, fixed_abs, tag = 'smem constant byte address 0x4 - core index']
  #allocation1 [shape = 'u32[72,128]{1,0:T(1,128)}', space=vmem, size = 0x9000, scoped, tag = 'internal scratch']
  #allocation2 [shape = 'f32[2,8,128]{2,1,0:T(8,128)}', space=vmem, size = 0x2000, scoped, tag = 'scratch operand']
  #allocation3 [shape = 's32[16]{0}', space=sflag, size = 0x40, scoped, tag = 'scratch operand']
  #allocation4 [shape = 'f32[8,128]{1,0:T(8,128)}', space=vmem, size = 0x1000, scoped, tag = 'scratch operand']
  #allocation5 [shape = 's32[1]{0}', space=sflag, size = 0x4, scoped, tag = 'scoped memory for tpu_custom_call.1']
  #allocation6 [shape = 'u8[4096]{0}', space=smem, size = 0x1000, scoped, tag = 'prefetched SMEM operand 0']
  #allocation11 [shape = 's32[]', space=sflag, size = 0x4, offset = 0, fixed_abs, tag = 'sflag constant byte address 0x0 - dummy sync flag']
  #allocation12 [shape = 's32[]', space=sflag, size = 0x4, offset = 0, fixed_abs, tag = 'sflag constant byte address 0x0 - dummy sync flag']
  #allocation13 [shape = 'u32[]', space=smem, size = 0x4, offset = 0x44, fixed_abs, tag = 'smem constant byte address 0x44 - assertion arg 0']
  #allocation14 [shape = 'u32[]', space=smem, size = 0x4, offset = 0x48, fixed_abs, tag = 'smem constant byte address 0x48 - assertion arg 1']
  #allocation15 [shape = 's32[]', space=sflag, size = 0x4, offset = 0, fixed_abs, tag = 'sflag constant byte address 0x0 - dummy sync flag']
  #allocation16 [shape = 's32[]', space=sflag, size = 0x4, offset = 0, fixed_abs, tag = 'sflag constant byte address 0x0 - dummy sync flag']
  #allocation17 [shape = 's32[]', space=sflag, size = 0x4, offset = 0, fixed_abs, tag = 'sflag constant byte address 0x0 - dummy sync flag']
  #allocation18 [shape = 's32[]', space=sflag, size = 0x4, offset = 0, fixed_abs, tag = 'sflag constant byte address 0x0 - dummy sync flag']
  #allocation19 [shape = 's32[]', space=sflag, size = 0x4, offset = 0, fixed_abs, tag = 'sflag constant byte address 0x0 - dummy sync flag']
  #allocation20 [shape = 's32[]', space=sflag, size = 0x4, offset = 0, fixed_abs, tag = 'sflag constant byte address 0x0 - dummy sync flag']
  #allocation21 [shape = 's32[]', space=sflag, size = 0x4, offset = 0, fixed_abs, tag = 'sflag constant byte address 0x0 - dummy sync flag']
  #allocation22 [shape = 's32[]', space=sflag, size = 0x4, offset = 0, fixed_abs, tag = 'sflag constant byte address 0x0 - dummy sync flag']
  #allocation23 [shape = 's32[]', space=sflag, size = 0x4, offset = 0, fixed_abs, tag = 'sflag constant byte address 0x0 - dummy sync flag']
  #allocation24 [shape = 's32[]', space=sflag, size = 0x4, offset = 0, fixed_abs, tag = 'sflag constant byte address 0x0 - dummy sync flag']
  #allocation25 [shape = 's32[]', space=sflag, size = 0x4, offset = 0, fixed_abs, tag = 'sflag constant byte address 0x0 - dummy sync flag']
  #allocation26 [shape = 's32[]', space=sflag, size = 0x4, offset = 0, fixed_abs, tag = 'sflag constant byte address 0x0 - dummy sync flag']
  #allocation27 [shape = 's32[]', space=sflag, size = 0x4, offset = 0, fixed_abs, tag = 'sflag constant byte address 0x0 - dummy sync flag']
  #allocation28 [shape = 's32[]', space=sflag, size = 0x4, offset = 0, fixed_abs, tag = 'sflag constant byte address 0x0 - dummy sync flag']
  #allocation29 [shape = 's32[]', space=sflag, size = 0x4, offset = 0, fixed_abs, tag = 'sflag constant byte address 0x0 - dummy sync flag']
  #allocation30 [shape = 's32[]', space=sflag, size = 0x4, offset = 0, fixed_abs, tag = 'sflag constant byte address 0x0 - dummy sync flag']
  #allocation31 [shape = 's32[]', space=sflag, size = 0x4, offset = 0, fixed_abs, tag = 'sflag constant byte address 0x0 - dummy sync flag']
  #allocation32 [shape = 's32[]', space=sflag, size = 0x4, offset = 0, fixed_abs, tag = 'sflag constant byte address 0x0 - dummy sync flag']
  #allocation33 [shape = 's32[]', space=sflag, size = 0x4, offset = 0, fixed_abs, tag = 'sflag constant byte address 0x0 - dummy sync flag']
  #allocation34 [shape = 's32[]', space=sflag, size = 0x4, offset = 0, fixed_abs, tag = 'sflag constant byte address 0x0 - dummy sync flag']
  #allocation35 [shape = 's32[]', space=sflag, size = 0x4, offset = 0, fixed_abs, tag = 'sflag constant byte address 0x0 - dummy sync flag']
  #allocation36 [shape = 's32[]', space=sflag, size = 0x4, offset = 0, fixed_abs, tag = 'sflag constant byte address 0x0 - dummy sync flag']
  #allocation37 [shape = 's32[]', space=sflag, size = 0x4, offset = 0, fixed_abs, tag = 'sflag constant byte address 0x0 - dummy sync flag']
  #allocation38 [shape = 's32[]', space=sflag, size = 0x4, offset = 0, fixed_abs, tag = 'sflag constant byte address 0x0 - dummy sync flag']
  #allocation39 [shape = 's32[]', space=sflag, size = 0x4, offset = 0, fixed_abs, tag = 'sflag constant byte address 0x0 - dummy sync flag']
  #allocation40 [shape = 's32[]', space=sflag, size = 0x4, offset = 0, fixed_abs, tag = 'sflag constant byte address 0x0 - dummy sync flag']
  #allocation41 [shape = 's32[]', space=sflag, size = 0x4, offset = 0, fixed_abs, tag = 'sflag constant byte address 0x0 - dummy sync flag']
  #allocation42 [shape = 's32[]', space=sflag, size = 0x4, offset = 0, fixed_abs, tag = 'sflag constant byte address 0x0 - dummy sync flag']
  #allocation43 [shape = 's32[]', space=sflag, size = 0x4, offset = 0, fixed_abs, tag = 'sflag constant byte address 0x0 - dummy sync flag']
  #allocation44 [shape = 's32[]', space=sflag, size = 0x4, offset = 0, fixed_abs, tag = 'sflag constant byte address 0x0 - dummy sync flag']
  #allocation45 [shape = 's32[]', space=sflag, size = 0x4, offset = 0, fixed_abs, tag = 'sflag constant byte address 0x0 - dummy sync flag']
  #allocation46 [shape = 's32[]', space=sflag, size = 0x4, offset = 0, fixed_abs, tag = 'sflag constant byte address 0x0 - dummy sync flag']
  #allocation47 [shape = 's32[]', space=sflag, size = 0x4, offset = 0, fixed_abs, tag = 'sflag constant byte address 0x0 - dummy sync flag']
  #allocation48 [shape = 's32[]', space=sflag, size = 0x4, offset = 0, fixed_abs, tag = 'sflag constant byte address 0x0 - dummy sync flag']
  #allocation49 [shape = 's32[]', space=sflag, size = 0x4, offset = 0, fixed_abs, tag = 'sflag constant byte address 0x0 - dummy sync flag']
  #allocation50 [shape = 's32[]', space=sflag, size = 0x4, offset = 0, fixed_abs, tag = 'sflag constant byte address 0x0 - dummy sync flag']
  #allocation51 [shape = 's32[]', space=sflag, size = 0x4, offset = 0, fixed_abs, tag = 'sflag constant byte address 0x0 - dummy sync flag']
  #allocation52 [shape = 's32[]', space=sflag, size = 0x4, offset = 0, fixed_abs, tag = 'sflag constant byte address 0x0 - dummy sync flag']
  #allocation53 [shape = 's32[]', space=sflag, size = 0x4, offset = 0, fixed_abs, tag = 'sflag constant byte address 0x0 - dummy sync flag']
  #allocation54 [shape = 's32[]', space=sflag, size = 0x4, offset = 0, fixed_abs, tag = 'sflag constant byte address 0x0 - dummy sync flag']
  #allocation55 [shape = 's32[]', space=sflag, size = 0x4, offset = 0, fixed_abs, tag = 'sflag constant byte address 0x0 - dummy sync flag']
  #allocation56 [shape = 's32[]', space=sflag, size = 0x4, offset = 0, fixed_abs, tag = 'sflag constant byte address 0x0 - dummy sync flag']
  #allocation57 [shape = 's32[]', space=sflag, size = 0x4, offset = 0, fixed_abs, tag = 'sflag constant byte address 0x0 - dummy sync flag']
  #allocation58 [shape = 's32[]', space=sflag, size = 0x4, offset = 0, fixed_abs, tag = 'sflag constant byte address 0x0 - dummy sync flag']
  #allocation59 [shape = 's32[]', space=sflag, size = 0x4, offset = 0, fixed_abs, tag = 'sflag constant byte address 0x0 - dummy sync flag']
  #allocation60 [shape = 's32[]', space=sflag, size = 0x4, offset = 0, fixed_abs, tag = 'sflag constant byte address 0x0 - dummy sync flag']
  #allocation61 [shape = 's32[]', space=sflag, size = 0x4, offset = 0, fixed_abs, tag = 'sflag constant byte address 0x0 - dummy sync flag']
  #allocation62 [shape = 's32[]', space=sflag, size = 0x4, offset = 0, fixed_abs, tag = 'sflag constant byte address 0x0 - dummy sync flag']
  #allocation63 [shape = 's32[]', space=sflag, size = 0x4, offset = 0, fixed_abs, tag = 'sflag constant byte address 0x0 - dummy sync flag']
  #allocation64 [shape = 's32[]', space=sflag, size = 0x4, offset = 0, fixed_abs, tag = 'sflag constant byte address 0x0 - dummy sync flag']
  #allocation65 [shape = 's32[]', space=sflag, size = 0x4, offset = 0, fixed_abs, tag = 'sflag constant byte address 0x0 - dummy sync flag']
  #allocation66 [shape = 's32[]', space=sflag, size = 0x4, offset = 0, fixed_abs, tag = 'sflag constant byte address 0x0 - dummy sync flag']
  #allocation67 [shape = 's32[]', space=sflag, size = 0x4, offset = 0, fixed_abs, tag = 'sflag constant byte address 0x0 - dummy sync flag']
  #allocation68 [shape = 's32[]', space=sflag, size = 0x4, offset = 0, fixed_abs, tag = 'sflag constant byte address 0x0 - dummy sync flag']
  #allocation69 [shape = 's32[]', space=sflag, size = 0x4, offset = 0, fixed_abs, tag = 'sflag constant byte address 0x0 - dummy sync flag']
  #allocation70 [shape = 's32[]', space=sflag, size = 0x4, offset = 0, fixed_abs, tag = 'sflag constant byte address 0x0 - dummy sync flag']
  #allocation71 [shape = 's32[]', space=sflag, size = 0x4, offset = 0, fixed_abs, tag = 'sflag constant byte address 0x0 - dummy sync flag']
  #allocation72 [shape = 's32[]', space=sflag, size = 0x4, offset = 0, fixed_abs, tag = 'sflag constant byte address 0x0 - dummy sync flag']
  #allocation73 [shape = 's32[]', space=sflag, size = 0x4, offset = 0, fixed_abs, tag = 'sflag constant byte address 0x0 - dummy sync flag']
  #allocation74 [shape = 's32[]', space=sflag, size = 0x4, offset = 0, fixed_abs, tag = 'sflag constant byte address 0x0 - dummy sync flag']
  #allocation75 [shape = 's32[]', space=sflag, size = 0x4, offset = 0, fixed_abs, tag = 'sflag constant byte address 0x0 - dummy sync flag']
  #allocation76 [shape = 's32[]', space=sflag, size = 0x4, offset = 0, fixed_abs, tag = 'sflag constant byte address 0x0 - dummy sync flag']
  #allocation77 [shape = 's32[]', space=sflag, size = 0x4, offset = 0, fixed_abs, tag = 'sflag constant byte address 0x0 - dummy sync flag']
  #allocation78 [shape = 's32[]', space=sflag, size = 0x4, offset = 0, fixed_abs, tag = 'sflag constant byte address 0x0 - dummy sync flag']
  #allocation79 [shape = 's32[]', space=sflag, size = 0x4, offset = 0, fixed_abs, tag = 'sflag constant byte address 0x0 - dummy sync flag']
  #allocation80 [shape = 's32[]', space=sflag, size = 0x4, offset = 0, fixed_abs, tag = 'sflag constant byte address 0x0 - dummy sync flag']
  #allocation81 [shape = 's32[]', space=sflag, size = 0x4, offset = 0, fixed_abs, tag = 'sflag constant byte address 0x0 - dummy sync flag']
  #allocation82 [shape = 's32[]', space=sflag, size = 0x4, offset = 0, fixed_abs, tag = 'sflag constant byte address 0x0 - dummy sync flag']
  #allocation83 [shape = 's32[]', space=sflag, size = 0x4, offset = 0, fixed_abs, tag = 'sflag constant byte address 0x0 - dummy sync flag']
  #allocation84 [shape = 's32[]', space=sflag, size = 0x4, offset = 0, fixed_abs, tag = 'sflag constant byte address 0x0 - dummy sync flag']
  #allocation85 [shape = 's32[]', space=sflag, size = 0x4, offset = 0, fixed_abs, tag = 'sflag constant byte address 0x0 - dummy sync flag']
  #allocation86 [shape = 's32[]', space=sflag, size = 0x4, offset = 0, fixed_abs, tag = 'sflag constant byte address 0x0 - dummy sync flag']
  #allocation87 [shape = 's32[]', space=sflag, size = 0x4, offset = 0, fixed_abs, tag = 'sflag constant byte address 0x0 - dummy sync flag']
  #allocation88 [shape = 's32[]', space=sflag, size = 0x4, offset = 0, fixed_abs, tag = 'sflag constant byte address 0x0 - dummy sync flag']
  #allocation89 [shape = 's32[]', space=sflag, size = 0x4, offset = 0, fixed_abs, tag = 'sflag constant byte address 0x0 - dummy sync flag']
  #allocation90 [shape = 's32[]', space=sflag, size = 0x4, offset = 0, fixed_abs, tag = 'sflag constant byte address 0x0 - dummy sync flag']
  #allocation91 [shape = 's32[]', space=sflag, size = 0x4, offset = 0, fixed_abs, tag = 'sflag constant byte address 0x0 - dummy sync flag']
  #allocation92 [shape = 's32[]', space=sflag, size = 0x4, offset = 0, fixed_abs, tag = 'sflag constant byte address 0x0 - dummy sync flag']
  #allocation93 [shape = 's32[]', space=sflag, size = 0x4, offset = 0, fixed_abs, tag = 'sflag constant byte address 0x0 - dummy sync flag']
  #allocation94 [shape = 's32[]', space=sflag, size = 0x4, offset = 0, fixed_abs, tag = 'sflag constant byte address 0x0 - dummy sync flag']
  #allocation95 [shape = 's32[]', space=sflag, size = 0x4, offset = 0, fixed_abs, tag = 'sflag constant byte address 0x0 - dummy sync flag']
  #allocation96 [shape = 's32[]', space=sflag, size = 0x4, offset = 0, fixed_abs, tag = 'sflag constant byte address 0x0 - dummy sync flag']
  #allocation97 [shape = 's32[]', space=sflag, size = 0x4, offset = 0, fixed_abs, tag = 'sflag constant byte address 0x0 - dummy sync flag']
  #allocation98 [shape = 's32[]', space=sflag, size = 0x4, offset = 0, fixed_abs, tag = 'sflag constant byte address 0x0 - dummy sync flag']
  #allocation99 [shape = 's32[]', space=sflag, size = 0x4, offset = 0, fixed_abs, tag = 'sflag constant byte address 0x0 - dummy sync flag']
  #allocation100 [shape = 's32[]', space=sflag, size = 0x4, offset = 0, fixed_abs, tag = 'sflag constant byte address 0x0 - dummy sync flag']
  #allocation101 [shape = 's32[]', space=sflag, size = 0x4, offset = 0, fixed_abs, tag = 'sflag constant byte address 0x0 - dummy sync flag']
  #allocation102 [shape = 's32[]', space=sflag, size = 0x4, offset = 0, fixed_abs, tag = 'sflag constant byte address 0x0 - dummy sync flag']
  #allocation103 [shape = 's32[]', space=sflag, size = 0x4, offset = 0, fixed_abs, tag = 'sflag constant byte address 0x0 - dummy sync flag']
  #allocation104 [shape = 's32[]', space=sflag, size = 0x4, offset = 0, fixed_abs, tag = 'sflag constant byte address 0x0 - dummy sync flag']
  #allocation105 [shape = 's32[]', space=sflag, size = 0x4, offset = 0, fixed_abs, tag = 'sflag constant byte address 0x0 - dummy sync flag']
  #allocation106 [shape = 's32[]', space=sflag, size = 0x4, offset = 0, fixed_abs, tag = 'sflag constant byte address 0x0 - dummy sync flag']
  #allocation107 [shape = 's32[]', space=sflag, size = 0x4, offset = 0, fixed_abs, tag = 'sflag constant byte address 0x0 - dummy sync flag']
  #allocation108 [shape = 's32[]', space=sflag, size = 0x4, offset = 0, fixed_abs, tag = 'sflag constant byte address 0x0 - dummy sync flag']
  #allocation109 [shape = 's32[]', space=sflag, size = 0x4, offset = 0, fixed_abs, tag = 'sflag constant byte address 0x0 - dummy sync flag']
  #allocation110 [shape = 's32[]', space=sflag, size = 0x4, offset = 0, fixed_abs, tag = 'sflag constant byte address 0x0 - dummy sync flag']
  #allocation111 [shape = 's32[]', space=sflag, size = 0x4, offset = 0, fixed_abs, tag = 'sflag constant byte address 0x0 - dummy sync flag']
  #allocation112 [shape = 's32[]', space=sflag, size = 0x4, offset = 0, fixed_abs, tag = 'sflag constant byte address 0x0 - dummy sync flag']
  #allocation113 [shape = 's32[]', space=sflag, size = 0x4, offset = 0, fixed_abs, tag = 'sflag constant byte address 0x0 - dummy sync flag']
  #allocation114 [shape = 's32[]', space=sflag, size = 0x4, offset = 0, fixed_abs, tag = 'sflag constant byte address 0x0 - dummy sync flag']
  #allocation115 [shape = 's32[]', space=sflag, size = 0x4, offset = 0, fixed_abs, tag = 'sflag constant byte address 0x0 - dummy sync flag']
  #allocation116 [shape = 's32[]', space=sflag, size = 0x4, offset = 0, fixed_abs, tag = 'sflag constant byte address 0x0 - dummy sync flag']
  #allocation117 [shape = 's32[]', space=sflag, size = 0x4, offset = 0, fixed_abs, tag = 'sflag constant byte address 0x0 - dummy sync flag']
  #allocation118 [shape = 's32[]', space=sflag, size = 0x4, offset = 0, fixed_abs, tag = 'sflag constant byte address 0x0 - dummy sync flag']
  #allocation119 [shape = 's32[]', space=sflag, size = 0x4, offset = 0, fixed_abs, tag = 'sflag constant byte address 0x0 - dummy sync flag']
  #allocation120 [shape = 's32[]', space=sflag, size = 0x4, offset = 0, fixed_abs, tag = 'sflag constant byte address 0x0 - dummy sync flag']
  #allocation121 [shape = 's32[]', space=sflag, size = 0x4, offset = 0, fixed_abs, tag = 'sflag constant byte address 0x0 - dummy sync flag']
  #allocation122 [shape = 's32[]', space=sflag, size = 0x4, offset = 0, fixed_abs, tag = 'sflag constant byte address 0x0 - dummy sync flag']
  #allocation123 [shape = 's32[]', space=sflag, size = 0x4, offset = 0, fixed_abs, tag = 'sflag constant byte address 0x0 - dummy sync flag']
  #allocation124 [shape = 's32[]', space=sflag, size = 0x4, offset = 0, fixed_abs, tag = 'sflag constant byte address 0x0 - dummy sync flag']
  #allocation125 [shape = 's32[]', space=sflag, size = 0x4, offset = 0, fixed_abs, tag = 'sflag constant byte address 0x0 - dummy sync flag']
  #allocation126 [shape = 's32[]', space=sflag, size = 0x4, offset = 0, fixed_abs, tag = 'sflag constant byte address 0x0 - dummy sync flag']
  #allocation127 [shape = 's32[]', space=sflag, size = 0x4, offset = 0, fixed_abs, tag = 'sflag constant byte address 0x0 - dummy sync flag']
  #allocation128 [shape = 's32[]', space=sflag, size = 0x4, offset = 0, fixed_abs, tag = 'sflag constant byte address 0x0 - dummy sync flag']
  #allocation129 [shape = 's32[]', space=sflag, size = 0x4, offset = 0, fixed_abs, tag = 'sflag constant byte address 0x0 - dummy sync flag']
  #allocation130 [shape = 's32[]', space=sflag, size = 0x4, offset = 0, fixed_abs, tag = 'sflag constant byte address 0x0 - dummy sync flag']
  #allocation131 [shape = 's32[]', space=sflag, size = 0x4, offset = 0, fixed_abs, tag = 'sflag constant byte address 0x0 - dummy sync flag']
  #allocation132 [shape = 's32[]', space=sflag, size = 0x4, offset = 0, fixed_abs, tag = 'sflag constant byte address 0x0 - dummy sync flag']
  #allocation133 [shape = 's32[]', space=sflag, size = 0x4, offset = 0, fixed_abs, tag = 'sflag constant byte address 0x0 - dummy sync flag']
  #allocation134 [shape = 's32[]', space=sflag, size = 0x4, offset = 0, fixed_abs, tag = 'sflag constant byte address 0x0 - dummy sync flag']
  #allocation135 [shape = 's32[]', space=sflag, size = 0x4, offset = 0, fixed_abs, tag = 'sflag constant byte address 0x0 - dummy sync flag']
  #allocation136 [shape = 's32[]', space=sflag, size = 0x4, offset = 0, fixed_abs, tag = 'sflag constant byte address 0x0 - dummy sync flag']
  #allocation137 [shape = 's32[]', space=sflag, size = 0x4, offset = 0, fixed_abs, tag = 'sflag constant byte address 0x0 - dummy sync flag']
  #allocation138 [shape = 's32[]', space=sflag, size = 0x4, offset = 0, fixed_abs, tag = 'sflag constant byte address 0x0 - dummy sync flag']
  #allocation139 [shape = 's32[]', space=sflag, size = 0x4, offset = 0, fixed_abs, tag = 'sflag constant byte address 0x0 - dummy sync flag']
  #allocation140 [shape = 's32[]', space=sflag, size = 0x4, offset = 0, fixed_abs, tag = 'sflag constant byte address 0x0 - dummy sync flag']
  %s0 = inlined_call_operand.hbm [shape: s32[8,8], index: 0, kind: input, shape index: {}]
  %s1 = inlined_call_operand.hbm [shape: f32[128,128], index: 1, kind: input, shape index: {}]
  %s2 = inlined_call_operand.vmem [shape: f32[1,128], index: 2, kind: input, shape index: {}]
  %s3 = inlined_call_operand.hbm [shape: f32[32,128], index: 3, kind: input, shape index: {}]
  %s4 = inlined_call_operand.hbm [shape: f32[8,128], index: 4, kind: output, shape index: {}]
  %s5 = sld [smem:[#allocation0]]
  $region278: #{tpu_custom_call.1} parent=0
    _
  %s7 = ssub.s32 1, %s5
  %s8 = scalar_select 0, %s7, %s5
  %s10 = sshll.u32 %s0, 4
  %s11 = int_to_ptr.hbm [resolvable:$true] %s10
  %13 = dma.hbm_to_smem %s11, 128, [#allocation6], [#allocation5]
  %15 = dma.done [#allocation5], 128
  %16 = sfence
  $region1: #{tpu_custom_call.1} parent=0
    #allocation7 [shape = 'u8[65536]{0}', space=vmem, size = 0x10000, scoped, tag = 'input window, operand 1, single buffered']
    #allocation8 [shape = 's32[1]{0}', space=sflag, size = 0x4, scoped, tag = 'scoped memory for tpu_custom_call.1']
    #allocation9 [shape = 's32[1]{0}', space=sflag, size = 0x4, scoped, tag = 'scoped memory for tpu_custom_call.1']
    #allocation10 [shape = 'u8[4096]{0}', space=vmem, size = 0x1000, scoped, tag = 'output window, operand 0, single buffered']
    %17 = vsyncpa [#allocation8], 0
    %18 = vsyncpa [#allocation9], 0
    // Predicated region
    $region2: #{tpu_custom_call.1} parent=1 // pred_check
      _
    $region3: #{tpu_custom_call.1} parent=1 // pred_check_branch
      %20 = sbr.rel (0) target = $region5
    $region4: #{tpu_custom_call.1} parent=1 // pred_region
      %22 = vsyncadd [#allocation8], 0
      %s23 = sshll.u32 %s1, 4
      %s24 = int_to_ptr.hbm [resolvable:$true] %s23
      %s25 = sshll.u32 [#allocation7], 4
      %s26 = int_to_ptr.vmem [resolvable:$true] %s25
      %31 = dma.hbm_to_vmem [thread:$0]  %s24, 2048, %s26, [#allocation8], 128, 128, 8
    $region5: #{tpu_custom_call.1} parent=1 // pred_fallthru
      _
    // Predicated region
    $region6: #{tpu_custom_call.1} parent=1 // pred_check
      _
    $region7: #{tpu_custom_call.1} parent=1 // pred_check_branch
      %33 = sbr.rel (0) target = $region9
    $region8: #{tpu_custom_call.1} parent=1 // pred_region
      _
    $region9: #{tpu_custom_call.1} parent=1 // pred_fallthru
      _
    // Predicated region
    $region10: #{tpu_custom_call.1} parent=1 // pred_check
      _
    $region11: #{tpu_custom_call.1} parent=1 // pred_check_branch
      %35 = sbr.rel (0) target = $region13
    $region12: #{tpu_custom_call.1} parent=1 // pred_region
      %37 = dma.done [#allocation8], 2048
    $region13: #{tpu_custom_call.1} parent=1 // pred_fallthru
      _
    %s38 = smul.u32 0, 8
    %39 = vst [vmem:[#allocation4] sm:$0xff] 0.0
    %s40 = smul.u32 %s38, 128
    %s41 = sld [smem:[#allocation6 + %s40]]
    %p42 = scmp.gt.s32.totalorder %s41, 0
    %s43 = scalar_select %p42, %s41, 0
    %p44 = scmp.lt.s32.totalorder %s43, 31
    %s45 = scalar_select %p44, %s43, 31
    %s46 = scalar_lea.hbm %s3, %s45
    // Predicated region
    $region14: #{tpu_custom_call.1} parent=1 // pred_check
      _
    $region15: #{tpu_custom_call.1} parent=1 // pred_check_branch
      %48 = sbr.rel target = $region17
    $region16: #{tpu_custom_call.1} parent=1 // pred_region
      %49 = sst [smem:[#allocation13]] [#allocation12]
      %50 = sst [smem:[#allocation14]] [#allocation11]
    $region17: #{tpu_custom_call.1} parent=1 // pred_fallthru
      _
    %52 = shalt.err (0)
    %s54 = sshll.u32 %s46, 4
    %s55 = int_to_ptr.hbm [resolvable:$true] %s54
    %s56 = sshll.u32 [#allocation2], 4
    %s57 = int_to_ptr.vmem [resolvable:$true] %s56
    %59 = dma.hbm_to_vmem [thread:$0]  %s55, 16, %s57, [#allocation3]
    %s60 = sadd.s32 %s40, 1
    %s61 = sld [smem:[#allocation6 + %s60]]
    %p62 = scmp.gt.s32.totalorder %s61, 0
    %s63 = scalar_select %p62, %s61, 0
    %p64 = scmp.lt.s32.totalorder %s63, 31
    %s65 = scalar_select %p64, %s63, 31
    %s66 = scalar_lea.hbm %s3, %s65
    %s67 = scalar_lea.vmem [#allocation2], 1
    %s68 = scalar_lea.sflag [#allocation3], 1
    // Predicated region
    $region18: #{tpu_custom_call.1} parent=1 // pred_check
      _
    $region19: #{tpu_custom_call.1} parent=1 // pred_check_branch
      %70 = sbr.rel target = $region21
    $region20: #{tpu_custom_call.1} parent=1 // pred_region
      %71 = sst [smem:[#allocation13]] [#allocation16]
      %72 = sst [smem:[#allocation14]] [#allocation15]
    $region21: #{tpu_custom_call.1} parent=1 // pred_fallthru
      _
    %74 = shalt.err (0)
    %s76 = sshll.u32 %s66, 4
    %s77 = int_to_ptr.hbm [resolvable:$true] %s76
    %s78 = sshll.u32 %s67, 4
    %s79 = int_to_ptr.vmem [resolvable:$true] %s78
    %81 = dma.hbm_to_vmem [thread:$0]  %s77, 16, %s79, %s68
    %s82 = sadd.s32 %s40, 2
    %s83 = sld [smem:[#allocation6 + %s82]]
    %p84 = scmp.gt.s32.totalorder %s83, 0
    %s85 = scalar_select %p84, %s83, 0
    %p86 = scmp.lt.s32.totalorder %s85, 31
    %s87 = scalar_select %p86, %s85, 31
    %s88 = scalar_lea.hbm %s3, %s87
    %s89 = scalar_lea.vmem [#allocation2], 2
    %s90 = scalar_lea.sflag [#allocation3], 2
    // Predicated region
    $region22: #{tpu_custom_call.1} parent=1 // pred_check
      _
    $region23: #{tpu_custom_call.1} parent=1 // pred_check_branch
      %92 = sbr.rel target = $region25
    $region24: #{tpu_custom_call.1} parent=1 // pred_region
      %93 = sst [smem:[#allocation13]] [#allocation18]
      %94 = sst [smem:[#allocation14]] [#allocation17]
    $region25: #{tpu_custom_call.1} parent=1 // pred_fallthru
      _
    %96 = shalt.err (0)
    %s98 = sshll.u32 %s88, 4
    %s99 = int_to_ptr.hbm [resolvable:$true] %s98
    %s100 = sshll.u32 %s89, 4
    %s101 = int_to_ptr.vmem [resolvable:$true] %s100
    %103 = dma.hbm_to_vmem [thread:$0]  %s99, 16, %s101, %s90
    %s104 = sadd.s32 %s40, 3
    %s105 = sld [smem:[#allocation6 + %s104]]
    %p106 = scmp.gt.s32.totalorder %s105, 0
    %s107 = scalar_select %p106, %s105, 0
    %p108 = scmp.lt.s32.totalorder %s107, 31
    %s109 = scalar_select %p108, %s107, 31
    %s110 = scalar_lea.hbm %s3, %s109
    %s111 = scalar_lea.vmem [#allocation2], 3
    %s112 = scalar_lea.sflag [#allocation3], 3
    // Predicated region
    $region26: #{tpu_custom_call.1} parent=1 // pred_check
      _
    $region27: #{tpu_custom_call.1} parent=1 // pred_check_branch
      %114 = sbr.rel target = $region29
    $region28: #{tpu_custom_call.1} parent=1 // pred_region
      %115 = sst [smem:[#allocation13]] [#allocation20]
      %116 = sst [smem:[#allocation14]] [#allocation19]
    $region29: #{tpu_custom_call.1} parent=1 // pred_fallthru
      _
    %118 = shalt.err (0)
    %s120 = sshll.u32 %s110, 4
    %s121 = int_to_ptr.hbm [resolvable:$true] %s120
    %s122 = sshll.u32 %s111, 4
    %s123 = int_to_ptr.vmem [resolvable:$true] %s122
    %125 = dma.hbm_to_vmem [thread:$0]  %s121, 16, %s123, %s112
    %s126 = sadd.s32 %s40, 4
    %s127 = sld [smem:[#allocation6 + %s126]]
    %p128 = scmp.gt.s32.totalorder %s127, 0
    %s129 = scalar_select %p128, %s127, 0
    %p130 = scmp.lt.s32.totalorder %s129, 31
    %s131 = scalar_select %p130, %s129, 31
    %s132 = scalar_lea.hbm %s3, %s131
    %s133 = scalar_lea.vmem [#allocation2], 4
    %s134 = scalar_lea.sflag [#allocation3], 4
    // Predicated region
    $region30: #{tpu_custom_call.1} parent=1 // pred_check
      _
    $region31: #{tpu_custom_call.1} parent=1 // pred_check_branch
      %136 = sbr.rel target = $region33
    $region32: #{tpu_custom_call.1} parent=1 // pred_region
      %137 = sst [smem:[#allocation13]] [#allocation22]
      %138 = sst [smem:[#allocation14]] [#allocation21]
    $region33: #{tpu_custom_call.1} parent=1 // pred_fallthru
      _
    %140 = shalt.err (0)
    %s142 = sshll.u32 %s132, 4
    %s143 = int_to_ptr.hbm [resolvable:$true] %s142
    %s144 = sshll.u32 %s133, 4
    %s145 = int_to_ptr.vmem [resolvable:$true] %s144
    %147 = dma.hbm_to_vmem [thread:$0]  %s143, 16, %s145, %s134
    %s148 = sadd.s32 %s40, 5
    %s149 = sld [smem:[#allocation6 + %s148]]
    %p150 = scmp.gt.s32.totalorder %s149, 0
    %s151 = scalar_select %p150, %s149, 0
    %p152 = scmp.lt.s32.totalorder %s151, 31
    %s153 = scalar_select %p152, %s151, 31
    %s154 = scalar_lea.hbm %s3, %s153
    %s155 = scalar_lea.vmem [#allocation2], 5
    %s156 = scalar_lea.sflag [#allocation3], 5
    // Predicated region
    $region34: #{tpu_custom_call.1} parent=1 // pred_check
      _
    $region35: #{tpu_custom_call.1} parent=1 // pred_check_branch
      %158 = sbr.rel target = $region37
    $region36: #{tpu_custom_call.1} parent=1 // pred_region
      %159 = sst [smem:[#allocation13]] [#allocation24]
      %160 = sst [smem:[#allocation14]] [#allocation23]
    $region37: #{tpu_custom_call.1} parent=1 // pred_fallthru
      _
    %162 = shalt.err (0)
    %s164 = sshll.u32 %s154, 4
    %s165 = int_to_ptr.hbm [resolvable:$true] %s164
    %s166 = sshll.u32 %s155, 4
    %s167 = int_to_ptr.vmem [resolvable:$true] %s166
    %169 = dma.hbm_to_vmem [thread:$0]  %s165, 16, %s167, %s156
    %s170 = sadd.s32 %s40, 6
    %s171 = sld [smem:[#allocation6 + %s170]]
    %p172 = scmp.gt.s32.totalorder %s171, 0
    %s173 = scalar_select %p172, %s171, 0
    %p174 = scmp.lt.s32.totalorder %s173, 31
    %s175 = scalar_select %p174, %s173, 31
    %s176 = scalar_lea.hbm %s3, %s175
    %s177 = scalar_lea.vmem [#allocation2], 6
    %s178 = scalar_lea.sflag [#allocation3], 6
    // Predicated region
    $region38: #{tpu_custom_call.1} parent=1 // pred_check
      _
    $region39: #{tpu_custom_call.1} parent=1 // pred_check_branch
      %180 = sbr.rel target = $region41
    $region40: #{tpu_custom_call.1} parent=1 // pred_region
      %181 = sst [smem:[#allocation13]] [#allocation26]
      %182 = sst [smem:[#allocation14]] [#allocation25]
    $region41: #{tpu_custom_call.1} parent=1 // pred_fallthru
      _
    %184 = shalt.err (0)
    %s186 = sshll.u32 %s176, 4
    %s187 = int_to_ptr.hbm [resolvable:$true] %s186
    %s188 = sshll.u32 %s177, 4
    %s189 = int_to_ptr.vmem [resolvable:$true] %s188
    %191 = dma.hbm_to_vmem [thread:$0]  %s187, 16, %s189, %s178
    %s192 = sadd.s32 %s40, 7
    %s193 = sld [smem:[#allocation6 + %s192]]
    %p194 = scmp.gt.s32.totalorder %s193, 0
    %s195 = scalar_select %p194, %s193, 0
    %p196 = scmp.lt.s32.totalorder %s195, 31
    %s197 = scalar_select %p196, %s195, 31
    %s198 = scalar_lea.hbm %s3, %s197
    %s199 = scalar_lea.vmem [#allocation2], 7
    %s200 = scalar_lea.sflag [#allocation3], 7
    // Predicated region
    $region42: #{tpu_custom_call.1} parent=1 // pred_check
      _
    $region43: #{tpu_custom_call.1} parent=1 // pred_check_branch
      %202 = sbr.rel target = $region45
    $region44: #{tpu_custom_call.1} parent=1 // pred_region
      %203 = sst [smem:[#allocation13]] [#allocation28]
      %204 = sst [smem:[#allocation14]] [#allocation27]
    $region45: #{tpu_custom_call.1} parent=1 // pred_fallthru
      _
    %206 = shalt.err (0)
    %s208 = sshll.u32 %s198, 4
    %s209 = int_to_ptr.hbm [resolvable:$true] %s208
    %s210 = sshll.u32 %s199, 4
    %s211 = int_to_ptr.vmem [resolvable:$true] %s210
    %213 = dma.hbm_to_vmem [thread:$0]  %s209, 16, %s211, %s200
    %s214 = sadd.s32 %s38, 1
    %s215 = smul.u32 %s214, 128
    %s216 = sld [smem:[#allocation6 + %s215]]
    %p217 = scmp.gt.s32.totalorder %s216, 0
    %s218 = scalar_select %p217, %s216, 0
    %p219 = scmp.lt.s32.totalorder %s218, 31
    %s220 = scalar_select %p219, %s218, 31
    %s221 = scalar_lea.hbm %s3, %s220
    %s222 = scalar_lea.vmem [#allocation2], 8
    %s223 = scalar_lea.sflag [#allocation3], 8
    // Predicated region
    $region46: #{tpu_custom_call.1} parent=1 // pred_check
      _
    $region47: #{tpu_custom_call.1} parent=1 // pred_check_branch
      %225 = sbr.rel target = $region49
    $region48: #{tpu_custom_call.1} parent=1 // pred_region
      %226 = sst [smem:[#allocation13]] [#allocation30]
      %227 = sst [smem:[#allocation14]] [#allocation29]
    $region49: #{tpu_custom_call.1} parent=1 // pred_fallthru
      _
    %229 = shalt.err (0)
    %s231 = sshll.u32 %s221, 4
    %s232 = int_to_ptr.hbm [resolvable:$true] %s231
    %s233 = sshll.u32 %s222, 4
    %s234 = int_to_ptr.vmem [resolvable:$true] %s233
    %236 = dma.hbm_to_vmem [thread:$0]  %s232, 16, %s234, %s223
    %s237 = sadd.s32 %s215, 1
    %s238 = sld [smem:[#allocation6 + %s237]]
    %p239 = scmp.gt.s32.totalorder %s238, 0
    %s240 = scalar_select %p239, %s238, 0
    %p241 = scmp.lt.s32.totalorder %s240, 31
    %s242 = scalar_select %p241, %s240, 31
    %s243 = scalar_lea.hbm %s3, %s242
    %s244 = scalar_lea.vmem [#allocation2], 9
    %s245 = scalar_lea.sflag [#allocation3], 9
    // Predicated region
    $region50: #{tpu_custom_call.1} parent=1 // pred_check
      _
    $region51: #{tpu_custom_call.1} parent=1 // pred_check_branch
      %247 = sbr.rel target = $region53
    $region52: #{tpu_custom_call.1} parent=1 // pred_region
      %248 = sst [smem:[#allocation13]] [#allocation32]
      %249 = sst [smem:[#allocation14]] [#allocation31]
    $region53: #{tpu_custom_call.1} parent=1 // pred_fallthru
      _
    %251 = shalt.err (0)
    %s253 = sshll.u32 %s243, 4
    %s254 = int_to_ptr.hbm [resolvable:$true] %s253
    %s255 = sshll.u32 %s244, 4
    %s256 = int_to_ptr.vmem [resolvable:$true] %s255
    %258 = dma.hbm_to_vmem [thread:$0]  %s254, 16, %s256, %s245
    %s259 = sadd.s32 %s215, 2
    %s260 = sld [smem:[#allocation6 + %s259]]
    %p261 = scmp.gt.s32.totalorder %s260, 0
    %s262 = scalar_select %p261, %s260, 0
    %p263 = scmp.lt.s32.totalorder %s262, 31
    %s264 = scalar_select %p263, %s262, 31
    %s265 = scalar_lea.hbm %s3, %s264
    %s266 = scalar_lea.vmem [#allocation2], 10
    %s267 = scalar_lea.sflag [#allocation3], 10
    // Predicated region
    $region54: #{tpu_custom_call.1} parent=1 // pred_check
      _
    $region55: #{tpu_custom_call.1} parent=1 // pred_check_branch
      %269 = sbr.rel target = $region57
    $region56: #{tpu_custom_call.1} parent=1 // pred_region
      %270 = sst [smem:[#allocation13]] [#allocation34]
      %271 = sst [smem:[#allocation14]] [#allocation33]
    $region57: #{tpu_custom_call.1} parent=1 // pred_fallthru
      _
    %273 = shalt.err (0)
    %s275 = sshll.u32 %s265, 4
    %s276 = int_to_ptr.hbm [resolvable:$true] %s275
    %s277 = sshll.u32 %s266, 4
    %s278 = int_to_ptr.vmem [resolvable:$true] %s277
    %280 = dma.hbm_to_vmem [thread:$0]  %s276, 16, %s278, %s267
    %s281 = sadd.s32 %s215, 3
    %s282 = sld [smem:[#allocation6 + %s281]]
    %p283 = scmp.gt.s32.totalorder %s282, 0
    %s284 = scalar_select %p283, %s282, 0
    %p285 = scmp.lt.s32.totalorder %s284, 31
    %s286 = scalar_select %p285, %s284, 31
    %s287 = scalar_lea.hbm %s3, %s286
    %s288 = scalar_lea.vmem [#allocation2], 11
    %s289 = scalar_lea.sflag [#allocation3], 11
    // Predicated region
    $region58: #{tpu_custom_call.1} parent=1 // pred_check
      _
    $region59: #{tpu_custom_call.1} parent=1 // pred_check_branch
      %291 = sbr.rel target = $region61
    $region60: #{tpu_custom_call.1} parent=1 // pred_region
      %292 = sst [smem:[#allocation13]] [#allocation36]
      %293 = sst [smem:[#allocation14]] [#allocation35]
    $region61: #{tpu_custom_call.1} parent=1 // pred_fallthru
      _
    %295 = shalt.err (0)
    %s297 = sshll.u32 %s287, 4
    %s298 = int_to_ptr.hbm [resolvable:$true] %s297
    %s299 = sshll.u32 %s288, 4
    %s300 = int_to_ptr.vmem [resolvable:$true] %s299
    %302 = dma.hbm_to_vmem [thread:$0]  %s298, 16, %s300, %s289
    %s303 = sadd.s32 %s215, 4
    %s304 = sld [smem:[#allocation6 + %s303]]
    %p305 = scmp.gt.s32.totalorder %s304, 0
    %s306 = scalar_select %p305, %s304, 0
    %p307 = scmp.lt.s32.totalorder %s306, 31
    %s308 = scalar_select %p307, %s306, 31
    %s309 = scalar_lea.hbm %s3, %s308
    %s310 = scalar_lea.vmem [#allocation2], 12
    %s311 = scalar_lea.sflag [#allocation3], 12
    // Predicated region
    $region62: #{tpu_custom_call.1} parent=1 // pred_check
      _
    $region63: #{tpu_custom_call.1} parent=1 // pred_check_branch
      %313 = sbr.rel target = $region65
    $region64: #{tpu_custom_call.1} parent=1 // pred_region
      %314 = sst [smem:[#allocation13]] [#allocation38]
      %315 = sst [smem:[#allocation14]] [#allocation37]
    $region65: #{tpu_custom_call.1} parent=1 // pred_fallthru
      _
    %317 = shalt.err (0)
    %s319 = sshll.u32 %s309, 4
    %s320 = int_to_ptr.hbm [resolvable:$true] %s319
    %s321 = sshll.u32 %s310, 4
    %s322 = int_to_ptr.vmem [resolvable:$true] %s321
    %324 = dma.hbm_to_vmem [thread:$0]  %s320, 16, %s322, %s311
    %s325 = sadd.s32 %s215, 5
    %s326 = sld [smem:[#allocation6 + %s325]]
    %p327 = scmp.gt.s32.totalorder %s326, 0
    %s328 = scalar_select %p327, %s326, 0
    %p329 = scmp.lt.s32.totalorder %s328, 31
    %s330 = scalar_select %p329, %s328, 31
    %s331 = scalar_lea.hbm %s3, %s330
    %s332 = scalar_lea.vmem [#allocation2], 13
    %s333 = scalar_lea.sflag [#allocation3], 13
    // Predicated region
    $region66: #{tpu_custom_call.1} parent=1 // pred_check
      _
    $region67: #{tpu_custom_call.1} parent=1 // pred_check_branch
      %335 = sbr.rel target = $region69
    $region68: #{tpu_custom_call.1} parent=1 // pred_region
      %336 = sst [smem:[#allocation13]] [#allocation40]
      %337 = sst [smem:[#allocation14]] [#allocation39]
    $region69: #{tpu_custom_call.1} parent=1 // pred_fallthru
      _
    %339 = shalt.err (0)
    %s341 = sshll.u32 %s331, 4
    %s342 = int_to_ptr.hbm [resolvable:$true] %s341
    %s343 = sshll.u32 %s332, 4
    %s344 = int_to_ptr.vmem [resolvable:$true] %s343
    %346 = dma.hbm_to_vmem [thread:$0]  %s342, 16, %s344, %s333
    %s347 = sadd.s32 %s215, 6
    %s348 = sld [smem:[#allocation6 + %s347]]
    %p349 = scmp.gt.s32.totalorder %s348, 0
    %s350 = scalar_select %p349, %s348, 0
    %p351 = scmp.lt.s32.totalorder %s350, 31
    %s352 = scalar_select %p351, %s350, 31
    %s353 = scalar_lea.hbm %s3, %s352
    %s354 = scalar_lea.vmem [#allocation2], 14
    %s355 = scalar_lea.sflag [#allocation3], 14
    // Predicated region
    $region70: #{tpu_custom_call.1} parent=1 // pred_check
      _
    $region71: #{tpu_custom_call.1} parent=1 // pred_check_branch
      %357 = sbr.rel target = $region73
    $region72: #{tpu_custom_call.1} parent=1 // pred_region
      %358 = sst [smem:[#allocation13]] [#allocation42]
      %359 = sst [smem:[#allocation14]] [#allocation41]
    $region73: #{tpu_custom_call.1} parent=1 // pred_fallthru
      _
    %361 = shalt.err (0)
    %s363 = sshll.u32 %s353, 4
    %s364 = int_to_ptr.hbm [resolvable:$true] %s363
    %s365 = sshll.u32 %s354, 4
    %s366 = int_to_ptr.vmem [resolvable:$true] %s365
    %368 = dma.hbm_to_vmem [thread:$0]  %s364, 16, %s366, %s355
    %s369 = sadd.s32 %s215, 7
    %s370 = sld [smem:[#allocation6 + %s369]]
    %p371 = scmp.gt.s32.totalorder %s370, 0
    %s372 = scalar_select %p371, %s370, 0
    %p373 = scmp.lt.s32.totalorder %s372, 31
    %s374 = scalar_select %p373, %s372, 31
    %s375 = scalar_lea.hbm %s3, %s374
    %s376 = scalar_lea.vmem [#allocation2], 15
    %s377 = scalar_lea.sflag [#allocation3], 15
    // Predicated region
    $region74: #{tpu_custom_call.1} parent=1 // pred_check
      _
    $region75: #{tpu_custom_call.1} parent=1 // pred_check_branch
      %379 = sbr.rel target = $region77
    $region76: #{tpu_custom_call.1} parent=1 // pred_region
      %380 = sst [smem:[#allocation13]] [#allocation44]
      %381 = sst [smem:[#allocation14]] [#allocation43]
    $region77: #{tpu_custom_call.1} parent=1 // pred_fallthru
      _
    %383 = shalt.err (0)
    %s385 = sshll.u32 %s375, 4
    %s386 = int_to_ptr.hbm [resolvable:$true] %s385
    %s387 = sshll.u32 %s376, 4
    %s388 = int_to_ptr.vmem [resolvable:$true] %s387
    %390 = dma.hbm_to_vmem [thread:$0]  %s386, 16, %s388, %s377
    %s391 = smul.u32 1, 1
    %s392 = sshll.u32 %s391, 4
    %393 = dma.done [#allocation3], %s392
    %s394 = sshll.u32 %s391, 4
    %395 = dma.done %s68, %s394
    %s396 = sshll.u32 %s391, 4
    %397 = dma.done %s90, %s396
    %s398 = sshll.u32 %s391, 4
    %399 = dma.done %s112, %s398
    %s400 = sshll.u32 %s391, 4
    %401 = dma.done %s134, %s400
    %s402 = sshll.u32 %s391, 4
    %403 = dma.done %s156, %s402
    %s404 = sshll.u32 %s391, 4
    %405 = dma.done %s178, %s404
    %s406 = sshll.u32 %s391, 4
    %407 = dma.done %s200, %s406
    %v408 = vld [vmem:[#allocation2] sm:$0xff]
    %v409 = vld [vmem:[#allocation4] sm:$0x1]
    %v410 = vrot.slane %v408, 4
    %v411 = vadd.f32 %v408, %v410
    %v412 = vrot.slane %v411, 2
    %v413 = vadd.f32 %v411, %v412
    %v414 = vrot.slane %v413, 1
    %v415 = vadd.f32 %v413, %v414
    %v416 = vadd.f32 %v409, %v415
    %417 = vst [vmem:[#allocation4] sm:$0x1] %v416
    %s418 = sadd.s32 %s38, 2
    %s419 = smul.u32 %s418, 128
    %s420 = sld [smem:[#allocation6 + %s419]]
    %p421 = scmp.gt.s32.totalorder %s420, 0
    %s422 = scalar_select %p421, %s420, 0
    %p423 = scmp.lt.s32.totalorder %s422, 31
    %s424 = scalar_select %p423, %s422, 31
    %s425 = scalar_lea.hbm %s3, %s424
    // Predicated region
    $region78: #{tpu_custom_call.1} parent=1 // pred_check
      _
    $region79: #{tpu_custom_call.1} parent=1 // pred_check_branch
      %427 = sbr.rel target = $region81
    $region80: #{tpu_custom_call.1} parent=1 // pred_region
      %428 = sst [smem:[#allocation13]] [#allocation46]
      %429 = sst [smem:[#allocation14]] [#allocation45]
    $region81: #{tpu_custom_call.1} parent=1 // pred_fallthru
      _
    %431 = shalt.err (0)
    %s433 = sshll.u32 %s425, 4
    %s434 = int_to_ptr.hbm [resolvable:$true] %s433
    %s435 = sshll.u32 [#allocation2], 4
    %s436 = int_to_ptr.vmem [resolvable:$true] %s435
    %438 = dma.hbm_to_vmem [thread:$0]  %s434, 16, %s436, [#allocation3]
    %s439 = sadd.s32 %s419, 1
    %s440 = sld [smem:[#allocation6 + %s439]]
    %p441 = scmp.gt.s32.totalorder %s440, 0
    %s442 = scalar_select %p441, %s440, 0
    %p443 = scmp.lt.s32.totalorder %s442, 31
    %s444 = scalar_select %p443, %s442, 31
    %s445 = scalar_lea.hbm %s3, %s444
    // Predicated region
    $region82: #{tpu_custom_call.1} parent=1 // pred_check
      _
    $region83: #{tpu_custom_call.1} parent=1 // pred_check_branch
      %447 = sbr.rel target = $region85
    $region84: #{tpu_custom_call.1} parent=1 // pred_region
      %448 = sst [smem:[#allocation13]] [#allocation48]
      %449 = sst [smem:[#allocation14]] [#allocation47]
    $region85: #{tpu_custom_call.1} parent=1 // pred_fallthru
      _
    %451 = shalt.err (0)
    %s453 = sshll.u32 %s445, 4
    %s454 = int_to_ptr.hbm [resolvable:$true] %s453
    %s455 = sshll.u32 %s67, 4
    %s456 = int_to_ptr.vmem [resolvable:$true] %s455
    %458 = dma.hbm_to_vmem [thread:$0]  %s454, 16, %s456, %s68
    %s459 = sadd.s32 %s419, 2
    %s460 = sld [smem:[#allocation6 + %s459]]
    %p461 = scmp.gt.s32.totalorder %s460, 0
    %s462 = scalar_select %p461, %s460, 0
    %p463 = scmp.lt.s32.totalorder %s462, 31
    %s464 = scalar_select %p463, %s462, 31
    %s465 = scalar_lea.hbm %s3, %s464
    // Predicated region
    $region86: #{tpu_custom_call.1} parent=1 // pred_check
      _
    $region87: #{tpu_custom_call.1} parent=1 // pred_check_branch
      %467 = sbr.rel target = $region89
    $region88: #{tpu_custom_call.1} parent=1 // pred_region
      %468 = sst [smem:[#allocation13]] [#allocation50]
      %469 = sst [smem:[#allocation14]] [#allocation49]
    $region89: #{tpu_custom_call.1} parent=1 // pred_fallthru
      _
    %471 = shalt.err (0)
    %s473 = sshll.u32 %s465, 4
    %s474 = int_to_ptr.hbm [resolvable:$true] %s473
    %s475 = sshll.u32 %s89, 4
    %s476 = int_to_ptr.vmem [resolvable:$true] %s475
    %478 = dma.hbm_to_vmem [thread:$0]  %s474, 16, %s476, %s90
    %s479 = sadd.s32 %s419, 3
    %s480 = sld [smem:[#allocation6 + %s479]]
    %p481 = scmp.gt.s32.totalorder %s480, 0
    %s482 = scalar_select %p481, %s480, 0
    %p483 = scmp.lt.s32.totalorder %s482, 31
    %s484 = scalar_select %p483, %s482, 31
    %s485 = scalar_lea.hbm %s3, %s484
    // Predicated region
    $region90: #{tpu_custom_call.1} parent=1 // pred_check
      _
    $region91: #{tpu_custom_call.1} parent=1 // pred_check_branch
      %487 = sbr.rel target = $region93
    $region92: #{tpu_custom_call.1} parent=1 // pred_region
      %488 = sst [smem:[#allocation13]] [#allocation52]
      %489 = sst [smem:[#allocation14]] [#allocation51]
    $region93: #{tpu_custom_call.1} parent=1 // pred_fallthru
      _
    %491 = shalt.err (0)
    %s493 = sshll.u32 %s485, 4
    %s494 = int_to_ptr.hbm [resolvable:$true] %s493
    %s495 = sshll.u32 %s111, 4
    %s496 = int_to_ptr.vmem [resolvable:$true] %s495
    %498 = dma.hbm_to_vmem [thread:$0]  %s494, 16, %s496, %s112
    %s499 = sadd.s32 %s419, 4
    %s500 = sld [smem:[#allocation6 + %s499]]
    %p501 = scmp.gt.s32.totalorder %s500, 0
    %s502 = scalar_select %p501, %s500, 0
    %p503 = scmp.lt.s32.totalorder %s502, 31
    %s504 = scalar_select %p503, %s502, 31
    %s505 = scalar_lea.hbm %s3, %s504
    // Predicated region
    $region94: #{tpu_custom_call.1} parent=1 // pred_check
      _
    $region95: #{tpu_custom_call.1} parent=1 // pred_check_branch
      %507 = sbr.rel target = $region97
    $region96: #{tpu_custom_call.1} parent=1 // pred_region
      %508 = sst [smem:[#allocation13]] [#allocation54]
      %509 = sst [smem:[#allocation14]] [#allocation53]
    $region97: #{tpu_custom_call.1} parent=1 // pred_fallthru
      _
    %511 = shalt.err (0)
    %s513 = sshll.u32 %s505, 4
    %s514 = int_to_ptr.hbm [resolvable:$true] %s513
    %s515 = sshll.u32 %s133, 4
    %s516 = int_to_ptr.vmem [resolvable:$true] %s515
    %518 = dma.hbm_to_vmem [thread:$0]  %s514, 16, %s516, %s134
    %s519 = sadd.s32 %s419, 5
    %s520 = sld [smem:[#allocation6 + %s519]]
    %p521 = scmp.gt.s32.totalorder %s520, 0
    %s522 = scalar_select %p521, %s520, 0
    %p523 = scmp.lt.s32.totalorder %s522, 31
    %s524 = scalar_select %p523, %s522, 31
    %s525 = scalar_lea.hbm %s3, %s524
    // Predicated region
    $region98: #{tpu_custom_call.1} parent=1 // pred_check
      _
    $region99: #{tpu_custom_call.1} parent=1 // pred_check_branch
      %527 = sbr.rel target = $region101
    $region100: #{tpu_custom_call.1} parent=1 // pred_region
      %528 = sst [smem:[#allocation13]] [#allocation56]
      %529 = sst [smem:[#allocation14]] [#allocation55]
    $region101: #{tpu_custom_call.1} parent=1 // pred_fallthru
      _
    %531 = shalt.err (0)
    %s533 = sshll.u32 %s525, 4
    %s534 = int_to_ptr.hbm [resolvable:$true] %s533
    %s535 = sshll.u32 %s155, 4
    %s536 = int_to_ptr.vmem [resolvable:$true] %s535
    %538 = dma.hbm_to_vmem [thread:$0]  %s534, 16, %s536, %s156
    %s539 = sadd.s32 %s419, 6
    %s540 = sld [smem:[#allocation6 + %s539]]
    %p541 = scmp.gt.s32.totalorder %s540, 0
    %s542 = scalar_select %p541, %s540, 0
    %p543 = scmp.lt.s32.totalorder %s542, 31
    %s544 = scalar_select %p543, %s542, 31
    %s545 = scalar_lea.hbm %s3, %s544
    // Predicated region
    $region102: #{tpu_custom_call.1} parent=1 // pred_check
      _
    $region103: #{tpu_custom_call.1} parent=1 // pred_check_branch
      %547 = sbr.rel target = $region105
    $region104: #{tpu_custom_call.1} parent=1 // pred_region
      %548 = sst [smem:[#allocation13]] [#allocation58]
      %549 = sst [smem:[#allocation14]] [#allocation57]
    $region105: #{tpu_custom_call.1} parent=1 // pred_fallthru
      _
    %551 = shalt.err (0)
    %s553 = sshll.u32 %s545, 4
    %s554 = int_to_ptr.hbm [resolvable:$true] %s553
    %s555 = sshll.u32 %s177, 4
    %s556 = int_to_ptr.vmem [resolvable:$true] %s555
    %558 = dma.hbm_to_vmem [thread:$0]  %s554, 16, %s556, %s178
    %s559 = sadd.s32 %s419, 7
    %s560 = sld [smem:[#allocation6 + %s559]]
    %p561 = scmp.gt.s32.totalorder %s560, 0
    %s562 = scalar_select %p561, %s560, 0
    %p563 = scmp.lt.s32.totalorder %s562, 31
    %s564 = scalar_select %p563, %s562, 31
    %s565 = scalar_lea.hbm %s3, %s564
    // Predicated region
    $region106: #{tpu_custom_call.1} parent=1 // pred_check
      _
    $region107: #{tpu_custom_call.1} parent=1 // pred_check_branch
      %567 = sbr.rel target = $region109
    $region108: #{tpu_custom_call.1} parent=1 // pred_region
      %568 = sst [smem:[#allocation13]] [#allocation60]
      %569 = sst [smem:[#allocation14]] [#allocation59]
    $region109: #{tpu_custom_call.1} parent=1 // pred_fallthru
      _
    %571 = shalt.err (0)
    %s573 = sshll.u32 %s565, 4
    %s574 = int_to_ptr.hbm [resolvable:$true] %s573
    %s575 = sshll.u32 %s199, 4
    %s576 = int_to_ptr.vmem [resolvable:$true] %s575
    %578 = dma.hbm_to_vmem [thread:$0]  %s574, 16, %s576, %s200
    %s579 = sshll.u32 %s391, 4
    %580 = dma.done %s223, %s579
    %s581 = sshll.u32 %s391, 4
    %582 = dma.done %s245, %s581
    %s583 = sshll.u32 %s391, 4
    %584 = dma.done %s267, %s583
    %s585 = sshll.u32 %s391, 4
    %586 = dma.done %s289, %s585
    %s587 = sshll.u32 %s391, 4
    %588 = dma.done %s311, %s587
    %s589 = sshll.u32 %s391, 4
    %590 = dma.done %s333, %s589
    %s591 = sshll.u32 %s391, 4
    %592 = dma.done %s355, %s591
    %s593 = sshll.u32 %s391, 4
    %594 = dma.done %s377, %s593
    %v595 = vld [vmem:[%s222] sm:$0xff]
    %v596 = vld [vmem:[#allocation4 + $0x1] sm:$0x1]
    %v597 = vrot.slane %v595, 4
    %v598 = vadd.f32 %v595, %v597
    %v599 = vrot.slane %v598, 2
    %v600 = vadd.f32 %v598, %v599
    %v601 = vrot.slane %v600, 1
    %v602 = vadd.f32 %v600, %v601
    %v603 = vadd.f32 %v596, %v602
    %604 = vst [vmem:[#allocation4 + $0x1] sm:$0x1] %v603
    %s605 = sadd.s32 %s38, 3
    %s606 = smul.u32 %s605, 128
    %s607 = sld [smem:[#allocation6 + %s606]]
    %p608 = scmp.gt.s32.totalorder %s607, 0
    %s609 = scalar_select %p608, %s607, 0
    %p610 = scmp.lt.s32.totalorder %s609, 31
    %s611 = scalar_select %p610, %s609, 31
    %s612 = scalar_lea.hbm %s3, %s611
    // Predicated region
    $region110: #{tpu_custom_call.1} parent=1 // pred_check
      _
    $region111: #{tpu_custom_call.1} parent=1 // pred_check_branch
      %614 = sbr.rel target = $region113
    $region112: #{tpu_custom_call.1} parent=1 // pred_region
      %615 = sst [smem:[#allocation13]] [#allocation62]
      %616 = sst [smem:[#allocation14]] [#allocation61]
    $region113: #{tpu_custom_call.1} parent=1 // pred_fallthru
      _
    %618 = shalt.err (0)
    %s620 = sshll.u32 %s612, 4
    %s621 = int_to_ptr.hbm [resolvable:$true] %s620
    %s622 = sshll.u32 %s222, 4
    %s623 = int_to_ptr.vmem [resolvable:$true] %s622
    %625 = dma.hbm_to_vmem [thread:$0]  %s621, 16, %s623, %s223
    %s626 = sadd.s32 %s606, 1
    %s627 = sld [smem:[#allocation6 + %s626]]
    %p628 = scmp.gt.s32.totalorder %s627, 0
    %s629 = scalar_select %p628, %s627, 0
    %p630 = scmp.lt.s32.totalorder %s629, 31
    %s631 = scalar_select %p630, %s629, 31
    %s632 = scalar_lea.hbm %s3, %s631
    // Predicated region
    $region114: #{tpu_custom_call.1} parent=1 // pred_check
      _
    $region115: #{tpu_custom_call.1} parent=1 // pred_check_branch
      %634 = sbr.rel target = $region117
    $region116: #{tpu_custom_call.1} parent=1 // pred_region
      %635 = sst [smem:[#allocation13]] [#allocation64]
      %636 = sst [smem:[#allocation14]] [#allocation63]
    $region117: #{tpu_custom_call.1} parent=1 // pred_fallthru
      _
    %638 = shalt.err (0)
    %s640 = sshll.u32 %s632, 4
    %s641 = int_to_ptr.hbm [resolvable:$true] %s640
    %s642 = sshll.u32 %s244, 4
    %s643 = int_to_ptr.vmem [resolvable:$true] %s642
    %645 = dma.hbm_to_vmem [thread:$0]  %s641, 16, %s643, %s245
    %s646 = sadd.s32 %s606, 2
    %s647 = sld [smem:[#allocation6 + %s646]]
    %p648 = scmp.gt.s32.totalorder %s647, 0
    %s649 = scalar_select %p648, %s647, 0
    %p650 = scmp.lt.s32.totalorder %s649, 31
    %s651 = scalar_select %p650, %s649, 31
    %s652 = scalar_lea.hbm %s3, %s651
    // Predicated region
    $region118: #{tpu_custom_call.1} parent=1 // pred_check
      _
    $region119: #{tpu_custom_call.1} parent=1 // pred_check_branch
      %654 = sbr.rel target = $region121
    $region120: #{tpu_custom_call.1} parent=1 // pred_region
      %655 = sst [smem:[#allocation13]] [#allocation66]
      %656 = sst [smem:[#allocation14]] [#allocation65]
    $region121: #{tpu_custom_call.1} parent=1 // pred_fallthru
      _
    %658 = shalt.err (0)
    %s660 = sshll.u32 %s652, 4
    %s661 = int_to_ptr.hbm [resolvable:$true] %s660
    %s662 = sshll.u32 %s266, 4
    %s663 = int_to_ptr.vmem [resolvable:$true] %s662
    %665 = dma.hbm_to_vmem [thread:$0]  %s661, 16, %s663, %s267
    %s666 = sadd.s32 %s606, 3
    %s667 = sld [smem:[#allocation6 + %s666]]
    %p668 = scmp.gt.s32.totalorder %s667, 0
    %s669 = scalar_select %p668, %s667, 0
    %p670 = scmp.lt.s32.totalorder %s669, 31
    %s671 = scalar_select %p670, %s669, 31
    %s672 = scalar_lea.hbm %s3, %s671
    // Predicated region
    $region122: #{tpu_custom_call.1} parent=1 // pred_check
      _
    $region123: #{tpu_custom_call.1} parent=1 // pred_check_branch
      %674 = sbr.rel target = $region125
    $region124: #{tpu_custom_call.1} parent=1 // pred_region
      %675 = sst [smem:[#allocation13]] [#allocation68]
      %676 = sst [smem:[#allocation14]] [#allocation67]
    $region125: #{tpu_custom_call.1} parent=1 // pred_fallthru
      _
    %678 = shalt.err (0)
    %s680 = sshll.u32 %s672, 4
    %s681 = int_to_ptr.hbm [resolvable:$true] %s680
    %s682 = sshll.u32 %s288, 4
    %s683 = int_to_ptr.vmem [resolvable:$true] %s682
    %685 = dma.hbm_to_vmem [thread:$0]  %s681, 16, %s683, %s289
    %s686 = sadd.s32 %s606, 4
    %s687 = sld [smem:[#allocation6 + %s686]]
    %p688 = scmp.gt.s32.totalorder %s687, 0
    %s689 = scalar_select %p688, %s687, 0
    %p690 = scmp.lt.s32.totalorder %s689, 31
    %s691 = scalar_select %p690, %s689, 31
    %s692 = scalar_lea.hbm %s3, %s691
    // Predicated region
    $region126: #{tpu_custom_call.1} parent=1 // pred_check
      _
    $region127: #{tpu_custom_call.1} parent=1 // pred_check_branch
      %694 = sbr.rel target = $region129
    $region128: #{tpu_custom_call.1} parent=1 // pred_region
      %695 = sst [smem:[#allocation13]] [#allocation70]
      %696 = sst [smem:[#allocation14]] [#allocation69]
    $region129: #{tpu_custom_call.1} parent=1 // pred_fallthru
      _
    %698 = shalt.err (0)
    %s700 = sshll.u32 %s692, 4
    %s701 = int_to_ptr.hbm [resolvable:$true] %s700
    %s702 = sshll.u32 %s310, 4
    %s703 = int_to_ptr.vmem [resolvable:$true] %s702
    %705 = dma.hbm_to_vmem [thread:$0]  %s701, 16, %s703, %s311
    %s706 = sadd.s32 %s606, 5
    %s707 = sld [smem:[#allocation6 + %s706]]
    %p708 = scmp.gt.s32.totalorder %s707, 0
    %s709 = scalar_select %p708, %s707, 0
    %p710 = scmp.lt.s32.totalorder %s709, 31
    %s711 = scalar_select %p710, %s709, 31
    %s712 = scalar_lea.hbm %s3, %s711
    // Predicated region
    $region130: #{tpu_custom_call.1} parent=1 // pred_check
      _
    $region131: #{tpu_custom_call.1} parent=1 // pred_check_branch
      %714 = sbr.rel target = $region133
    $region132: #{tpu_custom_call.1} parent=1 // pred_region
      %715 = sst [smem:[#allocation13]] [#allocation72]
      %716 = sst [smem:[#allocation14]] [#allocation71]
    $region133: #{tpu_custom_call.1} parent=1 // pred_fallthru
      _
    %718 = shalt.err (0)
    %s720 = sshll.u32 %s712, 4
    %s721 = int_to_ptr.hbm [resolvable:$true] %s720
    %s722 = sshll.u32 %s332, 4
    %s723 = int_to_ptr.vmem [resolvable:$true] %s722
    %725 = dma.hbm_to_vmem [thread:$0]  %s721, 16, %s723, %s333
    %s726 = sadd.s32 %s606, 6
    %s727 = sld [smem:[#allocation6 + %s726]]
    %p728 = scmp.gt.s32.totalorder %s727, 0
    %s729 = scalar_select %p728, %s727, 0
    %p730 = scmp.lt.s32.totalorder %s729, 31
    %s731 = scalar_select %p730, %s729, 31
    %s732 = scalar_lea.hbm %s3, %s731
    // Predicated region
    $region134: #{tpu_custom_call.1} parent=1 // pred_check
      _
    $region135: #{tpu_custom_call.1} parent=1 // pred_check_branch
      %734 = sbr.rel target = $region137
    $region136: #{tpu_custom_call.1} parent=1 // pred_region
      %735 = sst [smem:[#allocation13]] [#allocation74]
      %736 = sst [smem:[#allocation14]] [#allocation73]
    $region137: #{tpu_custom_call.1} parent=1 // pred_fallthru
      _
    %738 = shalt.err (0)
    %s740 = sshll.u32 %s732, 4
    %s741 = int_to_ptr.hbm [resolvable:$true] %s740
    %s742 = sshll.u32 %s354, 4
    %s743 = int_to_ptr.vmem [resolvable:$true] %s742
    %745 = dma.hbm_to_vmem [thread:$0]  %s741, 16, %s743, %s355
    %s746 = sadd.s32 %s606, 7
    %s747 = sld [smem:[#allocation6 + %s746]]
    %p748 = scmp.gt.s32.totalorder %s747, 0
    %s749 = scalar_select %p748, %s747, 0
    %p750 = scmp.lt.s32.totalorder %s749, 31
    %s751 = scalar_select %p750, %s749, 31
    %s752 = scalar_lea.hbm %s3, %s751
    // Predicated region
    $region138: #{tpu_custom_call.1} parent=1 // pred_check
      _
    $region139: #{tpu_custom_call.1} parent=1 // pred_check_branch
      %754 = sbr.rel target = $region141
    $region140: #{tpu_custom_call.1} parent=1 // pred_region
      %755 = sst [smem:[#allocation13]] [#allocation76]
      %756 = sst [smem:[#allocation14]] [#allocation75]
    $region141: #{tpu_custom_call.1} parent=1 // pred_fallthru
      _
    %758 = shalt.err (0)
    %s760 = sshll.u32 %s752, 4
    %s761 = int_to_ptr.hbm [resolvable:$true] %s760
    %s762 = sshll.u32 %s376, 4
    %s763 = int_to_ptr.vmem [resolvable:$true] %s762
    %765 = dma.hbm_to_vmem [thread:$0]  %s761, 16, %s763, %s377
    %s766 = sshll.u32 %s391, 4
    %767 = dma.done [#allocation3], %s766
    %s768 = sshll.u32 %s391, 4
    %769 = dma.done %s68, %s768
    %s770 = sshll.u32 %s391, 4
    %771 = dma.done %s90, %s770
    %s772 = sshll.u32 %s391, 4
    %773 = dma.done %s112, %s772
    %s774 = sshll.u32 %s391, 4
    %775 = dma.done %s134, %s774
    %s776 = sshll.u32 %s391, 4
    %777 = dma.done %s156, %s776
    %s778 = sshll.u32 %s391, 4
    %779 = dma.done %s178, %s778
    %s780 = sshll.u32 %s391, 4
    %781 = dma.done %s200, %s780
    %v782 = vld [vmem:[#allocation2] sm:$0xff]
    %v783 = vld [vmem:[#allocation4 + $0x2] sm:$0x1]
    %v784 = vrot.slane %v782, 4
    %v785 = vadd.f32 %v782, %v784
    %v786 = vrot.slane %v785, 2
    %v787 = vadd.f32 %v785, %v786
    %v788 = vrot.slane %v787, 1
    %v789 = vadd.f32 %v787, %v788
    %v790 = vadd.f32 %v783, %v789
    %791 = vst [vmem:[#allocation4 + $0x2] sm:$0x1] %v790
    %s792 = sadd.s32 %s38, 4
    %s793 = smul.u32 %s792, 128
    %s794 = sld [smem:[#allocation6 + %s793]]
    %p795 = scmp.gt.s32.totalorder %s794, 0
    %s796 = scalar_select %p795, %s794, 0
    %p797 = scmp.lt.s32.totalorder %s796, 31
    %s798 = scalar_select %p797, %s796, 31
    %s799 = scalar_lea.hbm %s3, %s798
    // Predicated region
    $region142: #{tpu_custom_call.1} parent=1 // pred_check
      _
    $region143: #{tpu_custom_call.1} parent=1 // pred_check_branch
      %801 = sbr.rel target = $region145
    $region144: #{tpu_custom_call.1} parent=1 // pred_region
      %802 = sst [smem:[#allocation13]] [#allocation78]
      %803 = sst [smem:[#allocation14]] [#allocation77]
    $region145: #{tpu_custom_call.1} parent=1 // pred_fallthru
      _
    %805 = shalt.err (0)
    %s807 = sshll.u32 %s799, 4
    %s808 = int_to_ptr.hbm [resolvable:$true] %s807
    %s809 = sshll.u32 [#allocation2], 4
    %s810 = int_to_ptr.vmem [resolvable:$true] %s809
    %812 = dma.hbm_to_vmem [thread:$0]  %s808, 16, %s810, [#allocation3]
    %s813 = sadd.s32 %s793, 1
    %s814 = sld [smem:[#allocation6 + %s813]]
    %p815 = scmp.gt.s32.totalorder %s814, 0
    %s816 = scalar_select %p815, %s814, 0
    %p817 = scmp.lt.s32.totalorder %s816, 31
    %s818 = scalar_select %p817, %s816, 31
    %s819 = scalar_lea.hbm %s3, %s818
    // Predicated region
    $region146: #{tpu_custom_call.1} parent=1 // pred_check
      _
    $region147: #{tpu_custom_call.1} parent=1 // pred_check_branch
      %821 = sbr.rel target = $region149
    $region148: #{tpu_custom_call.1} parent=1 // pred_region
      %822 = sst [smem:[#allocation13]] [#allocation80]
      %823 = sst [smem:[#allocation14]] [#allocation79]
    $region149: #{tpu_custom_call.1} parent=1 // pred_fallthru
      _
    %825 = shalt.err (0)
    %s827 = sshll.u32 %s819, 4
    %s828 = int_to_ptr.hbm [resolvable:$true] %s827
    %s829 = sshll.u32 %s67, 4
    %s830 = int_to_ptr.vmem [resolvable:$true] %s829
    %832 = dma.hbm_to_vmem [thread:$0]  %s828, 16, %s830, %s68
    %s833 = sadd.s32 %s793, 2
    %s834 = sld [smem:[#allocation6 + %s833]]
    %p835 = scmp.gt.s32.totalorder %s834, 0
    %s836 = scalar_select %p835, %s834, 0
    %p837 = scmp.lt.s32.totalorder %s836, 31
    %s838 = scalar_select %p837, %s836, 31
    %s839 = scalar_lea.hbm %s3, %s838
    // Predicated region
    $region150: #{tpu_custom_call.1} parent=1 // pred_check
      _
    $region151: #{tpu_custom_call.1} parent=1 // pred_check_branch
      %841 = sbr.rel target = $region153
    $region152: #{tpu_custom_call.1} parent=1 // pred_region
      %842 = sst [smem:[#allocation13]] [#allocation82]
      %843 = sst [smem:[#allocation14]] [#allocation81]
    $region153: #{tpu_custom_call.1} parent=1 // pred_fallthru
      _
    %845 = shalt.err (0)
    %s847 = sshll.u32 %s839, 4
    %s848 = int_to_ptr.hbm [resolvable:$true] %s847
    %s849 = sshll.u32 %s89, 4
    %s850 = int_to_ptr.vmem [resolvable:$true] %s849
    %852 = dma.hbm_to_vmem [thread:$0]  %s848, 16, %s850, %s90
    %s853 = sadd.s32 %s793, 3
    %s854 = sld [smem:[#allocation6 + %s853]]
    %p855 = scmp.gt.s32.totalorder %s854, 0
    %s856 = scalar_select %p855, %s854, 0
    %p857 = scmp.lt.s32.totalorder %s856, 31
    %s858 = scalar_select %p857, %s856, 31
    %s859 = scalar_lea.hbm %s3, %s858
    // Predicated region
    $region154: #{tpu_custom_call.1} parent=1 // pred_check
      _
    $region155: #{tpu_custom_call.1} parent=1 // pred_check_branch
      %861 = sbr.rel target = $region157
    $region156: #{tpu_custom_call.1} parent=1 // pred_region
      %862 = sst [smem:[#allocation13]] [#allocation84]
      %863 = sst [smem:[#allocation14]] [#allocation83]
    $region157: #{tpu_custom_call.1} parent=1 // pred_fallthru
      _
    %865 = shalt.err (0)
    %s867 = sshll.u32 %s859, 4
    %s868 = int_to_ptr.hbm [resolvable:$true] %s867
    %s869 = sshll.u32 %s111, 4
    %s870 = int_to_ptr.vmem [resolvable:$true] %s869
    %872 = dma.hbm_to_vmem [thread:$0]  %s868, 16, %s870, %s112
    %s873 = sadd.s32 %s793, 4
    %s874 = sld [smem:[#allocation6 + %s873]]
    %p875 = scmp.gt.s32.totalorder %s874, 0
    %s876 = scalar_select %p875, %s874, 0
    %p877 = scmp.lt.s32.totalorder %s876, 31
    %s878 = scalar_select %p877, %s876, 31
    %s879 = scalar_lea.hbm %s3, %s878
    // Predicated region
    $region158: #{tpu_custom_call.1} parent=1 // pred_check
      _
    $region159: #{tpu_custom_call.1} parent=1 // pred_check_branch
      %881 = sbr.rel target = $region161
    $region160: #{tpu_custom_call.1} parent=1 // pred_region
      %882 = sst [smem:[#allocation13]] [#allocation86]
      %883 = sst [smem:[#allocation14]] [#allocation85]
    $region161: #{tpu_custom_call.1} parent=1 // pred_fallthru
      _
    %885 = shalt.err (0)
    %s887 = sshll.u32 %s879, 4
    %s888 = int_to_ptr.hbm [resolvable:$true] %s887
    %s889 = sshll.u32 %s133, 4
    %s890 = int_to_ptr.vmem [resolvable:$true] %s889
    %892 = dma.hbm_to_vmem [thread:$0]  %s888, 16, %s890, %s134
    %s893 = sadd.s32 %s793, 5
    %s894 = sld [smem:[#allocation6 + %s893]]
    %p895 = scmp.gt.s32.totalorder %s894, 0
    %s896 = scalar_select %p895, %s894, 0
    %p897 = scmp.lt.s32.totalorder %s896, 31
    %s898 = scalar_select %p897, %s896, 31
    %s899 = scalar_lea.hbm %s3, %s898
    // Predicated region
    $region162: #{tpu_custom_call.1} parent=1 // pred_check
      _
    $region163: #{tpu_custom_call.1} parent=1 // pred_check_branch
      %901 = sbr.rel target = $region165
    $region164: #{tpu_custom_call.1} parent=1 // pred_region
      %902 = sst [smem:[#allocation13]] [#allocation88]
      %903 = sst [smem:[#allocation14]] [#allocation87]
    $region165: #{tpu_custom_call.1} parent=1 // pred_fallthru
      _
    %905 = shalt.err (0)
    %s907 = sshll.u32 %s899, 4
    %s908 = int_to_ptr.hbm [resolvable:$true] %s907
    %s909 = sshll.u32 %s155, 4
    %s910 = int_to_ptr.vmem [resolvable:$true] %s909
    %912 = dma.hbm_to_vmem [thread:$0]  %s908, 16, %s910, %s156
    %s913 = sadd.s32 %s793, 6
    %s914 = sld [smem:[#allocation6 + %s913]]
    %p915 = scmp.gt.s32.totalorder %s914, 0
    %s916 = scalar_select %p915, %s914, 0
    %p917 = scmp.lt.s32.totalorder %s916, 31
    %s918 = scalar_select %p917, %s916, 31
    %s919 = scalar_lea.hbm %s3, %s918
    // Predicated region
    $region166: #{tpu_custom_call.1} parent=1 // pred_check
      _
    $region167: #{tpu_custom_call.1} parent=1 // pred_check_branch
      %921 = sbr.rel target = $region169
    $region168: #{tpu_custom_call.1} parent=1 // pred_region
      %922 = sst [smem:[#allocation13]] [#allocation90]
      %923 = sst [smem:[#allocation14]] [#allocation89]
    $region169: #{tpu_custom_call.1} parent=1 // pred_fallthru
      _
    %925 = shalt.err (0)
    %s927 = sshll.u32 %s919, 4
    %s928 = int_to_ptr.hbm [resolvable:$true] %s927
    %s929 = sshll.u32 %s177, 4
    %s930 = int_to_ptr.vmem [resolvable:$true] %s929
    %932 = dma.hbm_to_vmem [thread:$0]  %s928, 16, %s930, %s178
    %s933 = sadd.s32 %s793, 7
    %s934 = sld [smem:[#allocation6 + %s933]]
    %p935 = scmp.gt.s32.totalorder %s934, 0
    %s936 = scalar_select %p935, %s934, 0
    %p937 = scmp.lt.s32.totalorder %s936, 31
    %s938 = scalar_select %p937, %s936, 31
    %s939 = scalar_lea.hbm %s3, %s938
    // Predicated region
    $region170: #{tpu_custom_call.1} parent=1 // pred_check
      _
    $region171: #{tpu_custom_call.1} parent=1 // pred_check_branch
      %941 = sbr.rel target = $region173
    $region172: #{tpu_custom_call.1} parent=1 // pred_region
      %942 = sst [smem:[#allocation13]] [#allocation92]
      %943 = sst [smem:[#allocation14]] [#allocation91]
    $region173: #{tpu_custom_call.1} parent=1 // pred_fallthru
      _
    %945 = shalt.err (0)
    %s947 = sshll.u32 %s939, 4
    %s948 = int_to_ptr.hbm [resolvable:$true] %s947
    %s949 = sshll.u32 %s199, 4
    %s950 = int_to_ptr.vmem [resolvable:$true] %s949
    %952 = dma.hbm_to_vmem [thread:$0]  %s948, 16, %s950, %s200
    %s953 = sshll.u32 %s391, 4
    %954 = dma.done %s223, %s953
    %s955 = sshll.u32 %s391, 4
    %956 = dma.done %s245, %s955
    %s957 = sshll.u32 %s391, 4
    %958 = dma.done %s267, %s957
    %s959 = sshll.u32 %s391, 4
    %960 = dma.done %s289, %s959
    %s961 = sshll.u32 %s391, 4
    %962 = dma.done %s311, %s961
    %s963 = sshll.u32 %s391, 4
    %964 = dma.done %s333, %s963
    %s965 = sshll.u32 %s391, 4
    %966 = dma.done %s355, %s965
    %s967 = sshll.u32 %s391, 4
    %968 = dma.done %s377, %s967
    %v969 = vld [vmem:[%s222] sm:$0xff]
    %v970 = vld [vmem:[#allocation4 + $0x3] sm:$0x1]
    %v971 = vrot.slane %v969, 4
    %v972 = vadd.f32 %v969, %v971
    %v973 = vrot.slane %v972, 2
    %v974 = vadd.f32 %v972, %v973
    %v975 = vrot.slane %v974, 1
    %v976 = vadd.f32 %v974, %v975
    %v977 = vadd.f32 %v970, %v976
    %978 = vst [vmem:[#allocation4 + $0x3] sm:$0x1] %v977
    %s979 = sadd.s32 %s38, 5
    %s980 = smul.u32 %s979, 128
    %s981 = sld [smem:[#allocation6 + %s980]]
    %p982 = scmp.gt.s32.totalorder %s981, 0
    %s983 = scalar_select %p982, %s981, 0
    %p984 = scmp.lt.s32.totalorder %s983, 31
    %s985 = scalar_select %p984, %s983, 31
    %s986 = scalar_lea.hbm %s3, %s985
    // Predicated region
    $region174: #{tpu_custom_call.1} parent=1 // pred_check
      _
    $region175: #{tpu_custom_call.1} parent=1 // pred_check_branch
      %988 = sbr.rel target = $region177
    $region176: #{tpu_custom_call.1} parent=1 // pred_region
      %989 = sst [smem:[#allocation13]] [#allocation94]
      %990 = sst [smem:[#allocation14]] [#allocation93]
    $region177: #{tpu_custom_call.1} parent=1 // pred_fallthru
      _
    %992 = shalt.err (0)
    %s994 = sshll.u32 %s986, 4
    %s995 = int_to_ptr.hbm [resolvable:$true] %s994
    %s996 = sshll.u32 %s222, 4
    %s997 = int_to_ptr.vmem [resolvable:$true] %s996
    %999 = dma.hbm_to_vmem [thread:$0]  %s995, 16, %s997, %s223
    %s1000 = sadd.s32 %s980, 1
    %s1001 = sld [smem:[#allocation6 + %s1000]]
    %p1002 = scmp.gt.s32.totalorder %s1001, 0
    %s1003 = scalar_select %p1002, %s1001, 0
    %p1004 = scmp.lt.s32.totalorder %s1003, 31
    %s1005 = scalar_select %p1004, %s1003, 31
    %s1006 = scalar_lea.hbm %s3, %s1005
    // Predicated region
    $region178: #{tpu_custom_call.1} parent=1 // pred_check
      _
    $region179: #{tpu_custom_call.1} parent=1 // pred_check_branch
      %1008 = sbr.rel target = $region181
    $region180: #{tpu_custom_call.1} parent=1 // pred_region
      %1009 = sst [smem:[#allocation13]] [#allocation96]
      %1010 = sst [smem:[#allocation14]] [#allocation95]
    $region181: #{tpu_custom_call.1} parent=1 // pred_fallthru
      _
    %1012 = shalt.err (0)
    %s1014 = sshll.u32 %s1006, 4
    %s1015 = int_to_ptr.hbm [resolvable:$true] %s1014
    %s1016 = sshll.u32 %s244, 4
    %s1017 = int_to_ptr.vmem [resolvable:$true] %s1016
    %1019 = dma.hbm_to_vmem [thread:$0]  %s1015, 16, %s1017, %s245
    %s1020 = sadd.s32 %s980, 2
    %s1021 = sld [smem:[#allocation6 + %s1020]]
    %p1022 = scmp.gt.s32.totalorder %s1021, 0
    %s1023 = scalar_select %p1022, %s1021, 0
    %p1024 = scmp.lt.s32.totalorder %s1023, 31
    %s1025 = scalar_select %p1024, %s1023, 31
    %s1026 = scalar_lea.hbm %s3, %s1025
    // Predicated region
    $region182: #{tpu_custom_call.1} parent=1 // pred_check
      _
    $region183: #{tpu_custom_call.1} parent=1 // pred_check_branch
      %1028 = sbr.rel target = $region185
    $region184: #{tpu_custom_call.1} parent=1 // pred_region
      %1029 = sst [smem:[#allocation13]] [#allocation98]
      %1030 = sst [smem:[#allocation14]] [#allocation97]
    $region185: #{tpu_custom_call.1} parent=1 // pred_fallthru
      _
    %1032 = shalt.err (0)
    %s1034 = sshll.u32 %s1026, 4
    %s1035 = int_to_ptr.hbm [resolvable:$true] %s1034
    %s1036 = sshll.u32 %s266, 4
    %s1037 = int_to_ptr.vmem [resolvable:$true] %s1036
    %1039 = dma.hbm_to_vmem [thread:$0]  %s1035, 16, %s1037, %s267
    %s1040 = sadd.s32 %s980, 3
    %s1041 = sld [smem:[#allocation6 + %s1040]]
    %p1042 = scmp.gt.s32.totalorder %s1041, 0
    %s1043 = scalar_select %p1042, %s1041, 0
    %p1044 = scmp.lt.s32.totalorder %s1043, 31
    %s1045 = scalar_select %p1044, %s1043, 31
    %s1046 = scalar_lea.hbm %s3, %s1045
    // Predicated region
    $region186: #{tpu_custom_call.1} parent=1 // pred_check
      _
    $region187: #{tpu_custom_call.1} parent=1 // pred_check_branch
      %1048 = sbr.rel target = $region189
    $region188: #{tpu_custom_call.1} parent=1 // pred_region
      %1049 = sst [smem:[#allocation13]] [#allocation100]
      %1050 = sst [smem:[#allocation14]] [#allocation99]
    $region189: #{tpu_custom_call.1} parent=1 // pred_fallthru
      _
    %1052 = shalt.err (0)
    %s1054 = sshll.u32 %s1046, 4
    %s1055 = int_to_ptr.hbm [resolvable:$true] %s1054
    %s1056 = sshll.u32 %s288, 4
    %s1057 = int_to_ptr.vmem [resolvable:$true] %s1056
    %1059 = dma.hbm_to_vmem [thread:$0]  %s1055, 16, %s1057, %s289
    %s1060 = sadd.s32 %s980, 4
    %s1061 = sld [smem:[#allocation6 + %s1060]]
    %p1062 = scmp.gt.s32.totalorder %s1061, 0
    %s1063 = scalar_select %p1062, %s1061, 0
    %p1064 = scmp.lt.s32.totalorder %s1063, 31
    %s1065 = scalar_select %p1064, %s1063, 31
    %s1066 = scalar_lea.hbm %s3, %s1065
    // Predicated region
    $region190: #{tpu_custom_call.1} parent=1 // pred_check
      _
    $region191: #{tpu_custom_call.1} parent=1 // pred_check_branch
      %1068 = sbr.rel target = $region193
    $region192: #{tpu_custom_call.1} parent=1 // pred_region
      %1069 = sst [smem:[#allocation13]] [#allocation102]
      %1070 = sst [smem:[#allocation14]] [#allocation101]
    $region193: #{tpu_custom_call.1} parent=1 // pred_fallthru
      _
    %1072 = shalt.err (0)
    %s1074 = sshll.u32 %s1066, 4
    %s1075 = int_to_ptr.hbm [resolvable:$true] %s1074
    %s1076 = sshll.u32 %s310, 4
    %s1077 = int_to_ptr.vmem [resolvable:$true] %s1076
    %1079 = dma.hbm_to_vmem [thread:$0]  %s1075, 16, %s1077, %s311
    %s1080 = sadd.s32 %s980, 5
    %s1081 = sld [smem:[#allocation6 + %s1080]]
    %p1082 = scmp.gt.s32.totalorder %s1081, 0
    %s1083 = scalar_select %p1082, %s1081, 0
    %p1084 = scmp.lt.s32.totalorder %s1083, 31
    %s1085 = scalar_select %p1084, %s1083, 31
    %s1086 = scalar_lea.hbm %s3, %s1085
    // Predicated region
    $region194: #{tpu_custom_call.1} parent=1 // pred_check
      _
    $region195: #{tpu_custom_call.1} parent=1 // pred_check_branch
      %1088 = sbr.rel target = $region197
    $region196: #{tpu_custom_call.1} parent=1 // pred_region
      %1089 = sst [smem:[#allocation13]] [#allocation104]
      %1090 = sst [smem:[#allocation14]] [#allocation103]
    $region197: #{tpu_custom_call.1} parent=1 // pred_fallthru
      _
    %1092 = shalt.err (0)
    %s1094 = sshll.u32 %s1086, 4
    %s1095 = int_to_ptr.hbm [resolvable:$true] %s1094
    %s1096 = sshll.u32 %s332, 4
    %s1097 = int_to_ptr.vmem [resolvable:$true] %s1096
    %1099 = dma.hbm_to_vmem [thread:$0]  %s1095, 16, %s1097, %s333
    %s1100 = sadd.s32 %s980, 6
    %s1101 = sld [smem:[#allocation6 + %s1100]]
    %p1102 = scmp.gt.s32.totalorder %s1101, 0
    %s1103 = scalar_select %p1102, %s1101, 0
    %p1104 = scmp.lt.s32.totalorder %s1103, 31
    %s1105 = scalar_select %p1104, %s1103, 31
    %s1106 = scalar_lea.hbm %s3, %s1105
    // Predicated region
    $region198: #{tpu_custom_call.1} parent=1 // pred_check
      _
    $region199: #{tpu_custom_call.1} parent=1 // pred_check_branch
      %1108 = sbr.rel target = $region201
    $region200: #{tpu_custom_call.1} parent=1 // pred_region
      %1109 = sst [smem:[#allocation13]] [#allocation106]
      %1110 = sst [smem:[#allocation14]] [#allocation105]
    $region201: #{tpu_custom_call.1} parent=1 // pred_fallthru
      _
    %1112 = shalt.err (0)
    %s1114 = sshll.u32 %s1106, 4
    %s1115 = int_to_ptr.hbm [resolvable:$true] %s1114
    %s1116 = sshll.u32 %s354, 4
    %s1117 = int_to_ptr.vmem [resolvable:$true] %s1116
    %1119 = dma.hbm_to_vmem [thread:$0]  %s1115, 16, %s1117, %s355
    %s1120 = sadd.s32 %s980, 7
    %s1121 = sld [smem:[#allocation6 + %s1120]]
    %p1122 = scmp.gt.s32.totalorder %s1121, 0
    %s1123 = scalar_select %p1122, %s1121, 0
    %p1124 = scmp.lt.s32.totalorder %s1123, 31
    %s1125 = scalar_select %p1124, %s1123, 31
    %s1126 = scalar_lea.hbm %s3, %s1125
    // Predicated region
    $region202: #{tpu_custom_call.1} parent=1 // pred_check
      _
    $region203: #{tpu_custom_call.1} parent=1 // pred_check_branch
      %1128 = sbr.rel target = $region205
    $region204: #{tpu_custom_call.1} parent=1 // pred_region
      %1129 = sst [smem:[#allocation13]] [#allocation108]
      %1130 = sst [smem:[#allocation14]] [#allocation107]
    $region205: #{tpu_custom_call.1} parent=1 // pred_fallthru
      _
    %1132 = shalt.err (0)
    %s1134 = sshll.u32 %s1126, 4
    %s1135 = int_to_ptr.hbm [resolvable:$true] %s1134
    %s1136 = sshll.u32 %s376, 4
    %s1137 = int_to_ptr.vmem [resolvable:$true] %s1136
    %1139 = dma.hbm_to_vmem [thread:$0]  %s1135, 16, %s1137, %s377
    %s1140 = sshll.u32 %s391, 4
    %1141 = dma.done [#allocation3], %s1140
    %s1142 = sshll.u32 %s391, 4
    %1143 = dma.done %s68, %s1142
    %s1144 = sshll.u32 %s391, 4
    %1145 = dma.done %s90, %s1144
    %s1146 = sshll.u32 %s391, 4
    %1147 = dma.done %s112, %s1146
    %s1148 = sshll.u32 %s391, 4
    %1149 = dma.done %s134, %s1148
    %s1150 = sshll.u32 %s391, 4
    %1151 = dma.done %s156, %s1150
    %s1152 = sshll.u32 %s391, 4
    %1153 = dma.done %s178, %s1152
    %s1154 = sshll.u32 %s391, 4
    %1155 = dma.done %s200, %s1154
    %v1156 = vld [vmem:[#allocation2] sm:$0xff]
    %v1157 = vld [vmem:[#allocation4 + $0x4] sm:$0x1]
    %v1158 = vrot.slane %v1156, 4
    %v1159 = vadd.f32 %v1156, %v1158
    %v1160 = vrot.slane %v1159, 2
    %v1161 = vadd.f32 %v1159, %v1160
    %v1162 = vrot.slane %v1161, 1
    %v1163 = vadd.f32 %v1161, %v1162
    %v1164 = vadd.f32 %v1157, %v1163
    %1165 = vst [vmem:[#allocation4 + $0x4] sm:$0x1] %v1164
    %s1166 = sadd.s32 %s38, 6
    %s1167 = smul.u32 %s1166, 128
    %s1168 = sld [smem:[#allocation6 + %s1167]]
    %p1169 = scmp.gt.s32.totalorder %s1168, 0
    %s1170 = scalar_select %p1169, %s1168, 0
    %p1171 = scmp.lt.s32.totalorder %s1170, 31
    %s1172 = scalar_select %p1171, %s1170, 31
    %s1173 = scalar_lea.hbm %s3, %s1172
    // Predicated region
    $region206: #{tpu_custom_call.1} parent=1 // pred_check
      _
    $region207: #{tpu_custom_call.1} parent=1 // pred_check_branch
      %1175 = sbr.rel target = $region209
    $region208: #{tpu_custom_call.1} parent=1 // pred_region
      %1176 = sst [smem:[#allocation13]] [#allocation110]
      %1177 = sst [smem:[#allocation14]] [#allocation109]
    $region209: #{tpu_custom_call.1} parent=1 // pred_fallthru
      _
    %1179 = shalt.err (0)
    %s1181 = sshll.u32 %s1173, 4
    %s1182 = int_to_ptr.hbm [resolvable:$true] %s1181
    %s1183 = sshll.u32 [#allocation2], 4
    %s1184 = int_to_ptr.vmem [resolvable:$true] %s1183
    %1186 = dma.hbm_to_vmem [thread:$0]  %s1182, 16, %s1184, [#allocation3]
    %s1187 = sadd.s32 %s1167, 1
    %s1188 = sld [smem:[#allocation6 + %s1187]]
    %p1189 = scmp.gt.s32.totalorder %s1188, 0
    %s1190 = scalar_select %p1189, %s1188, 0
    %p1191 = scmp.lt.s32.totalorder %s1190, 31
    %s1192 = scalar_select %p1191, %s1190, 31
    %s1193 = scalar_lea.hbm %s3, %s1192
    // Predicated region
    $region210: #{tpu_custom_call.1} parent=1 // pred_check
      _
    $region211: #{tpu_custom_call.1} parent=1 // pred_check_branch
      %1195 = sbr.rel target = $region213
    $region212: #{tpu_custom_call.1} parent=1 // pred_region
      %1196 = sst [smem:[#allocation13]] [#allocation112]
      %1197 = sst [smem:[#allocation14]] [#allocation111]
    $region213: #{tpu_custom_call.1} parent=1 // pred_fallthru
      _
    %1199 = shalt.err (0)
    %s1201 = sshll.u32 %s1193, 4
    %s1202 = int_to_ptr.hbm [resolvable:$true] %s1201
    %s1203 = sshll.u32 %s67, 4
    %s1204 = int_to_ptr.vmem [resolvable:$true] %s1203
    %1206 = dma.hbm_to_vmem [thread:$0]  %s1202, 16, %s1204, %s68
    %s1207 = sadd.s32 %s1167, 2
    %s1208 = sld [smem:[#allocation6 + %s1207]]
    %p1209 = scmp.gt.s32.totalorder %s1208, 0
    %s1210 = scalar_select %p1209, %s1208, 0
    %p1211 = scmp.lt.s32.totalorder %s1210, 31
    %s1212 = scalar_select %p1211, %s1210, 31
    %s1213 = scalar_lea.hbm %s3, %s1212
    // Predicated region
    $region214: #{tpu_custom_call.1} parent=1 // pred_check
      _
    $region215: #{tpu_custom_call.1} parent=1 // pred_check_branch
      %1215 = sbr.rel target = $region217
    $region216: #{tpu_custom_call.1} parent=1 // pred_region
      %1216 = sst [smem:[#allocation13]] [#allocation114]
      %1217 = sst [smem:[#allocation14]] [#allocation113]
    $region217: #{tpu_custom_call.1} parent=1 // pred_fallthru
      _
    %1219 = shalt.err (0)
    %s1221 = sshll.u32 %s1213, 4
    %s1222 = int_to_ptr.hbm [resolvable:$true] %s1221
    %s1223 = sshll.u32 %s89, 4
    %s1224 = int_to_ptr.vmem [resolvable:$true] %s1223
    %1226 = dma.hbm_to_vmem [thread:$0]  %s1222, 16, %s1224, %s90
    %s1227 = sadd.s32 %s1167, 3
    %s1228 = sld [smem:[#allocation6 + %s1227]]
    %p1229 = scmp.gt.s32.totalorder %s1228, 0
    %s1230 = scalar_select %p1229, %s1228, 0
    %p1231 = scmp.lt.s32.totalorder %s1230, 31
    %s1232 = scalar_select %p1231, %s1230, 31
    %s1233 = scalar_lea.hbm %s3, %s1232
    // Predicated region
    $region218: #{tpu_custom_call.1} parent=1 // pred_check
      _
    $region219: #{tpu_custom_call.1} parent=1 // pred_check_branch
      %1235 = sbr.rel target = $region221
    $region220: #{tpu_custom_call.1} parent=1 // pred_region
      %1236 = sst [smem:[#allocation13]] [#allocation116]
      %1237 = sst [smem:[#allocation14]] [#allocation115]
    $region221: #{tpu_custom_call.1} parent=1 // pred_fallthru
      _
    %1239 = shalt.err (0)
    %s1241 = sshll.u32 %s1233, 4
    %s1242 = int_to_ptr.hbm [resolvable:$true] %s1241
    %s1243 = sshll.u32 %s111, 4
    %s1244 = int_to_ptr.vmem [resolvable:$true] %s1243
    %1246 = dma.hbm_to_vmem [thread:$0]  %s1242, 16, %s1244, %s112
    %s1247 = sadd.s32 %s1167, 4
    %s1248 = sld [smem:[#allocation6 + %s1247]]
    %p1249 = scmp.gt.s32.totalorder %s1248, 0
    %s1250 = scalar_select %p1249, %s1248, 0
    %p1251 = scmp.lt.s32.totalorder %s1250, 31
    %s1252 = scalar_select %p1251, %s1250, 31
    %s1253 = scalar_lea.hbm %s3, %s1252
    // Predicated region
    $region222: #{tpu_custom_call.1} parent=1 // pred_check
      _
    $region223: #{tpu_custom_call.1} parent=1 // pred_check_branch
      %1255 = sbr.rel target = $region225
    $region224: #{tpu_custom_call.1} parent=1 // pred_region
      %1256 = sst [smem:[#allocation13]] [#allocation118]
      %1257 = sst [smem:[#allocation14]] [#allocation117]
    $region225: #{tpu_custom_call.1} parent=1 // pred_fallthru
      _
    %1259 = shalt.err (0)
    %s1261 = sshll.u32 %s1253, 4
    %s1262 = int_to_ptr.hbm [resolvable:$true] %s1261
    %s1263 = sshll.u32 %s133, 4
    %s1264 = int_to_ptr.vmem [resolvable:$true] %s1263
    %1266 = dma.hbm_to_vmem [thread:$0]  %s1262, 16, %s1264, %s134
    %s1267 = sadd.s32 %s1167, 5
    %s1268 = sld [smem:[#allocation6 + %s1267]]
    %p1269 = scmp.gt.s32.totalorder %s1268, 0
    %s1270 = scalar_select %p1269, %s1268, 0
    %p1271 = scmp.lt.s32.totalorder %s1270, 31
    %s1272 = scalar_select %p1271, %s1270, 31
    %s1273 = scalar_lea.hbm %s3, %s1272
    // Predicated region
    $region226: #{tpu_custom_call.1} parent=1 // pred_check
      _
    $region227: #{tpu_custom_call.1} parent=1 // pred_check_branch
      %1275 = sbr.rel target = $region229
    $region228: #{tpu_custom_call.1} parent=1 // pred_region
      %1276 = sst [smem:[#allocation13]] [#allocation120]
      %1277 = sst [smem:[#allocation14]] [#allocation119]
    $region229: #{tpu_custom_call.1} parent=1 // pred_fallthru
      _
    %1279 = shalt.err (0)
    %s1281 = sshll.u32 %s1273, 4
    %s1282 = int_to_ptr.hbm [resolvable:$true] %s1281
    %s1283 = sshll.u32 %s155, 4
    %s1284 = int_to_ptr.vmem [resolvable:$true] %s1283
    %1286 = dma.hbm_to_vmem [thread:$0]  %s1282, 16, %s1284, %s156
    %s1287 = sadd.s32 %s1167, 6
    %s1288 = sld [smem:[#allocation6 + %s1287]]
    %p1289 = scmp.gt.s32.totalorder %s1288, 0
    %s1290 = scalar_select %p1289, %s1288, 0
    %p1291 = scmp.lt.s32.totalorder %s1290, 31
    %s1292 = scalar_select %p1291, %s1290, 31
    %s1293 = scalar_lea.hbm %s3, %s1292
    // Predicated region
    $region230: #{tpu_custom_call.1} parent=1 // pred_check
      _
    $region231: #{tpu_custom_call.1} parent=1 // pred_check_branch
      %1295 = sbr.rel target = $region233
    $region232: #{tpu_custom_call.1} parent=1 // pred_region
      %1296 = sst [smem:[#allocation13]] [#allocation122]
      %1297 = sst [smem:[#allocation14]] [#allocation121]
    $region233: #{tpu_custom_call.1} parent=1 // pred_fallthru
      _
    %1299 = shalt.err (0)
    %s1301 = sshll.u32 %s1293, 4
    %s1302 = int_to_ptr.hbm [resolvable:$true] %s1301
    %s1303 = sshll.u32 %s177, 4
    %s1304 = int_to_ptr.vmem [resolvable:$true] %s1303
    %1306 = dma.hbm_to_vmem [thread:$0]  %s1302, 16, %s1304, %s178
    %s1307 = sadd.s32 %s1167, 7
    %s1308 = sld [smem:[#allocation6 + %s1307]]
    %p1309 = scmp.gt.s32.totalorder %s1308, 0
    %s1310 = scalar_select %p1309, %s1308, 0
    %p1311 = scmp.lt.s32.totalorder %s1310, 31
    %s1312 = scalar_select %p1311, %s1310, 31
    %s1313 = scalar_lea.hbm %s3, %s1312
    // Predicated region
    $region234: #{tpu_custom_call.1} parent=1 // pred_check
      _
    $region235: #{tpu_custom_call.1} parent=1 // pred_check_branch
      %1315 = sbr.rel target = $region237
    $region236: #{tpu_custom_call.1} parent=1 // pred_region
      %1316 = sst [smem:[#allocation13]] [#allocation124]
      %1317 = sst [smem:[#allocation14]] [#allocation123]
    $region237: #{tpu_custom_call.1} parent=1 // pred_fallthru
      _
    %1319 = shalt.err (0)
    %s1321 = sshll.u32 %s1313, 4
    %s1322 = int_to_ptr.hbm [resolvable:$true] %s1321
    %s1323 = sshll.u32 %s199, 4
    %s1324 = int_to_ptr.vmem [resolvable:$true] %s1323
    %1326 = dma.hbm_to_vmem [thread:$0]  %s1322, 16, %s1324, %s200
    %s1327 = sshll.u32 %s391, 4
    %1328 = dma.done %s223, %s1327
    %s1329 = sshll.u32 %s391, 4
    %1330 = dma.done %s245, %s1329
    %s1331 = sshll.u32 %s391, 4
    %1332 = dma.done %s267, %s1331
    %s1333 = sshll.u32 %s391, 4
    %1334 = dma.done %s289, %s1333
    %s1335 = sshll.u32 %s391, 4
    %1336 = dma.done %s311, %s1335
    %s1337 = sshll.u32 %s391, 4
    %1338 = dma.done %s333, %s1337
    %s1339 = sshll.u32 %s391, 4
    %1340 = dma.done %s355, %s1339
    %s1341 = sshll.u32 %s391, 4
    %1342 = dma.done %s377, %s1341
    %v1343 = vld [vmem:[%s222] sm:$0xff]
    %v1344 = vld [vmem:[#allocation4 + $0x5] sm:$0x1]
    %v1345 = vrot.slane %v1343, 4
    %v1346 = vadd.f32 %v1343, %v1345
    %v1347 = vrot.slane %v1346, 2
    %v1348 = vadd.f32 %v1346, %v1347
    %v1349 = vrot.slane %v1348, 1
    %v1350 = vadd.f32 %v1348, %v1349
    %v1351 = vadd.f32 %v1344, %v1350
    %1352 = vst [vmem:[#allocation4 + $0x5] sm:$0x1] %v1351
    %s1353 = sadd.s32 %s38, 7
    %s1354 = smul.u32 %s1353, 128
    %s1355 = sld [smem:[#allocation6 + %s1354]]
    %p1356 = scmp.gt.s32.totalorder %s1355, 0
    %s1357 = scalar_select %p1356, %s1355, 0
    %p1358 = scmp.lt.s32.totalorder %s1357, 31
    %s1359 = scalar_select %p1358, %s1357, 31
    %s1360 = scalar_lea.hbm %s3, %s1359
    // Predicated region
    $region238: #{tpu_custom_call.1} parent=1 // pred_check
      _
    $region239: #{tpu_custom_call.1} parent=1 // pred_check_branch
      %1362 = sbr.rel target = $region241
    $region240: #{tpu_custom_call.1} parent=1 // pred_region
      %1363 = sst [smem:[#allocation13]] [#allocation126]
      %1364 = sst [smem:[#allocation14]] [#allocation125]
    $region241: #{tpu_custom_call.1} parent=1 // pred_fallthru
      _
    %1366 = shalt.err (0)
    %s1368 = sshll.u32 %s1360, 4
    %s1369 = int_to_ptr.hbm [resolvable:$true] %s1368
    %s1370 = sshll.u32 %s222, 4
    %s1371 = int_to_ptr.vmem [resolvable:$true] %s1370
    %1373 = dma.hbm_to_vmem [thread:$0]  %s1369, 16, %s1371, %s223
    %s1374 = sadd.s32 %s1354, 1
    %s1375 = sld [smem:[#allocation6 + %s1374]]
    %p1376 = scmp.gt.s32.totalorder %s1375, 0
    %s1377 = scalar_select %p1376, %s1375, 0
    %p1378 = scmp.lt.s32.totalorder %s1377, 31
    %s1379 = scalar_select %p1378, %s1377, 31
    %s1380 = scalar_lea.hbm %s3, %s1379
    // Predicated region
    $region242: #{tpu_custom_call.1} parent=1 // pred_check
      _
    $region243: #{tpu_custom_call.1} parent=1 // pred_check_branch
      %1382 = sbr.rel target = $region245
    $region244: #{tpu_custom_call.1} parent=1 // pred_region
      %1383 = sst [smem:[#allocation13]] [#allocation128]
      %1384 = sst [smem:[#allocation14]] [#allocation127]
    $region245: #{tpu_custom_call.1} parent=1 // pred_fallthru
      _
    %1386 = shalt.err (0)
    %s1388 = sshll.u32 %s1380, 4
    %s1389 = int_to_ptr.hbm [resolvable:$true] %s1388
    %s1390 = sshll.u32 %s244, 4
    %s1391 = int_to_ptr.vmem [resolvable:$true] %s1390
    %1393 = dma.hbm_to_vmem [thread:$0]  %s1389, 16, %s1391, %s245
    %s1394 = sadd.s32 %s1354, 2
    %s1395 = sld [smem:[#allocation6 + %s1394]]
    %p1396 = scmp.gt.s32.totalorder %s1395, 0
    %s1397 = scalar_select %p1396, %s1395, 0
    %p1398 = scmp.lt.s32.totalorder %s1397, 31
    %s1399 = scalar_select %p1398, %s1397, 31
    %s1400 = scalar_lea.hbm %s3, %s1399
    // Predicated region
    $region246: #{tpu_custom_call.1} parent=1 // pred_check
      _
    $region247: #{tpu_custom_call.1} parent=1 // pred_check_branch
      %1402 = sbr.rel target = $region249
    $region248: #{tpu_custom_call.1} parent=1 // pred_region
      %1403 = sst [smem:[#allocation13]] [#allocation130]
      %1404 = sst [smem:[#allocation14]] [#allocation129]
    $region249: #{tpu_custom_call.1} parent=1 // pred_fallthru
      _
    %1406 = shalt.err (0)
    %s1408 = sshll.u32 %s1400, 4
    %s1409 = int_to_ptr.hbm [resolvable:$true] %s1408
    %s1410 = sshll.u32 %s266, 4
    %s1411 = int_to_ptr.vmem [resolvable:$true] %s1410
    %1413 = dma.hbm_to_vmem [thread:$0]  %s1409, 16, %s1411, %s267
    %s1414 = sadd.s32 %s1354, 3
    %s1415 = sld [smem:[#allocation6 + %s1414]]
    %p1416 = scmp.gt.s32.totalorder %s1415, 0
    %s1417 = scalar_select %p1416, %s1415, 0
    %p1418 = scmp.lt.s32.totalorder %s1417, 31
    %s1419 = scalar_select %p1418, %s1417, 31
    %s1420 = scalar_lea.hbm %s3, %s1419
    // Predicated region
    $region250: #{tpu_custom_call.1} parent=1 // pred_check
      _
    $region251: #{tpu_custom_call.1} parent=1 // pred_check_branch
      %1422 = sbr.rel target = $region253
    $region252: #{tpu_custom_call.1} parent=1 // pred_region
      %1423 = sst [smem:[#allocation13]] [#allocation132]
      %1424 = sst [smem:[#allocation14]] [#allocation131]
    $region253: #{tpu_custom_call.1} parent=1 // pred_fallthru
      _
    %1426 = shalt.err (0)
    %s1428 = sshll.u32 %s1420, 4
    %s1429 = int_to_ptr.hbm [resolvable:$true] %s1428
    %s1430 = sshll.u32 %s288, 4
    %s1431 = int_to_ptr.vmem [resolvable:$true] %s1430
    %1433 = dma.hbm_to_vmem [thread:$0]  %s1429, 16, %s1431, %s289
    %s1434 = sadd.s32 %s1354, 4
    %s1435 = sld [smem:[#allocation6 + %s1434]]
    %p1436 = scmp.gt.s32.totalorder %s1435, 0
    %s1437 = scalar_select %p1436, %s1435, 0
    %p1438 = scmp.lt.s32.totalorder %s1437, 31
    %s1439 = scalar_select %p1438, %s1437, 31
    %s1440 = scalar_lea.hbm %s3, %s1439
    // Predicated region
    $region254: #{tpu_custom_call.1} parent=1 // pred_check
      _
    $region255: #{tpu_custom_call.1} parent=1 // pred_check_branch
      %1442 = sbr.rel target = $region257
    $region256: #{tpu_custom_call.1} parent=1 // pred_region
      %1443 = sst [smem:[#allocation13]] [#allocation134]
      %1444 = sst [smem:[#allocation14]] [#allocation133]
    $region257: #{tpu_custom_call.1} parent=1 // pred_fallthru
      _
    %1446 = shalt.err (0)
    %s1448 = sshll.u32 %s1440, 4
    %s1449 = int_to_ptr.hbm [resolvable:$true] %s1448
    %s1450 = sshll.u32 %s310, 4
    %s1451 = int_to_ptr.vmem [resolvable:$true] %s1450
    %1453 = dma.hbm_to_vmem [thread:$0]  %s1449, 16, %s1451, %s311
    %s1454 = sadd.s32 %s1354, 5
    %s1455 = sld [smem:[#allocation6 + %s1454]]
    %p1456 = scmp.gt.s32.totalorder %s1455, 0
    %s1457 = scalar_select %p1456, %s1455, 0
    %p1458 = scmp.lt.s32.totalorder %s1457, 31
    %s1459 = scalar_select %p1458, %s1457, 31
    %s1460 = scalar_lea.hbm %s3, %s1459
    // Predicated region
    $region258: #{tpu_custom_call.1} parent=1 // pred_check
      _
    $region259: #{tpu_custom_call.1} parent=1 // pred_check_branch
      %1462 = sbr.rel target = $region261
    $region260: #{tpu_custom_call.1} parent=1 // pred_region
      %1463 = sst [smem:[#allocation13]] [#allocation136]
      %1464 = sst [smem:[#allocation14]] [#allocation135]
    $region261: #{tpu_custom_call.1} parent=1 // pred_fallthru
      _
    %1466 = shalt.err (0)
    %s1468 = sshll.u32 %s1460, 4
    %s1469 = int_to_ptr.hbm [resolvable:$true] %s1468
    %s1470 = sshll.u32 %s332, 4
    %s1471 = int_to_ptr.vmem [resolvable:$true] %s1470
    %1473 = dma.hbm_to_vmem [thread:$0]  %s1469, 16, %s1471, %s333
    %s1474 = sadd.s32 %s1354, 6
    %s1475 = sld [smem:[#allocation6 + %s1474]]
    %p1476 = scmp.gt.s32.totalorder %s1475, 0
    %s1477 = scalar_select %p1476, %s1475, 0
    %p1478 = scmp.lt.s32.totalorder %s1477, 31
    %s1479 = scalar_select %p1478, %s1477, 31
    %s1480 = scalar_lea.hbm %s3, %s1479
    // Predicated region
    $region262: #{tpu_custom_call.1} parent=1 // pred_check
      _
    $region263: #{tpu_custom_call.1} parent=1 // pred_check_branch
      %1482 = sbr.rel target = $region265
    $region264: #{tpu_custom_call.1} parent=1 // pred_region
      %1483 = sst [smem:[#allocation13]] [#allocation138]
      %1484 = sst [smem:[#allocation14]] [#allocation137]
    $region265: #{tpu_custom_call.1} parent=1 // pred_fallthru
      _
    %1486 = shalt.err (0)
    %s1488 = sshll.u32 %s1480, 4
    %s1489 = int_to_ptr.hbm [resolvable:$true] %s1488
    %s1490 = sshll.u32 %s354, 4
    %s1491 = int_to_ptr.vmem [resolvable:$true] %s1490
    %1493 = dma.hbm_to_vmem [thread:$0]  %s1489, 16, %s1491, %s355
    %s1494 = sadd.s32 %s1354, 7
    %s1495 = sld [smem:[#allocation6 + %s1494]]
    %p1496 = scmp.gt.s32.totalorder %s1495, 0
    %s1497 = scalar_select %p1496, %s1495, 0
    %p1498 = scmp.lt.s32.totalorder %s1497, 31
    %s1499 = scalar_select %p1498, %s1497, 31
    %s1500 = scalar_lea.hbm %s3, %s1499
    // Predicated region
    $region266: #{tpu_custom_call.1} parent=1 // pred_check
      _
    $region267: #{tpu_custom_call.1} parent=1 // pred_check_branch
      %1502 = sbr.rel target = $region269
    $region268: #{tpu_custom_call.1} parent=1 // pred_region
      %1503 = sst [smem:[#allocation13]] [#allocation140]
      %1504 = sst [smem:[#allocation14]] [#allocation139]
    $region269: #{tpu_custom_call.1} parent=1 // pred_fallthru
      _
    %1506 = shalt.err (0)
    %s1508 = sshll.u32 %s1500, 4
    %s1509 = int_to_ptr.hbm [resolvable:$true] %s1508
    %s1510 = sshll.u32 %s376, 4
    %s1511 = int_to_ptr.vmem [resolvable:$true] %s1510
    %1513 = dma.hbm_to_vmem [thread:$0]  %s1509, 16, %s1511, %s377
    %s1514 = sshll.u32 %s391, 4
    %1515 = dma.done [#allocation3], %s1514
    %s1516 = sshll.u32 %s391, 4
    %1517 = dma.done %s68, %s1516
    %s1518 = sshll.u32 %s391, 4
    %1519 = dma.done %s90, %s1518
    %s1520 = sshll.u32 %s391, 4
    %1521 = dma.done %s112, %s1520
    %s1522 = sshll.u32 %s391, 4
    %1523 = dma.done %s134, %s1522
    %s1524 = sshll.u32 %s391, 4
    %1525 = dma.done %s156, %s1524
    %s1526 = sshll.u32 %s391, 4
    %1527 = dma.done %s178, %s1526
    %s1528 = sshll.u32 %s391, 4
    %1529 = dma.done %s200, %s1528
    %v1530 = vld [vmem:[#allocation2] sm:$0xff]
    %v1531 = vld [vmem:[#allocation4 + $0x6] sm:$0x1]
    %v1532 = vrot.slane %v1530, 4
    %v1533 = vadd.f32 %v1530, %v1532
    %v1534 = vrot.slane %v1533, 2
    %v1535 = vadd.f32 %v1533, %v1534
    %v1536 = vrot.slane %v1535, 1
    %v1537 = vadd.f32 %v1535, %v1536
    %v1538 = vadd.f32 %v1531, %v1537
    %1539 = vst [vmem:[#allocation4 + $0x6] sm:$0x1] %v1538
    %s1540 = sshll.u32 %s391, 4
    %1541 = dma.done %s223, %s1540
    %s1542 = sshll.u32 %s391, 4
    %1543 = dma.done %s245, %s1542
    %s1544 = sshll.u32 %s391, 4
    %1545 = dma.done %s267, %s1544
    %s1546 = sshll.u32 %s391, 4
    %1547 = dma.done %s289, %s1546
    %s1548 = sshll.u32 %s391, 4
    %1549 = dma.done %s311, %s1548
    %s1550 = sshll.u32 %s391, 4
    %1551 = dma.done %s333, %s1550
    %s1552 = sshll.u32 %s391, 4
    %1553 = dma.done %s355, %s1552
    %s1554 = sshll.u32 %s391, 4
    %1555 = dma.done %s377, %s1554
    %v1556 = vld [vmem:[%s222] sm:$0xff]
    %v1557 = vld [vmem:[#allocation4 + $0x7] sm:$0x1]
    %v1558 = vrot.slane %v1556, 4
    %v1559 = vadd.f32 %v1556, %v1558
    %v1560 = vrot.slane %v1559, 2
    %v1561 = vadd.f32 %v1559, %v1560
    %v1562 = vrot.slane %v1561, 1
    %v1563 = vadd.f32 %v1561, %v1562
    %v1564 = vadd.f32 %v1557, %v1563
    %1565 = vst [vmem:[#allocation4 + $0x7] sm:$0x1] %v1564
    %v1566 = vld [vmem:[#allocation4] sm:$0xff]
    %v1567 = vmul.f32 %v1566, 0.125
    %v1568 = vld [vmem:[#allocation7] sm:$0xff]
    %v1569 = vld [vmem:[#allocation7 + $0x8] sm:$0xff]
    %v1570 = vld [vmem:[#allocation7 + $0x10] sm:$0xff]
    %v1571 = vld [vmem:[#allocation7 + $0x18] sm:$0xff]
    %v1572 = vld [vmem:[#allocation7 + $0x20] sm:$0xff]
    %v1573 = vld [vmem:[#allocation7 + $0x28] sm:$0xff]
    %v1574 = vld [vmem:[#allocation7 + $0x30] sm:$0xff]
    %v1575 = vld [vmem:[#allocation7 + $0x38] sm:$0xff]
    %v1576 = vld [vmem:[#allocation7 + $0x40] sm:$0xff]
    %v1577 = vld [vmem:[#allocation7 + $0x48] sm:$0xff]
    %v1578 = vld [vmem:[#allocation7 + $0x50] sm:$0xff]
    %v1579 = vld [vmem:[#allocation7 + $0x58] sm:$0xff]
    %v1580 = vld [vmem:[#allocation7 + $0x60] sm:$0xff]
    %v1581 = vld [vmem:[#allocation7 + $0x68] sm:$0xff]
    %v1582 = vld [vmem:[#allocation7 + $0x70] sm:$0xff]
    %v1583 = vld [vmem:[#allocation7 + $0x78] sm:$0xff]
    %v1584 = vld [vmem:[%s2] sm:$0x1]
    %v1586 = vperm.slane %v1584, 0
    %1588 = vmatpush.msra.mxu0 %v1583
    %1589 = vmatpush.msra.mxu0 %v1582
    %1590 = vmatpush.msra.mxu0 %v1581
    %1591 = vmatpush.msra.mxu0 %v1580
    %1592 = vmatpush.msra.mxu0 %v1579
    %1593 = vmatpush.msra.mxu0 %v1578
    %1594 = vmatpush.msra.mxu0 %v1577
    %1595 = vmatpush.msra.mxu0 %v1576
    %1596 = vmatpush.msra.mxu0 %v1575
    %1597 = vmatpush.msra.mxu0 %v1574
    %1598 = vmatpush.msra.mxu0 %v1573
    %1599 = vmatpush.msra.mxu0 %v1572
    %1600 = vmatpush.msra.mxu0 %v1571
    %1601 = vmatpush.msra.mxu0 %v1570
    %1602 = vmatpush.msra.mxu0 %v1569
    %1603 = vmatpush.msra.mxu0 %v1568
    %1604 = vmatmul.f32.gmra.mxu0 %v1567
    %v1605 = vpop.f32.mrf.mxu0
    %v1606 = vadd.f32 %v1586, %v1605
    %1607 = vdwg.mxu0
    %1608 = vst [vmem:[#allocation10] sm:$0xff] %v1606
    // Predicated region
    $region270: #{tpu_custom_call.1} parent=1 // pred_check
      _
    $region271: #{tpu_custom_call.1} parent=1 // pred_check_branch
      %1610 = sbr.rel (0) target = $region273
    $region272: #{tpu_custom_call.1} parent=1 // pred_region
      %1612 = vsyncadd [#allocation9], 0
      %s1614 = sshll.u32 [#allocation10], 4
      %s1615 = int_to_ptr.vmem [resolvable:$true] %s1614
      %s1616 = sshll.u32 %s4, 4
      %s1617 = int_to_ptr.hbm [resolvable:$true] %s1616
      %1619 = dma.vmem_to_hbm [thread:$0]  %s1615, 128, %s1617, [#allocation9]
    $region273: #{tpu_custom_call.1} parent=1 // pred_fallthru
      _
    // Predicated region
    $region274: #{tpu_custom_call.1} parent=1 // pred_check
      _
    $region275: #{tpu_custom_call.1} parent=1 // pred_check_branch
      %1621 = sbr.rel (0) target = $region277
    $region276: #{tpu_custom_call.1} parent=1 // pred_region
      %1623 = dma.done [#allocation9], 128
    $region277: #{tpu_custom_call.1} parent=1 // pred_fallthru
      _
    %1624 = vsyncpa [#allocation8], 1
    %1625 = vsyncpa [#allocation9], 1
  %1626 = vsyncmov [#allocation3]
  %s1627 = vpop.sfrf %1626
  %p1628 = scmp.eq.s32.totalorder %s1627, 0
  %p1629 = pneg %p1628
  %1631 = shalt.err (%p1629)
  %s1632 = scalar_lea.sflag [#allocation3], 1
  %1633 = vsyncmov %s1632
  %s1634 = vpop.sfrf %1633
  %p1635 = scmp.eq.s32.totalorder %s1634, 0
  %p1636 = pneg %p1635
  %1638 = shalt.err (%p1636)
  %s1639 = scalar_lea.sflag [#allocation3], 2
  %1640 = vsyncmov %s1639
  %s1641 = vpop.sfrf %1640
  %p1642 = scmp.eq.s32.totalorder %s1641, 0
  %p1643 = pneg %p1642
  %1645 = shalt.err (%p1643)
  %s1646 = scalar_lea.sflag [#allocation3], 3
  %1647 = vsyncmov %s1646
  %s1648 = vpop.sfrf %1647
  %p1649 = scmp.eq.s32.totalorder %s1648, 0
  %p1650 = pneg %p1649
  %1652 = shalt.err (%p1650)
  %s1653 = scalar_lea.sflag [#allocation3], 4
  %1654 = vsyncmov %s1653
  %s1655 = vpop.sfrf %1654
  %p1656 = scmp.eq.s32.totalorder %s1655, 0
  %p1657 = pneg %p1656
  %1659 = shalt.err (%p1657)
  %s1660 = scalar_lea.sflag [#allocation3], 5
  %1661 = vsyncmov %s1660
  %s1662 = vpop.sfrf %1661
  %p1663 = scmp.eq.s32.totalorder %s1662, 0
  %p1664 = pneg %p1663
  %1666 = shalt.err (%p1664)
  %s1667 = scalar_lea.sflag [#allocation3], 6
  %1668 = vsyncmov %s1667
  %s1669 = vpop.sfrf %1668
  %p1670 = scmp.eq.s32.totalorder %s1669, 0
  %p1671 = pneg %p1670
  %1673 = shalt.err (%p1671)
  %s1674 = scalar_lea.sflag [#allocation3], 7
  %1675 = vsyncmov %s1674
  %s1676 = vpop.sfrf %1675
  %p1677 = scmp.eq.s32.totalorder %s1676, 0
  %p1678 = pneg %p1677
  %1680 = shalt.err (%p1678)
  %s1681 = scalar_lea.sflag [#allocation3], 8
  %1682 = vsyncmov %s1681
  %s1683 = vpop.sfrf %1682
  %p1684 = scmp.eq.s32.totalorder %s1683, 0
  %p1685 = pneg %p1684
  %1687 = shalt.err (%p1685)
  %s1688 = scalar_lea.sflag [#allocation3], 9
  %1689 = vsyncmov %s1688
  %s1690 = vpop.sfrf %1689
  %p1691 = scmp.eq.s32.totalorder %s1690, 0
  %p1692 = pneg %p1691
  %1694 = shalt.err (%p1692)
  %s1695 = scalar_lea.sflag [#allocation3], 10
  %1696 = vsyncmov %s1695
  %s1697 = vpop.sfrf %1696
  %p1698 = scmp.eq.s32.totalorder %s1697, 0
  %p1699 = pneg %p1698
  %1701 = shalt.err (%p1699)
  %s1702 = scalar_lea.sflag [#allocation3], 11
  %1703 = vsyncmov %s1702
  %s1704 = vpop.sfrf %1703
  %p1705 = scmp.eq.s32.totalorder %s1704, 0
  %p1706 = pneg %p1705
  %1708 = shalt.err (%p1706)
  %s1709 = scalar_lea.sflag [#allocation3], 12
  %1710 = vsyncmov %s1709
  %s1711 = vpop.sfrf %1710
  %p1712 = scmp.eq.s32.totalorder %s1711, 0
  %p1713 = pneg %p1712
  %1715 = shalt.err (%p1713)
  %s1716 = scalar_lea.sflag [#allocation3], 13
  %1717 = vsyncmov %s1716
  %s1718 = vpop.sfrf %1717
  %p1719 = scmp.eq.s32.totalorder %s1718, 0
  %p1720 = pneg %p1719
  %1722 = shalt.err (%p1720)
  %s1723 = scalar_lea.sflag [#allocation3], 14
  %1724 = vsyncmov %s1723
  %s1725 = vpop.sfrf %1724
  %p1726 = scmp.eq.s32.totalorder %s1725, 0
  %p1727 = pneg %p1726
  %1729 = shalt.err (%p1727)
  %s1730 = scalar_lea.sflag [#allocation3], 15
  %1731 = vsyncmov %s1730
  %s1732 = vpop.sfrf %1731
  %p1733 = scmp.eq.s32.totalorder %s1732, 0
  %p1734 = pneg %p1733
  %1736 = shalt.err (%p1734)

</llo_original>
